<compile_context>
chip_gen: v7x
topology: tpu7x:2x2x1
jax: 0.10.0
libtpu: 0.0.40
codegen_flags: <defaults>
</compile_context>

<pallas_src>
import functools
import math

import jax
import jax.numpy as jnp
from jax import lax
from jax.experimental import pallas as pl
from jax.experimental.pallas import tpu as pltpu

NUM_HEADS = 4        # Attention(num_hidden) default h=4
NUM_LAYERS = 2       # two cross-attention layers
LN_EPS = 1e-5        # nn.LayerNorm default


def _layer_norm(x, gamma, beta):
    mean = jnp.mean(x, axis=-1, keepdims=True)
    xc = x - mean
    var = jnp.mean(xc * xc, axis=-1, keepdims=True)
    return gamma * (xc * lax.rsqrt(var + LN_EPS)) + beta


def encoder_kernel(ctx_ref, y_ref, tgt_ref,
                   w_inp_x_ref, w_inp_y_ref, b_inp_ref,
                   w_ctx_ref, b_ctx_ref, w_tgt_ref, b_tgt_ref,
                   wk_ref, wv_ref, wq_ref,
                   wf_res_ref, wf_att_ref, bf_ref,
                   g_ref, be_ref,
                   out_ref, *, compute_dtype):
    f32 = jnp.float32
    cdt = compute_dtype

    BB, Nc, Dc = ctx_ref.shape
    Nt = tgt_ref.shape[1]
    H = w_ctx_ref.shape[-1]
    NH = wk_ref.shape[1]
    dh = H // NH
    scale = 1.0 / math.sqrt(dh)

    def mm(a, b):
        # 2-D a @ b, bf16/f32 operands, f32 accumulation on the MXU.
        return lax.dot_general(a.astype(cdt), b.astype(cdt),
                               dimension_numbers=(((1,), (0,)), ((), ())),
                               preferred_element_type=f32)

    def bmm(a, b, b_contract):
        # batched (over leading dim) matmul; b_contract selects b's contracted
        # axis so no explicit transpose is ever materialized.
        return lax.dot_general(a.astype(cdt), b.astype(cdt),
                               dimension_numbers=(((2,), (b_contract,)), ((0,), (0,))),
                               preferred_element_type=f32)

    # Flatten batch into the M dimension of all projection matmuls
    # (last dim unchanged -> cheap layout-preserving reshape).
    ctx2d = ctx_ref[...].reshape(BB * Nc, Dc)        # (BB*Nc, Dc)
    y2d = y_ref[...].reshape(BB * Nc, 1)             # (BB*Nc, 1)
    tgt2d = tgt_ref[...].reshape(BB * Nt, Dc)        # (BB*Nt, Dc)

    # Input / context / target projections.
    # enc_in concat removed: cat([ctx, y]) @ W == ctx @ W[:Dc] + y * W[Dc]
    value = mm(ctx2d, w_inp_x_ref[...]) + y2d * w_inp_y_ref[...] + b_inp_ref[...]
    keys = mm(ctx2d, w_ctx_ref[...]) + b_ctx_ref[...]
    query = mm(tgt2d, w_tgt_ref[...]) + b_tgt_ref[...]

    for l in range(NUM_LAYERS):                      # static unroll: 2 layers
        residual = query                             # (BB*Nt, H)

        # final_linear split: cat([residual, attn]) @ Wf
        #   == residual @ Wf[:H] + sum_h head_h @ Wf[H + h*dh : H + (h+1)*dh]
        acc = mm(residual, wf_res_ref[l]) + bf_ref[l]

        for hh in range(NUM_HEADS):                  # static unroll over heads
            # Static ref indexing on the weight stacks: no runtime slicing of
            # loaded arrays, zero-cost views into VMEM.
            kh = mm(keys, wk_ref[l, hh]).reshape(BB, Nc, dh)
            vh = mm(value, wv_ref[l, hh]).reshape(BB, Nc, dh)
            qh = mm(query, wq_ref[l, hh]).reshape(BB, Nt, dh)

            s = bmm(qh, kh, 2) * scale               # (BB, Nt, Nc), trans-B contraction
            s = s - jnp.max(s, axis=-1, keepdims=True)
            e = jnp.exp(s)
            p = e * pl.reciprocal(jnp.sum(e, axis=-1, keepdims=True), approx=True)
            head = bmm(p, vh, 1)                     # (BB, Nt, dh)

            acc = acc + mm(head.reshape(BB * Nt, dh), wf_att_ref[l, hh])

        res = acc + residual                          # residual_dropout = identity (eval)
        query = _layer_norm(res, g_ref[l], be_ref[l])

    out_ref[...] = query.reshape(BB, Nt, H)


def deterministic_encoder(context_x, context_y, target_x, params, *,
                          block_b=None, matmul_dtype=jnp.float32):
    B, Nc, _ = context_x.shape
    Nt = target_x.shape[1]
    H = params["w_ctx"].shape[-1]
    Dc = params["w_ctx"].shape[0]
    L, NH = NUM_LAYERS, NUM_HEADS
    dh = H // NH

    # ---- plain-JAX glue: feature slicing + parameter re-layout (no runtime concats) ----
    ctx = context_x[..., 2:]                                    # (B, Nc, Dc)
    tgt = target_x[..., 2:]                                     # (B, Nt, Dc)
    y = context_y                                               # (B, Nc, 1)

    w_inp = params["w_inp"]
    w_inp_x, w_inp_y = w_inp[:Dc], w_inp[Dc:]                   # (Dc, H), (1, H)
    per_head = lambda w: w.reshape(L, H, NH, dh).transpose(0, 2, 1, 3)
    wk = per_head(params["wk"])                                 # (L, NH, H, dh)
    wv = per_head(params["wv"])
    wq = per_head(params["wq"])
    wf = params["wf"]
    wf_res = wf[:, :H, :]                                       # (L, H, H)
    wf_att = wf[:, H:, :].reshape(L, NH, dh, H)                 # (L, NH, dh, H)

    # ---- pick batch block: amortize ~0.35us/step overhead, grow MXU M rows.
    # Keep blocks modest so activations + (BB, Nt, Nc) scores stay far under
    # VMEM (64 MiB on v7x); for large Nc/Nt re-derive this budget.
    if block_b is None:
        block_b = 1
        for cand in range(1, B + 1):
            if B % cand == 0 and cand * max(Nc, Nt) <= 1024:
                block_b = cand
                if cand * max(Nc, Nt) >= 256:
                    break
    assert B % block_b == 0
    grid = (B // block_b,)

    def batched(n, d):
        return pl.BlockSpec((block_b, n, d), lambda b: (b, 0, 0))

    def full(a):
        nd = a.ndim
        return pl.BlockSpec(a.shape, lambda b, _nd=nd: (0,) * _nd)

    weights = [w_inp_x, w_inp_y, params["b_inp"],
               params["w_ctx"], params["b_ctx"],
               params["w_tgt"], params["b_tgt"],
               wk, wv, wq, wf_res, wf_att, params["bf"],
               params["ln_g"], params["ln_b"]]

    in_specs = ([batched(Nc, Dc), batched(Nc, 1), batched(Nt, Dc)]
                + [full(w) for w in weights])
    out_spec = pl.BlockSpec((block_b, Nt, H), lambda b: (b, 0, 0))

    kernel = functools.partial(encoder_kernel, compute_dtype=matmul_dtype)

    return pl.pallas_call(
        kernel,
        out_shape=jax.ShapeDtypeStruct((B, Nt, H), jnp.float32),
        grid=grid,
        in_specs=in_specs,
        out_specs=out_spec,
        compiler_params=pltpu.CompilerParams(
            dimension_semantics=("parallel",)),   # batch axis shards across TCs (v7x)
    )(ctx, y, tgt, *weights)


def encoder_reference(context_x, context_y, target_x, params):
    """Pure-JAX f32 reference (mirrors the PyTorch forward, eval mode)."""
    enc_in = jnp.concatenate([context_x[..., 2:], context_y], axis=-1)
    value = enc_in @ params["w_inp"] + params["b_inp"]
    keys = context_x[..., 2:] @ params["w_ctx"] + params["b_ctx"]
    query = target_x[..., 2:] @ params["w_tgt"] + params["b_tgt"]
    H = value.shape[-1]
    dh = H // NUM_HEADS
    B = value.shape[0]
    for l in range(NUM_LAYERS):
        k = (keys @ params["wk"][l]).reshape(B, -1, NUM_HEADS, dh)
        v = (value @ params["wv"][l]).reshape(B, -1, NUM_HEADS, dh)
        q = (query @ params["wq"][l]).reshape(B, -1, NUM_HEADS, dh)
        residual = query
        scores = jnp.einsum("bqhd,bkhd->bhqk", q, k) / math.sqrt(dh)
        attn = jax.nn.softmax(scores, axis=-1)
        res = jnp.einsum("bhqk,bkhd->bqhd", attn, v).reshape(B, -1, H)
        catted = jnp.concatenate([residual, res], axis=-1)
        out = catted @ params["wf"][l] + params["bf"][l]
        out = out + residual
        mean = out.mean(-1, keepdims=True)
        var = ((out - mean) ** 2).mean(-1, keepdims=True)
        query = params["ln_g"][l] * (out - mean) / jnp.sqrt(var + LN_EPS) + params["ln_b"][l]
    return query


def init_params(key, input_dim, num_hidden):
    H = num_hidden
    ks = jax.random.split(key, 12)

    def xavier(k, shape):
        fan_in, fan_out = shape[-2], shape[-1]
        lim = math.sqrt(6.0 / (fan_in + fan_out))
        return jax.random.uniform(k, shape, jnp.float32, -lim, lim)

    def small(k, shape):
        return 0.1 * jax.random.uniform(k, shape, jnp.float32, -1.0, 1.0)

    return dict(
        # Linear projections (weights stored (in, out); PyTorch computes x @ W.T)
        w_inp=xavier(ks[0], (input_dim, H)),
        b_inp=small(ks[1], (1, H)),
        w_ctx=xavier(ks[2], (input_dim - 1, H)),
        b_ctx=small(ks[3], (1, H)),
        w_tgt=xavier(ks[4], (input_dim - 1, H)),
        b_tgt=small(ks[5], (1, H)),
        # per-layer attention weights, stacked over the 2 cross-attention layers
        wk=xavier(ks[6], (NUM_LAYERS, H, H)),
        wv=xavier(ks[7], (NUM_LAYERS, H, H)),
        wq=xavier(ks[8], (NUM_LAYERS, H, H)),
        wf=xavier(ks[9], (NUM_LAYERS, 2 * H, H)),
        bf=small(ks[10], (NUM_LAYERS, 1, H)),
        ln_g=jnp.ones((NUM_LAYERS, 1, H), jnp.float32),
        ln_b=jnp.zeros((NUM_LAYERS, 1, H), jnp.float32),
    )


if __name__ == "__main__":
    # Small shapes consistent with the module:
    #   input_dim = 4 -> context_x/target_x last dim = 5 (2 dropped cols + 3 feats),
    #   context_y last dim = 1, num_hidden = 32.
    B, Nc, Nt = 2, 8, 8
    input_dim, num_hidden = 4, 32
    Dx = (input_dim - 1) + 2  # = 5

    key = jax.random.PRNGKey(0)
    k_cx, k_cy, k_tx, k_p = jax.random.split(key, 4)
    context_x = jax.random.normal(k_cx, (B, Nc, Dx), jnp.float32)
    context_y = jax.random.normal(k_cy, (B, Nc, 1), jnp.float32)
    target_x = jax.random.normal(k_tx, (B, Nt, Dx), jnp.float32)
    params = init_params(k_p, input_dim, num_hidden)

    ref = encoder_reference(context_x, context_y, target_x, params)

    # f32 MXU path: strict semantic check against the PyTorch-equivalent reference.
    out = deterministic_encoder(context_x, context_y, target_x, params,
                                matmul_dtype=jnp.float32)
    out = jax.block_until_ready(out)
    assert out.shape == (B, Nt, num_hidden), out.shape
    assert jnp.all(jnp.isfinite(out))
    assert jnp.allclose(out, ref, rtol=3e-2, atol=3e-2), float(jnp.max(jnp.abs(out - ref)))

    # bf16-operand / f32-accumulate fast path (v5e/v6e MXU): looser tolerance,
    # bf16 inputs add ~1e-2-level relative error through two attention layers.
    out_bf16 = deterministic_encoder(context_x, context_y, target_x, params,
                                     matmul_dtype=jnp.bfloat16)
    out_bf16 = jax.block_until_ready(out_bf16)
    assert jnp.all(jnp.isfinite(out_bf16))
    assert jnp.allclose(out_bf16, ref, rtol=1e-1, atol=1e-1), \
        float(jnp.max(jnp.abs(out_bf16 - ref)))

    print("KERNEL_OK")
</pallas_src>

<mosaic_0001>
module attributes {stable_mosaic.version = 11 : i64} {
  func.func @encoder_kernel(%arg0: i32, %arg1: memref<2x8x3xf32, #tpu.memory_space<vmem>>, %arg2: memref<2x8x1xf32, #tpu.memory_space<vmem>>, %arg3: memref<2x8x3xf32, #tpu.memory_space<vmem>>, %arg4: memref<3x32xf32, #tpu.memory_space<vmem>>, %arg5: memref<1x32xf32, #tpu.memory_space<vmem>>, %arg6: memref<1x32xf32, #tpu.memory_space<vmem>>, %arg7: memref<3x32xf32, #tpu.memory_space<vmem>>, %arg8: memref<1x32xf32, #tpu.memory_space<vmem>>, %arg9: memref<3x32xf32, #tpu.memory_space<vmem>>, %arg10: memref<1x32xf32, #tpu.memory_space<vmem>>, %arg11: memref<2x4x32x8xf32, #tpu.memory_space<vmem>>, %arg12: memref<2x4x32x8xf32, #tpu.memory_space<vmem>>, %arg13: memref<2x4x32x8xf32, #tpu.memory_space<vmem>>, %arg14: memref<2x32x32xf32, #tpu.memory_space<vmem>>, %arg15: memref<2x4x8x32xf32, #tpu.memory_space<vmem>>, %arg16: memref<2x1x32xf32, #tpu.memory_space<vmem>>, %arg17: memref<2x1x32xf32, #tpu.memory_space<vmem>>, %arg18: memref<2x1x32xf32, #tpu.memory_space<vmem>>, %arg19: memref<2x8x32xf32, #tpu.memory_space<vmem>>) attributes {dimension_semantics = [#tpu.dimension_semantics<parallel>], iteration_bounds = array<i64: 1>, scalar_prefetch = 0 : i64, scratch_operands = 0 : i64, tpu.core_type = #tpu.core_type<tc>, window_params = [{transform_indices = @transform_0, window_bounds = array<i64: 2, 8, 3>}, {transform_indices = @transform_1, window_bounds = array<i64: 2, 8, 1>}, {transform_indices = @transform_2, window_bounds = array<i64: 2, 8, 3>}, {pipeline_mode = #tpu.pipeline_mode<synchronous>, transform_indices = @transform_3, window_bounds = array<i64: 3, 32>}, {pipeline_mode = #tpu.pipeline_mode<synchronous>, transform_indices = @transform_4, window_bounds = array<i64: 1, 32>}, {pipeline_mode = #tpu.pipeline_mode<synchronous>, transform_indices = @transform_5, window_bounds = array<i64: 1, 32>}, {pipeline_mode = #tpu.pipeline_mode<synchronous>, transform_indices = @transform_6, window_bounds = array<i64: 3, 32>}, {pipeline_mode = #tpu.pipeline_mode<synchronous>, transform_indices = @transform_7, window_bounds = array<i64: 1, 32>}, {pipeline_mode = #tpu.pipeline_mode<synchronous>, transform_indices = @transform_8, window_bounds = array<i64: 3, 32>}, {pipeline_mode = #tpu.pipeline_mode<synchronous>, transform_indices = @transform_9, window_bounds = array<i64: 1, 32>}, {pipeline_mode = #tpu.pipeline_mode<synchronous>, transform_indices = @transform_10, window_bounds = array<i64: 2, 4, 32, 8>}, {pipeline_mode = #tpu.pipeline_mode<synchronous>, transform_indices = @transform_11, window_bounds = array<i64: 2, 4, 32, 8>}, {pipeline_mode = #tpu.pipeline_mode<synchronous>, transform_indices = @transform_12, window_bounds = array<i64: 2, 4, 32, 8>}, {pipeline_mode = #tpu.pipeline_mode<synchronous>, transform_indices = @transform_13, window_bounds = array<i64: 2, 32, 32>}, {pipeline_mode = #tpu.pipeline_mode<synchronous>, transform_indices = @transform_14, window_bounds = array<i64: 2, 4, 8, 32>}, {pipeline_mode = #tpu.pipeline_mode<synchronous>, transform_indices = @transform_15, window_bounds = array<i64: 2, 1, 32>}, {pipeline_mode = #tpu.pipeline_mode<synchronous>, transform_indices = @transform_16, window_bounds = array<i64: 2, 1, 32>}, {pipeline_mode = #tpu.pipeline_mode<synchronous>, transform_indices = @transform_17, window_bounds = array<i64: 2, 1, 32>}, {transform_indices = @transform_18, window_bounds = array<i64: 2, 8, 32>}]} {
    %c0 = arith.constant 0 : index
    %c0_0 = arith.constant 0 : index
    %c0_1 = arith.constant 0 : index
    %0 = vector.load %arg1[%c0, %c0_0, %c0_1] : memref<2x8x3xf32, #tpu.memory_space<vmem>>, vector<2x8x3xf32>
    %1 = vector.shape_cast %0 : vector<2x8x3xf32> to vector<16x3xf32>
    %c0_2 = arith.constant 0 : index
    %c0_3 = arith.constant 0 : index
    %c0_4 = arith.constant 0 : index
    %2 = vector.load %arg2[%c0_2, %c0_3, %c0_4] : memref<2x8x1xf32, #tpu.memory_space<vmem>>, vector<2x8x1xf32>
    %3 = vector.shape_cast %2 : vector<2x8x1xf32> to vector<16x1xf32>
    %c0_5 = arith.constant 0 : index
    %c0_6 = arith.constant 0 : index
    %c0_7 = arith.constant 0 : index
    %4 = vector.load %arg3[%c0_5, %c0_6, %c0_7] : memref<2x8x3xf32, #tpu.memory_space<vmem>>, vector<2x8x3xf32>
    %5 = vector.shape_cast %4 : vector<2x8x3xf32> to vector<16x3xf32>
    %c0_8 = arith.constant 0 : index
    %c0_9 = arith.constant 0 : index
    %6 = vector.load %arg4[%c0_8, %c0_9] : memref<3x32xf32, #tpu.memory_space<vmem>>, vector<3x32xf32>
    %cst = arith.constant dense<0.000000e+00> : vector<16x32xf32>
    %7 = tpu.matmul %1, %6, %cst {dimension_numbers = #tpu.dot_dimension_numbers<[1], [0], [0], [1], [0, 0, 1, 1], [], []>} : vector<16x3xf32>, vector<3x32xf32>, vector<16x32xf32> -> vector<16x32xf32>
    %c0_10 = arith.constant 0 : index
    %c0_11 = arith.constant 0 : index
    %8 = vector.load %arg5[%c0_10, %c0_11] : memref<1x32xf32, #tpu.memory_space<vmem>>, vector<1x32xf32>
    %9 = vector.broadcast %3 : vector<16x1xf32> to vector<16x32xf32>
    %10 = vector.broadcast %8 : vector<1x32xf32> to vector<16x32xf32>
    %11 = arith.mulf %9, %10 : vector<16x32xf32>
    %12 = arith.addf %7, %11 : vector<16x32xf32>
    %c0_12 = arith.constant 0 : index
    %c0_13 = arith.constant 0 : index
    %13 = vector.load %arg6[%c0_12, %c0_13] : memref<1x32xf32, #tpu.memory_space<vmem>>, vector<1x32xf32>
    %14 = vector.broadcast %13 : vector<1x32xf32> to vector<16x32xf32>
    %15 = arith.addf %12, %14 : vector<16x32xf32>
    %c0_14 = arith.constant 0 : index
    %c0_15 = arith.constant 0 : index
    %16 = vector.load %arg7[%c0_14, %c0_15] : memref<3x32xf32, #tpu.memory_space<vmem>>, vector<3x32xf32>
    %cst_16 = arith.constant dense<0.000000e+00> : vector<16x32xf32>
    %17 = tpu.matmul %1, %16, %cst_16 {dimension_numbers = #tpu.dot_dimension_numbers<[1], [0], [0], [1], [0, 0, 1, 1], [], []>} : vector<16x3xf32>, vector<3x32xf32>, vector<16x32xf32> -> vector<16x32xf32>
    %c0_17 = arith.constant 0 : index
    %c0_18 = arith.constant 0 : index
    %18 = vector.load %arg8[%c0_17, %c0_18] : memref<1x32xf32, #tpu.memory_space<vmem>>, vector<1x32xf32>
    %19 = vector.broadcast %18 : vector<1x32xf32> to vector<16x32xf32>
    %20 = arith.addf %17, %19 : vector<16x32xf32>
    %c0_19 = arith.constant 0 : index
    %c0_20 = arith.constant 0 : index
    %21 = vector.load %arg9[%c0_19, %c0_20] : memref<3x32xf32, #tpu.memory_space<vmem>>, vector<3x32xf32>
    %cst_21 = arith.constant dense<0.000000e+00> : vector<16x32xf32>
    %22 = tpu.matmul %5, %21, %cst_21 {dimension_numbers = #tpu.dot_dimension_numbers<[1], [0], [0], [1], [0, 0, 1, 1], [], []>} : vector<16x3xf32>, vector<3x32xf32>, vector<16x32xf32> -> vector<16x32xf32>
    %c0_22 = arith.constant 0 : index
    %c0_23 = arith.constant 0 : index
    %23 = vector.load %arg10[%c0_22, %c0_23] : memref<1x32xf32, #tpu.memory_space<vmem>>, vector<1x32xf32>
    %24 = vector.broadcast %23 : vector<1x32xf32> to vector<16x32xf32>
    %25 = arith.addf %22, %24 : vector<16x32xf32>
    %c0_24 = arith.constant 0 : index
    %c0_25 = arith.constant 0 : index
    %c0_26 = arith.constant 0 : index
    %26 = vector.load %arg14[%c0_24, %c0_25, %c0_26] : memref<2x32x32xf32, #tpu.memory_space<vmem>>, vector<1x32x32xf32>
    %27 = vector.shape_cast %26 : vector<1x32x32xf32> to vector<32x32xf32>
    %cst_27 = arith.constant dense<0.000000e+00> : vector<16x32xf32>
    %28 = tpu.matmul %25, %27, %cst_27 {dimension_numbers = #tpu.dot_dimension_numbers<[1], [0], [0], [1], [0, 0, 1, 1], [], []>} : vector<16x32xf32>, vector<32x32xf32>, vector<16x32xf32> -> vector<16x32xf32>
    %c0_28 = arith.constant 0 : index
    %c0_29 = arith.constant 0 : index
    %c0_30 = arith.constant 0 : index
    %29 = vector.load %arg16[%c0_28, %c0_29, %c0_30] : memref<2x1x32xf32, #tpu.memory_space<vmem>>, vector<1x1x32xf32>
    %30 = vector.shape_cast %29 : vector<1x1x32xf32> to vector<1x32xf32>
    %31 = vector.broadcast %30 : vector<1x32xf32> to vector<16x32xf32>
    %32 = arith.addf %28, %31 : vector<16x32xf32>
    %c0_31 = arith.constant 0 : index
    %c0_32 = arith.constant 0 : index
    %c0_33 = arith.constant 0 : index
    %c0_34 = arith.constant 0 : index
    %33 = vector.load %arg11[%c0_31, %c0_32, %c0_33, %c0_34] : memref<2x4x32x8xf32, #tpu.memory_space<vmem>>, vector<1x1x32x8xf32>
    %34 = vector.shape_cast %33 : vector<1x1x32x8xf32> to vector<32x8xf32>
    %cst_35 = arith.constant dense<0.000000e+00> : vector<16x8xf32>
    %35 = tpu.matmul %20, %34, %cst_35 {dimension_numbers = #tpu.dot_dimension_numbers<[1], [0], [0], [1], [0, 0, 1, 1], [], []>} : vector<16x32xf32>, vector<32x8xf32>, vector<16x8xf32> -> vector<16x8xf32>
    %36 = vector.shape_cast %35 : vector<16x8xf32> to vector<2x8x8xf32>
    %c0_36 = arith.constant 0 : index
    %c0_37 = arith.constant 0 : index
    %c0_38 = arith.constant 0 : index
    %c0_39 = arith.constant 0 : index
    %37 = vector.load %arg12[%c0_36, %c0_37, %c0_38, %c0_39] : memref<2x4x32x8xf32, #tpu.memory_space<vmem>>, vector<1x1x32x8xf32>
    %38 = vector.shape_cast %37 : vector<1x1x32x8xf32> to vector<32x8xf32>
    %cst_40 = arith.constant dense<0.000000e+00> : vector<16x8xf32>
    %39 = tpu.matmul %15, %38, %cst_40 {dimension_numbers = #tpu.dot_dimension_numbers<[1], [0], [0], [1], [0, 0, 1, 1], [], []>} : vector<16x32xf32>, vector<32x8xf32>, vector<16x8xf32> -> vector<16x8xf32>
    %40 = vector.shape_cast %39 : vector<16x8xf32> to vector<2x8x8xf32>
    %c0_41 = arith.constant 0 : index
    %c0_42 = arith.constant 0 : index
    %c0_43 = arith.constant 0 : index
    %c0_44 = arith.constant 0 : index
    %41 = vector.load %arg13[%c0_41, %c0_42, %c0_43, %c0_44] : memref<2x4x32x8xf32, #tpu.memory_space<vmem>>, vector<1x1x32x8xf32>
    %42 = vector.shape_cast %41 : vector<1x1x32x8xf32> to vector<32x8xf32>
    %cst_45 = arith.constant dense<0.000000e+00> : vector<16x8xf32>
    %43 = tpu.matmul %25, %42, %cst_45 {dimension_numbers = #tpu.dot_dimension_numbers<[1], [0], [0], [1], [0, 0, 1, 1], [], []>} : vector<16x32xf32>, vector<32x8xf32>, vector<16x8xf32> -> vector<16x8xf32>
    %44 = vector.shape_cast %43 : vector<16x8xf32> to vector<2x8x8xf32>
    %cst_46 = arith.constant dense<0.000000e+00> : vector<2x8x8xf32>
    %45 = tpu.matmul %44, %36, %cst_46 {dimension_numbers = #tpu.dot_dimension_numbers<[2], [2], [1], [1], [0, 0, 0, 1, 1, 1], [0], [0]>} : vector<2x8x8xf32>, vector<2x8x8xf32>, vector<2x8x8xf32> -> vector<2x8x8xf32>
    %cst_47 = arith.constant 0.353553385 : f32
    %46 = vector.broadcast %cst_47 : f32 to vector<2x8x8xf32>
    %47 = arith.mulf %45, %46 : vector<2x8x8xf32>
    %cst_48 = arith.constant dense<0xFF800000> : vector<2x8xf32>
    %48 = vector.multi_reduction <maximumf>, %47, %cst_48 [2] : vector<2x8x8xf32> to vector<2x8xf32>
    %49 = vector.shape_cast %48 : vector<2x8xf32> to vector<2x8x1xf32>
    %50 = vector.broadcast %49 : vector<2x8x1xf32> to vector<2x8x8xf32>
    %51 = arith.subf %47, %50 : vector<2x8x8xf32>
    %52 = math.exp %51 : vector<2x8x8xf32>
    %cst_49 = arith.constant dense<0.000000e+00> : vector<2x8xf32>
    %53 = vector.multi_reduction <add>, %52, %cst_49 [2] : vector<2x8x8xf32> to vector<2x8xf32>
    %54 = vector.shape_cast %53 : vector<2x8xf32> to vector<2x8x1xf32>
    %55 = tpu.reciprocal %54 {approx = true} : vector<2x8x1xf32> -> vector<2x8x1xf32>
    %56 = vector.broadcast %55 : vector<2x8x1xf32> to vector<2x8x8xf32>
    %57 = arith.mulf %52, %56 : vector<2x8x8xf32>
    %cst_50 = arith.constant dense<0.000000e+00> : vector<2x8x8xf32>
    %58 = tpu.matmul %57, %40, %cst_50 {dimension_numbers = #tpu.dot_dimension_numbers<[2], [1], [1], [2], [0, 0, 0, 1, 1, 2], [0], [0]>} : vector<2x8x8xf32>, vector<2x8x8xf32>, vector<2x8x8xf32> -> vector<2x8x8xf32>
    %59 = vector.shape_cast %58 : vector<2x8x8xf32> to vector<16x8xf32>
    %c0_51 = arith.constant 0 : index
    %c0_52 = arith.constant 0 : index
    %c0_53 = arith.constant 0 : index
    %c0_54 = arith.constant 0 : index
    %60 = vector.load %arg15[%c0_51, %c0_52, %c0_53, %c0_54] : memref<2x4x8x32xf32, #tpu.memory_space<vmem>>, vector<1x1x8x32xf32>
    %61 = vector.shape_cast %60 : vector<1x1x8x32xf32> to vector<8x32xf32>
    %cst_55 = arith.constant dense<0.000000e+00> : vector<16x32xf32>
    %62 = tpu.matmul %59, %61, %cst_55 {dimension_numbers = #tpu.dot_dimension_numbers<[1], [0], [0], [1], [0, 0, 1, 1], [], []>} : vector<16x8xf32>, vector<8x32xf32>, vector<16x32xf32> -> vector<16x32xf32>
    %63 = arith.addf %32, %62 : vector<16x32xf32>
    %c0_56 = arith.constant 0 : index
    %c1 = arith.constant 1 : index
    %c0_57 = arith.constant 0 : index
    %c0_58 = arith.constant 0 : index
    %64 = vector.load %arg11[%c0_56, %c1, %c0_57, %c0_58] : memref<2x4x32x8xf32, #tpu.memory_space<vmem>>, vector<1x1x32x8xf32>
    %65 = vector.shape_cast %64 : vector<1x1x32x8xf32> to vector<32x8xf32>
    %cst_59 = arith.constant dense<0.000000e+00> : vector<16x8xf32>
    %66 = tpu.matmul %20, %65, %cst_59 {dimension_numbers = #tpu.dot_dimension_numbers<[1], [0], [0], [1], [0, 0, 1, 1], [], []>} : vector<16x32xf32>, vector<32x8xf32>, vector<16x8xf32> -> vector<16x8xf32>
    %67 = vector.shape_cast %66 : vector<16x8xf32> to vector<2x8x8xf32>
    %c0_60 = arith.constant 0 : index
    %c1_61 = arith.constant 1 : index
    %c0_62 = arith.constant 0 : index
    %c0_63 = arith.constant 0 : index
    %68 = vector.load %arg12[%c0_60, %c1_61, %c0_62, %c0_63] : memref<2x4x32x8xf32, #tpu.memory_space<vmem>>, vector<1x1x32x8xf32>
    %69 = vector.shape_cast %68 : vector<1x1x32x8xf32> to vector<32x8xf32>
    %cst_64 = arith.constant dense<0.000000e+00> : vector<16x8xf32>
    %70 = tpu.matmul %15, %69, %cst_64 {dimension_numbers = #tpu.dot_dimension_numbers<[1], [0], [0], [1], [0, 0, 1, 1], [], []>} : vector<16x32xf32>, vector<32x8xf32>, vector<16x8xf32> -> vector<16x8xf32>
    %71 = vector.shape_cast %70 : vector<16x8xf32> to vector<2x8x8xf32>
    %c0_65 = arith.constant 0 : index
    %c1_66 = arith.constant 1 : index
    %c0_67 = arith.constant 0 : index
    %c0_68 = arith.constant 0 : index
    %72 = vector.load %arg13[%c0_65, %c1_66, %c0_67, %c0_68] : memref<2x4x32x8xf32, #tpu.memory_space<vmem>>, vector<1x1x32x8xf32>
    %73 = vector.shape_cast %72 : vector<1x1x32x8xf32> to vector<32x8xf32>
    %cst_69 = arith.constant dense<0.000000e+00> : vector<16x8xf32>
    %74 = tpu.matmul %25, %73, %cst_69 {dimension_numbers = #tpu.dot_dimension_numbers<[1], [0], [0], [1], [0, 0, 1, 1], [], []>} : vector<16x32xf32>, vector<32x8xf32>, vector<16x8xf32> -> vector<16x8xf32>
    %75 = vector.shape_cast %74 : vector<16x8xf32> to vector<2x8x8xf32>
    %cst_70 = arith.constant dense<0.000000e+00> : vector<2x8x8xf32>
    %76 = tpu.matmul %75, %67, %cst_70 {dimension_numbers = #tpu.dot_dimension_numbers<[2], [2], [1], [1], [0, 0, 0, 1, 1, 1], [0], [0]>} : vector<2x8x8xf32>, vector<2x8x8xf32>, vector<2x8x8xf32> -> vector<2x8x8xf32>
    %cst_71 = arith.constant 0.353553385 : f32
    %77 = vector.broadcast %cst_71 : f32 to vector<2x8x8xf32>
    %78 = arith.mulf %76, %77 : vector<2x8x8xf32>
    %cst_72 = arith.constant dense<0xFF800000> : vector<2x8xf32>
    %79 = vector.multi_reduction <maximumf>, %78, %cst_72 [2] : vector<2x8x8xf32> to vector<2x8xf32>
    %80 = vector.shape_cast %79 : vector<2x8xf32> to vector<2x8x1xf32>
    %81 = vector.broadcast %80 : vector<2x8x1xf32> to vector<2x8x8xf32>
    %82 = arith.subf %78, %81 : vector<2x8x8xf32>
    %83 = math.exp %82 : vector<2x8x8xf32>
    %cst_73 = arith.constant dense<0.000000e+00> : vector<2x8xf32>
    %84 = vector.multi_reduction <add>, %83, %cst_73 [2] : vector<2x8x8xf32> to vector<2x8xf32>
    %85 = vector.shape_cast %84 : vector<2x8xf32> to vector<2x8x1xf32>
    %86 = tpu.reciprocal %85 {approx = true} : vector<2x8x1xf32> -> vector<2x8x1xf32>
    %87 = vector.broadcast %86 : vector<2x8x1xf32> to vector<2x8x8xf32>
    %88 = arith.mulf %83, %87 : vector<2x8x8xf32>
    %cst_74 = arith.constant dense<0.000000e+00> : vector<2x8x8xf32>
    %89 = tpu.matmul %88, %71, %cst_74 {dimension_numbers = #tpu.dot_dimension_numbers<[2], [1], [1], [2], [0, 0, 0, 1, 1, 2], [0], [0]>} : vector<2x8x8xf32>, vector<2x8x8xf32>, vector<2x8x8xf32> -> vector<2x8x8xf32>
    %90 = vector.shape_cast %89 : vector<2x8x8xf32> to vector<16x8xf32>
    %c0_75 = arith.constant 0 : index
    %c1_76 = arith.constant 1 : index
    %c0_77 = arith.constant 0 : index
    %c0_78 = arith.constant 0 : index
    %91 = vector.load %arg15[%c0_75, %c1_76, %c0_77, %c0_78] : memref<2x4x8x32xf32, #tpu.memory_space<vmem>>, vector<1x1x8x32xf32>
    %92 = vector.shape_cast %91 : vector<1x1x8x32xf32> to vector<8x32xf32>
    %cst_79 = arith.constant dense<0.000000e+00> : vector<16x32xf32>
    %93 = tpu.matmul %90, %92, %cst_79 {dimension_numbers = #tpu.dot_dimension_numbers<[1], [0], [0], [1], [0, 0, 1, 1], [], []>} : vector<16x8xf32>, vector<8x32xf32>, vector<16x32xf32> -> vector<16x32xf32>
    %94 = arith.addf %63, %93 : vector<16x32xf32>
    %c0_80 = arith.constant 0 : index
    %c2 = arith.constant 2 : index
    %c0_81 = arith.constant 0 : index
    %c0_82 = arith.constant 0 : index
    %95 = vector.load %arg11[%c0_80, %c2, %c0_81, %c0_82] : memref<2x4x32x8xf32, #tpu.memory_space<vmem>>, vector<1x1x32x8xf32>
    %96 = vector.shape_cast %95 : vector<1x1x32x8xf32> to vector<32x8xf32>
    %cst_83 = arith.constant dense<0.000000e+00> : vector<16x8xf32>
    %97 = tpu.matmul %20, %96, %cst_83 {dimension_numbers = #tpu.dot_dimension_numbers<[1], [0], [0], [1], [0, 0, 1, 1], [], []>} : vector<16x32xf32>, vector<32x8xf32>, vector<16x8xf32> -> vector<16x8xf32>
    %98 = vector.shape_cast %97 : vector<16x8xf32> to vector<2x8x8xf32>
    %c0_84 = arith.constant 0 : index
    %c2_85 = arith.constant 2 : index
    %c0_86 = arith.constant 0 : index
    %c0_87 = arith.constant 0 : index
    %99 = vector.load %arg12[%c0_84, %c2_85, %c0_86, %c0_87] : memref<2x4x32x8xf32, #tpu.memory_space<vmem>>, vector<1x1x32x8xf32>
    %100 = vector.shape_cast %99 : vector<1x1x32x8xf32> to vector<32x8xf32>
    %cst_88 = arith.constant dense<0.000000e+00> : vector<16x8xf32>
    %101 = tpu.matmul %15, %100, %cst_88 {dimension_numbers = #tpu.dot_dimension_numbers<[1], [0], [0], [1], [0, 0, 1, 1], [], []>} : vector<16x32xf32>, vector<32x8xf32>, vector<16x8xf32> -> vector<16x8xf32>
    %102 = vector.shape_cast %101 : vector<16x8xf32> to vector<2x8x8xf32>
    %c0_89 = arith.constant 0 : index
    %c2_90 = arith.constant 2 : index
    %c0_91 = arith.constant 0 : index
    %c0_92 = arith.constant 0 : index
    %103 = vector.load %arg13[%c0_89, %c2_90, %c0_91, %c0_92] : memref<2x4x32x8xf32, #tpu.memory_space<vmem>>, vector<1x1x32x8xf32>
    %104 = vector.shape_cast %103 : vector<1x1x32x8xf32> to vector<32x8xf32>
    %cst_93 = arith.constant dense<0.000000e+00> : vector<16x8xf32>
    %105 = tpu.matmul %25, %104, %cst_93 {dimension_numbers = #tpu.dot_dimension_numbers<[1], [0], [0], [1], [0, 0, 1, 1], [], []>} : vector<16x32xf32>, vector<32x8xf32>, vector<16x8xf32> -> vector<16x8xf32>
    %106 = vector.shape_cast %105 : vector<16x8xf32> to vector<2x8x8xf32>
    %cst_94 = arith.constant dense<0.000000e+00> : vector<2x8x8xf32>
    %107 = tpu.matmul %106, %98, %cst_94 {dimension_numbers = #tpu.dot_dimension_numbers<[2], [2], [1], [1], [0, 0, 0, 1, 1, 1], [0], [0]>} : vector<2x8x8xf32>, vector<2x8x8xf32>, vector<2x8x8xf32> -> vector<2x8x8xf32>
    %cst_95 = arith.constant 0.353553385 : f32
    %108 = vector.broadcast %cst_95 : f32 to vector<2x8x8xf32>
    %109 = arith.mulf %107, %108 : vector<2x8x8xf32>
    %cst_96 = arith.constant dense<0xFF800000> : vector<2x8xf32>
    %110 = vector.multi_reduction <maximumf>, %109, %cst_96 [2] : vector<2x8x8xf32> to vector<2x8xf32>
    %111 = vector.shape_cast %110 : vector<2x8xf32> to vector<2x8x1xf32>
    %112 = vector.broadcast %111 : vector<2x8x1xf32> to vector<2x8x8xf32>
    %113 = arith.subf %109, %112 : vector<2x8x8xf32>
    %114 = math.exp %113 : vector<2x8x8xf32>
    %cst_97 = arith.constant dense<0.000000e+00> : vector<2x8xf32>
    %115 = vector.multi_reduction <add>, %114, %cst_97 [2] : vector<2x8x8xf32> to vector<2x8xf32>
    %116 = vector.shape_cast %115 : vector<2x8xf32> to vector<2x8x1xf32>
    %117 = tpu.reciprocal %116 {approx = true} : vector<2x8x1xf32> -> vector<2x8x1xf32>
    %118 = vector.broadcast %117 : vector<2x8x1xf32> to vector<2x8x8xf32>
    %119 = arith.mulf %114, %118 : vector<2x8x8xf32>
    %cst_98 = arith.constant dense<0.000000e+00> : vector<2x8x8xf32>
    %120 = tpu.matmul %119, %102, %cst_98 {dimension_numbers = #tpu.dot_dimension_numbers<[2], [1], [1], [2], [0, 0, 0, 1, 1, 2], [0], [0]>} : vector<2x8x8xf32>, vector<2x8x8xf32>, vector<2x8x8xf32> -> vector<2x8x8xf32>
    %121 = vector.shape_cast %120 : vector<2x8x8xf32> to vector<16x8xf32>
    %c0_99 = arith.constant 0 : index
    %c2_100 = arith.constant 2 : index
    %c0_101 = arith.constant 0 : index
    %c0_102 = arith.constant 0 : index
    %122 = vector.load %arg15[%c0_99, %c2_100, %c0_101, %c0_102] : memref<2x4x8x32xf32, #tpu.memory_space<vmem>>, vector<1x1x8x32xf32>
    %123 = vector.shape_cast %122 : vector<1x1x8x32xf32> to vector<8x32xf32>
    %cst_103 = arith.constant dense<0.000000e+00> : vector<16x32xf32>
    %124 = tpu.matmul %121, %123, %cst_103 {dimension_numbers = #tpu.dot_dimension_numbers<[1], [0], [0], [1], [0, 0, 1, 1], [], []>} : vector<16x8xf32>, vector<8x32xf32>, vector<16x32xf32> -> vector<16x32xf32>
    %125 = arith.addf %94, %124 : vector<16x32xf32>
    %c0_104 = arith.constant 0 : index
    %c3 = arith.constant 3 : index
    %c0_105 = arith.constant 0 : index
    %c0_106 = arith.constant 0 : index
    %126 = vector.load %arg11[%c0_104, %c3, %c0_105, %c0_106] : memref<2x4x32x8xf32, #tpu.memory_space<vmem>>, vector<1x1x32x8xf32>
    %127 = vector.shape_cast %126 : vector<1x1x32x8xf32> to vector<32x8xf32>
    %cst_107 = arith.constant dense<0.000000e+00> : vector<16x8xf32>
    %128 = tpu.matmul %20, %127, %cst_107 {dimension_numbers = #tpu.dot_dimension_numbers<[1], [0], [0], [1], [0, 0, 1, 1], [], []>} : vector<16x32xf32>, vector<32x8xf32>, vector<16x8xf32> -> vector<16x8xf32>
    %129 = vector.shape_cast %128 : vector<16x8xf32> to vector<2x8x8xf32>
    %c0_108 = arith.constant 0 : index
    %c3_109 = arith.constant 3 : index
    %c0_110 = arith.constant 0 : index
    %c0_111 = arith.constant 0 : index
    %130 = vector.load %arg12[%c0_108, %c3_109, %c0_110, %c0_111] : memref<2x4x32x8xf32, #tpu.memory_space<vmem>>, vector<1x1x32x8xf32>
    %131 = vector.shape_cast %130 : vector<1x1x32x8xf32> to vector<32x8xf32>
    %cst_112 = arith.constant dense<0.000000e+00> : vector<16x8xf32>
    %132 = tpu.matmul %15, %131, %cst_112 {dimension_numbers = #tpu.dot_dimension_numbers<[1], [0], [0], [1], [0, 0, 1, 1], [], []>} : vector<16x32xf32>, vector<32x8xf32>, vector<16x8xf32> -> vector<16x8xf32>
    %133 = vector.shape_cast %132 : vector<16x8xf32> to vector<2x8x8xf32>
    %c0_113 = arith.constant 0 : index
    %c3_114 = arith.constant 3 : index
    %c0_115 = arith.constant 0 : index
    %c0_116 = arith.constant 0 : index
    %134 = vector.load %arg13[%c0_113, %c3_114, %c0_115, %c0_116] : memref<2x4x32x8xf32, #tpu.memory_space<vmem>>, vector<1x1x32x8xf32>
    %135 = vector.shape_cast %134 : vector<1x1x32x8xf32> to vector<32x8xf32>
    %cst_117 = arith.constant dense<0.000000e+00> : vector<16x8xf32>
    %136 = tpu.matmul %25, %135, %cst_117 {dimension_numbers = #tpu.dot_dimension_numbers<[1], [0], [0], [1], [0, 0, 1, 1], [], []>} : vector<16x32xf32>, vector<32x8xf32>, vector<16x8xf32> -> vector<16x8xf32>
    %137 = vector.shape_cast %136 : vector<16x8xf32> to vector<2x8x8xf32>
    %cst_118 = arith.constant dense<0.000000e+00> : vector<2x8x8xf32>
    %138 = tpu.matmul %137, %129, %cst_118 {dimension_numbers = #tpu.dot_dimension_numbers<[2], [2], [1], [1], [0, 0, 0, 1, 1, 1], [0], [0]>} : vector<2x8x8xf32>, vector<2x8x8xf32>, vector<2x8x8xf32> -> vector<2x8x8xf32>
    %cst_119 = arith.constant 0.353553385 : f32
    %139 = vector.broadcast %cst_119 : f32 to vector<2x8x8xf32>
    %140 = arith.mulf %138, %139 : vector<2x8x8xf32>
    %cst_120 = arith.constant dense<0xFF800000> : vector<2x8xf32>
    %141 = vector.multi_reduction <maximumf>, %140, %cst_120 [2] : vector<2x8x8xf32> to vector<2x8xf32>
    %142 = vector.shape_cast %141 : vector<2x8xf32> to vector<2x8x1xf32>
    %143 = vector.broadcast %142 : vector<2x8x1xf32> to vector<2x8x8xf32>
    %144 = arith.subf %140, %143 : vector<2x8x8xf32>
    %145 = math.exp %144 : vector<2x8x8xf32>
    %cst_121 = arith.constant dense<0.000000e+00> : vector<2x8xf32>
    %146 = vector.multi_reduction <add>, %145, %cst_121 [2] : vector<2x8x8xf32> to vector<2x8xf32>
    %147 = vector.shape_cast %146 : vector<2x8xf32> to vector<2x8x1xf32>
    %148 = tpu.reciprocal %147 {approx = true} : vector<2x8x1xf32> -> vector<2x8x1xf32>
    %149 = vector.broadcast %148 : vector<2x8x1xf32> to vector<2x8x8xf32>
    %150 = arith.mulf %145, %149 : vector<2x8x8xf32>
    %cst_122 = arith.constant dense<0.000000e+00> : vector<2x8x8xf32>
    %151 = tpu.matmul %150, %133, %cst_122 {dimension_numbers = #tpu.dot_dimension_numbers<[2], [1], [1], [2], [0, 0, 0, 1, 1, 2], [0], [0]>} : vector<2x8x8xf32>, vector<2x8x8xf32>, vector<2x8x8xf32> -> vector<2x8x8xf32>
    %152 = vector.shape_cast %151 : vector<2x8x8xf32> to vector<16x8xf32>
    %c0_123 = arith.constant 0 : index
    %c3_124 = arith.constant 3 : index
    %c0_125 = arith.constant 0 : index
    %c0_126 = arith.constant 0 : index
    %153 = vector.load %arg15[%c0_123, %c3_124, %c0_125, %c0_126] : memref<2x4x8x32xf32, #tpu.memory_space<vmem>>, vector<1x1x8x32xf32>
    %154 = vector.shape_cast %153 : vector<1x1x8x32xf32> to vector<8x32xf32>
    %cst_127 = arith.constant dense<0.000000e+00> : vector<16x32xf32>
    %155 = tpu.matmul %152, %154, %cst_127 {dimension_numbers = #tpu.dot_dimension_numbers<[1], [0], [0], [1], [0, 0, 1, 1], [], []>} : vector<16x8xf32>, vector<8x32xf32>, vector<16x32xf32> -> vector<16x32xf32>
    %156 = arith.addf %125, %155 : vector<16x32xf32>
    %157 = arith.addf %156, %25 : vector<16x32xf32>
    %c0_128 = arith.constant 0 : index
    %c0_129 = arith.constant 0 : index
    %c0_130 = arith.constant 0 : index
    %158 = vector.load %arg17[%c0_128, %c0_129, %c0_130] : memref<2x1x32xf32, #tpu.memory_space<vmem>>, vector<1x1x32xf32>
    %159 = vector.shape_cast %158 : vector<1x1x32xf32> to vector<1x32xf32>
    %c0_131 = arith.constant 0 : index
    %c0_132 = arith.constant 0 : index
    %c0_133 = arith.constant 0 : index
    %160 = vector.load %arg18[%c0_131, %c0_132, %c0_133] : memref<2x1x32xf32, #tpu.memory_space<vmem>>, vector<1x1x32xf32>
    %161 = vector.shape_cast %160 : vector<1x1x32xf32> to vector<1x32xf32>
    %cst_134 = arith.constant dense<0.000000e+00> : vector<16xf32>
    %162 = vector.multi_reduction <add>, %157, %cst_134 [1] : vector<16x32xf32> to vector<16xf32>
    %163 = vector.shape_cast %162 : vector<16xf32> to vector<16x1xf32>
    %cst_135 = arith.constant 3.200000e+01 : f32
    %164 = vector.broadcast %cst_135 : f32 to vector<16x1xf32>
    %165 = arith.divf %163, %164 : vector<16x1xf32>
    %166 = vector.broadcast %165 : vector<16x1xf32> to vector<16x32xf32>
    %167 = arith.subf %157, %166 : vector<16x32xf32>
    %168 = arith.mulf %167, %167 : vector<16x32xf32>
    %cst_136 = arith.constant dense<0.000000e+00> : vector<16xf32>
    %169 = vector.multi_reduction <add>, %168, %cst_136 [1] : vector<16x32xf32> to vector<16xf32>
    %170 = vector.shape_cast %169 : vector<16xf32> to vector<16x1xf32>
    %cst_137 = arith.constant 3.200000e+01 : f32
    %171 = vector.broadcast %cst_137 : f32 to vector<16x1xf32>
    %172 = arith.divf %170, %171 : vector<16x1xf32>
    %cst_138 = arith.constant 9.99999974E-6 : f32
    %173 = vector.broadcast %cst_138 : f32 to vector<16x1xf32>
    %174 = arith.addf %172, %173 : vector<16x1xf32>
    %175 = math.rsqrt %174 : vector<16x1xf32>
    %176 = vector.broadcast %175 : vector<16x1xf32> to vector<16x32xf32>
    %177 = arith.mulf %167, %176 : vector<16x32xf32>
    %178 = vector.broadcast %159 : vector<1x32xf32> to vector<16x32xf32>
    %179 = arith.mulf %178, %177 : vector<16x32xf32>
    %180 = vector.broadcast %161 : vector<1x32xf32> to vector<16x32xf32>
    %181 = arith.addf %179, %180 : vector<16x32xf32>
    %c1_139 = arith.constant 1 : index
    %c0_140 = arith.constant 0 : index
    %c0_141 = arith.constant 0 : index
    %182 = vector.load %arg14[%c1_139, %c0_140, %c0_141] : memref<2x32x32xf32, #tpu.memory_space<vmem>>, vector<1x32x32xf32>
    %183 = vector.shape_cast %182 : vector<1x32x32xf32> to vector<32x32xf32>
    %cst_142 = arith.constant dense<0.000000e+00> : vector<16x32xf32>
    %184 = tpu.matmul %181, %183, %cst_142 {dimension_numbers = #tpu.dot_dimension_numbers<[1], [0], [0], [1], [0, 0, 1, 1], [], []>} : vector<16x32xf32>, vector<32x32xf32>, vector<16x32xf32> -> vector<16x32xf32>
    %c1_143 = arith.constant 1 : index
    %c0_144 = arith.constant 0 : index
    %c0_145 = arith.constant 0 : index
    %185 = vector.load %arg16[%c1_143, %c0_144, %c0_145] : memref<2x1x32xf32, #tpu.memory_space<vmem>>, vector<1x1x32xf32>
    %186 = vector.shape_cast %185 : vector<1x1x32xf32> to vector<1x32xf32>
    %187 = vector.broadcast %186 : vector<1x32xf32> to vector<16x32xf32>
    %188 = arith.addf %184, %187 : vector<16x32xf32>
    %c1_146 = arith.constant 1 : index
    %c0_147 = arith.constant 0 : index
    %c0_148 = arith.constant 0 : index
    %c0_149 = arith.constant 0 : index
    %189 = vector.load %arg11[%c1_146, %c0_147, %c0_148, %c0_149] : memref<2x4x32x8xf32, #tpu.memory_space<vmem>>, vector<1x1x32x8xf32>
    %190 = vector.shape_cast %189 : vector<1x1x32x8xf32> to vector<32x8xf32>
    %cst_150 = arith.constant dense<0.000000e+00> : vector<16x8xf32>
    %191 = tpu.matmul %20, %190, %cst_150 {dimension_numbers = #tpu.dot_dimension_numbers<[1], [0], [0], [1], [0, 0, 1, 1], [], []>} : vector<16x32xf32>, vector<32x8xf32>, vector<16x8xf32> -> vector<16x8xf32>
    %192 = vector.shape_cast %191 : vector<16x8xf32> to vector<2x8x8xf32>
    %c1_151 = arith.constant 1 : index
    %c0_152 = arith.constant 0 : index
    %c0_153 = arith.constant 0 : index
    %c0_154 = arith.constant 0 : index
    %193 = vector.load %arg12[%c1_151, %c0_152, %c0_153, %c0_154] : memref<2x4x32x8xf32, #tpu.memory_space<vmem>>, vector<1x1x32x8xf32>
    %194 = vector.shape_cast %193 : vector<1x1x32x8xf32> to vector<32x8xf32>
    %cst_155 = arith.constant dense<0.000000e+00> : vector<16x8xf32>
    %195 = tpu.matmul %15, %194, %cst_155 {dimension_numbers = #tpu.dot_dimension_numbers<[1], [0], [0], [1], [0, 0, 1, 1], [], []>} : vector<16x32xf32>, vector<32x8xf32>, vector<16x8xf32> -> vector<16x8xf32>
    %196 = vector.shape_cast %195 : vector<16x8xf32> to vector<2x8x8xf32>
    %c1_156 = arith.constant 1 : index
    %c0_157 = arith.constant 0 : index
    %c0_158 = arith.constant 0 : index
    %c0_159 = arith.constant 0 : index
    %197 = vector.load %arg13[%c1_156, %c0_157, %c0_158, %c0_159] : memref<2x4x32x8xf32, #tpu.memory_space<vmem>>, vector<1x1x32x8xf32>
    %198 = vector.shape_cast %197 : vector<1x1x32x8xf32> to vector<32x8xf32>
    %cst_160 = arith.constant dense<0.000000e+00> : vector<16x8xf32>
    %199 = tpu.matmul %181, %198, %cst_160 {dimension_numbers = #tpu.dot_dimension_numbers<[1], [0], [0], [1], [0, 0, 1, 1], [], []>} : vector<16x32xf32>, vector<32x8xf32>, vector<16x8xf32> -> vector<16x8xf32>
    %200 = vector.shape_cast %199 : vector<16x8xf32> to vector<2x8x8xf32>
    %cst_161 = arith.constant dense<0.000000e+00> : vector<2x8x8xf32>
    %201 = tpu.matmul %200, %192, %cst_161 {dimension_numbers = #tpu.dot_dimension_numbers<[2], [2], [1], [1], [0, 0, 0, 1, 1, 1], [0], [0]>} : vector<2x8x8xf32>, vector<2x8x8xf32>, vector<2x8x8xf32> -> vector<2x8x8xf32>
    %cst_162 = arith.constant 0.353553385 : f32
    %202 = vector.broadcast %cst_162 : f32 to vector<2x8x8xf32>
    %203 = arith.mulf %201, %202 : vector<2x8x8xf32>
    %cst_163 = arith.constant dense<0xFF800000> : vector<2x8xf32>
    %204 = vector.multi_reduction <maximumf>, %203, %cst_163 [2] : vector<2x8x8xf32> to vector<2x8xf32>
    %205 = vector.shape_cast %204 : vector<2x8xf32> to vector<2x8x1xf32>
    %206 = vector.broadcast %205 : vector<2x8x1xf32> to vector<2x8x8xf32>
    %207 = arith.subf %203, %206 : vector<2x8x8xf32>
    %208 = math.exp %207 : vector<2x8x8xf32>
    %cst_164 = arith.constant dense<0.000000e+00> : vector<2x8xf32>
    %209 = vector.multi_reduction <add>, %208, %cst_164 [2] : vector<2x8x8xf32> to vector<2x8xf32>
    %210 = vector.shape_cast %209 : vector<2x8xf32> to vector<2x8x1xf32>
    %211 = tpu.reciprocal %210 {approx = true} : vector<2x8x1xf32> -> vector<2x8x1xf32>
    %212 = vector.broadcast %211 : vector<2x8x1xf32> to vector<2x8x8xf32>
    %213 = arith.mulf %208, %212 : vector<2x8x8xf32>
    %cst_165 = arith.constant dense<0.000000e+00> : vector<2x8x8xf32>
    %214 = tpu.matmul %213, %196, %cst_165 {dimension_numbers = #tpu.dot_dimension_numbers<[2], [1], [1], [2], [0, 0, 0, 1, 1, 2], [0], [0]>} : vector<2x8x8xf32>, vector<2x8x8xf32>, vector<2x8x8xf32> -> vector<2x8x8xf32>
    %215 = vector.shape_cast %214 : vector<2x8x8xf32> to vector<16x8xf32>
    %c1_166 = arith.constant 1 : index
    %c0_167 = arith.constant 0 : index
    %c0_168 = arith.constant 0 : index
    %c0_169 = arith.constant 0 : index
    %216 = vector.load %arg15[%c1_166, %c0_167, %c0_168, %c0_169] : memref<2x4x8x32xf32, #tpu.memory_space<vmem>>, vector<1x1x8x32xf32>
    %217 = vector.shape_cast %216 : vector<1x1x8x32xf32> to vector<8x32xf32>
    %cst_170 = arith.constant dense<0.000000e+00> : vector<16x32xf32>
    %218 = tpu.matmul %215, %217, %cst_170 {dimension_numbers = #tpu.dot_dimension_numbers<[1], [0], [0], [1], [0, 0, 1, 1], [], []>} : vector<16x8xf32>, vector<8x32xf32>, vector<16x32xf32> -> vector<16x32xf32>
    %219 = arith.addf %188, %218 : vector<16x32xf32>
    %c1_171 = arith.constant 1 : index
    %c1_172 = arith.constant 1 : index
    %c0_173 = arith.constant 0 : index
    %c0_174 = arith.constant 0 : index
    %220 = vector.load %arg11[%c1_171, %c1_172, %c0_173, %c0_174] : memref<2x4x32x8xf32, #tpu.memory_space<vmem>>, vector<1x1x32x8xf32>
    %221 = vector.shape_cast %220 : vector<1x1x32x8xf32> to vector<32x8xf32>
    %cst_175 = arith.constant dense<0.000000e+00> : vector<16x8xf32>
    %222 = tpu.matmul %20, %221, %cst_175 {dimension_numbers = #tpu.dot_dimension_numbers<[1], [0], [0], [1], [0, 0, 1, 1], [], []>} : vector<16x32xf32>, vector<32x8xf32>, vector<16x8xf32> -> vector<16x8xf32>
    %223 = vector.shape_cast %222 : vector<16x8xf32> to vector<2x8x8xf32>
    %c1_176 = arith.constant 1 : index
    %c1_177 = arith.constant 1 : index
    %c0_178 = arith.constant 0 : index
    %c0_179 = arith.constant 0 : index
    %224 = vector.load %arg12[%c1_176, %c1_177, %c0_178, %c0_179] : memref<2x4x32x8xf32, #tpu.memory_space<vmem>>, vector<1x1x32x8xf32>
    %225 = vector.shape_cast %224 : vector<1x1x32x8xf32> to vector<32x8xf32>
    %cst_180 = arith.constant dense<0.000000e+00> : vector<16x8xf32>
    %226 = tpu.matmul %15, %225, %cst_180 {dimension_numbers = #tpu.dot_dimension_numbers<[1], [0], [0], [1], [0, 0, 1, 1], [], []>} : vector<16x32xf32>, vector<32x8xf32>, vector<16x8xf32> -> vector<16x8xf32>
    %227 = vector.shape_cast %226 : vector<16x8xf32> to vector<2x8x8xf32>
    %c1_181 = arith.constant 1 : index
    %c1_182 = arith.constant 1 : index
    %c0_183 = arith.constant 0 : index
    %c0_184 = arith.constant 0 : index
    %228 = vector.load %arg13[%c1_181, %c1_182, %c0_183, %c0_184] : memref<2x4x32x8xf32, #tpu.memory_space<vmem>>, vector<1x1x32x8xf32>
    %229 = vector.shape_cast %228 : vector<1x1x32x8xf32> to vector<32x8xf32>
    %cst_185 = arith.constant dense<0.000000e+00> : vector<16x8xf32>
    %230 = tpu.matmul %181, %229, %cst_185 {dimension_numbers = #tpu.dot_dimension_numbers<[1], [0], [0], [1], [0, 0, 1, 1], [], []>} : vector<16x32xf32>, vector<32x8xf32>, vector<16x8xf32> -> vector<16x8xf32>
    %231 = vector.shape_cast %230 : vector<16x8xf32> to vector<2x8x8xf32>
    %cst_186 = arith.constant dense<0.000000e+00> : vector<2x8x8xf32>
    %232 = tpu.matmul %231, %223, %cst_186 {dimension_numbers = #tpu.dot_dimension_numbers<[2], [2], [1], [1], [0, 0, 0, 1, 1, 1], [0], [0]>} : vector<2x8x8xf32>, vector<2x8x8xf32>, vector<2x8x8xf32> -> vector<2x8x8xf32>
    %cst_187 = arith.constant 0.353553385 : f32
    %233 = vector.broadcast %cst_187 : f32 to vector<2x8x8xf32>
    %234 = arith.mulf %232, %233 : vector<2x8x8xf32>
    %cst_188 = arith.constant dense<0xFF800000> : vector<2x8xf32>
    %235 = vector.multi_reduction <maximumf>, %234, %cst_188 [2] : vector<2x8x8xf32> to vector<2x8xf32>
    %236 = vector.shape_cast %235 : vector<2x8xf32> to vector<2x8x1xf32>
    %237 = vector.broadcast %236 : vector<2x8x1xf32> to vector<2x8x8xf32>
    %238 = arith.subf %234, %237 : vector<2x8x8xf32>
    %239 = math.exp %238 : vector<2x8x8xf32>
    %cst_189 = arith.constant dense<0.000000e+00> : vector<2x8xf32>
    %240 = vector.multi_reduction <add>, %239, %cst_189 [2] : vector<2x8x8xf32> to vector<2x8xf32>
    %241 = vector.shape_cast %240 : vector<2x8xf32> to vector<2x8x1xf32>
    %242 = tpu.reciprocal %241 {approx = true} : vector<2x8x1xf32> -> vector<2x8x1xf32>
    %243 = vector.broadcast %242 : vector<2x8x1xf32> to vector<2x8x8xf32>
    %244 = arith.mulf %239, %243 : vector<2x8x8xf32>
    %cst_190 = arith.constant dense<0.000000e+00> : vector<2x8x8xf32>
    %245 = tpu.matmul %244, %227, %cst_190 {dimension_numbers = #tpu.dot_dimension_numbers<[2], [1], [1], [2], [0, 0, 0, 1, 1, 2], [0], [0]>} : vector<2x8x8xf32>, vector<2x8x8xf32>, vector<2x8x8xf32> -> vector<2x8x8xf32>
    %246 = vector.shape_cast %245 : vector<2x8x8xf32> to vector<16x8xf32>
    %c1_191 = arith.constant 1 : index
    %c1_192 = arith.constant 1 : index
    %c0_193 = arith.constant 0 : index
    %c0_194 = arith.constant 0 : index
    %247 = vector.load %arg15[%c1_191, %c1_192, %c0_193, %c0_194] : memref<2x4x8x32xf32, #tpu.memory_space<vmem>>, vector<1x1x8x32xf32>
    %248 = vector.shape_cast %247 : vector<1x1x8x32xf32> to vector<8x32xf32>
    %cst_195 = arith.constant dense<0.000000e+00> : vector<16x32xf32>
    %249 = tpu.matmul %246, %248, %cst_195 {dimension_numbers = #tpu.dot_dimension_numbers<[1], [0], [0], [1], [0, 0, 1, 1], [], []>} : vector<16x8xf32>, vector<8x32xf32>, vector<16x32xf32> -> vector<16x32xf32>
    %250 = arith.addf %219, %249 : vector<16x32xf32>
    %c1_196 = arith.constant 1 : index
    %c2_197 = arith.constant 2 : index
    %c0_198 = arith.constant 0 : index
    %c0_199 = arith.constant 0 : index
    %251 = vector.load %arg11[%c1_196, %c2_197, %c0_198, %c0_199] : memref<2x4x32x8xf32, #tpu.memory_space<vmem>>, vector<1x1x32x8xf32>
    %252 = vector.shape_cast %251 : vector<1x1x32x8xf32> to vector<32x8xf32>
    %cst_200 = arith.constant dense<0.000000e+00> : vector<16x8xf32>
    %253 = tpu.matmul %20, %252, %cst_200 {dimension_numbers = #tpu.dot_dimension_numbers<[1], [0], [0], [1], [0, 0, 1, 1], [], []>} : vector<16x32xf32>, vector<32x8xf32>, vector<16x8xf32> -> vector<16x8xf32>
    %254 = vector.shape_cast %253 : vector<16x8xf32> to vector<2x8x8xf32>
    %c1_201 = arith.constant 1 : index
    %c2_202 = arith.constant 2 : index
    %c0_203 = arith.constant 0 : index
    %c0_204 = arith.constant 0 : index
    %255 = vector.load %arg12[%c1_201, %c2_202, %c0_203, %c0_204] : memref<2x4x32x8xf32, #tpu.memory_space<vmem>>, vector<1x1x32x8xf32>
    %256 = vector.shape_cast %255 : vector<1x1x32x8xf32> to vector<32x8xf32>
    %cst_205 = arith.constant dense<0.000000e+00> : vector<16x8xf32>
    %257 = tpu.matmul %15, %256, %cst_205 {dimension_numbers = #tpu.dot_dimension_numbers<[1], [0], [0], [1], [0, 0, 1, 1], [], []>} : vector<16x32xf32>, vector<32x8xf32>, vector<16x8xf32> -> vector<16x8xf32>
    %258 = vector.shape_cast %257 : vector<16x8xf32> to vector<2x8x8xf32>
    %c1_206 = arith.constant 1 : index
    %c2_207 = arith.constant 2 : index
    %c0_208 = arith.constant 0 : index
    %c0_209 = arith.constant 0 : index
    %259 = vector.load %arg13[%c1_206, %c2_207, %c0_208, %c0_209] : memref<2x4x32x8xf32, #tpu.memory_space<vmem>>, vector<1x1x32x8xf32>
    %260 = vector.shape_cast %259 : vector<1x1x32x8xf32> to vector<32x8xf32>
    %cst_210 = arith.constant dense<0.000000e+00> : vector<16x8xf32>
    %261 = tpu.matmul %181, %260, %cst_210 {dimension_numbers = #tpu.dot_dimension_numbers<[1], [0], [0], [1], [0, 0, 1, 1], [], []>} : vector<16x32xf32>, vector<32x8xf32>, vector<16x8xf32> -> vector<16x8xf32>
    %262 = vector.shape_cast %261 : vector<16x8xf32> to vector<2x8x8xf32>
    %cst_211 = arith.constant dense<0.000000e+00> : vector<2x8x8xf32>
    %263 = tpu.matmul %262, %254, %cst_211 {dimension_numbers = #tpu.dot_dimension_numbers<[2], [2], [1], [1], [0, 0, 0, 1, 1, 1], [0], [0]>} : vector<2x8x8xf32>, vector<2x8x8xf32>, vector<2x8x8xf32> -> vector<2x8x8xf32>
    %cst_212 = arith.constant 0.353553385 : f32
    %264 = vector.broadcast %cst_212 : f32 to vector<2x8x8xf32>
    %265 = arith.mulf %263, %264 : vector<2x8x8xf32>
    %cst_213 = arith.constant dense<0xFF800000> : vector<2x8xf32>
    %266 = vector.multi_reduction <maximumf>, %265, %cst_213 [2] : vector<2x8x8xf32> to vector<2x8xf32>
    %267 = vector.shape_cast %266 : vector<2x8xf32> to vector<2x8x1xf32>
    %268 = vector.broadcast %267 : vector<2x8x1xf32> to vector<2x8x8xf32>
    %269 = arith.subf %265, %268 : vector<2x8x8xf32>
    %270 = math.exp %269 : vector<2x8x8xf32>
    %cst_214 = arith.constant dense<0.000000e+00> : vector<2x8xf32>
    %271 = vector.multi_reduction <add>, %270, %cst_214 [2] : vector<2x8x8xf32> to vector<2x8xf32>
    %272 = vector.shape_cast %271 : vector<2x8xf32> to vector<2x8x1xf32>
    %273 = tpu.reciprocal %272 {approx = true} : vector<2x8x1xf32> -> vector<2x8x1xf32>
    %274 = vector.broadcast %273 : vector<2x8x1xf32> to vector<2x8x8xf32>
    %275 = arith.mulf %270, %274 : vector<2x8x8xf32>
    %cst_215 = arith.constant dense<0.000000e+00> : vector<2x8x8xf32>
    %276 = tpu.matmul %275, %258, %cst_215 {dimension_numbers = #tpu.dot_dimension_numbers<[2], [1], [1], [2], [0, 0, 0, 1, 1, 2], [0], [0]>} : vector<2x8x8xf32>, vector<2x8x8xf32>, vector<2x8x8xf32> -> vector<2x8x8xf32>
    %277 = vector.shape_cast %276 : vector<2x8x8xf32> to vector<16x8xf32>
    %c1_216 = arith.constant 1 : index
    %c2_217 = arith.constant 2 : index
    %c0_218 = arith.constant 0 : index
    %c0_219 = arith.constant 0 : index
    %278 = vector.load %arg15[%c1_216, %c2_217, %c0_218, %c0_219] : memref<2x4x8x32xf32, #tpu.memory_space<vmem>>, vector<1x1x8x32xf32>
    %279 = vector.shape_cast %278 : vector<1x1x8x32xf32> to vector<8x32xf32>
    %cst_220 = arith.constant dense<0.000000e+00> : vector<16x32xf32>
    %280 = tpu.matmul %277, %279, %cst_220 {dimension_numbers = #tpu.dot_dimension_numbers<[1], [0], [0], [1], [0, 0, 1, 1], [], []>} : vector<16x8xf32>, vector<8x32xf32>, vector<16x32xf32> -> vector<16x32xf32>
    %281 = arith.addf %250, %280 : vector<16x32xf32>
    %c1_221 = arith.constant 1 : index
    %c3_222 = arith.constant 3 : index
    %c0_223 = arith.constant 0 : index
    %c0_224 = arith.constant 0 : index
    %282 = vector.load %arg11[%c1_221, %c3_222, %c0_223, %c0_224] : memref<2x4x32x8xf32, #tpu.memory_space<vmem>>, vector<1x1x32x8xf32>
    %283 = vector.shape_cast %282 : vector<1x1x32x8xf32> to vector<32x8xf32>
    %cst_225 = arith.constant dense<0.000000e+00> : vector<16x8xf32>
    %284 = tpu.matmul %20, %283, %cst_225 {dimension_numbers = #tpu.dot_dimension_numbers<[1], [0], [0], [1], [0, 0, 1, 1], [], []>} : vector<16x32xf32>, vector<32x8xf32>, vector<16x8xf32> -> vector<16x8xf32>
    %285 = vector.shape_cast %284 : vector<16x8xf32> to vector<2x8x8xf32>
    %c1_226 = arith.constant 1 : index
    %c3_227 = arith.constant 3 : index
    %c0_228 = arith.constant 0 : index
    %c0_229 = arith.constant 0 : index
    %286 = vector.load %arg12[%c1_226, %c3_227, %c0_228, %c0_229] : memref<2x4x32x8xf32, #tpu.memory_space<vmem>>, vector<1x1x32x8xf32>
    %287 = vector.shape_cast %286 : vector<1x1x32x8xf32> to vector<32x8xf32>
    %cst_230 = arith.constant dense<0.000000e+00> : vector<16x8xf32>
    %288 = tpu.matmul %15, %287, %cst_230 {dimension_numbers = #tpu.dot_dimension_numbers<[1], [0], [0], [1], [0, 0, 1, 1], [], []>} : vector<16x32xf32>, vector<32x8xf32>, vector<16x8xf32> -> vector<16x8xf32>
    %289 = vector.shape_cast %288 : vector<16x8xf32> to vector<2x8x8xf32>
    %c1_231 = arith.constant 1 : index
    %c3_232 = arith.constant 3 : index
    %c0_233 = arith.constant 0 : index
    %c0_234 = arith.constant 0 : index
    %290 = vector.load %arg13[%c1_231, %c3_232, %c0_233, %c0_234] : memref<2x4x32x8xf32, #tpu.memory_space<vmem>>, vector<1x1x32x8xf32>
    %291 = vector.shape_cast %290 : vector<1x1x32x8xf32> to vector<32x8xf32>
    %cst_235 = arith.constant dense<0.000000e+00> : vector<16x8xf32>
    %292 = tpu.matmul %181, %291, %cst_235 {dimension_numbers = #tpu.dot_dimension_numbers<[1], [0], [0], [1], [0, 0, 1, 1], [], []>} : vector<16x32xf32>, vector<32x8xf32>, vector<16x8xf32> -> vector<16x8xf32>
    %293 = vector.shape_cast %292 : vector<16x8xf32> to vector<2x8x8xf32>
    %cst_236 = arith.constant dense<0.000000e+00> : vector<2x8x8xf32>
    %294 = tpu.matmul %293, %285, %cst_236 {dimension_numbers = #tpu.dot_dimension_numbers<[2], [2], [1], [1], [0, 0, 0, 1, 1, 1], [0], [0]>} : vector<2x8x8xf32>, vector<2x8x8xf32>, vector<2x8x8xf32> -> vector<2x8x8xf32>
    %cst_237 = arith.constant 0.353553385 : f32
    %295 = vector.broadcast %cst_237 : f32 to vector<2x8x8xf32>
    %296 = arith.mulf %294, %295 : vector<2x8x8xf32>
    %cst_238 = arith.constant dense<0xFF800000> : vector<2x8xf32>
    %297 = vector.multi_reduction <maximumf>, %296, %cst_238 [2] : vector<2x8x8xf32> to vector<2x8xf32>
    %298 = vector.shape_cast %297 : vector<2x8xf32> to vector<2x8x1xf32>
    %299 = vector.broadcast %298 : vector<2x8x1xf32> to vector<2x8x8xf32>
    %300 = arith.subf %296, %299 : vector<2x8x8xf32>
    %301 = math.exp %300 : vector<2x8x8xf32>
    %cst_239 = arith.constant dense<0.000000e+00> : vector<2x8xf32>
    %302 = vector.multi_reduction <add>, %301, %cst_239 [2] : vector<2x8x8xf32> to vector<2x8xf32>
    %303 = vector.shape_cast %302 : vector<2x8xf32> to vector<2x8x1xf32>
    %304 = tpu.reciprocal %303 {approx = true} : vector<2x8x1xf32> -> vector<2x8x1xf32>
    %305 = vector.broadcast %304 : vector<2x8x1xf32> to vector<2x8x8xf32>
    %306 = arith.mulf %301, %305 : vector<2x8x8xf32>
    %cst_240 = arith.constant dense<0.000000e+00> : vector<2x8x8xf32>
    %307 = tpu.matmul %306, %289, %cst_240 {dimension_numbers = #tpu.dot_dimension_numbers<[2], [1], [1], [2], [0, 0, 0, 1, 1, 2], [0], [0]>} : vector<2x8x8xf32>, vector<2x8x8xf32>, vector<2x8x8xf32> -> vector<2x8x8xf32>
    %308 = vector.shape_cast %307 : vector<2x8x8xf32> to vector<16x8xf32>
    %c1_241 = arith.constant 1 : index
    %c3_242 = arith.constant 3 : index
    %c0_243 = arith.constant 0 : index
    %c0_244 = arith.constant 0 : index
    %309 = vector.load %arg15[%c1_241, %c3_242, %c0_243, %c0_244] : memref<2x4x8x32xf32, #tpu.memory_space<vmem>>, vector<1x1x8x32xf32>
    %310 = vector.shape_cast %309 : vector<1x1x8x32xf32> to vector<8x32xf32>
    %cst_245 = arith.constant dense<0.000000e+00> : vector<16x32xf32>
    %311 = tpu.matmul %308, %310, %cst_245 {dimension_numbers = #tpu.dot_dimension_numbers<[1], [0], [0], [1], [0, 0, 1, 1], [], []>} : vector<16x8xf32>, vector<8x32xf32>, vector<16x32xf32> -> vector<16x32xf32>
    %312 = arith.addf %281, %311 : vector<16x32xf32>
    %313 = arith.addf %312, %181 : vector<16x32xf32>
    %c1_246 = arith.constant 1 : index
    %c0_247 = arith.constant 0 : index
    %c0_248 = arith.constant 0 : index
    %314 = vector.load %arg17[%c1_246, %c0_247, %c0_248] : memref<2x1x32xf32, #tpu.memory_space<vmem>>, vector<1x1x32xf32>
    %315 = vector.shape_cast %314 : vector<1x1x32xf32> to vector<1x32xf32>
    %c1_249 = arith.constant 1 : index
    %c0_250 = arith.constant 0 : index
    %c0_251 = arith.constant 0 : index
    %316 = vector.load %arg18[%c1_249, %c0_250, %c0_251] : memref<2x1x32xf32, #tpu.memory_space<vmem>>, vector<1x1x32xf32>
    %317 = vector.shape_cast %316 : vector<1x1x32xf32> to vector<1x32xf32>
    %cst_252 = arith.constant dense<0.000000e+00> : vector<16xf32>
    %318 = vector.multi_reduction <add>, %313, %cst_252 [1] : vector<16x32xf32> to vector<16xf32>
    %319 = vector.shape_cast %318 : vector<16xf32> to vector<16x1xf32>
    %cst_253 = arith.constant 3.200000e+01 : f32
    %320 = vector.broadcast %cst_253 : f32 to vector<16x1xf32>
    %321 = arith.divf %319, %320 : vector<16x1xf32>
    %322 = vector.broadcast %321 : vector<16x1xf32> to vector<16x32xf32>
    %323 = arith.subf %313, %322 : vector<16x32xf32>
    %324 = arith.mulf %323, %323 : vector<16x32xf32>
    %cst_254 = arith.constant dense<0.000000e+00> : vector<16xf32>
    %325 = vector.multi_reduction <add>, %324, %cst_254 [1] : vector<16x32xf32> to vector<16xf32>
    %326 = vector.shape_cast %325 : vector<16xf32> to vector<16x1xf32>
    %cst_255 = arith.constant 3.200000e+01 : f32
    %327 = vector.broadcast %cst_255 : f32 to vector<16x1xf32>
    %328 = arith.divf %326, %327 : vector<16x1xf32>
    %cst_256 = arith.constant 9.99999974E-6 : f32
    %329 = vector.broadcast %cst_256 : f32 to vector<16x1xf32>
    %330 = arith.addf %328, %329 : vector<16x1xf32>
    %331 = math.rsqrt %330 : vector<16x1xf32>
    %332 = vector.broadcast %331 : vector<16x1xf32> to vector<16x32xf32>
    %333 = arith.mulf %323, %332 : vector<16x32xf32>
    %334 = vector.broadcast %315 : vector<1x32xf32> to vector<16x32xf32>
    %335 = arith.mulf %334, %333 : vector<16x32xf32>
    %336 = vector.broadcast %317 : vector<1x32xf32> to vector<16x32xf32>
    %337 = arith.addf %335, %336 : vector<16x32xf32>
    %338 = vector.shape_cast %337 : vector<16x32xf32> to vector<2x8x32xf32>
    %c0_257 = arith.constant 0 : index
    %c0_258 = arith.constant 0 : index
    %c0_259 = arith.constant 0 : index
    %339 = vector.load %arg19[%c0_257, %c0_258, %c0_259] : memref<2x8x32xf32, #tpu.memory_space<vmem>>, vector<2x8x32xf32>
    tpu.vector_store %arg19[%c0_257, %c0_258, %c0_259], %338 {strides = array<i32>} : memref<2x8x32xf32, #tpu.memory_space<vmem>>, vector<2x8x32xf32>,
    return
  }
  func.func @transform_0(%arg0: i32) -> (i32, i32, i32) {
    %c0_i32 = arith.constant 0 : i32
    %c0_i32_0 = arith.constant 0 : i32
    %c0_i32_1 = arith.constant 0 : i32
    return %arg0, %c0_i32, %c0_i32_0 : i32, i32, i32
  }
  func.func @transform_1(%arg0: i32) -> (i32, i32, i32) {
    %c0_i32 = arith.constant 0 : i32
    %c0_i32_0 = arith.constant 0 : i32
    %c0_i32_1 = arith.constant 0 : i32
    return %arg0, %c0_i32, %c0_i32_0 : i32, i32, i32
  }
  func.func @transform_2(%arg0: i32) -> (i32, i32, i32) {
    %c0_i32 = arith.constant 0 : i32
    %c0_i32_0 = arith.constant 0 : i32
    %c0_i32_1 = arith.constant 0 : i32
    return %arg0, %c0_i32, %c0_i32_0 : i32, i32, i32
  }
  func.func @transform_3(%arg0: i32) -> (i32, i32) {
    %c0_i32 = arith.constant 0 : i32
    %c0_i32_0 = arith.constant 0 : i32
    %c0_i32_1 = arith.constant 0 : i32
    return %c0_i32, %c0_i32_0 : i32, i32
  }
  func.func @transform_4(%arg0: i32) -> (i32, i32) {
    %c0_i32 = arith.constant 0 : i32
    %c0_i32_0 = arith.constant 0 : i32
    %c0_i32_1 = arith.constant 0 : i32
    return %c0_i32, %c0_i32_0 : i32, i32
  }
  func.func @transform_5(%arg0: i32) -> (i32, i32) {
    %c0_i32 = arith.constant 0 : i32
    %c0_i32_0 = arith.constant 0 : i32
    %c0_i32_1 = arith.constant 0 : i32
    return %c0_i32, %c0_i32_0 : i32, i32
  }
  func.func @transform_6(%arg0: i32) -> (i32, i32) {
    %c0_i32 = arith.constant 0 : i32
    %c0_i32_0 = arith.constant 0 : i32
    %c0_i32_1 = arith.constant 0 : i32
    return %c0_i32, %c0_i32_0 : i32, i32
  }
  func.func @transform_7(%arg0: i32) -> (i32, i32) {
    %c0_i32 = arith.constant 0 : i32
    %c0_i32_0 = arith.constant 0 : i32
    %c0_i32_1 = arith.constant 0 : i32
    return %c0_i32, %c0_i32_0 : i32, i32
  }
  func.func @transform_8(%arg0: i32) -> (i32, i32) {
    %c0_i32 = arith.constant 0 : i32
    %c0_i32_0 = arith.constant 0 : i32
    %c0_i32_1 = arith.constant 0 : i32
    return %c0_i32, %c0_i32_0 : i32, i32
  }
  func.func @transform_9(%arg0: i32) -> (i32, i32) {
    %c0_i32 = arith.constant 0 : i32
    %c0_i32_0 = arith.constant 0 : i32
    %c0_i32_1 = arith.constant 0 : i32
    return %c0_i32, %c0_i32_0 : i32, i32
  }
  func.func @transform_10(%arg0: i32) -> (i32, i32, i32, i32) {
    %c0_i32 = arith.constant 0 : i32
    %c0_i32_0 = arith.constant 0 : i32
    %c0_i32_1 = arith.constant 0 : i32
    %c0_i32_2 = arith.constant 0 : i32
    %c0_i32_3 = arith.constant 0 : i32
    return %c0_i32, %c0_i32_0, %c0_i32_1, %c0_i32_2 : i32, i32, i32, i32
  }
  func.func @transform_11(%arg0: i32) -> (i32, i32, i32, i32) {
    %c0_i32 = arith.constant 0 : i32
    %c0_i32_0 = arith.constant 0 : i32
    %c0_i32_1 = arith.constant 0 : i32
    %c0_i32_2 = arith.constant 0 : i32
    %c0_i32_3 = arith.constant 0 : i32
    return %c0_i32, %c0_i32_0, %c0_i32_1, %c0_i32_2 : i32, i32, i32, i32
  }
  func.func @transform_12(%arg0: i32) -> (i32, i32, i32, i32) {
    %c0_i32 = arith.constant 0 : i32
    %c0_i32_0 = arith.constant 0 : i32
    %c0_i32_1 = arith.constant 0 : i32
    %c0_i32_2 = arith.constant 0 : i32
    %c0_i32_3 = arith.constant 0 : i32
    return %c0_i32, %c0_i32_0, %c0_i32_1, %c0_i32_2 : i32, i32, i32, i32
  }
  func.func @transform_13(%arg0: i32) -> (i32, i32, i32) {
    %c0_i32 = arith.constant 0 : i32
    %c0_i32_0 = arith.constant 0 : i32
    %c0_i32_1 = arith.constant 0 : i32
    %c0_i32_2 = arith.constant 0 : i32
    return %c0_i32, %c0_i32_0, %c0_i32_1 : i32, i32, i32
  }
  func.func @transform_14(%arg0: i32) -> (i32, i32, i32, i32) {
    %c0_i32 = arith.constant 0 : i32
    %c0_i32_0 = arith.constant 0 : i32
    %c0_i32_1 = arith.constant 0 : i32
    %c0_i32_2 = arith.constant 0 : i32
    %c0_i32_3 = arith.constant 0 : i32
    return %c0_i32, %c0_i32_0, %c0_i32_1, %c0_i32_2 : i32, i32, i32, i32
  }
  func.func @transform_15(%arg0: i32) -> (i32, i32, i32) {
    %c0_i32 = arith.constant 0 : i32
    %c0_i32_0 = arith.constant 0 : i32
    %c0_i32_1 = arith.constant 0 : i32
    %c0_i32_2 = arith.constant 0 : i32
    return %c0_i32, %c0_i32_0, %c0_i32_1 : i32, i32, i32
  }
  func.func @transform_16(%arg0: i32) -> (i32, i32, i32) {
    %c0_i32 = arith.constant 0 : i32
    %c0_i32_0 = arith.constant 0 : i32
    %c0_i32_1 = arith.constant 0 : i32
    %c0_i32_2 = arith.constant 0 : i32
    return %c0_i32, %c0_i32_0, %c0_i32_1 : i32, i32, i32
  }
  func.func @transform_17(%arg0: i32) -> (i32, i32, i32) {
    %c0_i32 = arith.constant 0 : i32
    %c0_i32_0 = arith.constant 0 : i32
    %c0_i32_1 = arith.constant 0 : i32
    %c0_i32_2 = arith.constant 0 : i32
    return %c0_i32, %c0_i32_0, %c0_i32_1 : i32, i32, i32
  }
  func.func @transform_18(%arg0: i32) -> (i32, i32, i32) {
    %c0_i32 = arith.constant 0 : i32
    %c0_i32_0 = arith.constant 0 : i32
    %c0_i32_1 = arith.constant 0 : i32
    return %arg0, %c0_i32, %c0_i32_0 : i32, i32, i32
  }
}

</mosaic_0001>

<llo_original>
// kernel: tpu_custom_call.1
$region0: #{tpu_custom_call.1}
  #allocation0 [shape = 'u32[]', space=smem, size = 0x4, offset = 0x4, fixed_abs, tag = 'smem constant byte address 0x4 - core index']
  #allocation1 [shape = 'u32[144,128]{1,0:T(1,128)}', space=vmem, size = 0x12000, scoped, tag = 'internal scratch']
  %s0 = inlined_call_operand.vmem [shape: f32[2,8,3], index: 0, kind: input, shape index: {}]
  %s1 = inlined_call_operand.vmem [shape: f32[2,8,1], index: 1, kind: input, shape index: {}]
  %s2 = inlined_call_operand.vmem [shape: f32[2,8,3], index: 2, kind: input, shape index: {}]
  %s3 = inlined_call_operand.vmem [shape: f32[3,32], index: 3, kind: input, shape index: {}]
  %s4 = inlined_call_operand.vmem [shape: f32[1,32], index: 4, kind: input, shape index: {}]
  %s5 = inlined_call_operand.vmem [shape: f32[1,32], index: 5, kind: input, shape index: {}]
  %s6 = inlined_call_operand.vmem [shape: f32[3,32], index: 6, kind: input, shape index: {}]
  %s7 = inlined_call_operand.vmem [shape: f32[1,32], index: 7, kind: input, shape index: {}]
  %s8 = inlined_call_operand.vmem [shape: f32[3,32], index: 8, kind: input, shape index: {}]
  %s9 = inlined_call_operand.vmem [shape: f32[1,32], index: 9, kind: input, shape index: {}]
  %s10 = inlined_call_operand.vmem [shape: f32[2,4,32,8], index: 10, kind: input, shape index: {}]
  %s11 = inlined_call_operand.vmem [shape: f32[2,4,32,8], index: 11, kind: input, shape index: {}]
  %s12 = inlined_call_operand.vmem [shape: f32[2,4,32,8], index: 12, kind: input, shape index: {}]
  %s13 = inlined_call_operand.vmem [shape: f32[2,32,32], index: 13, kind: input, shape index: {}]
  %s14 = inlined_call_operand.vmem [shape: f32[2,4,8,32], index: 14, kind: input, shape index: {}]
  %s15 = inlined_call_operand.vmem [shape: f32[2,1,32], index: 15, kind: input, shape index: {}]
  %s16 = inlined_call_operand.vmem [shape: f32[2,1,32], index: 16, kind: input, shape index: {}]
  %s17 = inlined_call_operand.vmem [shape: f32[2,1,32], index: 17, kind: input, shape index: {}]
  %s18 = inlined_call_operand.hbm [shape: f32[2,8,32], index: 18, kind: output, shape index: {}]
  %s19 = sld [smem:[#allocation0]]
  $region82: #{tpu_custom_call.1} parent=0
    _
  %s21 = ssub.s32 1, %s19
  %s22 = scalar_select 0, %s21, %s19
  $region1: #{tpu_custom_call.1} parent=0
    #allocation2 [shape = 'u8[8192]{0}', space=vmem, size = 0x2000, scoped, tag = 'output window, operand 0, single buffered']
    #allocation3 [shape = 's32[1]{0}', space=sflag, size = 0x4, scoped, tag = 'scoped memory for tpu_custom_call.1']
    %23 = vsyncpa [#allocation3], 0
    // Predicated region
    $region2: #{tpu_custom_call.1} parent=1 // pred_check
      _
    $region3: #{tpu_custom_call.1} parent=1 // pred_check_branch
      %25 = sbr.rel (0) target = $region5
    $region4: #{tpu_custom_call.1} parent=1 // pred_region
      _
    $region5: #{tpu_custom_call.1} parent=1 // pred_fallthru
      _
    // Predicated region
    $region6: #{tpu_custom_call.1} parent=1 // pred_check
      _
    $region7: #{tpu_custom_call.1} parent=1 // pred_check_branch
      %27 = sbr.rel (0) target = $region9
    $region8: #{tpu_custom_call.1} parent=1 // pred_region
      _
    $region9: #{tpu_custom_call.1} parent=1 // pred_fallthru
      _
    // Predicated region
    $region10: #{tpu_custom_call.1} parent=1 // pred_check
      _
    $region11: #{tpu_custom_call.1} parent=1 // pred_check_branch
      %29 = sbr.rel (0) target = $region13
    $region12: #{tpu_custom_call.1} parent=1 // pred_region
      _
    $region13: #{tpu_custom_call.1} parent=1 // pred_fallthru
      _
    // Predicated region
    $region14: #{tpu_custom_call.1} parent=1 // pred_check
      _
    $region15: #{tpu_custom_call.1} parent=1 // pred_check_branch
      %31 = sbr.rel (0) target = $region17
    $region16: #{tpu_custom_call.1} parent=1 // pred_region
      _
    $region17: #{tpu_custom_call.1} parent=1 // pred_fallthru
      _
    // Predicated region
    $region18: #{tpu_custom_call.1} parent=1 // pred_check
      _
    $region19: #{tpu_custom_call.1} parent=1 // pred_check_branch
      %33 = sbr.rel (0) target = $region21
    $region20: #{tpu_custom_call.1} parent=1 // pred_region
      _
    $region21: #{tpu_custom_call.1} parent=1 // pred_fallthru
      _
    // Predicated region
    $region22: #{tpu_custom_call.1} parent=1 // pred_check
      _
    $region23: #{tpu_custom_call.1} parent=1 // pred_check_branch
      %35 = sbr.rel (0) target = $region25
    $region24: #{tpu_custom_call.1} parent=1 // pred_region
      _
    $region25: #{tpu_custom_call.1} parent=1 // pred_fallthru
      _
    // Predicated region
    $region26: #{tpu_custom_call.1} parent=1 // pred_check
      _
    $region27: #{tpu_custom_call.1} parent=1 // pred_check_branch
      %37 = sbr.rel (0) target = $region29
    $region28: #{tpu_custom_call.1} parent=1 // pred_region
      _
    $region29: #{tpu_custom_call.1} parent=1 // pred_fallthru
      _
    // Predicated region
    $region30: #{tpu_custom_call.1} parent=1 // pred_check
      _
    $region31: #{tpu_custom_call.1} parent=1 // pred_check_branch
      %39 = sbr.rel (0) target = $region33
    $region32: #{tpu_custom_call.1} parent=1 // pred_region
      _
    $region33: #{tpu_custom_call.1} parent=1 // pred_fallthru
      _
    // Predicated region
    $region34: #{tpu_custom_call.1} parent=1 // pred_check
      _
    $region35: #{tpu_custom_call.1} parent=1 // pred_check_branch
      %41 = sbr.rel (0) target = $region37
    $region36: #{tpu_custom_call.1} parent=1 // pred_region
      _
    $region37: #{tpu_custom_call.1} parent=1 // pred_fallthru
      _
    // Predicated region
    $region38: #{tpu_custom_call.1} parent=1 // pred_check
      _
    $region39: #{tpu_custom_call.1} parent=1 // pred_check_branch
      %43 = sbr.rel (0) target = $region41
    $region40: #{tpu_custom_call.1} parent=1 // pred_region
      _
    $region41: #{tpu_custom_call.1} parent=1 // pred_fallthru
      _
    // Predicated region
    $region42: #{tpu_custom_call.1} parent=1 // pred_check
      _
    $region43: #{tpu_custom_call.1} parent=1 // pred_check_branch
      %45 = sbr.rel (0) target = $region45
    $region44: #{tpu_custom_call.1} parent=1 // pred_region
      _
    $region45: #{tpu_custom_call.1} parent=1 // pred_fallthru
      _
    // Predicated region
    $region46: #{tpu_custom_call.1} parent=1 // pred_check
      _
    $region47: #{tpu_custom_call.1} parent=1 // pred_check_branch
      %47 = sbr.rel (0) target = $region49
    $region48: #{tpu_custom_call.1} parent=1 // pred_region
      _
    $region49: #{tpu_custom_call.1} parent=1 // pred_fallthru
      _
    // Predicated region
    $region50: #{tpu_custom_call.1} parent=1 // pred_check
      _
    $region51: #{tpu_custom_call.1} parent=1 // pred_check_branch
      %49 = sbr.rel (0) target = $region53
    $region52: #{tpu_custom_call.1} parent=1 // pred_region
      _
    $region53: #{tpu_custom_call.1} parent=1 // pred_fallthru
      _
    // Predicated region
    $region54: #{tpu_custom_call.1} parent=1 // pred_check
      _
    $region55: #{tpu_custom_call.1} parent=1 // pred_check_branch
      %51 = sbr.rel (0) target = $region57
    $region56: #{tpu_custom_call.1} parent=1 // pred_region
      _
    $region57: #{tpu_custom_call.1} parent=1 // pred_fallthru
      _
    // Predicated region
    $region58: #{tpu_custom_call.1} parent=1 // pred_check
      _
    $region59: #{tpu_custom_call.1} parent=1 // pred_check_branch
      %53 = sbr.rel (0) target = $region61
    $region60: #{tpu_custom_call.1} parent=1 // pred_region
      _
    $region61: #{tpu_custom_call.1} parent=1 // pred_fallthru
      _
    // Predicated region
    $region62: #{tpu_custom_call.1} parent=1 // pred_check
      _
    $region63: #{tpu_custom_call.1} parent=1 // pred_check_branch
      %55 = sbr.rel (0) target = $region65
    $region64: #{tpu_custom_call.1} parent=1 // pred_region
      _
    $region65: #{tpu_custom_call.1} parent=1 // pred_fallthru
      _
    // Predicated region
    $region66: #{tpu_custom_call.1} parent=1 // pred_check
      _
    $region67: #{tpu_custom_call.1} parent=1 // pred_check_branch
      %57 = sbr.rel (0) target = $region69
    $region68: #{tpu_custom_call.1} parent=1 // pred_region
      _
    $region69: #{tpu_custom_call.1} parent=1 // pred_fallthru
      _
    // Predicated region
    $region70: #{tpu_custom_call.1} parent=1 // pred_check
      _
    $region71: #{tpu_custom_call.1} parent=1 // pred_check_branch
      %59 = sbr.rel (0) target = $region73
    $region72: #{tpu_custom_call.1} parent=1 // pred_region
      _
    $region73: #{tpu_custom_call.1} parent=1 // pred_fallthru
      _
    %v60 = vld [vmem:[%s0] sm:$0xff]
    %v61 = vld [vmem:[%s0 + $0x8] sm:$0xff]
    %v62 = vld [vmem:[%s1] sm:$0xff]
    %v63 = vld [vmem:[%s1 + $0x8] sm:$0xff]
    %v64 = vld [vmem:[%s2] sm:$0xff]
    %v65 = vld [vmem:[%s2 + $0x8] sm:$0xff]
    %v66 = vld [vmem:[%s3] sm:$0x7]
    %v67 = vld [vmem:[%s4] sm:$0x1]
    %69 = vset.pattern.permute.xlu0 0
    %70 = vperm.xlu0 %69, %v62
    %v71 = vpop.permute.xlu0 %70
    %74 = vset.pattern.permute.xlu0 0
    %75 = vperm.xlu0 %74, %v63
    %v76 = vpop.permute.xlu0 %75
    %v79 = vlaneseq
    %v80 = vshrl.u32 %v79, 7
    %v81 = vsub.s32 0, %v80
    %v82 = vrot.slane %v67, %v81
    %v84 = vmul.f32 %v71, %v82
    %v85 = vmul.f32 %v76, %v82
    %vm86 = vcmask 23552
    %v88 = vsel %vm86, %v60, 0
    %v91 = vsel %vm86, %v61, 0
    %vm93 = vcmask 1042432
    %v95 = vsel %vm93, %v66, 0
    %97 = vmatprep.subr.mxu0 0.0
    %98 = vmatpush1.msra.mxu0 %v95
    %99 = vmatprep.subr.mxu0 0.0
    %100 = vmatpush1.msra.mxu0 0.0
    %101 = vmatprep.subr.mxu0 0.0
    %102 = vmatpush1.msra.mxu0 0.0
    %103 = vmatprep.subr.mxu0 0.0
    %104 = vmatpush1.msra.mxu0 0.0
    %105 = vmatprep.subr.mxu0 0.0
    %106 = vmatpush1.msra.mxu0 0.0
    %107 = vmatprep.subr.mxu0 0.0
    %108 = vmatpush1.msra.mxu0 0.0
    %109 = vmatprep.subr.mxu0 0.0
    %110 = vmatpush1.msra.mxu0 0.0
    %111 = vmatprep.subr.mxu0 0.0
    %112 = vmatpush1.msra.mxu0 0.0
    %113 = vmatprep.subr.mxu0 0.0
    %114 = vmatpush1.msra.mxu0 0.0
    %115 = vmatprep.subr.mxu0 0.0
    %116 = vmatpush1.msra.mxu0 0.0
    %117 = vmatprep.subr.mxu0 0.0
    %118 = vmatpush1.msra.mxu0 0.0
    %119 = vmatprep.subr.mxu0 0.0
    %120 = vmatpush1.msra.mxu0 0.0
    %121 = vmatprep.subr.mxu0 0.0
    %122 = vmatpush1.msra.mxu0 0.0
    %123 = vmatprep.subr.mxu0 0.0
    %124 = vmatpush1.msra.mxu0 0.0
    %125 = vmatprep.subr.mxu0 0.0
    %126 = vmatpush1.msra.mxu0 0.0
    %127 = vmatprep.subr.mxu0 0.0
    %128 = vmatpush1.msra.mxu0 0.0
    %129 = vmatprep.subr.mxu0 0.0
    %130 = vmatpush1.msra.mxu0 0.0
    %131 = vmatprep.subr.mxu0 0.0
    %132 = vmatpush1.msra.mxu0 0.0
    %133 = vmatprep.subr.mxu0 0.0
    %134 = vmatpush1.msra.mxu0 0.0
    %135 = vmatprep.subr.mxu0 0.0
    %136 = vmatpush1.msra.mxu0 0.0
    %137 = vmatprep.subr.mxu0 0.0
    %138 = vmatpush1.msra.mxu0 0.0
    %139 = vmatprep.subr.mxu0 0.0
    %140 = vmatpush1.msra.mxu0 0.0
    %141 = vmatprep.subr.mxu0 0.0
    %142 = vmatpush1.msra.mxu0 0.0
    %143 = vmatprep.subr.mxu0 0.0
    %144 = vmatpush1.msra.mxu0 0.0
    %145 = vmatprep.subr.mxu0 0.0
    %146 = vmatpush1.msra.mxu0 0.0
    %147 = vmatprep.subr.mxu0 0.0
    %148 = vmatpush1.msra.mxu0 0.0
    %149 = vmatprep.subr.mxu0 0.0
    %150 = vmatpush1.msra.mxu0 0.0
    %151 = vmatprep.subr.mxu0 0.0
    %152 = vmatpush1.msra.mxu0 0.0
    %153 = vmatprep.subr.mxu0 0.0
    %154 = vmatpush1.msra.mxu0 0.0
    %155 = vmatprep.subr.mxu0 0.0
    %156 = vmatpush1.msra.mxu0 0.0
    %157 = vmatprep.subr.mxu0 0.0
    %158 = vmatpush1.msra.mxu0 0.0
    %159 = vmatprep.subr.mxu0 0.0
    %160 = vmatpush1.msra.mxu0 0.0
    %161 = vmatprep.mubr.f32.mxu0 0.0
    %162 = vmatmul.mubr.f32.gmra.mrb[0].mxu0 %v88
    %v163 = vpop.f32.mrb[0].mxu0
    %v164 = vadd.f32 %v84, %v163
    %v165 = vpop.f32.mrb[0].mxu0
    %166 = vmatprep.mubr.f32.mxu0 0.0
    %167 = vmatmul.mubr.f32.gmra.mrb[0].mxu0 %v91
    %v168 = vpop.f32.mrb[0].mxu0
    %v169 = vadd.f32 %v85, %v168
    %v170 = vpop.f32.mrb[0].mxu0
    %171 = vdwg.mxu0
    %v172 = vld [vmem:[%s5] sm:$0x1]
    %v174 = vlaneseq
    %v175 = vshrl.u32 %v174, 7
    %v176 = vsub.s32 0, %v175
    %v177 = vrot.slane %v172, %v176
    %v179 = vadd.f32 %v164, %v177
    %v180 = vadd.f32 %v169, %v177
    %v181 = vld [vmem:[%s6] sm:$0x7]
    %v182 = vld [vmem:[%s7] sm:$0x1]
    %v184 = vlaneseq
    %v185 = vshrl.u32 %v184, 7
    %v186 = vsub.s32 0, %v185
    %v187 = vrot.slane %v182, %v186
    %v190 = vsel %vm93, %v181, 0
    %192 = vmatprep.subr.mxu0 0.0
    %193 = vmatpush1.msra.mxu0 %v190
    %194 = vmatprep.subr.mxu0 0.0
    %195 = vmatpush1.msra.mxu0 0.0
    %196 = vmatprep.subr.mxu0 0.0
    %197 = vmatpush1.msra.mxu0 0.0
    %198 = vmatprep.subr.mxu0 0.0
    %199 = vmatpush1.msra.mxu0 0.0
    %200 = vmatprep.subr.mxu0 0.0
    %201 = vmatpush1.msra.mxu0 0.0
    %202 = vmatprep.subr.mxu0 0.0
    %203 = vmatpush1.msra.mxu0 0.0
    %204 = vmatprep.subr.mxu0 0.0
    %205 = vmatpush1.msra.mxu0 0.0
    %206 = vmatprep.subr.mxu0 0.0
    %207 = vmatpush1.msra.mxu0 0.0
    %208 = vmatprep.subr.mxu0 0.0
    %209 = vmatpush1.msra.mxu0 0.0
    %210 = vmatprep.subr.mxu0 0.0
    %211 = vmatpush1.msra.mxu0 0.0
    %212 = vmatprep.subr.mxu0 0.0
    %213 = vmatpush1.msra.mxu0 0.0
    %214 = vmatprep.subr.mxu0 0.0
    %215 = vmatpush1.msra.mxu0 0.0
    %216 = vmatprep.subr.mxu0 0.0
    %217 = vmatpush1.msra.mxu0 0.0
    %218 = vmatprep.subr.mxu0 0.0
    %219 = vmatpush1.msra.mxu0 0.0
    %220 = vmatprep.subr.mxu0 0.0
    %221 = vmatpush1.msra.mxu0 0.0
    %222 = vmatprep.subr.mxu0 0.0
    %223 = vmatpush1.msra.mxu0 0.0
    %224 = vmatprep.subr.mxu0 0.0
    %225 = vmatpush1.msra.mxu0 0.0
    %226 = vmatprep.subr.mxu0 0.0
    %227 = vmatpush1.msra.mxu0 0.0
    %228 = vmatprep.subr.mxu0 0.0
    %229 = vmatpush1.msra.mxu0 0.0
    %230 = vmatprep.subr.mxu0 0.0
    %231 = vmatpush1.msra.mxu0 0.0
    %232 = vmatprep.subr.mxu0 0.0
    %233 = vmatpush1.msra.mxu0 0.0
    %234 = vmatprep.subr.mxu0 0.0
    %235 = vmatpush1.msra.mxu0 0.0
    %236 = vmatprep.subr.mxu0 0.0
    %237 = vmatpush1.msra.mxu0 0.0
    %238 = vmatprep.subr.mxu0 0.0
    %239 = vmatpush1.msra.mxu0 0.0
    %240 = vmatprep.subr.mxu0 0.0
    %241 = vmatpush1.msra.mxu0 0.0
    %242 = vmatprep.subr.mxu0 0.0
    %243 = vmatpush1.msra.mxu0 0.0
    %244 = vmatprep.subr.mxu0 0.0
    %245 = vmatpush1.msra.mxu0 0.0
    %246 = vmatprep.subr.mxu0 0.0
    %247 = vmatpush1.msra.mxu0 0.0
    %248 = vmatprep.subr.mxu0 0.0
    %249 = vmatpush1.msra.mxu0 0.0
    %250 = vmatprep.subr.mxu0 0.0
    %251 = vmatpush1.msra.mxu0 0.0
    %252 = vmatprep.subr.mxu0 0.0
    %253 = vmatpush1.msra.mxu0 0.0
    %254 = vmatprep.subr.mxu0 0.0
    %255 = vmatpush1.msra.mxu0 0.0
    %256 = vmatprep.mubr.f32.mxu0 0.0
    %257 = vmatmul.mubr.f32.gmra.mrb[0].mxu0 %v88
    %v258 = vpop.f32.mrb[0].mxu0
    %v259 = vadd.f32 %v187, %v258
    %v260 = vpop.f32.mrb[0].mxu0
    %261 = vmatprep.mubr.f32.mxu0 0.0
    %262 = vmatmul.mubr.f32.gmra.mrb[0].mxu0 %v91
    %v263 = vpop.f32.mrb[0].mxu0
    %v264 = vadd.f32 %v187, %v263
    %v265 = vpop.f32.mrb[0].mxu0
    %266 = vdwg.mxu0
    %v267 = vld [vmem:[%s8] sm:$0x7]
    %v268 = vld [vmem:[%s9] sm:$0x1]
    %v270 = vlaneseq
    %v271 = vshrl.u32 %v270, 7
    %v272 = vsub.s32 0, %v271
    %v273 = vrot.slane %v268, %v272
    %v276 = vsel %vm86, %v64, 0
    %v279 = vsel %vm86, %v65, 0
    %v282 = vsel %vm93, %v267, 0
    %284 = vmatprep.subr.mxu0 0.0
    %285 = vmatpush1.msra.mxu0 %v282
    %286 = vmatprep.subr.mxu0 0.0
    %287 = vmatpush1.msra.mxu0 0.0
    %288 = vmatprep.subr.mxu0 0.0
    %289 = vmatpush1.msra.mxu0 0.0
    %290 = vmatprep.subr.mxu0 0.0
    %291 = vmatpush1.msra.mxu0 0.0
    %292 = vmatprep.subr.mxu0 0.0
    %293 = vmatpush1.msra.mxu0 0.0
    %294 = vmatprep.subr.mxu0 0.0
    %295 = vmatpush1.msra.mxu0 0.0
    %296 = vmatprep.subr.mxu0 0.0
    %297 = vmatpush1.msra.mxu0 0.0
    %298 = vmatprep.subr.mxu0 0.0
    %299 = vmatpush1.msra.mxu0 0.0
    %300 = vmatprep.subr.mxu0 0.0
    %301 = vmatpush1.msra.mxu0 0.0
    %302 = vmatprep.subr.mxu0 0.0
    %303 = vmatpush1.msra.mxu0 0.0
    %304 = vmatprep.subr.mxu0 0.0
    %305 = vmatpush1.msra.mxu0 0.0
    %306 = vmatprep.subr.mxu0 0.0
    %307 = vmatpush1.msra.mxu0 0.0
    %308 = vmatprep.subr.mxu0 0.0
    %309 = vmatpush1.msra.mxu0 0.0
    %310 = vmatprep.subr.mxu0 0.0
    %311 = vmatpush1.msra.mxu0 0.0
    %312 = vmatprep.subr.mxu0 0.0
    %313 = vmatpush1.msra.mxu0 0.0
    %314 = vmatprep.subr.mxu0 0.0
    %315 = vmatpush1.msra.mxu0 0.0
    %316 = vmatprep.subr.mxu0 0.0
    %317 = vmatpush1.msra.mxu0 0.0
    %318 = vmatprep.subr.mxu0 0.0
    %319 = vmatpush1.msra.mxu0 0.0
    %320 = vmatprep.subr.mxu0 0.0
    %321 = vmatpush1.msra.mxu0 0.0
    %322 = vmatprep.subr.mxu0 0.0
    %323 = vmatpush1.msra.mxu0 0.0
    %324 = vmatprep.subr.mxu0 0.0
    %325 = vmatpush1.msra.mxu0 0.0
    %326 = vmatprep.subr.mxu0 0.0
    %327 = vmatpush1.msra.mxu0 0.0
    %328 = vmatprep.subr.mxu0 0.0
    %329 = vmatpush1.msra.mxu0 0.0
    %330 = vmatprep.subr.mxu0 0.0
    %331 = vmatpush1.msra.mxu0 0.0
    %332 = vmatprep.subr.mxu0 0.0
    %333 = vmatpush1.msra.mxu0 0.0
    %334 = vmatprep.subr.mxu0 0.0
    %335 = vmatpush1.msra.mxu0 0.0
    %336 = vmatprep.subr.mxu0 0.0
    %337 = vmatpush1.msra.mxu0 0.0
    %338 = vmatprep.subr.mxu0 0.0
    %339 = vmatpush1.msra.mxu0 0.0
    %340 = vmatprep.subr.mxu0 0.0
    %341 = vmatpush1.msra.mxu0 0.0
    %342 = vmatprep.subr.mxu0 0.0
    %343 = vmatpush1.msra.mxu0 0.0
    %344 = vmatprep.subr.mxu0 0.0
    %345 = vmatpush1.msra.mxu0 0.0
    %346 = vmatprep.subr.mxu0 0.0
    %347 = vmatpush1.msra.mxu0 0.0
    %348 = vmatprep.mubr.f32.mxu0 0.0
    %349 = vmatmul.mubr.f32.gmra.mrb[0].mxu0 %v276
    %v350 = vpop.f32.mrb[0].mxu0
    %v351 = vadd.f32 %v273, %v350
    %v352 = vpop.f32.mrb[0].mxu0
    %353 = vmatprep.mubr.f32.mxu0 0.0
    %354 = vmatmul.mubr.f32.gmra.mrb[0].mxu0 %v279
    %v355 = vpop.f32.mrb[0].mxu0
    %v356 = vadd.f32 %v273, %v355
    %v357 = vpop.f32.mrb[0].mxu0
    %358 = vdwg.mxu0
    %v359 = vld [vmem:[%s13] sm:$0xff]
    %v360 = vld [vmem:[%s13 + $0x8] sm:$0xff]
    %v361 = vld [vmem:[%s13 + $0x10] sm:$0xff]
    %v362 = vld [vmem:[%s13 + $0x18] sm:$0xff]
    %v363 = vld [vmem:[%s15] sm:$0x1]
    %v365 = vlaneseq
    %v366 = vshrl.u32 %v365, 7
    %v367 = vsub.s32 0, %v366
    %v368 = vrot.slane %v363, %v367
    %vm370 = vcmask 261120
    %v372 = vsel %vm370, %v351, 0
    %v375 = vsel %vm370, %v356, 0
    %377 = vmatprep.subr.mxu0 0.0
    %378 = vmatpush1.msra.mxu0 %v359
    %379 = vmatprep.subr.mxu0 0.0
    %380 = vmatpush1.msra.mxu0 %v360
    %381 = vmatprep.subr.mxu0 0.0
    %382 = vmatpush1.msra.mxu0 %v361
    %383 = vmatprep.subr.mxu0 0.0
    %384 = vmatpush1.msra.mxu0 %v362
    %385 = vmatprep.subr.mxu0 0.0
    %386 = vmatpush1.msra.mxu0 0.0
    %387 = vmatprep.subr.mxu0 0.0
    %388 = vmatpush1.msra.mxu0 0.0
    %389 = vmatprep.subr.mxu0 0.0
    %390 = vmatpush1.msra.mxu0 0.0
    %391 = vmatprep.subr.mxu0 0.0
    %392 = vmatpush1.msra.mxu0 0.0
    %393 = vmatprep.subr.mxu0 0.0
    %394 = vmatpush1.msra.mxu0 0.0
    %395 = vmatprep.subr.mxu0 0.0
    %396 = vmatpush1.msra.mxu0 0.0
    %397 = vmatprep.subr.mxu0 0.0
    %398 = vmatpush1.msra.mxu0 0.0
    %399 = vmatprep.subr.mxu0 0.0
    %400 = vmatpush1.msra.mxu0 0.0
    %401 = vmatprep.subr.mxu0 0.0
    %402 = vmatpush1.msra.mxu0 0.0
    %403 = vmatprep.subr.mxu0 0.0
    %404 = vmatpush1.msra.mxu0 0.0
    %405 = vmatprep.subr.mxu0 0.0
    %406 = vmatpush1.msra.mxu0 0.0
    %407 = vmatprep.subr.mxu0 0.0
    %408 = vmatpush1.msra.mxu0 0.0
    %409 = vmatprep.subr.mxu0 0.0
    %410 = vmatpush1.msra.mxu0 0.0
    %411 = vmatprep.subr.mxu0 0.0
    %412 = vmatpush1.msra.mxu0 0.0
    %413 = vmatprep.subr.mxu0 0.0
    %414 = vmatpush1.msra.mxu0 0.0
    %415 = vmatprep.subr.mxu0 0.0
    %416 = vmatpush1.msra.mxu0 0.0
    %417 = vmatprep.subr.mxu0 0.0
    %418 = vmatpush1.msra.mxu0 0.0
    %419 = vmatprep.subr.mxu0 0.0
    %420 = vmatpush1.msra.mxu0 0.0
    %421 = vmatprep.subr.mxu0 0.0
    %422 = vmatpush1.msra.mxu0 0.0
    %423 = vmatprep.subr.mxu0 0.0
    %424 = vmatpush1.msra.mxu0 0.0
    %425 = vmatprep.subr.mxu0 0.0
    %426 = vmatpush1.msra.mxu0 0.0
    %427 = vmatprep.subr.mxu0 0.0
    %428 = vmatpush1.msra.mxu0 0.0
    %429 = vmatprep.subr.mxu0 0.0
    %430 = vmatpush1.msra.mxu0 0.0
    %431 = vmatprep.subr.mxu0 0.0
    %432 = vmatpush1.msra.mxu0 0.0
    %433 = vmatprep.subr.mxu0 0.0
    %434 = vmatpush1.msra.mxu0 0.0
    %435 = vmatprep.subr.mxu0 0.0
    %436 = vmatpush1.msra.mxu0 0.0
    %437 = vmatprep.subr.mxu0 0.0
    %438 = vmatpush1.msra.mxu0 0.0
    %439 = vmatprep.subr.mxu0 0.0
    %440 = vmatpush1.msra.mxu0 0.0
    %441 = vmatprep.mubr.f32.mxu0 0.0
    %442 = vmatmul.mubr.f32.gmra.mrb[0].mxu0 %v372
    %v443 = vpop.f32.mrb[0].mxu0
    %v444 = vadd.f32 %v368, %v443
    %v445 = vpop.f32.mrb[0].mxu0
    %446 = vmatprep.mubr.f32.mxu0 0.0
    %447 = vmatmul.mubr.f32.gmra.mrb[0].mxu0 %v375
    %v448 = vpop.f32.mrb[0].mxu0
    %v449 = vadd.f32 %v368, %v448
    %v450 = vpop.f32.mrb[0].mxu0
    %451 = vdwg.mxu0
    %v452 = vld [vmem:[%s10] sm:$0xff]
    %v453 = vld [vmem:[%s10 + $0x8] sm:$0xff]
    %v454 = vld [vmem:[%s10 + $0x10] sm:$0xff]
    %v455 = vld [vmem:[%s10 + $0x18] sm:$0xff]
    %v457 = vsel %vm370, %v259, 0
    %v460 = vsel %vm370, %v264, 0
    %462 = vmatprep.subr.mxu0 0.0
    %463 = vmatpush1.msra.mxu0 %v452
    %464 = vmatprep.subr.mxu0 0.0
    %465 = vmatpush1.msra.mxu0 %v453
    %466 = vmatprep.subr.mxu0 0.0
    %467 = vmatpush1.msra.mxu0 %v454
    %468 = vmatprep.subr.mxu0 0.0
    %469 = vmatpush1.msra.mxu0 %v455
    %470 = vmatprep.subr.mxu0 0.0
    %471 = vmatpush1.msra.mxu0 0.0
    %472 = vmatprep.subr.mxu0 0.0
    %473 = vmatpush1.msra.mxu0 0.0
    %474 = vmatprep.subr.mxu0 0.0
    %475 = vmatpush1.msra.mxu0 0.0
    %476 = vmatprep.subr.mxu0 0.0
    %477 = vmatpush1.msra.mxu0 0.0
    %478 = vmatprep.subr.mxu0 0.0
    %479 = vmatpush1.msra.mxu0 0.0
    %480 = vmatprep.subr.mxu0 0.0
    %481 = vmatpush1.msra.mxu0 0.0
    %482 = vmatprep.subr.mxu0 0.0
    %483 = vmatpush1.msra.mxu0 0.0
    %484 = vmatprep.subr.mxu0 0.0
    %485 = vmatpush1.msra.mxu0 0.0
    %486 = vmatprep.subr.mxu0 0.0
    %487 = vmatpush1.msra.mxu0 0.0
    %488 = vmatprep.subr.mxu0 0.0
    %489 = vmatpush1.msra.mxu0 0.0
    %490 = vmatprep.subr.mxu0 0.0
    %491 = vmatpush1.msra.mxu0 0.0
    %492 = vmatprep.subr.mxu0 0.0
    %493 = vmatpush1.msra.mxu0 0.0
    %494 = vmatprep.subr.mxu0 0.0
    %495 = vmatpush1.msra.mxu0 0.0
    %496 = vmatprep.subr.mxu0 0.0
    %497 = vmatpush1.msra.mxu0 0.0
    %498 = vmatprep.subr.mxu0 0.0
    %499 = vmatpush1.msra.mxu0 0.0
    %500 = vmatprep.subr.mxu0 0.0
    %501 = vmatpush1.msra.mxu0 0.0
    %502 = vmatprep.subr.mxu0 0.0
    %503 = vmatpush1.msra.mxu0 0.0
    %504 = vmatprep.subr.mxu0 0.0
    %505 = vmatpush1.msra.mxu0 0.0
    %506 = vmatprep.subr.mxu0 0.0
    %507 = vmatpush1.msra.mxu0 0.0
    %508 = vmatprep.subr.mxu0 0.0
    %509 = vmatpush1.msra.mxu0 0.0
    %510 = vmatprep.subr.mxu0 0.0
    %511 = vmatpush1.msra.mxu0 0.0
    %512 = vmatprep.subr.mxu0 0.0
    %513 = vmatpush1.msra.mxu0 0.0
    %514 = vmatprep.subr.mxu0 0.0
    %515 = vmatpush1.msra.mxu0 0.0
    %516 = vmatprep.subr.mxu0 0.0
    %517 = vmatpush1.msra.mxu0 0.0
    %518 = vmatprep.subr.mxu0 0.0
    %519 = vmatpush1.msra.mxu0 0.0
    %520 = vmatprep.subr.mxu0 0.0
    %521 = vmatpush1.msra.mxu0 0.0
    %522 = vmatprep.subr.mxu0 0.0
    %523 = vmatpush1.msra.mxu0 0.0
    %524 = vmatprep.subr.mxu0 0.0
    %525 = vmatpush1.msra.mxu0 0.0
    %526 = vmatprep.mubr.f32.mxu0 0.0
    %527 = vmatmul.mubr.f32.gmra.mrb[0].mxu0 %v457
    %v528 = vpop.f32.mrb[0].mxu0
    %v529 = vadd.f32 0.0, %v528
    %v530 = vpop.f32.mrb[0].mxu0
    %531 = vmatprep.mubr.f32.mxu0 0.0
    %532 = vmatmul.mubr.f32.gmra.mrb[0].mxu0 %v460
    %v533 = vpop.f32.mrb[0].mxu0
    %v534 = vadd.f32 0.0, %v533
    %v535 = vpop.f32.mrb[0].mxu0
    %536 = vdwg.mxu0
    %v537 = vld [vmem:[%s11] sm:$0xff]
    %v538 = vld [vmem:[%s11 + $0x8] sm:$0xff]
    %v539 = vld [vmem:[%s11 + $0x10] sm:$0xff]
    %v540 = vld [vmem:[%s11 + $0x18] sm:$0xff]
    %v542 = vsel %vm370, %v179, 0
    %v545 = vsel %vm370, %v180, 0
    %547 = vmatprep.subr.mxu0 0.0
    %548 = vmatpush1.msra.mxu0 %v537
    %549 = vmatprep.subr.mxu0 0.0
    %550 = vmatpush1.msra.mxu0 %v538
    %551 = vmatprep.subr.mxu0 0.0
    %552 = vmatpush1.msra.mxu0 %v539
    %553 = vmatprep.subr.mxu0 0.0
    %554 = vmatpush1.msra.mxu0 %v540
    %555 = vmatprep.subr.mxu0 0.0
    %556 = vmatpush1.msra.mxu0 0.0
    %557 = vmatprep.subr.mxu0 0.0
    %558 = vmatpush1.msra.mxu0 0.0
    %559 = vmatprep.subr.mxu0 0.0
    %560 = vmatpush1.msra.mxu0 0.0
    %561 = vmatprep.subr.mxu0 0.0
    %562 = vmatpush1.msra.mxu0 0.0
    %563 = vmatprep.subr.mxu0 0.0
    %564 = vmatpush1.msra.mxu0 0.0
    %565 = vmatprep.subr.mxu0 0.0
    %566 = vmatpush1.msra.mxu0 0.0
    %567 = vmatprep.subr.mxu0 0.0
    %568 = vmatpush1.msra.mxu0 0.0
    %569 = vmatprep.subr.mxu0 0.0
    %570 = vmatpush1.msra.mxu0 0.0
    %571 = vmatprep.subr.mxu0 0.0
    %572 = vmatpush1.msra.mxu0 0.0
    %573 = vmatprep.subr.mxu0 0.0
    %574 = vmatpush1.msra.mxu0 0.0
    %575 = vmatprep.subr.mxu0 0.0
    %576 = vmatpush1.msra.mxu0 0.0
    %577 = vmatprep.subr.mxu0 0.0
    %578 = vmatpush1.msra.mxu0 0.0
    %579 = vmatprep.subr.mxu0 0.0
    %580 = vmatpush1.msra.mxu0 0.0
    %581 = vmatprep.subr.mxu0 0.0
    %582 = vmatpush1.msra.mxu0 0.0
    %583 = vmatprep.subr.mxu0 0.0
    %584 = vmatpush1.msra.mxu0 0.0
    %585 = vmatprep.subr.mxu0 0.0
    %586 = vmatpush1.msra.mxu0 0.0
    %587 = vmatprep.subr.mxu0 0.0
    %588 = vmatpush1.msra.mxu0 0.0
    %589 = vmatprep.subr.mxu0 0.0
    %590 = vmatpush1.msra.mxu0 0.0
    %591 = vmatprep.subr.mxu0 0.0
    %592 = vmatpush1.msra.mxu0 0.0
    %593 = vmatprep.subr.mxu0 0.0
    %594 = vmatpush1.msra.mxu0 0.0
    %595 = vmatprep.subr.mxu0 0.0
    %596 = vmatpush1.msra.mxu0 0.0
    %597 = vmatprep.subr.mxu0 0.0
    %598 = vmatpush1.msra.mxu0 0.0
    %599 = vmatprep.subr.mxu0 0.0
    %600 = vmatpush1.msra.mxu0 0.0
    %601 = vmatprep.subr.mxu0 0.0
    %602 = vmatpush1.msra.mxu0 0.0
    %603 = vmatprep.subr.mxu0 0.0
    %604 = vmatpush1.msra.mxu0 0.0
    %605 = vmatprep.subr.mxu0 0.0
    %606 = vmatpush1.msra.mxu0 0.0
    %607 = vmatprep.subr.mxu0 0.0
    %608 = vmatpush1.msra.mxu0 0.0
    %609 = vmatprep.subr.mxu0 0.0
    %610 = vmatpush1.msra.mxu0 0.0
    %611 = vmatprep.mubr.f32.mxu0 0.0
    %612 = vmatmul.mubr.f32.gmra.mrb[0].mxu0 %v542
    %v613 = vpop.f32.mrb[0].mxu0
    %v614 = vadd.f32 0.0, %v613
    %v615 = vpop.f32.mrb[0].mxu0
    %616 = vmatprep.mubr.f32.mxu0 0.0
    %617 = vmatmul.mubr.f32.gmra.mrb[0].mxu0 %v545
    %v618 = vpop.f32.mrb[0].mxu0
    %v619 = vadd.f32 0.0, %v618
    %v620 = vpop.f32.mrb[0].mxu0
    %621 = vdwg.mxu0
    %v622 = vld [vmem:[%s12] sm:$0xff]
    %v623 = vld [vmem:[%s12 + $0x8] sm:$0xff]
    %v624 = vld [vmem:[%s12 + $0x10] sm:$0xff]
    %v625 = vld [vmem:[%s12 + $0x18] sm:$0xff]
    %626 = vmatprep.subr.mxu0 0.0
    %627 = vmatpush1.msra.mxu0 %v622
    %628 = vmatprep.subr.mxu0 0.0
    %629 = vmatpush1.msra.mxu0 %v623
    %630 = vmatprep.subr.mxu0 0.0
    %631 = vmatpush1.msra.mxu0 %v624
    %632 = vmatprep.subr.mxu0 0.0
    %633 = vmatpush1.msra.mxu0 %v625
    %634 = vmatprep.subr.mxu0 0.0
    %635 = vmatpush1.msra.mxu0 0.0
    %636 = vmatprep.subr.mxu0 0.0
    %637 = vmatpush1.msra.mxu0 0.0
    %638 = vmatprep.subr.mxu0 0.0
    %639 = vmatpush1.msra.mxu0 0.0
    %640 = vmatprep.subr.mxu0 0.0
    %641 = vmatpush1.msra.mxu0 0.0
    %642 = vmatprep.subr.mxu0 0.0
    %643 = vmatpush1.msra.mxu0 0.0
    %644 = vmatprep.subr.mxu0 0.0
    %645 = vmatpush1.msra.mxu0 0.0
    %646 = vmatprep.subr.mxu0 0.0
    %647 = vmatpush1.msra.mxu0 0.0
    %648 = vmatprep.subr.mxu0 0.0
    %649 = vmatpush1.msra.mxu0 0.0
    %650 = vmatprep.subr.mxu0 0.0
    %651 = vmatpush1.msra.mxu0 0.0
    %652 = vmatprep.subr.mxu0 0.0
    %653 = vmatpush1.msra.mxu0 0.0
    %654 = vmatprep.subr.mxu0 0.0
    %655 = vmatpush1.msra.mxu0 0.0
    %656 = vmatprep.subr.mxu0 0.0
    %657 = vmatpush1.msra.mxu0 0.0
    %658 = vmatprep.subr.mxu0 0.0
    %659 = vmatpush1.msra.mxu0 0.0
    %660 = vmatprep.subr.mxu0 0.0
    %661 = vmatpush1.msra.mxu0 0.0
    %662 = vmatprep.subr.mxu0 0.0
    %663 = vmatpush1.msra.mxu0 0.0
    %664 = vmatprep.subr.mxu0 0.0
    %665 = vmatpush1.msra.mxu0 0.0
    %666 = vmatprep.subr.mxu0 0.0
    %667 = vmatpush1.msra.mxu0 0.0
    %668 = vmatprep.subr.mxu0 0.0
    %669 = vmatpush1.msra.mxu0 0.0
    %670 = vmatprep.subr.mxu0 0.0
    %671 = vmatpush1.msra.mxu0 0.0
    %672 = vmatprep.subr.mxu0 0.0
    %673 = vmatpush1.msra.mxu0 0.0
    %674 = vmatprep.subr.mxu0 0.0
    %675 = vmatpush1.msra.mxu0 0.0
    %676 = vmatprep.subr.mxu0 0.0
    %677 = vmatpush1.msra.mxu0 0.0
    %678 = vmatprep.subr.mxu0 0.0
    %679 = vmatpush1.msra.mxu0 0.0
    %680 = vmatprep.subr.mxu0 0.0
    %681 = vmatpush1.msra.mxu0 0.0
    %682 = vmatprep.subr.mxu0 0.0
    %683 = vmatpush1.msra.mxu0 0.0
    %684 = vmatprep.subr.mxu0 0.0
    %685 = vmatpush1.msra.mxu0 0.0
    %686 = vmatprep.subr.mxu0 0.0
    %687 = vmatpush1.msra.mxu0 0.0
    %688 = vmatprep.subr.mxu0 0.0
    %689 = vmatpush1.msra.mxu0 0.0
    %690 = vmatprep.mubr.f32.mxu0 0.0
    %691 = vmatmul.mubr.f32.gmra.mrb[0].mxu0 %v372
    %v692 = vpop.f32.mrb[0].mxu0
    %v693 = vadd.f32 0.0, %v692
    %v694 = vpop.f32.mrb[0].mxu0
    %695 = vmatprep.mubr.f32.mxu0 0.0
    %696 = vmatmul.mubr.f32.gmra.mrb[0].mxu0 %v375
    %v697 = vpop.f32.mrb[0].mxu0
    %v698 = vadd.f32 0.0, %v697
    %v699 = vpop.f32.mrb[0].mxu0
    %700 = vdwg.mxu0
    %vm701 = vcmask 64512
    %v703 = vsel %vm701, %v693, 0
    %v706 = vsel %vm701, %v529, 0
    %708 = vmatprep.subr.mxu0 0.0
    %709 = vmatpush1.xpose.msra.mxu0 %v706
    %710 = vmatprep.subr.mxu0 0.0
    %711 = vmatpush1.xpose.msra.mxu0 0.0
    %712 = vmatprep.subr.mxu0 0.0
    %713 = vmatpush1.xpose.msra.mxu0 0.0
    %714 = vmatprep.subr.mxu0 0.0
    %715 = vmatpush1.xpose.msra.mxu0 0.0
    %716 = vmatprep.subr.mxu0 0.0
    %717 = vmatpush1.xpose.msra.mxu0 0.0
    %718 = vmatprep.subr.mxu0 0.0
    %719 = vmatpush1.xpose.msra.mxu0 0.0
    %720 = vmatprep.subr.mxu0 0.0
    %721 = vmatpush1.xpose.msra.mxu0 0.0
    %722 = vmatprep.subr.mxu0 0.0
    %723 = vmatpush1.xpose.msra.mxu0 0.0
    %724 = vmatprep.subr.mxu0 0.0
    %725 = vmatpush1.xpose.msra.mxu0 0.0
    %726 = vmatprep.subr.mxu0 0.0
    %727 = vmatpush1.xpose.msra.mxu0 0.0
    %728 = vmatprep.subr.mxu0 0.0
    %729 = vmatpush1.xpose.msra.mxu0 0.0
    %730 = vmatprep.subr.mxu0 0.0
    %731 = vmatpush1.xpose.msra.mxu0 0.0
    %732 = vmatprep.subr.mxu0 0.0
    %733 = vmatpush1.xpose.msra.mxu0 0.0
    %734 = vmatprep.subr.mxu0 0.0
    %735 = vmatpush1.xpose.msra.mxu0 0.0
    %736 = vmatprep.subr.mxu0 0.0
    %737 = vmatpush1.xpose.msra.mxu0 0.0
    %738 = vmatprep.subr.mxu0 0.0
    %739 = vmatpush1.xpose.msra.mxu0 0.0
    %740 = vmatprep.subr.mxu0 0.0
    %741 = vmatpush1.xpose.msra.mxu0 0.0
    %742 = vmatprep.subr.mxu0 0.0
    %743 = vmatpush1.xpose.msra.mxu0 0.0
    %744 = vmatprep.subr.mxu0 0.0
    %745 = vmatpush1.xpose.msra.mxu0 0.0
    %746 = vmatprep.subr.mxu0 0.0
    %747 = vmatpush1.xpose.msra.mxu0 0.0
    %748 = vmatprep.subr.mxu0 0.0
    %749 = vmatpush1.xpose.msra.mxu0 0.0
    %750 = vmatprep.subr.mxu0 0.0
    %751 = vmatpush1.xpose.msra.mxu0 0.0
    %752 = vmatprep.subr.mxu0 0.0
    %753 = vmatpush1.xpose.msra.mxu0 0.0
    %754 = vmatprep.subr.mxu0 0.0
    %755 = vmatpush1.xpose.msra.mxu0 0.0
    %756 = vmatprep.subr.mxu0 0.0
    %757 = vmatpush1.xpose.msra.mxu0 0.0
    %758 = vmatprep.subr.mxu0 0.0
    %759 = vmatpush1.xpose.msra.mxu0 0.0
    %760 = vmatprep.subr.mxu0 0.0
    %761 = vmatpush1.xpose.msra.mxu0 0.0
    %762 = vmatprep.subr.mxu0 0.0
    %763 = vmatpush1.xpose.msra.mxu0 0.0
    %764 = vmatprep.subr.mxu0 0.0
    %765 = vmatpush1.xpose.msra.mxu0 0.0
    %766 = vmatprep.subr.mxu0 0.0
    %767 = vmatpush1.xpose.msra.mxu0 0.0
    %768 = vmatprep.subr.mxu0 0.0
    %769 = vmatpush1.xpose.msra.mxu0 0.0
    %770 = vmatprep.subr.mxu0 0.0
    %771 = vmatpush1.xpose.msra.mxu0 0.0
    %772 = vmatprep.mubr.f32.mxu0 0.0
    %773 = vmatmul.mubr.f32.gmra.mrb[0].mxu0 %v703
    %v774 = vpop.f32.mrb[0].mxu0
    %v775 = vadd.f32 0.0, %v774
    %v776 = vpop.f32.mrb[0].mxu0
    %777 = vdwg.mxu0
    %v779 = vsel %vm701, %v698, 0
    %v782 = vsel %vm701, %v534, 0
    %784 = vmatprep.subr.mxu0 0.0
    %785 = vmatpush1.xpose.msra.mxu0 %v782
    %786 = vmatprep.subr.mxu0 0.0
    %787 = vmatpush1.xpose.msra.mxu0 0.0
    %788 = vmatprep.subr.mxu0 0.0
    %789 = vmatpush1.xpose.msra.mxu0 0.0
    %790 = vmatprep.subr.mxu0 0.0
    %791 = vmatpush1.xpose.msra.mxu0 0.0
    %792 = vmatprep.subr.mxu0 0.0
    %793 = vmatpush1.xpose.msra.mxu0 0.0
    %794 = vmatprep.subr.mxu0 0.0
    %795 = vmatpush1.xpose.msra.mxu0 0.0
    %796 = vmatprep.subr.mxu0 0.0
    %797 = vmatpush1.xpose.msra.mxu0 0.0
    %798 = vmatprep.subr.mxu0 0.0
    %799 = vmatpush1.xpose.msra.mxu0 0.0
    %800 = vmatprep.subr.mxu0 0.0
    %801 = vmatpush1.xpose.msra.mxu0 0.0
    %802 = vmatprep.subr.mxu0 0.0
    %803 = vmatpush1.xpose.msra.mxu0 0.0
    %804 = vmatprep.subr.mxu0 0.0
    %805 = vmatpush1.xpose.msra.mxu0 0.0
    %806 = vmatprep.subr.mxu0 0.0
    %807 = vmatpush1.xpose.msra.mxu0 0.0
    %808 = vmatprep.subr.mxu0 0.0
    %809 = vmatpush1.xpose.msra.mxu0 0.0
    %810 = vmatprep.subr.mxu0 0.0
    %811 = vmatpush1.xpose.msra.mxu0 0.0
    %812 = vmatprep.subr.mxu0 0.0
    %813 = vmatpush1.xpose.msra.mxu0 0.0
    %814 = vmatprep.subr.mxu0 0.0
    %815 = vmatpush1.xpose.msra.mxu0 0.0
    %816 = vmatprep.subr.mxu0 0.0
    %817 = vmatpush1.xpose.msra.mxu0 0.0
    %818 = vmatprep.subr.mxu0 0.0
    %819 = vmatpush1.xpose.msra.mxu0 0.0
    %820 = vmatprep.subr.mxu0 0.0
    %821 = vmatpush1.xpose.msra.mxu0 0.0
    %822 = vmatprep.subr.mxu0 0.0
    %823 = vmatpush1.xpose.msra.mxu0 0.0
    %824 = vmatprep.subr.mxu0 0.0
    %825 = vmatpush1.xpose.msra.mxu0 0.0
    %826 = vmatprep.subr.mxu0 0.0
    %827 = vmatpush1.xpose.msra.mxu0 0.0
    %828 = vmatprep.subr.mxu0 0.0
    %829 = vmatpush1.xpose.msra.mxu0 0.0
    %830 = vmatprep.subr.mxu0 0.0
    %831 = vmatpush1.xpose.msra.mxu0 0.0
    %832 = vmatprep.subr.mxu0 0.0
    %833 = vmatpush1.xpose.msra.mxu0 0.0
    %834 = vmatprep.subr.mxu0 0.0
    %835 = vmatpush1.xpose.msra.mxu0 0.0
    %836 = vmatprep.subr.mxu0 0.0
    %837 = vmatpush1.xpose.msra.mxu0 0.0
    %838 = vmatprep.subr.mxu0 0.0
    %839 = vmatpush1.xpose.msra.mxu0 0.0
    %840 = vmatprep.subr.mxu0 0.0
    %841 = vmatpush1.xpose.msra.mxu0 0.0
    %842 = vmatprep.subr.mxu0 0.0
    %843 = vmatpush1.xpose.msra.mxu0 0.0
    %844 = vmatprep.subr.mxu0 0.0
    %845 = vmatpush1.xpose.msra.mxu0 0.0
    %846 = vmatprep.subr.mxu0 0.0
    %847 = vmatpush1.xpose.msra.mxu0 0.0
    %848 = vmatprep.mubr.f32.mxu0 0.0
    %849 = vmatmul.mubr.f32.gmra.mrb[0].mxu0 %v779
    %v850 = vpop.f32.mrb[0].mxu0
    %v851 = vadd.f32 0.0, %v850
    %v852 = vpop.f32.mrb[0].mxu0
    %853 = vdwg.mxu0
    %v854 = vmul.f32 %v775, 0.35355338
    %v855 = vmul.f32 %v851, 0.35355338
    %v856 = vsel %vm701, %v854, -inf
    %857 = vmax.xlane.f32.xlu0 %v856
    %v858 = vpop.xlane.xlu0 %857
    %v859 = vsel %vm701, %v855, -inf
    %860 = vmax.xlane.f32.xlu0 %v859
    %v861 = vpop.xlane.xlu0 %860
    %v862 = vsub.f32 %v854, %v858
    %v863 = vsub.f32 %v855, %v861
    %v864 = vmul.f32 %v862, 1.442695
    %v865 = vpow.pop %v864
    %v866 = vmul.f32 %v863, 1.442695
    %v867 = vpow.pop %v866
    %v868 = vsel %vm701, %v865, 0.0
    %869 = vadd.xlane.f32.xlu0 %v868
    %v870 = vpop.xlane.xlu0 %869
    %v871 = vsel %vm701, %v867, 0.0
    %872 = vadd.xlane.f32.xlu0 %v871
    %v873 = vpop.xlane.xlu0 %872
    %v874 = vrcp.pop %v870
    %v875 = vrcp.pop %v873
    %v876 = vmul.f32 %v865, %v874
    %v877 = vmul.f32 %v867, %v875
    %v879 = vsel %vm701, %v876, 0
    %881 = vmatprep.subr.mxu0 0.0
    %882 = vmatpush1.msra.mxu0 %v614
    %883 = vmatprep.subr.mxu0 0.0
    %884 = vmatpush1.msra.mxu0 0.0
    %885 = vmatprep.subr.mxu0 0.0
    %886 = vmatpush1.msra.mxu0 0.0
    %887 = vmatprep.subr.mxu0 0.0
    %888 = vmatpush1.msra.mxu0 0.0
    %889 = vmatprep.subr.mxu0 0.0
    %890 = vmatpush1.msra.mxu0 0.0
    %891 = vmatprep.subr.mxu0 0.0
    %892 = vmatpush1.msra.mxu0 0.0
    %893 = vmatprep.subr.mxu0 0.0
    %894 = vmatpush1.msra.mxu0 0.0
    %895 = vmatprep.subr.mxu0 0.0
    %896 = vmatpush1.msra.mxu0 0.0
    %897 = vmatprep.subr.mxu0 0.0
    %898 = vmatpush1.msra.mxu0 0.0
    %899 = vmatprep.subr.mxu0 0.0
    %900 = vmatpush1.msra.mxu0 0.0
    %901 = vmatprep.subr.mxu0 0.0
    %902 = vmatpush1.msra.mxu0 0.0
    %903 = vmatprep.subr.mxu0 0.0
    %904 = vmatpush1.msra.mxu0 0.0
    %905 = vmatprep.subr.mxu0 0.0
    %906 = vmatpush1.msra.mxu0 0.0
    %907 = vmatprep.subr.mxu0 0.0
    %908 = vmatpush1.msra.mxu0 0.0
    %909 = vmatprep.subr.mxu0 0.0
    %910 = vmatpush1.msra.mxu0 0.0
    %911 = vmatprep.subr.mxu0 0.0
    %912 = vmatpush1.msra.mxu0 0.0
    %913 = vmatprep.subr.mxu0 0.0
    %914 = vmatpush1.msra.mxu0 0.0
    %915 = vmatprep.subr.mxu0 0.0
    %916 = vmatpush1.msra.mxu0 0.0
    %917 = vmatprep.subr.mxu0 0.0
    %918 = vmatpush1.msra.mxu0 0.0
    %919 = vmatprep.subr.mxu0 0.0
    %920 = vmatpush1.msra.mxu0 0.0
    %921 = vmatprep.subr.mxu0 0.0
    %922 = vmatpush1.msra.mxu0 0.0
    %923 = vmatprep.subr.mxu0 0.0
    %924 = vmatpush1.msra.mxu0 0.0
    %925 = vmatprep.subr.mxu0 0.0
    %926 = vmatpush1.msra.mxu0 0.0
    %927 = vmatprep.subr.mxu0 0.0
    %928 = vmatpush1.msra.mxu0 0.0
    %929 = vmatprep.subr.mxu0 0.0
    %930 = vmatpush1.msra.mxu0 0.0
    %931 = vmatprep.subr.mxu0 0.0
    %932 = vmatpush1.msra.mxu0 0.0
    %933 = vmatprep.subr.mxu0 0.0
    %934 = vmatpush1.msra.mxu0 0.0
    %935 = vmatprep.subr.mxu0 0.0
    %936 = vmatpush1.msra.mxu0 0.0
    %937 = vmatprep.subr.mxu0 0.0
    %938 = vmatpush1.msra.mxu0 0.0
    %939 = vmatprep.subr.mxu0 0.0
    %940 = vmatpush1.msra.mxu0 0.0
    %941 = vmatprep.subr.mxu0 0.0
    %942 = vmatpush1.msra.mxu0 0.0
    %943 = vmatprep.subr.mxu0 0.0
    %944 = vmatpush1.msra.mxu0 0.0
    %945 = vmatprep.mubr.f32.mxu0 0.0
    %946 = vmatmul.mubr.f32.gmra.mrb[0].mxu0 %v879
    %v947 = vpop.f32.mrb[0].mxu0
    %v948 = vadd.f32 0.0, %v947
    %v949 = vpop.f32.mrb[0].mxu0
    %950 = vdwg.mxu0
    %v952 = vsel %vm701, %v877, 0
    %954 = vmatprep.subr.mxu0 0.0
    %955 = vmatpush1.msra.mxu0 %v619
    %956 = vmatprep.subr.mxu0 0.0
    %957 = vmatpush1.msra.mxu0 0.0
    %958 = vmatprep.subr.mxu0 0.0
    %959 = vmatpush1.msra.mxu0 0.0
    %960 = vmatprep.subr.mxu0 0.0
    %961 = vmatpush1.msra.mxu0 0.0
    %962 = vmatprep.subr.mxu0 0.0
    %963 = vmatpush1.msra.mxu0 0.0
    %964 = vmatprep.subr.mxu0 0.0
    %965 = vmatpush1.msra.mxu0 0.0
    %966 = vmatprep.subr.mxu0 0.0
    %967 = vmatpush1.msra.mxu0 0.0
    %968 = vmatprep.subr.mxu0 0.0
    %969 = vmatpush1.msra.mxu0 0.0
    %970 = vmatprep.subr.mxu0 0.0
    %971 = vmatpush1.msra.mxu0 0.0
    %972 = vmatprep.subr.mxu0 0.0
    %973 = vmatpush1.msra.mxu0 0.0
    %974 = vmatprep.subr.mxu0 0.0
    %975 = vmatpush1.msra.mxu0 0.0
    %976 = vmatprep.subr.mxu0 0.0
    %977 = vmatpush1.msra.mxu0 0.0
    %978 = vmatprep.subr.mxu0 0.0
    %979 = vmatpush1.msra.mxu0 0.0
    %980 = vmatprep.subr.mxu0 0.0
    %981 = vmatpush1.msra.mxu0 0.0
    %982 = vmatprep.subr.mxu0 0.0
    %983 = vmatpush1.msra.mxu0 0.0
    %984 = vmatprep.subr.mxu0 0.0
    %985 = vmatpush1.msra.mxu0 0.0
    %986 = vmatprep.subr.mxu0 0.0
    %987 = vmatpush1.msra.mxu0 0.0
    %988 = vmatprep.subr.mxu0 0.0
    %989 = vmatpush1.msra.mxu0 0.0
    %990 = vmatprep.subr.mxu0 0.0
    %991 = vmatpush1.msra.mxu0 0.0
    %992 = vmatprep.subr.mxu0 0.0
    %993 = vmatpush1.msra.mxu0 0.0
    %994 = vmatprep.subr.mxu0 0.0
    %995 = vmatpush1.msra.mxu0 0.0
    %996 = vmatprep.subr.mxu0 0.0
    %997 = vmatpush1.msra.mxu0 0.0
    %998 = vmatprep.subr.mxu0 0.0
    %999 = vmatpush1.msra.mxu0 0.0
    %1000 = vmatprep.subr.mxu0 0.0
    %1001 = vmatpush1.msra.mxu0 0.0
    %1002 = vmatprep.subr.mxu0 0.0
    %1003 = vmatpush1.msra.mxu0 0.0
    %1004 = vmatprep.subr.mxu0 0.0
    %1005 = vmatpush1.msra.mxu0 0.0
    %1006 = vmatprep.subr.mxu0 0.0
    %1007 = vmatpush1.msra.mxu0 0.0
    %1008 = vmatprep.subr.mxu0 0.0
    %1009 = vmatpush1.msra.mxu0 0.0
    %1010 = vmatprep.subr.mxu0 0.0
    %1011 = vmatpush1.msra.mxu0 0.0
    %1012 = vmatprep.subr.mxu0 0.0
    %1013 = vmatpush1.msra.mxu0 0.0
    %1014 = vmatprep.subr.mxu0 0.0
    %1015 = vmatpush1.msra.mxu0 0.0
    %1016 = vmatprep.subr.mxu0 0.0
    %1017 = vmatpush1.msra.mxu0 0.0
    %1018 = vmatprep.mubr.f32.mxu0 0.0
    %1019 = vmatmul.mubr.f32.gmra.mrb[0].mxu0 %v952
    %v1020 = vpop.f32.mrb[0].mxu0
    %v1021 = vadd.f32 0.0, %v1020
    %v1022 = vpop.f32.mrb[0].mxu0
    %1023 = vdwg.mxu0
    %v1024 = vld [vmem:[%s14] sm:$0xff]
    %v1026 = vsel %vm701, %v948, 0
    %v1029 = vsel %vm701, %v1021, 0
    %1031 = vmatprep.subr.mxu0 0.0
    %1032 = vmatpush1.msra.mxu0 %v1024
    %1033 = vmatprep.subr.mxu0 0.0
    %1034 = vmatpush1.msra.mxu0 0.0
    %1035 = vmatprep.subr.mxu0 0.0
    %1036 = vmatpush1.msra.mxu0 0.0
    %1037 = vmatprep.subr.mxu0 0.0
    %1038 = vmatpush1.msra.mxu0 0.0
    %1039 = vmatprep.subr.mxu0 0.0
    %1040 = vmatpush1.msra.mxu0 0.0
    %1041 = vmatprep.subr.mxu0 0.0
    %1042 = vmatpush1.msra.mxu0 0.0
    %1043 = vmatprep.subr.mxu0 0.0
    %1044 = vmatpush1.msra.mxu0 0.0
    %1045 = vmatprep.subr.mxu0 0.0
    %1046 = vmatpush1.msra.mxu0 0.0
    %1047 = vmatprep.subr.mxu0 0.0
    %1048 = vmatpush1.msra.mxu0 0.0
    %1049 = vmatprep.subr.mxu0 0.0
    %1050 = vmatpush1.msra.mxu0 0.0
    %1051 = vmatprep.subr.mxu0 0.0
    %1052 = vmatpush1.msra.mxu0 0.0
    %1053 = vmatprep.subr.mxu0 0.0
    %1054 = vmatpush1.msra.mxu0 0.0
    %1055 = vmatprep.subr.mxu0 0.0
    %1056 = vmatpush1.msra.mxu0 0.0
    %1057 = vmatprep.subr.mxu0 0.0
    %1058 = vmatpush1.msra.mxu0 0.0
    %1059 = vmatprep.subr.mxu0 0.0
    %1060 = vmatpush1.msra.mxu0 0.0
    %1061 = vmatprep.subr.mxu0 0.0
    %1062 = vmatpush1.msra.mxu0 0.0
    %1063 = vmatprep.subr.mxu0 0.0
    %1064 = vmatpush1.msra.mxu0 0.0
    %1065 = vmatprep.subr.mxu0 0.0
    %1066 = vmatpush1.msra.mxu0 0.0
    %1067 = vmatprep.subr.mxu0 0.0
    %1068 = vmatpush1.msra.mxu0 0.0
    %1069 = vmatprep.subr.mxu0 0.0
    %1070 = vmatpush1.msra.mxu0 0.0
    %1071 = vmatprep.subr.mxu0 0.0
    %1072 = vmatpush1.msra.mxu0 0.0
    %1073 = vmatprep.subr.mxu0 0.0
    %1074 = vmatpush1.msra.mxu0 0.0
    %1075 = vmatprep.subr.mxu0 0.0
    %1076 = vmatpush1.msra.mxu0 0.0
    %1077 = vmatprep.subr.mxu0 0.0
    %1078 = vmatpush1.msra.mxu0 0.0
    %1079 = vmatprep.subr.mxu0 0.0
    %1080 = vmatpush1.msra.mxu0 0.0
    %1081 = vmatprep.subr.mxu0 0.0
    %1082 = vmatpush1.msra.mxu0 0.0
    %1083 = vmatprep.subr.mxu0 0.0
    %1084 = vmatpush1.msra.mxu0 0.0
    %1085 = vmatprep.subr.mxu0 0.0
    %1086 = vmatpush1.msra.mxu0 0.0
    %1087 = vmatprep.subr.mxu0 0.0
    %1088 = vmatpush1.msra.mxu0 0.0
    %1089 = vmatprep.subr.mxu0 0.0
    %1090 = vmatpush1.msra.mxu0 0.0
    %1091 = vmatprep.subr.mxu0 0.0
    %1092 = vmatpush1.msra.mxu0 0.0
    %1093 = vmatprep.subr.mxu0 0.0
    %1094 = vmatpush1.msra.mxu0 0.0
    %1095 = vmatprep.mubr.f32.mxu0 0.0
    %1096 = vmatmul.mubr.f32.gmra.mrb[0].mxu0 %v1026
    %v1097 = vpop.f32.mrb[0].mxu0
    %v1098 = vadd.f32 0.0, %v1097
    %v1099 = vpop.f32.mrb[0].mxu0
    %1100 = vmatprep.mubr.f32.mxu0 0.0
    %1101 = vmatmul.mubr.f32.gmra.mrb[0].mxu0 %v1029
    %v1102 = vpop.f32.mrb[0].mxu0
    %v1103 = vadd.f32 0.0, %v1102
    %v1104 = vpop.f32.mrb[0].mxu0
    %1105 = vdwg.mxu0
    %v1106 = vadd.f32 %v444, %v1098
    %v1107 = vadd.f32 %v449, %v1103
    %s1108 = scalar_lea.vmem %s10, 32
    %v1109 = vld [vmem:[%s1108] sm:$0xff]
    %v1110 = vld [vmem:[%s1108 + $0x8] sm:$0xff]
    %v1111 = vld [vmem:[%s1108 + $0x10] sm:$0xff]
    %v1112 = vld [vmem:[%s1108 + $0x18] sm:$0xff]
    %1113 = vmatprep.subr.mxu0 0.0
    %1114 = vmatpush1.msra.mxu0 %v1109
    %1115 = vmatprep.subr.mxu0 0.0
    %1116 = vmatpush1.msra.mxu0 %v1110
    %1117 = vmatprep.subr.mxu0 0.0
    %1118 = vmatpush1.msra.mxu0 %v1111
    %1119 = vmatprep.subr.mxu0 0.0
    %1120 = vmatpush1.msra.mxu0 %v1112
    %1121 = vmatprep.subr.mxu0 0.0
    %1122 = vmatpush1.msra.mxu0 0.0
    %1123 = vmatprep.subr.mxu0 0.0
    %1124 = vmatpush1.msra.mxu0 0.0
    %1125 = vmatprep.subr.mxu0 0.0
    %1126 = vmatpush1.msra.mxu0 0.0
    %1127 = vmatprep.subr.mxu0 0.0
    %1128 = vmatpush1.msra.mxu0 0.0
    %1129 = vmatprep.subr.mxu0 0.0
    %1130 = vmatpush1.msra.mxu0 0.0
    %1131 = vmatprep.subr.mxu0 0.0
    %1132 = vmatpush1.msra.mxu0 0.0
    %1133 = vmatprep.subr.mxu0 0.0
    %1134 = vmatpush1.msra.mxu0 0.0
    %1135 = vmatprep.subr.mxu0 0.0
    %1136 = vmatpush1.msra.mxu0 0.0
    %1137 = vmatprep.subr.mxu0 0.0
    %1138 = vmatpush1.msra.mxu0 0.0
    %1139 = vmatprep.subr.mxu0 0.0
    %1140 = vmatpush1.msra.mxu0 0.0
    %1141 = vmatprep.subr.mxu0 0.0
    %1142 = vmatpush1.msra.mxu0 0.0
    %1143 = vmatprep.subr.mxu0 0.0
    %1144 = vmatpush1.msra.mxu0 0.0
    %1145 = vmatprep.subr.mxu0 0.0
    %1146 = vmatpush1.msra.mxu0 0.0
    %1147 = vmatprep.subr.mxu0 0.0
    %1148 = vmatpush1.msra.mxu0 0.0
    %1149 = vmatprep.subr.mxu0 0.0
    %1150 = vmatpush1.msra.mxu0 0.0
    %1151 = vmatprep.subr.mxu0 0.0
    %1152 = vmatpush1.msra.mxu0 0.0
    %1153 = vmatprep.subr.mxu0 0.0
    %1154 = vmatpush1.msra.mxu0 0.0
    %1155 = vmatprep.subr.mxu0 0.0
    %1156 = vmatpush1.msra.mxu0 0.0
    %1157 = vmatprep.subr.mxu0 0.0
    %1158 = vmatpush1.msra.mxu0 0.0
    %1159 = vmatprep.subr.mxu0 0.0
    %1160 = vmatpush1.msra.mxu0 0.0
    %1161 = vmatprep.subr.mxu0 0.0
    %1162 = vmatpush1.msra.mxu0 0.0
    %1163 = vmatprep.subr.mxu0 0.0
    %1164 = vmatpush1.msra.mxu0 0.0
    %1165 = vmatprep.subr.mxu0 0.0
    %1166 = vmatpush1.msra.mxu0 0.0
    %1167 = vmatprep.subr.mxu0 0.0
    %1168 = vmatpush1.msra.mxu0 0.0
    %1169 = vmatprep.subr.mxu0 0.0
    %1170 = vmatpush1.msra.mxu0 0.0
    %1171 = vmatprep.subr.mxu0 0.0
    %1172 = vmatpush1.msra.mxu0 0.0
    %1173 = vmatprep.subr.mxu0 0.0
    %1174 = vmatpush1.msra.mxu0 0.0
    %1175 = vmatprep.subr.mxu0 0.0
    %1176 = vmatpush1.msra.mxu0 0.0
    %1177 = vmatprep.mubr.f32.mxu0 0.0
    %1178 = vmatmul.mubr.f32.gmra.mrb[0].mxu0 %v457
    %v1179 = vpop.f32.mrb[0].mxu0
    %v1180 = vadd.f32 0.0, %v1179
    %v1181 = vpop.f32.mrb[0].mxu0
    %1182 = vmatprep.mubr.f32.mxu0 0.0
    %1183 = vmatmul.mubr.f32.gmra.mrb[0].mxu0 %v460
    %v1184 = vpop.f32.mrb[0].mxu0
    %v1185 = vadd.f32 0.0, %v1184
    %v1186 = vpop.f32.mrb[0].mxu0
    %1187 = vdwg.mxu0
    %s1188 = scalar_lea.vmem %s11, 32
    %v1189 = vld [vmem:[%s1188] sm:$0xff]
    %v1190 = vld [vmem:[%s1188 + $0x8] sm:$0xff]
    %v1191 = vld [vmem:[%s1188 + $0x10] sm:$0xff]
    %v1192 = vld [vmem:[%s1188 + $0x18] sm:$0xff]
    %1193 = vmatprep.subr.mxu0 0.0
    %1194 = vmatpush1.msra.mxu0 %v1189
    %1195 = vmatprep.subr.mxu0 0.0
    %1196 = vmatpush1.msra.mxu0 %v1190
    %1197 = vmatprep.subr.mxu0 0.0
    %1198 = vmatpush1.msra.mxu0 %v1191
    %1199 = vmatprep.subr.mxu0 0.0
    %1200 = vmatpush1.msra.mxu0 %v1192
    %1201 = vmatprep.subr.mxu0 0.0
    %1202 = vmatpush1.msra.mxu0 0.0
    %1203 = vmatprep.subr.mxu0 0.0
    %1204 = vmatpush1.msra.mxu0 0.0
    %1205 = vmatprep.subr.mxu0 0.0
    %1206 = vmatpush1.msra.mxu0 0.0
    %1207 = vmatprep.subr.mxu0 0.0
    %1208 = vmatpush1.msra.mxu0 0.0
    %1209 = vmatprep.subr.mxu0 0.0
    %1210 = vmatpush1.msra.mxu0 0.0
    %1211 = vmatprep.subr.mxu0 0.0
    %1212 = vmatpush1.msra.mxu0 0.0
    %1213 = vmatprep.subr.mxu0 0.0
    %1214 = vmatpush1.msra.mxu0 0.0
    %1215 = vmatprep.subr.mxu0 0.0
    %1216 = vmatpush1.msra.mxu0 0.0
    %1217 = vmatprep.subr.mxu0 0.0
    %1218 = vmatpush1.msra.mxu0 0.0
    %1219 = vmatprep.subr.mxu0 0.0
    %1220 = vmatpush1.msra.mxu0 0.0
    %1221 = vmatprep.subr.mxu0 0.0
    %1222 = vmatpush1.msra.mxu0 0.0
    %1223 = vmatprep.subr.mxu0 0.0
    %1224 = vmatpush1.msra.mxu0 0.0
    %1225 = vmatprep.subr.mxu0 0.0
    %1226 = vmatpush1.msra.mxu0 0.0
    %1227 = vmatprep.subr.mxu0 0.0
    %1228 = vmatpush1.msra.mxu0 0.0
    %1229 = vmatprep.subr.mxu0 0.0
    %1230 = vmatpush1.msra.mxu0 0.0
    %1231 = vmatprep.subr.mxu0 0.0
    %1232 = vmatpush1.msra.mxu0 0.0
    %1233 = vmatprep.subr.mxu0 0.0
    %1234 = vmatpush1.msra.mxu0 0.0
    %1235 = vmatprep.subr.mxu0 0.0
    %1236 = vmatpush1.msra.mxu0 0.0
    %1237 = vmatprep.subr.mxu0 0.0
    %1238 = vmatpush1.msra.mxu0 0.0
    %1239 = vmatprep.subr.mxu0 0.0
    %1240 = vmatpush1.msra.mxu0 0.0
    %1241 = vmatprep.subr.mxu0 0.0
    %1242 = vmatpush1.msra.mxu0 0.0
    %1243 = vmatprep.subr.mxu0 0.0
    %1244 = vmatpush1.msra.mxu0 0.0
    %1245 = vmatprep.subr.mxu0 0.0
    %1246 = vmatpush1.msra.mxu0 0.0
    %1247 = vmatprep.subr.mxu0 0.0
    %1248 = vmatpush1.msra.mxu0 0.0
    %1249 = vmatprep.subr.mxu0 0.0
    %1250 = vmatpush1.msra.mxu0 0.0
    %1251 = vmatprep.subr.mxu0 0.0
    %1252 = vmatpush1.msra.mxu0 0.0
    %1253 = vmatprep.subr.mxu0 0.0
    %1254 = vmatpush1.msra.mxu0 0.0
    %1255 = vmatprep.subr.mxu0 0.0
    %1256 = vmatpush1.msra.mxu0 0.0
    %1257 = vmatprep.mubr.f32.mxu0 0.0
    %1258 = vmatmul.mubr.f32.gmra.mrb[0].mxu0 %v542
    %v1259 = vpop.f32.mrb[0].mxu0
    %v1260 = vadd.f32 0.0, %v1259
    %v1261 = vpop.f32.mrb[0].mxu0
    %1262 = vmatprep.mubr.f32.mxu0 0.0
    %1263 = vmatmul.mubr.f32.gmra.mrb[0].mxu0 %v545
    %v1264 = vpop.f32.mrb[0].mxu0
    %v1265 = vadd.f32 0.0, %v1264
    %v1266 = vpop.f32.mrb[0].mxu0
    %1267 = vdwg.mxu0
    %s1268 = scalar_lea.vmem %s12, 32
    %v1269 = vld [vmem:[%s1268] sm:$0xff]
    %v1270 = vld [vmem:[%s1268 + $0x8] sm:$0xff]
    %v1271 = vld [vmem:[%s1268 + $0x10] sm:$0xff]
    %v1272 = vld [vmem:[%s1268 + $0x18] sm:$0xff]
    %1273 = vmatprep.subr.mxu0 0.0
    %1274 = vmatpush1.msra.mxu0 %v1269
    %1275 = vmatprep.subr.mxu0 0.0
    %1276 = vmatpush1.msra.mxu0 %v1270
    %1277 = vmatprep.subr.mxu0 0.0
    %1278 = vmatpush1.msra.mxu0 %v1271
    %1279 = vmatprep.subr.mxu0 0.0
    %1280 = vmatpush1.msra.mxu0 %v1272
    %1281 = vmatprep.subr.mxu0 0.0
    %1282 = vmatpush1.msra.mxu0 0.0
    %1283 = vmatprep.subr.mxu0 0.0
    %1284 = vmatpush1.msra.mxu0 0.0
    %1285 = vmatprep.subr.mxu0 0.0
    %1286 = vmatpush1.msra.mxu0 0.0
    %1287 = vmatprep.subr.mxu0 0.0
    %1288 = vmatpush1.msra.mxu0 0.0
    %1289 = vmatprep.subr.mxu0 0.0
    %1290 = vmatpush1.msra.mxu0 0.0
    %1291 = vmatprep.subr.mxu0 0.0
    %1292 = vmatpush1.msra.mxu0 0.0
    %1293 = vmatprep.subr.mxu0 0.0
    %1294 = vmatpush1.msra.mxu0 0.0
    %1295 = vmatprep.subr.mxu0 0.0
    %1296 = vmatpush1.msra.mxu0 0.0
    %1297 = vmatprep.subr.mxu0 0.0
    %1298 = vmatpush1.msra.mxu0 0.0
    %1299 = vmatprep.subr.mxu0 0.0
    %1300 = vmatpush1.msra.mxu0 0.0
    %1301 = vmatprep.subr.mxu0 0.0
    %1302 = vmatpush1.msra.mxu0 0.0
    %1303 = vmatprep.subr.mxu0 0.0
    %1304 = vmatpush1.msra.mxu0 0.0
    %1305 = vmatprep.subr.mxu0 0.0
    %1306 = vmatpush1.msra.mxu0 0.0
    %1307 = vmatprep.subr.mxu0 0.0
    %1308 = vmatpush1.msra.mxu0 0.0
    %1309 = vmatprep.subr.mxu0 0.0
    %1310 = vmatpush1.msra.mxu0 0.0
    %1311 = vmatprep.subr.mxu0 0.0
    %1312 = vmatpush1.msra.mxu0 0.0
    %1313 = vmatprep.subr.mxu0 0.0
    %1314 = vmatpush1.msra.mxu0 0.0
    %1315 = vmatprep.subr.mxu0 0.0
    %1316 = vmatpush1.msra.mxu0 0.0
    %1317 = vmatprep.subr.mxu0 0.0
    %1318 = vmatpush1.msra.mxu0 0.0
    %1319 = vmatprep.subr.mxu0 0.0
    %1320 = vmatpush1.msra.mxu0 0.0
    %1321 = vmatprep.subr.mxu0 0.0
    %1322 = vmatpush1.msra.mxu0 0.0
    %1323 = vmatprep.subr.mxu0 0.0
    %1324 = vmatpush1.msra.mxu0 0.0
    %1325 = vmatprep.subr.mxu0 0.0
    %1326 = vmatpush1.msra.mxu0 0.0
    %1327 = vmatprep.subr.mxu0 0.0
    %1328 = vmatpush1.msra.mxu0 0.0
    %1329 = vmatprep.subr.mxu0 0.0
    %1330 = vmatpush1.msra.mxu0 0.0
    %1331 = vmatprep.subr.mxu0 0.0
    %1332 = vmatpush1.msra.mxu0 0.0
    %1333 = vmatprep.subr.mxu0 0.0
    %1334 = vmatpush1.msra.mxu0 0.0
    %1335 = vmatprep.subr.mxu0 0.0
    %1336 = vmatpush1.msra.mxu0 0.0
    %1337 = vmatprep.mubr.f32.mxu0 0.0
    %1338 = vmatmul.mubr.f32.gmra.mrb[0].mxu0 %v372
    %v1339 = vpop.f32.mrb[0].mxu0
    %v1340 = vadd.f32 0.0, %v1339
    %v1341 = vpop.f32.mrb[0].mxu0
    %1342 = vmatprep.mubr.f32.mxu0 0.0
    %1343 = vmatmul.mubr.f32.gmra.mrb[0].mxu0 %v375
    %v1344 = vpop.f32.mrb[0].mxu0
    %v1345 = vadd.f32 0.0, %v1344
    %v1346 = vpop.f32.mrb[0].mxu0
    %1347 = vdwg.mxu0
    %v1349 = vsel %vm701, %v1340, 0
    %v1352 = vsel %vm701, %v1180, 0
    %1354 = vmatprep.subr.mxu0 0.0
    %1355 = vmatpush1.xpose.msra.mxu0 %v1352
    %1356 = vmatprep.subr.mxu0 0.0
    %1357 = vmatpush1.xpose.msra.mxu0 0.0
    %1358 = vmatprep.subr.mxu0 0.0
    %1359 = vmatpush1.xpose.msra.mxu0 0.0
    %1360 = vmatprep.subr.mxu0 0.0
    %1361 = vmatpush1.xpose.msra.mxu0 0.0
    %1362 = vmatprep.subr.mxu0 0.0
    %1363 = vmatpush1.xpose.msra.mxu0 0.0
    %1364 = vmatprep.subr.mxu0 0.0
    %1365 = vmatpush1.xpose.msra.mxu0 0.0
    %1366 = vmatprep.subr.mxu0 0.0
    %1367 = vmatpush1.xpose.msra.mxu0 0.0
    %1368 = vmatprep.subr.mxu0 0.0
    %1369 = vmatpush1.xpose.msra.mxu0 0.0
    %1370 = vmatprep.subr.mxu0 0.0
    %1371 = vmatpush1.xpose.msra.mxu0 0.0
    %1372 = vmatprep.subr.mxu0 0.0
    %1373 = vmatpush1.xpose.msra.mxu0 0.0
    %1374 = vmatprep.subr.mxu0 0.0
    %1375 = vmatpush1.xpose.msra.mxu0 0.0
    %1376 = vmatprep.subr.mxu0 0.0
    %1377 = vmatpush1.xpose.msra.mxu0 0.0
    %1378 = vmatprep.subr.mxu0 0.0
    %1379 = vmatpush1.xpose.msra.mxu0 0.0
    %1380 = vmatprep.subr.mxu0 0.0
    %1381 = vmatpush1.xpose.msra.mxu0 0.0
    %1382 = vmatprep.subr.mxu0 0.0
    %1383 = vmatpush1.xpose.msra.mxu0 0.0
    %1384 = vmatprep.subr.mxu0 0.0
    %1385 = vmatpush1.xpose.msra.mxu0 0.0
    %1386 = vmatprep.subr.mxu0 0.0
    %1387 = vmatpush1.xpose.msra.mxu0 0.0
    %1388 = vmatprep.subr.mxu0 0.0
    %1389 = vmatpush1.xpose.msra.mxu0 0.0
    %1390 = vmatprep.subr.mxu0 0.0
    %1391 = vmatpush1.xpose.msra.mxu0 0.0
    %1392 = vmatprep.subr.mxu0 0.0
    %1393 = vmatpush1.xpose.msra.mxu0 0.0
    %1394 = vmatprep.subr.mxu0 0.0
    %1395 = vmatpush1.xpose.msra.mxu0 0.0
    %1396 = vmatprep.subr.mxu0 0.0
    %1397 = vmatpush1.xpose.msra.mxu0 0.0
    %1398 = vmatprep.subr.mxu0 0.0
    %1399 = vmatpush1.xpose.msra.mxu0 0.0
    %1400 = vmatprep.subr.mxu0 0.0
    %1401 = vmatpush1.xpose.msra.mxu0 0.0
    %1402 = vmatprep.subr.mxu0 0.0
    %1403 = vmatpush1.xpose.msra.mxu0 0.0
    %1404 = vmatprep.subr.mxu0 0.0
    %1405 = vmatpush1.xpose.msra.mxu0 0.0
    %1406 = vmatprep.subr.mxu0 0.0
    %1407 = vmatpush1.xpose.msra.mxu0 0.0
    %1408 = vmatprep.subr.mxu0 0.0
    %1409 = vmatpush1.xpose.msra.mxu0 0.0
    %1410 = vmatprep.subr.mxu0 0.0
    %1411 = vmatpush1.xpose.msra.mxu0 0.0
    %1412 = vmatprep.subr.mxu0 0.0
    %1413 = vmatpush1.xpose.msra.mxu0 0.0
    %1414 = vmatprep.subr.mxu0 0.0
    %1415 = vmatpush1.xpose.msra.mxu0 0.0
    %1416 = vmatprep.subr.mxu0 0.0
    %1417 = vmatpush1.xpose.msra.mxu0 0.0
    %1418 = vmatprep.mubr.f32.mxu0 0.0
    %1419 = vmatmul.mubr.f32.gmra.mrb[0].mxu0 %v1349
    %v1420 = vpop.f32.mrb[0].mxu0
    %v1421 = vadd.f32 0.0, %v1420
    %v1422 = vpop.f32.mrb[0].mxu0
    %1423 = vdwg.mxu0
    %v1425 = vsel %vm701, %v1345, 0
    %v1428 = vsel %vm701, %v1185, 0
    %1430 = vmatprep.subr.mxu0 0.0
    %1431 = vmatpush1.xpose.msra.mxu0 %v1428
    %1432 = vmatprep.subr.mxu0 0.0
    %1433 = vmatpush1.xpose.msra.mxu0 0.0
    %1434 = vmatprep.subr.mxu0 0.0
    %1435 = vmatpush1.xpose.msra.mxu0 0.0
    %1436 = vmatprep.subr.mxu0 0.0
    %1437 = vmatpush1.xpose.msra.mxu0 0.0
    %1438 = vmatprep.subr.mxu0 0.0
    %1439 = vmatpush1.xpose.msra.mxu0 0.0
    %1440 = vmatprep.subr.mxu0 0.0
    %1441 = vmatpush1.xpose.msra.mxu0 0.0
    %1442 = vmatprep.subr.mxu0 0.0
    %1443 = vmatpush1.xpose.msra.mxu0 0.0
    %1444 = vmatprep.subr.mxu0 0.0
    %1445 = vmatpush1.xpose.msra.mxu0 0.0
    %1446 = vmatprep.subr.mxu0 0.0
    %1447 = vmatpush1.xpose.msra.mxu0 0.0
    %1448 = vmatprep.subr.mxu0 0.0
    %1449 = vmatpush1.xpose.msra.mxu0 0.0
    %1450 = vmatprep.subr.mxu0 0.0
    %1451 = vmatpush1.xpose.msra.mxu0 0.0
    %1452 = vmatprep.subr.mxu0 0.0
    %1453 = vmatpush1.xpose.msra.mxu0 0.0
    %1454 = vmatprep.subr.mxu0 0.0
    %1455 = vmatpush1.xpose.msra.mxu0 0.0
    %1456 = vmatprep.subr.mxu0 0.0
    %1457 = vmatpush1.xpose.msra.mxu0 0.0
    %1458 = vmatprep.subr.mxu0 0.0
    %1459 = vmatpush1.xpose.msra.mxu0 0.0
    %1460 = vmatprep.subr.mxu0 0.0
    %1461 = vmatpush1.xpose.msra.mxu0 0.0
    %1462 = vmatprep.subr.mxu0 0.0
    %1463 = vmatpush1.xpose.msra.mxu0 0.0
    %1464 = vmatprep.subr.mxu0 0.0
    %1465 = vmatpush1.xpose.msra.mxu0 0.0
    %1466 = vmatprep.subr.mxu0 0.0
    %1467 = vmatpush1.xpose.msra.mxu0 0.0
    %1468 = vmatprep.subr.mxu0 0.0
    %1469 = vmatpush1.xpose.msra.mxu0 0.0
    %1470 = vmatprep.subr.mxu0 0.0
    %1471 = vmatpush1.xpose.msra.mxu0 0.0
    %1472 = vmatprep.subr.mxu0 0.0
    %1473 = vmatpush1.xpose.msra.mxu0 0.0
    %1474 = vmatprep.subr.mxu0 0.0
    %1475 = vmatpush1.xpose.msra.mxu0 0.0
    %1476 = vmatprep.subr.mxu0 0.0
    %1477 = vmatpush1.xpose.msra.mxu0 0.0
    %1478 = vmatprep.subr.mxu0 0.0
    %1479 = vmatpush1.xpose.msra.mxu0 0.0
    %1480 = vmatprep.subr.mxu0 0.0
    %1481 = vmatpush1.xpose.msra.mxu0 0.0
    %1482 = vmatprep.subr.mxu0 0.0
    %1483 = vmatpush1.xpose.msra.mxu0 0.0
    %1484 = vmatprep.subr.mxu0 0.0
    %1485 = vmatpush1.xpose.msra.mxu0 0.0
    %1486 = vmatprep.subr.mxu0 0.0
    %1487 = vmatpush1.xpose.msra.mxu0 0.0
    %1488 = vmatprep.subr.mxu0 0.0
    %1489 = vmatpush1.xpose.msra.mxu0 0.0
    %1490 = vmatprep.subr.mxu0 0.0
    %1491 = vmatpush1.xpose.msra.mxu0 0.0
    %1492 = vmatprep.subr.mxu0 0.0
    %1493 = vmatpush1.xpose.msra.mxu0 0.0
    %1494 = vmatprep.mubr.f32.mxu0 0.0
    %1495 = vmatmul.mubr.f32.gmra.mrb[0].mxu0 %v1425
    %v1496 = vpop.f32.mrb[0].mxu0
    %v1497 = vadd.f32 0.0, %v1496
    %v1498 = vpop.f32.mrb[0].mxu0
    %1499 = vdwg.mxu0
    %v1500 = vmul.f32 %v1421, 0.35355338
    %v1501 = vmul.f32 %v1497, 0.35355338
    %v1502 = vsel %vm701, %v1500, -inf
    %1503 = vmax.xlane.f32.xlu0 %v1502
    %v1504 = vpop.xlane.xlu0 %1503
    %v1505 = vsel %vm701, %v1501, -inf
    %1506 = vmax.xlane.f32.xlu0 %v1505
    %v1507 = vpop.xlane.xlu0 %1506
    %v1508 = vsub.f32 %v1500, %v1504
    %v1509 = vsub.f32 %v1501, %v1507
    %v1510 = vmul.f32 %v1508, 1.442695
    %v1511 = vpow.pop %v1510
    %v1512 = vmul.f32 %v1509, 1.442695
    %v1513 = vpow.pop %v1512
    %v1514 = vsel %vm701, %v1511, 0.0
    %1515 = vadd.xlane.f32.xlu0 %v1514
    %v1516 = vpop.xlane.xlu0 %1515
    %v1517 = vsel %vm701, %v1513, 0.0
    %1518 = vadd.xlane.f32.xlu0 %v1517
    %v1519 = vpop.xlane.xlu0 %1518
    %v1520 = vrcp.pop %v1516
    %v1521 = vrcp.pop %v1519
    %v1522 = vmul.f32 %v1511, %v1520
    %v1523 = vmul.f32 %v1513, %v1521
    %v1525 = vsel %vm701, %v1522, 0
    %1527 = vmatprep.subr.mxu0 0.0
    %1528 = vmatpush1.msra.mxu0 %v1260
    %1529 = vmatprep.subr.mxu0 0.0
    %1530 = vmatpush1.msra.mxu0 0.0
    %1531 = vmatprep.subr.mxu0 0.0
    %1532 = vmatpush1.msra.mxu0 0.0
    %1533 = vmatprep.subr.mxu0 0.0
    %1534 = vmatpush1.msra.mxu0 0.0
    %1535 = vmatprep.subr.mxu0 0.0
    %1536 = vmatpush1.msra.mxu0 0.0
    %1537 = vmatprep.subr.mxu0 0.0
    %1538 = vmatpush1.msra.mxu0 0.0
    %1539 = vmatprep.subr.mxu0 0.0
    %1540 = vmatpush1.msra.mxu0 0.0
    %1541 = vmatprep.subr.mxu0 0.0
    %1542 = vmatpush1.msra.mxu0 0.0
    %1543 = vmatprep.subr.mxu0 0.0
    %1544 = vmatpush1.msra.mxu0 0.0
    %1545 = vmatprep.subr.mxu0 0.0
    %1546 = vmatpush1.msra.mxu0 0.0
    %1547 = vmatprep.subr.mxu0 0.0
    %1548 = vmatpush1.msra.mxu0 0.0
    %1549 = vmatprep.subr.mxu0 0.0
    %1550 = vmatpush1.msra.mxu0 0.0
    %1551 = vmatprep.subr.mxu0 0.0
    %1552 = vmatpush1.msra.mxu0 0.0
    %1553 = vmatprep.subr.mxu0 0.0
    %1554 = vmatpush1.msra.mxu0 0.0
    %1555 = vmatprep.subr.mxu0 0.0
    %1556 = vmatpush1.msra.mxu0 0.0
    %1557 = vmatprep.subr.mxu0 0.0
    %1558 = vmatpush1.msra.mxu0 0.0
    %1559 = vmatprep.subr.mxu0 0.0
    %1560 = vmatpush1.msra.mxu0 0.0
    %1561 = vmatprep.subr.mxu0 0.0
    %1562 = vmatpush1.msra.mxu0 0.0
    %1563 = vmatprep.subr.mxu0 0.0
    %1564 = vmatpush1.msra.mxu0 0.0
    %1565 = vmatprep.subr.mxu0 0.0
    %1566 = vmatpush1.msra.mxu0 0.0
    %1567 = vmatprep.subr.mxu0 0.0
    %1568 = vmatpush1.msra.mxu0 0.0
    %1569 = vmatprep.subr.mxu0 0.0
    %1570 = vmatpush1.msra.mxu0 0.0
    %1571 = vmatprep.subr.mxu0 0.0
    %1572 = vmatpush1.msra.mxu0 0.0
    %1573 = vmatprep.subr.mxu0 0.0
    %1574 = vmatpush1.msra.mxu0 0.0
    %1575 = vmatprep.subr.mxu0 0.0
    %1576 = vmatpush1.msra.mxu0 0.0
    %1577 = vmatprep.subr.mxu0 0.0
    %1578 = vmatpush1.msra.mxu0 0.0
    %1579 = vmatprep.subr.mxu0 0.0
    %1580 = vmatpush1.msra.mxu0 0.0
    %1581 = vmatprep.subr.mxu0 0.0
    %1582 = vmatpush1.msra.mxu0 0.0
    %1583 = vmatprep.subr.mxu0 0.0
    %1584 = vmatpush1.msra.mxu0 0.0
    %1585 = vmatprep.subr.mxu0 0.0
    %1586 = vmatpush1.msra.mxu0 0.0
    %1587 = vmatprep.subr.mxu0 0.0
    %1588 = vmatpush1.msra.mxu0 0.0
    %1589 = vmatprep.subr.mxu0 0.0
    %1590 = vmatpush1.msra.mxu0 0.0
    %1591 = vmatprep.mubr.f32.mxu0 0.0
    %1592 = vmatmul.mubr.f32.gmra.mrb[0].mxu0 %v1525
    %v1593 = vpop.f32.mrb[0].mxu0
    %v1594 = vadd.f32 0.0, %v1593
    %v1595 = vpop.f32.mrb[0].mxu0
    %1596 = vdwg.mxu0
    %v1598 = vsel %vm701, %v1523, 0
    %1600 = vmatprep.subr.mxu0 0.0
    %1601 = vmatpush1.msra.mxu0 %v1265
    %1602 = vmatprep.subr.mxu0 0.0
    %1603 = vmatpush1.msra.mxu0 0.0
    %1604 = vmatprep.subr.mxu0 0.0
    %1605 = vmatpush1.msra.mxu0 0.0
    %1606 = vmatprep.subr.mxu0 0.0
    %1607 = vmatpush1.msra.mxu0 0.0
    %1608 = vmatprep.subr.mxu0 0.0
    %1609 = vmatpush1.msra.mxu0 0.0
    %1610 = vmatprep.subr.mxu0 0.0
    %1611 = vmatpush1.msra.mxu0 0.0
    %1612 = vmatprep.subr.mxu0 0.0
    %1613 = vmatpush1.msra.mxu0 0.0
    %1614 = vmatprep.subr.mxu0 0.0
    %1615 = vmatpush1.msra.mxu0 0.0
    %1616 = vmatprep.subr.mxu0 0.0
    %1617 = vmatpush1.msra.mxu0 0.0
    %1618 = vmatprep.subr.mxu0 0.0
    %1619 = vmatpush1.msra.mxu0 0.0
    %1620 = vmatprep.subr.mxu0 0.0
    %1621 = vmatpush1.msra.mxu0 0.0
    %1622 = vmatprep.subr.mxu0 0.0
    %1623 = vmatpush1.msra.mxu0 0.0
    %1624 = vmatprep.subr.mxu0 0.0
    %1625 = vmatpush1.msra.mxu0 0.0
    %1626 = vmatprep.subr.mxu0 0.0
    %1627 = vmatpush1.msra.mxu0 0.0
    %1628 = vmatprep.subr.mxu0 0.0
    %1629 = vmatpush1.msra.mxu0 0.0
    %1630 = vmatprep.subr.mxu0 0.0
    %1631 = vmatpush1.msra.mxu0 0.0
    %1632 = vmatprep.subr.mxu0 0.0
    %1633 = vmatpush1.msra.mxu0 0.0
    %1634 = vmatprep.subr.mxu0 0.0
    %1635 = vmatpush1.msra.mxu0 0.0
    %1636 = vmatprep.subr.mxu0 0.0
    %1637 = vmatpush1.msra.mxu0 0.0
    %1638 = vmatprep.subr.mxu0 0.0
    %1639 = vmatpush1.msra.mxu0 0.0
    %1640 = vmatprep.subr.mxu0 0.0
    %1641 = vmatpush1.msra.mxu0 0.0
    %1642 = vmatprep.subr.mxu0 0.0
    %1643 = vmatpush1.msra.mxu0 0.0
    %1644 = vmatprep.subr.mxu0 0.0
    %1645 = vmatpush1.msra.mxu0 0.0
    %1646 = vmatprep.subr.mxu0 0.0
    %1647 = vmatpush1.msra.mxu0 0.0
    %1648 = vmatprep.subr.mxu0 0.0
    %1649 = vmatpush1.msra.mxu0 0.0
    %1650 = vmatprep.subr.mxu0 0.0
    %1651 = vmatpush1.msra.mxu0 0.0
    %1652 = vmatprep.subr.mxu0 0.0
    %1653 = vmatpush1.msra.mxu0 0.0
    %1654 = vmatprep.subr.mxu0 0.0
    %1655 = vmatpush1.msra.mxu0 0.0
    %1656 = vmatprep.subr.mxu0 0.0
    %1657 = vmatpush1.msra.mxu0 0.0
    %1658 = vmatprep.subr.mxu0 0.0
    %1659 = vmatpush1.msra.mxu0 0.0
    %1660 = vmatprep.subr.mxu0 0.0
    %1661 = vmatpush1.msra.mxu0 0.0
    %1662 = vmatprep.subr.mxu0 0.0
    %1663 = vmatpush1.msra.mxu0 0.0
    %1664 = vmatprep.mubr.f32.mxu0 0.0
    %1665 = vmatmul.mubr.f32.gmra.mrb[0].mxu0 %v1598
    %v1666 = vpop.f32.mrb[0].mxu0
    %v1667 = vadd.f32 0.0, %v1666
    %v1668 = vpop.f32.mrb[0].mxu0
    %1669 = vdwg.mxu0
    %s1670 = scalar_lea.vmem %s14, 8
    %v1671 = vld [vmem:[%s1670] sm:$0xff]
    %v1673 = vsel %vm701, %v1594, 0
    %v1676 = vsel %vm701, %v1667, 0
    %1678 = vmatprep.subr.mxu0 0.0
    %1679 = vmatpush1.msra.mxu0 %v1671
    %1680 = vmatprep.subr.mxu0 0.0
    %1681 = vmatpush1.msra.mxu0 0.0
    %1682 = vmatprep.subr.mxu0 0.0
    %1683 = vmatpush1.msra.mxu0 0.0
    %1684 = vmatprep.subr.mxu0 0.0
    %1685 = vmatpush1.msra.mxu0 0.0
    %1686 = vmatprep.subr.mxu0 0.0
    %1687 = vmatpush1.msra.mxu0 0.0
    %1688 = vmatprep.subr.mxu0 0.0
    %1689 = vmatpush1.msra.mxu0 0.0
    %1690 = vmatprep.subr.mxu0 0.0
    %1691 = vmatpush1.msra.mxu0 0.0
    %1692 = vmatprep.subr.mxu0 0.0
    %1693 = vmatpush1.msra.mxu0 0.0
    %1694 = vmatprep.subr.mxu0 0.0
    %1695 = vmatpush1.msra.mxu0 0.0
    %1696 = vmatprep.subr.mxu0 0.0
    %1697 = vmatpush1.msra.mxu0 0.0
    %1698 = vmatprep.subr.mxu0 0.0
    %1699 = vmatpush1.msra.mxu0 0.0
    %1700 = vmatprep.subr.mxu0 0.0
    %1701 = vmatpush1.msra.mxu0 0.0
    %1702 = vmatprep.subr.mxu0 0.0
    %1703 = vmatpush1.msra.mxu0 0.0
    %1704 = vmatprep.subr.mxu0 0.0
    %1705 = vmatpush1.msra.mxu0 0.0
    %1706 = vmatprep.subr.mxu0 0.0
    %1707 = vmatpush1.msra.mxu0 0.0
    %1708 = vmatprep.subr.mxu0 0.0
    %1709 = vmatpush1.msra.mxu0 0.0
    %1710 = vmatprep.subr.mxu0 0.0
    %1711 = vmatpush1.msra.mxu0 0.0
    %1712 = vmatprep.subr.mxu0 0.0
    %1713 = vmatpush1.msra.mxu0 0.0
    %1714 = vmatprep.subr.mxu0 0.0
    %1715 = vmatpush1.msra.mxu0 0.0
    %1716 = vmatprep.subr.mxu0 0.0
    %1717 = vmatpush1.msra.mxu0 0.0
    %1718 = vmatprep.subr.mxu0 0.0
    %1719 = vmatpush1.msra.mxu0 0.0
    %1720 = vmatprep.subr.mxu0 0.0
    %1721 = vmatpush1.msra.mxu0 0.0
    %1722 = vmatprep.subr.mxu0 0.0
    %1723 = vmatpush1.msra.mxu0 0.0
    %1724 = vmatprep.subr.mxu0 0.0
    %1725 = vmatpush1.msra.mxu0 0.0
    %1726 = vmatprep.subr.mxu0 0.0
    %1727 = vmatpush1.msra.mxu0 0.0
    %1728 = vmatprep.subr.mxu0 0.0
    %1729 = vmatpush1.msra.mxu0 0.0
    %1730 = vmatprep.subr.mxu0 0.0
    %1731 = vmatpush1.msra.mxu0 0.0
    %1732 = vmatprep.subr.mxu0 0.0
    %1733 = vmatpush1.msra.mxu0 0.0
    %1734 = vmatprep.subr.mxu0 0.0
    %1735 = vmatpush1.msra.mxu0 0.0
    %1736 = vmatprep.subr.mxu0 0.0
    %1737 = vmatpush1.msra.mxu0 0.0
    %1738 = vmatprep.subr.mxu0 0.0
    %1739 = vmatpush1.msra.mxu0 0.0
    %1740 = vmatprep.subr.mxu0 0.0
    %1741 = vmatpush1.msra.mxu0 0.0
    %1742 = vmatprep.mubr.f32.mxu0 0.0
    %1743 = vmatmul.mubr.f32.gmra.mrb[0].mxu0 %v1673
    %v1744 = vpop.f32.mrb[0].mxu0
    %v1745 = vadd.f32 0.0, %v1744
    %v1746 = vpop.f32.mrb[0].mxu0
    %1747 = vmatprep.mubr.f32.mxu0 0.0
    %1748 = vmatmul.mubr.f32.gmra.mrb[0].mxu0 %v1676
    %v1749 = vpop.f32.mrb[0].mxu0
    %v1750 = vadd.f32 0.0, %v1749
    %v1751 = vpop.f32.mrb[0].mxu0
    %1752 = vdwg.mxu0
    %v1753 = vadd.f32 %v1106, %v1745
    %v1754 = vadd.f32 %v1107, %v1750
    %s1755 = scalar_lea.vmem %s10, 64
    %v1756 = vld [vmem:[%s1755] sm:$0xff]
    %v1757 = vld [vmem:[%s1755 + $0x8] sm:$0xff]
    %v1758 = vld [vmem:[%s1755 + $0x10] sm:$0xff]
    %v1759 = vld [vmem:[%s1755 + $0x18] sm:$0xff]
    %1760 = vmatprep.subr.mxu0 0.0
    %1761 = vmatpush1.msra.mxu0 %v1756
    %1762 = vmatprep.subr.mxu0 0.0
    %1763 = vmatpush1.msra.mxu0 %v1757
    %1764 = vmatprep.subr.mxu0 0.0
    %1765 = vmatpush1.msra.mxu0 %v1758
    %1766 = vmatprep.subr.mxu0 0.0
    %1767 = vmatpush1.msra.mxu0 %v1759
    %1768 = vmatprep.subr.mxu0 0.0
    %1769 = vmatpush1.msra.mxu0 0.0
    %1770 = vmatprep.subr.mxu0 0.0
    %1771 = vmatpush1.msra.mxu0 0.0
    %1772 = vmatprep.subr.mxu0 0.0
    %1773 = vmatpush1.msra.mxu0 0.0
    %1774 = vmatprep.subr.mxu0 0.0
    %1775 = vmatpush1.msra.mxu0 0.0
    %1776 = vmatprep.subr.mxu0 0.0
    %1777 = vmatpush1.msra.mxu0 0.0
    %1778 = vmatprep.subr.mxu0 0.0
    %1779 = vmatpush1.msra.mxu0 0.0
    %1780 = vmatprep.subr.mxu0 0.0
    %1781 = vmatpush1.msra.mxu0 0.0
    %1782 = vmatprep.subr.mxu0 0.0
    %1783 = vmatpush1.msra.mxu0 0.0
    %1784 = vmatprep.subr.mxu0 0.0
    %1785 = vmatpush1.msra.mxu0 0.0
    %1786 = vmatprep.subr.mxu0 0.0
    %1787 = vmatpush1.msra.mxu0 0.0
    %1788 = vmatprep.subr.mxu0 0.0
    %1789 = vmatpush1.msra.mxu0 0.0
    %1790 = vmatprep.subr.mxu0 0.0
    %1791 = vmatpush1.msra.mxu0 0.0
    %1792 = vmatprep.subr.mxu0 0.0
    %1793 = vmatpush1.msra.mxu0 0.0
    %1794 = vmatprep.subr.mxu0 0.0
    %1795 = vmatpush1.msra.mxu0 0.0
    %1796 = vmatprep.subr.mxu0 0.0
    %1797 = vmatpush1.msra.mxu0 0.0
    %1798 = vmatprep.subr.mxu0 0.0
    %1799 = vmatpush1.msra.mxu0 0.0
    %1800 = vmatprep.subr.mxu0 0.0
    %1801 = vmatpush1.msra.mxu0 0.0
    %1802 = vmatprep.subr.mxu0 0.0
    %1803 = vmatpush1.msra.mxu0 0.0
    %1804 = vmatprep.subr.mxu0 0.0
    %1805 = vmatpush1.msra.mxu0 0.0
    %1806 = vmatprep.subr.mxu0 0.0
    %1807 = vmatpush1.msra.mxu0 0.0
    %1808 = vmatprep.subr.mxu0 0.0
    %1809 = vmatpush1.msra.mxu0 0.0
    %1810 = vmatprep.subr.mxu0 0.0
    %1811 = vmatpush1.msra.mxu0 0.0
    %1812 = vmatprep.subr.mxu0 0.0
    %1813 = vmatpush1.msra.mxu0 0.0
    %1814 = vmatprep.subr.mxu0 0.0
    %1815 = vmatpush1.msra.mxu0 0.0
    %1816 = vmatprep.subr.mxu0 0.0
    %1817 = vmatpush1.msra.mxu0 0.0
    %1818 = vmatprep.subr.mxu0 0.0
    %1819 = vmatpush1.msra.mxu0 0.0
    %1820 = vmatprep.subr.mxu0 0.0
    %1821 = vmatpush1.msra.mxu0 0.0
    %1822 = vmatprep.subr.mxu0 0.0
    %1823 = vmatpush1.msra.mxu0 0.0
    %1824 = vmatprep.mubr.f32.mxu0 0.0
    %1825 = vmatmul.mubr.f32.gmra.mrb[0].mxu0 %v457
    %v1826 = vpop.f32.mrb[0].mxu0
    %v1827 = vadd.f32 0.0, %v1826
    %v1828 = vpop.f32.mrb[0].mxu0
    %1829 = vmatprep.mubr.f32.mxu0 0.0
    %1830 = vmatmul.mubr.f32.gmra.mrb[0].mxu0 %v460
    %v1831 = vpop.f32.mrb[0].mxu0
    %v1832 = vadd.f32 0.0, %v1831
    %v1833 = vpop.f32.mrb[0].mxu0
    %1834 = vdwg.mxu0
    %s1835 = scalar_lea.vmem %s11, 64
    %v1836 = vld [vmem:[%s1835] sm:$0xff]
    %v1837 = vld [vmem:[%s1835 + $0x8] sm:$0xff]
    %v1838 = vld [vmem:[%s1835 + $0x10] sm:$0xff]
    %v1839 = vld [vmem:[%s1835 + $0x18] sm:$0xff]
    %1840 = vmatprep.subr.mxu0 0.0
    %1841 = vmatpush1.msra.mxu0 %v1836
    %1842 = vmatprep.subr.mxu0 0.0
    %1843 = vmatpush1.msra.mxu0 %v1837
    %1844 = vmatprep.subr.mxu0 0.0
    %1845 = vmatpush1.msra.mxu0 %v1838
    %1846 = vmatprep.subr.mxu0 0.0
    %1847 = vmatpush1.msra.mxu0 %v1839
    %1848 = vmatprep.subr.mxu0 0.0
    %1849 = vmatpush1.msra.mxu0 0.0
    %1850 = vmatprep.subr.mxu0 0.0
    %1851 = vmatpush1.msra.mxu0 0.0
    %1852 = vmatprep.subr.mxu0 0.0
    %1853 = vmatpush1.msra.mxu0 0.0
    %1854 = vmatprep.subr.mxu0 0.0
    %1855 = vmatpush1.msra.mxu0 0.0
    %1856 = vmatprep.subr.mxu0 0.0
    %1857 = vmatpush1.msra.mxu0 0.0
    %1858 = vmatprep.subr.mxu0 0.0
    %1859 = vmatpush1.msra.mxu0 0.0
    %1860 = vmatprep.subr.mxu0 0.0
    %1861 = vmatpush1.msra.mxu0 0.0
    %1862 = vmatprep.subr.mxu0 0.0
    %1863 = vmatpush1.msra.mxu0 0.0
    %1864 = vmatprep.subr.mxu0 0.0
    %1865 = vmatpush1.msra.mxu0 0.0
    %1866 = vmatprep.subr.mxu0 0.0
    %1867 = vmatpush1.msra.mxu0 0.0
    %1868 = vmatprep.subr.mxu0 0.0
    %1869 = vmatpush1.msra.mxu0 0.0
    %1870 = vmatprep.subr.mxu0 0.0
    %1871 = vmatpush1.msra.mxu0 0.0
    %1872 = vmatprep.subr.mxu0 0.0
    %1873 = vmatpush1.msra.mxu0 0.0
    %1874 = vmatprep.subr.mxu0 0.0
    %1875 = vmatpush1.msra.mxu0 0.0
    %1876 = vmatprep.subr.mxu0 0.0
    %1877 = vmatpush1.msra.mxu0 0.0
    %1878 = vmatprep.subr.mxu0 0.0
    %1879 = vmatpush1.msra.mxu0 0.0
    %1880 = vmatprep.subr.mxu0 0.0
    %1881 = vmatpush1.msra.mxu0 0.0
    %1882 = vmatprep.subr.mxu0 0.0
    %1883 = vmatpush1.msra.mxu0 0.0
    %1884 = vmatprep.subr.mxu0 0.0
    %1885 = vmatpush1.msra.mxu0 0.0
    %1886 = vmatprep.subr.mxu0 0.0
    %1887 = vmatpush1.msra.mxu0 0.0
    %1888 = vmatprep.subr.mxu0 0.0
    %1889 = vmatpush1.msra.mxu0 0.0
    %1890 = vmatprep.subr.mxu0 0.0
    %1891 = vmatpush1.msra.mxu0 0.0
    %1892 = vmatprep.subr.mxu0 0.0
    %1893 = vmatpush1.msra.mxu0 0.0
    %1894 = vmatprep.subr.mxu0 0.0
    %1895 = vmatpush1.msra.mxu0 0.0
    %1896 = vmatprep.subr.mxu0 0.0
    %1897 = vmatpush1.msra.mxu0 0.0
    %1898 = vmatprep.subr.mxu0 0.0
    %1899 = vmatpush1.msra.mxu0 0.0
    %1900 = vmatprep.subr.mxu0 0.0
    %1901 = vmatpush1.msra.mxu0 0.0
    %1902 = vmatprep.subr.mxu0 0.0
    %1903 = vmatpush1.msra.mxu0 0.0
    %1904 = vmatprep.mubr.f32.mxu0 0.0
    %1905 = vmatmul.mubr.f32.gmra.mrb[0].mxu0 %v542
    %v1906 = vpop.f32.mrb[0].mxu0
    %v1907 = vadd.f32 0.0, %v1906
    %v1908 = vpop.f32.mrb[0].mxu0
    %1909 = vmatprep.mubr.f32.mxu0 0.0
    %1910 = vmatmul.mubr.f32.gmra.mrb[0].mxu0 %v545
    %v1911 = vpop.f32.mrb[0].mxu0
    %v1912 = vadd.f32 0.0, %v1911
    %v1913 = vpop.f32.mrb[0].mxu0
    %1914 = vdwg.mxu0
    %s1915 = scalar_lea.vmem %s12, 64
    %v1916 = vld [vmem:[%s1915] sm:$0xff]
    %v1917 = vld [vmem:[%s1915 + $0x8] sm:$0xff]
    %v1918 = vld [vmem:[%s1915 + $0x10] sm:$0xff]
    %v1919 = vld [vmem:[%s1915 + $0x18] sm:$0xff]
    %1920 = vmatprep.subr.mxu0 0.0
    %1921 = vmatpush1.msra.mxu0 %v1916
    %1922 = vmatprep.subr.mxu0 0.0
    %1923 = vmatpush1.msra.mxu0 %v1917
    %1924 = vmatprep.subr.mxu0 0.0
    %1925 = vmatpush1.msra.mxu0 %v1918
    %1926 = vmatprep.subr.mxu0 0.0
    %1927 = vmatpush1.msra.mxu0 %v1919
    %1928 = vmatprep.subr.mxu0 0.0
    %1929 = vmatpush1.msra.mxu0 0.0
    %1930 = vmatprep.subr.mxu0 0.0
    %1931 = vmatpush1.msra.mxu0 0.0
    %1932 = vmatprep.subr.mxu0 0.0
    %1933 = vmatpush1.msra.mxu0 0.0
    %1934 = vmatprep.subr.mxu0 0.0
    %1935 = vmatpush1.msra.mxu0 0.0
    %1936 = vmatprep.subr.mxu0 0.0
    %1937 = vmatpush1.msra.mxu0 0.0
    %1938 = vmatprep.subr.mxu0 0.0
    %1939 = vmatpush1.msra.mxu0 0.0
    %1940 = vmatprep.subr.mxu0 0.0
    %1941 = vmatpush1.msra.mxu0 0.0
    %1942 = vmatprep.subr.mxu0 0.0
    %1943 = vmatpush1.msra.mxu0 0.0
    %1944 = vmatprep.subr.mxu0 0.0
    %1945 = vmatpush1.msra.mxu0 0.0
    %1946 = vmatprep.subr.mxu0 0.0
    %1947 = vmatpush1.msra.mxu0 0.0
    %1948 = vmatprep.subr.mxu0 0.0
    %1949 = vmatpush1.msra.mxu0 0.0
    %1950 = vmatprep.subr.mxu0 0.0
    %1951 = vmatpush1.msra.mxu0 0.0
    %1952 = vmatprep.subr.mxu0 0.0
    %1953 = vmatpush1.msra.mxu0 0.0
    %1954 = vmatprep.subr.mxu0 0.0
    %1955 = vmatpush1.msra.mxu0 0.0
    %1956 = vmatprep.subr.mxu0 0.0
    %1957 = vmatpush1.msra.mxu0 0.0
    %1958 = vmatprep.subr.mxu0 0.0
    %1959 = vmatpush1.msra.mxu0 0.0
    %1960 = vmatprep.subr.mxu0 0.0
    %1961 = vmatpush1.msra.mxu0 0.0
    %1962 = vmatprep.subr.mxu0 0.0
    %1963 = vmatpush1.msra.mxu0 0.0
    %1964 = vmatprep.subr.mxu0 0.0
    %1965 = vmatpush1.msra.mxu0 0.0
    %1966 = vmatprep.subr.mxu0 0.0
    %1967 = vmatpush1.msra.mxu0 0.0
    %1968 = vmatprep.subr.mxu0 0.0
    %1969 = vmatpush1.msra.mxu0 0.0
    %1970 = vmatprep.subr.mxu0 0.0
    %1971 = vmatpush1.msra.mxu0 0.0
    %1972 = vmatprep.subr.mxu0 0.0
    %1973 = vmatpush1.msra.mxu0 0.0
    %1974 = vmatprep.subr.mxu0 0.0
    %1975 = vmatpush1.msra.mxu0 0.0
    %1976 = vmatprep.subr.mxu0 0.0
    %1977 = vmatpush1.msra.mxu0 0.0
    %1978 = vmatprep.subr.mxu0 0.0
    %1979 = vmatpush1.msra.mxu0 0.0
    %1980 = vmatprep.subr.mxu0 0.0
    %1981 = vmatpush1.msra.mxu0 0.0
    %1982 = vmatprep.subr.mxu0 0.0
    %1983 = vmatpush1.msra.mxu0 0.0
    %1984 = vmatprep.mubr.f32.mxu0 0.0
    %1985 = vmatmul.mubr.f32.gmra.mrb[0].mxu0 %v372
    %v1986 = vpop.f32.mrb[0].mxu0
    %v1987 = vadd.f32 0.0, %v1986
    %v1988 = vpop.f32.mrb[0].mxu0
    %1989 = vmatprep.mubr.f32.mxu0 0.0
    %1990 = vmatmul.mubr.f32.gmra.mrb[0].mxu0 %v375
    %v1991 = vpop.f32.mrb[0].mxu0
    %v1992 = vadd.f32 0.0, %v1991
    %v1993 = vpop.f32.mrb[0].mxu0
    %1994 = vdwg.mxu0
    %v1996 = vsel %vm701, %v1987, 0
    %v1999 = vsel %vm701, %v1827, 0
    %2001 = vmatprep.subr.mxu0 0.0
    %2002 = vmatpush1.xpose.msra.mxu0 %v1999
    %2003 = vmatprep.subr.mxu0 0.0
    %2004 = vmatpush1.xpose.msra.mxu0 0.0
    %2005 = vmatprep.subr.mxu0 0.0
    %2006 = vmatpush1.xpose.msra.mxu0 0.0
    %2007 = vmatprep.subr.mxu0 0.0
    %2008 = vmatpush1.xpose.msra.mxu0 0.0
    %2009 = vmatprep.subr.mxu0 0.0
    %2010 = vmatpush1.xpose.msra.mxu0 0.0
    %2011 = vmatprep.subr.mxu0 0.0
    %2012 = vmatpush1.xpose.msra.mxu0 0.0
    %2013 = vmatprep.subr.mxu0 0.0
    %2014 = vmatpush1.xpose.msra.mxu0 0.0
    %2015 = vmatprep.subr.mxu0 0.0
    %2016 = vmatpush1.xpose.msra.mxu0 0.0
    %2017 = vmatprep.subr.mxu0 0.0
    %2018 = vmatpush1.xpose.msra.mxu0 0.0
    %2019 = vmatprep.subr.mxu0 0.0
    %2020 = vmatpush1.xpose.msra.mxu0 0.0
    %2021 = vmatprep.subr.mxu0 0.0
    %2022 = vmatpush1.xpose.msra.mxu0 0.0
    %2023 = vmatprep.subr.mxu0 0.0
    %2024 = vmatpush1.xpose.msra.mxu0 0.0
    %2025 = vmatprep.subr.mxu0 0.0
    %2026 = vmatpush1.xpose.msra.mxu0 0.0
    %2027 = vmatprep.subr.mxu0 0.0
    %2028 = vmatpush1.xpose.msra.mxu0 0.0
    %2029 = vmatprep.subr.mxu0 0.0
    %2030 = vmatpush1.xpose.msra.mxu0 0.0
    %2031 = vmatprep.subr.mxu0 0.0
    %2032 = vmatpush1.xpose.msra.mxu0 0.0
    %2033 = vmatprep.subr.mxu0 0.0
    %2034 = vmatpush1.xpose.msra.mxu0 0.0
    %2035 = vmatprep.subr.mxu0 0.0
    %2036 = vmatpush1.xpose.msra.mxu0 0.0
    %2037 = vmatprep.subr.mxu0 0.0
    %2038 = vmatpush1.xpose.msra.mxu0 0.0
    %2039 = vmatprep.subr.mxu0 0.0
    %2040 = vmatpush1.xpose.msra.mxu0 0.0
    %2041 = vmatprep.subr.mxu0 0.0
    %2042 = vmatpush1.xpose.msra.mxu0 0.0
    %2043 = vmatprep.subr.mxu0 0.0
    %2044 = vmatpush1.xpose.msra.mxu0 0.0
    %2045 = vmatprep.subr.mxu0 0.0
    %2046 = vmatpush1.xpose.msra.mxu0 0.0
    %2047 = vmatprep.subr.mxu0 0.0
    %2048 = vmatpush1.xpose.msra.mxu0 0.0
    %2049 = vmatprep.subr.mxu0 0.0
    %2050 = vmatpush1.xpose.msra.mxu0 0.0
    %2051 = vmatprep.subr.mxu0 0.0
    %2052 = vmatpush1.xpose.msra.mxu0 0.0
    %2053 = vmatprep.subr.mxu0 0.0
    %2054 = vmatpush1.xpose.msra.mxu0 0.0
    %2055 = vmatprep.subr.mxu0 0.0
    %2056 = vmatpush1.xpose.msra.mxu0 0.0
    %2057 = vmatprep.subr.mxu0 0.0
    %2058 = vmatpush1.xpose.msra.mxu0 0.0
    %2059 = vmatprep.subr.mxu0 0.0
    %2060 = vmatpush1.xpose.msra.mxu0 0.0
    %2061 = vmatprep.subr.mxu0 0.0
    %2062 = vmatpush1.xpose.msra.mxu0 0.0
    %2063 = vmatprep.subr.mxu0 0.0
    %2064 = vmatpush1.xpose.msra.mxu0 0.0
    %2065 = vmatprep.mubr.f32.mxu0 0.0
    %2066 = vmatmul.mubr.f32.gmra.mrb[0].mxu0 %v1996
    %v2067 = vpop.f32.mrb[0].mxu0
    %v2068 = vadd.f32 0.0, %v2067
    %v2069 = vpop.f32.mrb[0].mxu0
    %2070 = vdwg.mxu0
    %v2072 = vsel %vm701, %v1992, 0
    %v2075 = vsel %vm701, %v1832, 0
    %2077 = vmatprep.subr.mxu0 0.0
    %2078 = vmatpush1.xpose.msra.mxu0 %v2075
    %2079 = vmatprep.subr.mxu0 0.0
    %2080 = vmatpush1.xpose.msra.mxu0 0.0
    %2081 = vmatprep.subr.mxu0 0.0
    %2082 = vmatpush1.xpose.msra.mxu0 0.0
    %2083 = vmatprep.subr.mxu0 0.0
    %2084 = vmatpush1.xpose.msra.mxu0 0.0
    %2085 = vmatprep.subr.mxu0 0.0
    %2086 = vmatpush1.xpose.msra.mxu0 0.0
    %2087 = vmatprep.subr.mxu0 0.0
    %2088 = vmatpush1.xpose.msra.mxu0 0.0
    %2089 = vmatprep.subr.mxu0 0.0
    %2090 = vmatpush1.xpose.msra.mxu0 0.0
    %2091 = vmatprep.subr.mxu0 0.0
    %2092 = vmatpush1.xpose.msra.mxu0 0.0
    %2093 = vmatprep.subr.mxu0 0.0
    %2094 = vmatpush1.xpose.msra.mxu0 0.0
    %2095 = vmatprep.subr.mxu0 0.0
    %2096 = vmatpush1.xpose.msra.mxu0 0.0
    %2097 = vmatprep.subr.mxu0 0.0
    %2098 = vmatpush1.xpose.msra.mxu0 0.0
    %2099 = vmatprep.subr.mxu0 0.0
    %2100 = vmatpush1.xpose.msra.mxu0 0.0
    %2101 = vmatprep.subr.mxu0 0.0
    %2102 = vmatpush1.xpose.msra.mxu0 0.0
    %2103 = vmatprep.subr.mxu0 0.0
    %2104 = vmatpush1.xpose.msra.mxu0 0.0
    %2105 = vmatprep.subr.mxu0 0.0
    %2106 = vmatpush1.xpose.msra.mxu0 0.0
    %2107 = vmatprep.subr.mxu0 0.0
    %2108 = vmatpush1.xpose.msra.mxu0 0.0
    %2109 = vmatprep.subr.mxu0 0.0
    %2110 = vmatpush1.xpose.msra.mxu0 0.0
    %2111 = vmatprep.subr.mxu0 0.0
    %2112 = vmatpush1.xpose.msra.mxu0 0.0
    %2113 = vmatprep.subr.mxu0 0.0
    %2114 = vmatpush1.xpose.msra.mxu0 0.0
    %2115 = vmatprep.subr.mxu0 0.0
    %2116 = vmatpush1.xpose.msra.mxu0 0.0
    %2117 = vmatprep.subr.mxu0 0.0
    %2118 = vmatpush1.xpose.msra.mxu0 0.0
    %2119 = vmatprep.subr.mxu0 0.0
    %2120 = vmatpush1.xpose.msra.mxu0 0.0
    %2121 = vmatprep.subr.mxu0 0.0
    %2122 = vmatpush1.xpose.msra.mxu0 0.0
    %2123 = vmatprep.subr.mxu0 0.0
    %2124 = vmatpush1.xpose.msra.mxu0 0.0
    %2125 = vmatprep.subr.mxu0 0.0
    %2126 = vmatpush1.xpose.msra.mxu0 0.0
    %2127 = vmatprep.subr.mxu0 0.0
    %2128 = vmatpush1.xpose.msra.mxu0 0.0
    %2129 = vmatprep.subr.mxu0 0.0
    %2130 = vmatpush1.xpose.msra.mxu0 0.0
    %2131 = vmatprep.subr.mxu0 0.0
    %2132 = vmatpush1.xpose.msra.mxu0 0.0
    %2133 = vmatprep.subr.mxu0 0.0
    %2134 = vmatpush1.xpose.msra.mxu0 0.0
    %2135 = vmatprep.subr.mxu0 0.0
    %2136 = vmatpush1.xpose.msra.mxu0 0.0
    %2137 = vmatprep.subr.mxu0 0.0
    %2138 = vmatpush1.xpose.msra.mxu0 0.0
    %2139 = vmatprep.subr.mxu0 0.0
    %2140 = vmatpush1.xpose.msra.mxu0 0.0
    %2141 = vmatprep.mubr.f32.mxu0 0.0
    %2142 = vmatmul.mubr.f32.gmra.mrb[0].mxu0 %v2072
    %v2143 = vpop.f32.mrb[0].mxu0
    %v2144 = vadd.f32 0.0, %v2143
    %v2145 = vpop.f32.mrb[0].mxu0
    %2146 = vdwg.mxu0
    %v2147 = vmul.f32 %v2068, 0.35355338
    %v2148 = vmul.f32 %v2144, 0.35355338
    %v2149 = vsel %vm701, %v2147, -inf
    %2150 = vmax.xlane.f32.xlu0 %v2149
    %v2151 = vpop.xlane.xlu0 %2150
    %v2152 = vsel %vm701, %v2148, -inf
    %2153 = vmax.xlane.f32.xlu0 %v2152
    %v2154 = vpop.xlane.xlu0 %2153
    %v2155 = vsub.f32 %v2147, %v2151
    %v2156 = vsub.f32 %v2148, %v2154
    %v2157 = vmul.f32 %v2155, 1.442695
    %v2158 = vpow.pop %v2157
    %v2159 = vmul.f32 %v2156, 1.442695
    %v2160 = vpow.pop %v2159
    %v2161 = vsel %vm701, %v2158, 0.0
    %2162 = vadd.xlane.f32.xlu0 %v2161
    %v2163 = vpop.xlane.xlu0 %2162
    %v2164 = vsel %vm701, %v2160, 0.0
    %2165 = vadd.xlane.f32.xlu0 %v2164
    %v2166 = vpop.xlane.xlu0 %2165
    %v2167 = vrcp.pop %v2163
    %v2168 = vrcp.pop %v2166
    %v2169 = vmul.f32 %v2158, %v2167
    %v2170 = vmul.f32 %v2160, %v2168
    %v2172 = vsel %vm701, %v2169, 0
    %2174 = vmatprep.subr.mxu0 0.0
    %2175 = vmatpush1.msra.mxu0 %v1907
    %2176 = vmatprep.subr.mxu0 0.0
    %2177 = vmatpush1.msra.mxu0 0.0
    %2178 = vmatprep.subr.mxu0 0.0
    %2179 = vmatpush1.msra.mxu0 0.0
    %2180 = vmatprep.subr.mxu0 0.0
    %2181 = vmatpush1.msra.mxu0 0.0
    %2182 = vmatprep.subr.mxu0 0.0
    %2183 = vmatpush1.msra.mxu0 0.0
    %2184 = vmatprep.subr.mxu0 0.0
    %2185 = vmatpush1.msra.mxu0 0.0
    %2186 = vmatprep.subr.mxu0 0.0
    %2187 = vmatpush1.msra.mxu0 0.0
    %2188 = vmatprep.subr.mxu0 0.0
    %2189 = vmatpush1.msra.mxu0 0.0
    %2190 = vmatprep.subr.mxu0 0.0
    %2191 = vmatpush1.msra.mxu0 0.0
    %2192 = vmatprep.subr.mxu0 0.0
    %2193 = vmatpush1.msra.mxu0 0.0
    %2194 = vmatprep.subr.mxu0 0.0
    %2195 = vmatpush1.msra.mxu0 0.0
    %2196 = vmatprep.subr.mxu0 0.0
    %2197 = vmatpush1.msra.mxu0 0.0
    %2198 = vmatprep.subr.mxu0 0.0
    %2199 = vmatpush1.msra.mxu0 0.0
    %2200 = vmatprep.subr.mxu0 0.0
    %2201 = vmatpush1.msra.mxu0 0.0
    %2202 = vmatprep.subr.mxu0 0.0
    %2203 = vmatpush1.msra.mxu0 0.0
    %2204 = vmatprep.subr.mxu0 0.0
    %2205 = vmatpush1.msra.mxu0 0.0
    %2206 = vmatprep.subr.mxu0 0.0
    %2207 = vmatpush1.msra.mxu0 0.0
    %2208 = vmatprep.subr.mxu0 0.0
    %2209 = vmatpush1.msra.mxu0 0.0
    %2210 = vmatprep.subr.mxu0 0.0
    %2211 = vmatpush1.msra.mxu0 0.0
    %2212 = vmatprep.subr.mxu0 0.0
    %2213 = vmatpush1.msra.mxu0 0.0
    %2214 = vmatprep.subr.mxu0 0.0
    %2215 = vmatpush1.msra.mxu0 0.0
    %2216 = vmatprep.subr.mxu0 0.0
    %2217 = vmatpush1.msra.mxu0 0.0
    %2218 = vmatprep.subr.mxu0 0.0
    %2219 = vmatpush1.msra.mxu0 0.0
    %2220 = vmatprep.subr.mxu0 0.0
    %2221 = vmatpush1.msra.mxu0 0.0
    %2222 = vmatprep.subr.mxu0 0.0
    %2223 = vmatpush1.msra.mxu0 0.0
    %2224 = vmatprep.subr.mxu0 0.0
    %2225 = vmatpush1.msra.mxu0 0.0
    %2226 = vmatprep.subr.mxu0 0.0
    %2227 = vmatpush1.msra.mxu0 0.0
    %2228 = vmatprep.subr.mxu0 0.0
    %2229 = vmatpush1.msra.mxu0 0.0
    %2230 = vmatprep.subr.mxu0 0.0
    %2231 = vmatpush1.msra.mxu0 0.0
    %2232 = vmatprep.subr.mxu0 0.0
    %2233 = vmatpush1.msra.mxu0 0.0
    %2234 = vmatprep.subr.mxu0 0.0
    %2235 = vmatpush1.msra.mxu0 0.0
    %2236 = vmatprep.subr.mxu0 0.0
    %2237 = vmatpush1.msra.mxu0 0.0
    %2238 = vmatprep.mubr.f32.mxu0 0.0
    %2239 = vmatmul.mubr.f32.gmra.mrb[0].mxu0 %v2172
    %v2240 = vpop.f32.mrb[0].mxu0
    %v2241 = vadd.f32 0.0, %v2240
    %v2242 = vpop.f32.mrb[0].mxu0
    %2243 = vdwg.mxu0
    %v2245 = vsel %vm701, %v2170, 0
    %2247 = vmatprep.subr.mxu0 0.0
    %2248 = vmatpush1.msra.mxu0 %v1912
    %2249 = vmatprep.subr.mxu0 0.0
    %2250 = vmatpush1.msra.mxu0 0.0
    %2251 = vmatprep.subr.mxu0 0.0
    %2252 = vmatpush1.msra.mxu0 0.0
    %2253 = vmatprep.subr.mxu0 0.0
    %2254 = vmatpush1.msra.mxu0 0.0
    %2255 = vmatprep.subr.mxu0 0.0
    %2256 = vmatpush1.msra.mxu0 0.0
    %2257 = vmatprep.subr.mxu0 0.0
    %2258 = vmatpush1.msra.mxu0 0.0
    %2259 = vmatprep.subr.mxu0 0.0
    %2260 = vmatpush1.msra.mxu0 0.0
    %2261 = vmatprep.subr.mxu0 0.0
    %2262 = vmatpush1.msra.mxu0 0.0
    %2263 = vmatprep.subr.mxu0 0.0
    %2264 = vmatpush1.msra.mxu0 0.0
    %2265 = vmatprep.subr.mxu0 0.0
    %2266 = vmatpush1.msra.mxu0 0.0
    %2267 = vmatprep.subr.mxu0 0.0
    %2268 = vmatpush1.msra.mxu0 0.0
    %2269 = vmatprep.subr.mxu0 0.0
    %2270 = vmatpush1.msra.mxu0 0.0
    %2271 = vmatprep.subr.mxu0 0.0
    %2272 = vmatpush1.msra.mxu0 0.0
    %2273 = vmatprep.subr.mxu0 0.0
    %2274 = vmatpush1.msra.mxu0 0.0
    %2275 = vmatprep.subr.mxu0 0.0
    %2276 = vmatpush1.msra.mxu0 0.0
    %2277 = vmatprep.subr.mxu0 0.0
    %2278 = vmatpush1.msra.mxu0 0.0
    %2279 = vmatprep.subr.mxu0 0.0
    %2280 = vmatpush1.msra.mxu0 0.0
    %2281 = vmatprep.subr.mxu0 0.0
    %2282 = vmatpush1.msra.mxu0 0.0
    %2283 = vmatprep.subr.mxu0 0.0
    %2284 = vmatpush1.msra.mxu0 0.0
    %2285 = vmatprep.subr.mxu0 0.0
    %2286 = vmatpush1.msra.mxu0 0.0
    %2287 = vmatprep.subr.mxu0 0.0
    %2288 = vmatpush1.msra.mxu0 0.0
    %2289 = vmatprep.subr.mxu0 0.0
    %2290 = vmatpush1.msra.mxu0 0.0
    %2291 = vmatprep.subr.mxu0 0.0
    %2292 = vmatpush1.msra.mxu0 0.0
    %2293 = vmatprep.subr.mxu0 0.0
    %2294 = vmatpush1.msra.mxu0 0.0
    %2295 = vmatprep.subr.mxu0 0.0
    %2296 = vmatpush1.msra.mxu0 0.0
    %2297 = vmatprep.subr.mxu0 0.0
    %2298 = vmatpush1.msra.mxu0 0.0
    %2299 = vmatprep.subr.mxu0 0.0
    %2300 = vmatpush1.msra.mxu0 0.0
    %2301 = vmatprep.subr.mxu0 0.0
    %2302 = vmatpush1.msra.mxu0 0.0
    %2303 = vmatprep.subr.mxu0 0.0
    %2304 = vmatpush1.msra.mxu0 0.0
    %2305 = vmatprep.subr.mxu0 0.0
    %2306 = vmatpush1.msra.mxu0 0.0
    %2307 = vmatprep.subr.mxu0 0.0
    %2308 = vmatpush1.msra.mxu0 0.0
    %2309 = vmatprep.subr.mxu0 0.0
    %2310 = vmatpush1.msra.mxu0 0.0
    %2311 = vmatprep.mubr.f32.mxu0 0.0
    %2312 = vmatmul.mubr.f32.gmra.mrb[0].mxu0 %v2245
    %v2313 = vpop.f32.mrb[0].mxu0
    %v2314 = vadd.f32 0.0, %v2313
    %v2315 = vpop.f32.mrb[0].mxu0
    %2316 = vdwg.mxu0
    %s2317 = scalar_lea.vmem %s14, 16
    %v2318 = vld [vmem:[%s2317] sm:$0xff]
    %v2320 = vsel %vm701, %v2241, 0
    %v2323 = vsel %vm701, %v2314, 0
    %2325 = vmatprep.subr.mxu0 0.0
    %2326 = vmatpush1.msra.mxu0 %v2318
    %2327 = vmatprep.subr.mxu0 0.0
    %2328 = vmatpush1.msra.mxu0 0.0
    %2329 = vmatprep.subr.mxu0 0.0
    %2330 = vmatpush1.msra.mxu0 0.0
    %2331 = vmatprep.subr.mxu0 0.0
    %2332 = vmatpush1.msra.mxu0 0.0
    %2333 = vmatprep.subr.mxu0 0.0
    %2334 = vmatpush1.msra.mxu0 0.0
    %2335 = vmatprep.subr.mxu0 0.0
    %2336 = vmatpush1.msra.mxu0 0.0
    %2337 = vmatprep.subr.mxu0 0.0
    %2338 = vmatpush1.msra.mxu0 0.0
    %2339 = vmatprep.subr.mxu0 0.0
    %2340 = vmatpush1.msra.mxu0 0.0
    %2341 = vmatprep.subr.mxu0 0.0
    %2342 = vmatpush1.msra.mxu0 0.0
    %2343 = vmatprep.subr.mxu0 0.0
    %2344 = vmatpush1.msra.mxu0 0.0
    %2345 = vmatprep.subr.mxu0 0.0
    %2346 = vmatpush1.msra.mxu0 0.0
    %2347 = vmatprep.subr.mxu0 0.0
    %2348 = vmatpush1.msra.mxu0 0.0
    %2349 = vmatprep.subr.mxu0 0.0
    %2350 = vmatpush1.msra.mxu0 0.0
    %2351 = vmatprep.subr.mxu0 0.0
    %2352 = vmatpush1.msra.mxu0 0.0
    %2353 = vmatprep.subr.mxu0 0.0
    %2354 = vmatpush1.msra.mxu0 0.0
    %2355 = vmatprep.subr.mxu0 0.0
    %2356 = vmatpush1.msra.mxu0 0.0
    %2357 = vmatprep.subr.mxu0 0.0
    %2358 = vmatpush1.msra.mxu0 0.0
    %2359 = vmatprep.subr.mxu0 0.0
    %2360 = vmatpush1.msra.mxu0 0.0
    %2361 = vmatprep.subr.mxu0 0.0
    %2362 = vmatpush1.msra.mxu0 0.0
    %2363 = vmatprep.subr.mxu0 0.0
    %2364 = vmatpush1.msra.mxu0 0.0
    %2365 = vmatprep.subr.mxu0 0.0
    %2366 = vmatpush1.msra.mxu0 0.0
    %2367 = vmatprep.subr.mxu0 0.0
    %2368 = vmatpush1.msra.mxu0 0.0
    %2369 = vmatprep.subr.mxu0 0.0
    %2370 = vmatpush1.msra.mxu0 0.0
    %2371 = vmatprep.subr.mxu0 0.0
    %2372 = vmatpush1.msra.mxu0 0.0
    %2373 = vmatprep.subr.mxu0 0.0
    %2374 = vmatpush1.msra.mxu0 0.0
    %2375 = vmatprep.subr.mxu0 0.0
    %2376 = vmatpush1.msra.mxu0 0.0
    %2377 = vmatprep.subr.mxu0 0.0
    %2378 = vmatpush1.msra.mxu0 0.0
    %2379 = vmatprep.subr.mxu0 0.0
    %2380 = vmatpush1.msra.mxu0 0.0
    %2381 = vmatprep.subr.mxu0 0.0
    %2382 = vmatpush1.msra.mxu0 0.0
    %2383 = vmatprep.subr.mxu0 0.0
    %2384 = vmatpush1.msra.mxu0 0.0
    %2385 = vmatprep.subr.mxu0 0.0
    %2386 = vmatpush1.msra.mxu0 0.0
    %2387 = vmatprep.subr.mxu0 0.0
    %2388 = vmatpush1.msra.mxu0 0.0
    %2389 = vmatprep.mubr.f32.mxu0 0.0
    %2390 = vmatmul.mubr.f32.gmra.mrb[0].mxu0 %v2320
    %v2391 = vpop.f32.mrb[0].mxu0
    %v2392 = vadd.f32 0.0, %v2391
    %v2393 = vpop.f32.mrb[0].mxu0
    %2394 = vmatprep.mubr.f32.mxu0 0.0
    %2395 = vmatmul.mubr.f32.gmra.mrb[0].mxu0 %v2323
    %v2396 = vpop.f32.mrb[0].mxu0
    %v2397 = vadd.f32 0.0, %v2396
    %v2398 = vpop.f32.mrb[0].mxu0
    %2399 = vdwg.mxu0
    %v2400 = vadd.f32 %v1753, %v2392
    %v2401 = vadd.f32 %v1754, %v2397
    %s2402 = scalar_lea.vmem %s10, 96
    %v2403 = vld [vmem:[%s2402] sm:$0xff]
    %v2404 = vld [vmem:[%s2402 + $0x8] sm:$0xff]
    %v2405 = vld [vmem:[%s2402 + $0x10] sm:$0xff]
    %v2406 = vld [vmem:[%s2402 + $0x18] sm:$0xff]
    %2407 = vmatprep.subr.mxu0 0.0
    %2408 = vmatpush1.msra.mxu0 %v2403
    %2409 = vmatprep.subr.mxu0 0.0
    %2410 = vmatpush1.msra.mxu0 %v2404
    %2411 = vmatprep.subr.mxu0 0.0
    %2412 = vmatpush1.msra.mxu0 %v2405
    %2413 = vmatprep.subr.mxu0 0.0
    %2414 = vmatpush1.msra.mxu0 %v2406
    %2415 = vmatprep.subr.mxu0 0.0
    %2416 = vmatpush1.msra.mxu0 0.0
    %2417 = vmatprep.subr.mxu0 0.0
    %2418 = vmatpush1.msra.mxu0 0.0
    %2419 = vmatprep.subr.mxu0 0.0
    %2420 = vmatpush1.msra.mxu0 0.0
    %2421 = vmatprep.subr.mxu0 0.0
    %2422 = vmatpush1.msra.mxu0 0.0
    %2423 = vmatprep.subr.mxu0 0.0
    %2424 = vmatpush1.msra.mxu0 0.0
    %2425 = vmatprep.subr.mxu0 0.0
    %2426 = vmatpush1.msra.mxu0 0.0
    %2427 = vmatprep.subr.mxu0 0.0
    %2428 = vmatpush1.msra.mxu0 0.0
    %2429 = vmatprep.subr.mxu0 0.0
    %2430 = vmatpush1.msra.mxu0 0.0
    %2431 = vmatprep.subr.mxu0 0.0
    %2432 = vmatpush1.msra.mxu0 0.0
    %2433 = vmatprep.subr.mxu0 0.0
    %2434 = vmatpush1.msra.mxu0 0.0
    %2435 = vmatprep.subr.mxu0 0.0
    %2436 = vmatpush1.msra.mxu0 0.0
    %2437 = vmatprep.subr.mxu0 0.0
    %2438 = vmatpush1.msra.mxu0 0.0
    %2439 = vmatprep.subr.mxu0 0.0
    %2440 = vmatpush1.msra.mxu0 0.0
    %2441 = vmatprep.subr.mxu0 0.0
    %2442 = vmatpush1.msra.mxu0 0.0
    %2443 = vmatprep.subr.mxu0 0.0
    %2444 = vmatpush1.msra.mxu0 0.0
    %2445 = vmatprep.subr.mxu0 0.0
    %2446 = vmatpush1.msra.mxu0 0.0
    %2447 = vmatprep.subr.mxu0 0.0
    %2448 = vmatpush1.msra.mxu0 0.0
    %2449 = vmatprep.subr.mxu0 0.0
    %2450 = vmatpush1.msra.mxu0 0.0
    %2451 = vmatprep.subr.mxu0 0.0
    %2452 = vmatpush1.msra.mxu0 0.0
    %2453 = vmatprep.subr.mxu0 0.0
    %2454 = vmatpush1.msra.mxu0 0.0
    %2455 = vmatprep.subr.mxu0 0.0
    %2456 = vmatpush1.msra.mxu0 0.0
    %2457 = vmatprep.subr.mxu0 0.0
    %2458 = vmatpush1.msra.mxu0 0.0
    %2459 = vmatprep.subr.mxu0 0.0
    %2460 = vmatpush1.msra.mxu0 0.0
    %2461 = vmatprep.subr.mxu0 0.0
    %2462 = vmatpush1.msra.mxu0 0.0
    %2463 = vmatprep.subr.mxu0 0.0
    %2464 = vmatpush1.msra.mxu0 0.0
    %2465 = vmatprep.subr.mxu0 0.0
    %2466 = vmatpush1.msra.mxu0 0.0
    %2467 = vmatprep.subr.mxu0 0.0
    %2468 = vmatpush1.msra.mxu0 0.0
    %2469 = vmatprep.subr.mxu0 0.0
    %2470 = vmatpush1.msra.mxu0 0.0
    %2471 = vmatprep.mubr.f32.mxu0 0.0
    %2472 = vmatmul.mubr.f32.gmra.mrb[0].mxu0 %v457
    %v2473 = vpop.f32.mrb[0].mxu0
    %v2474 = vadd.f32 0.0, %v2473
    %v2475 = vpop.f32.mrb[0].mxu0
    %2476 = vmatprep.mubr.f32.mxu0 0.0
    %2477 = vmatmul.mubr.f32.gmra.mrb[0].mxu0 %v460
    %v2478 = vpop.f32.mrb[0].mxu0
    %v2479 = vadd.f32 0.0, %v2478
    %v2480 = vpop.f32.mrb[0].mxu0
    %2481 = vdwg.mxu0
    %s2482 = scalar_lea.vmem %s11, 96
    %v2483 = vld [vmem:[%s2482] sm:$0xff]
    %v2484 = vld [vmem:[%s2482 + $0x8] sm:$0xff]
    %v2485 = vld [vmem:[%s2482 + $0x10] sm:$0xff]
    %v2486 = vld [vmem:[%s2482 + $0x18] sm:$0xff]
    %2487 = vmatprep.subr.mxu0 0.0
    %2488 = vmatpush1.msra.mxu0 %v2483
    %2489 = vmatprep.subr.mxu0 0.0
    %2490 = vmatpush1.msra.mxu0 %v2484
    %2491 = vmatprep.subr.mxu0 0.0
    %2492 = vmatpush1.msra.mxu0 %v2485
    %2493 = vmatprep.subr.mxu0 0.0
    %2494 = vmatpush1.msra.mxu0 %v2486
    %2495 = vmatprep.subr.mxu0 0.0
    %2496 = vmatpush1.msra.mxu0 0.0
    %2497 = vmatprep.subr.mxu0 0.0
    %2498 = vmatpush1.msra.mxu0 0.0
    %2499 = vmatprep.subr.mxu0 0.0
    %2500 = vmatpush1.msra.mxu0 0.0
    %2501 = vmatprep.subr.mxu0 0.0
    %2502 = vmatpush1.msra.mxu0 0.0
    %2503 = vmatprep.subr.mxu0 0.0
    %2504 = vmatpush1.msra.mxu0 0.0
    %2505 = vmatprep.subr.mxu0 0.0
    %2506 = vmatpush1.msra.mxu0 0.0
    %2507 = vmatprep.subr.mxu0 0.0
    %2508 = vmatpush1.msra.mxu0 0.0
    %2509 = vmatprep.subr.mxu0 0.0
    %2510 = vmatpush1.msra.mxu0 0.0
    %2511 = vmatprep.subr.mxu0 0.0
    %2512 = vmatpush1.msra.mxu0 0.0
    %2513 = vmatprep.subr.mxu0 0.0
    %2514 = vmatpush1.msra.mxu0 0.0
    %2515 = vmatprep.subr.mxu0 0.0
    %2516 = vmatpush1.msra.mxu0 0.0
    %2517 = vmatprep.subr.mxu0 0.0
    %2518 = vmatpush1.msra.mxu0 0.0
    %2519 = vmatprep.subr.mxu0 0.0
    %2520 = vmatpush1.msra.mxu0 0.0
    %2521 = vmatprep.subr.mxu0 0.0
    %2522 = vmatpush1.msra.mxu0 0.0
    %2523 = vmatprep.subr.mxu0 0.0
    %2524 = vmatpush1.msra.mxu0 0.0
    %2525 = vmatprep.subr.mxu0 0.0
    %2526 = vmatpush1.msra.mxu0 0.0
    %2527 = vmatprep.subr.mxu0 0.0
    %2528 = vmatpush1.msra.mxu0 0.0
    %2529 = vmatprep.subr.mxu0 0.0
    %2530 = vmatpush1.msra.mxu0 0.0
    %2531 = vmatprep.subr.mxu0 0.0
    %2532 = vmatpush1.msra.mxu0 0.0
    %2533 = vmatprep.subr.mxu0 0.0
    %2534 = vmatpush1.msra.mxu0 0.0
    %2535 = vmatprep.subr.mxu0 0.0
    %2536 = vmatpush1.msra.mxu0 0.0
    %2537 = vmatprep.subr.mxu0 0.0
    %2538 = vmatpush1.msra.mxu0 0.0
    %2539 = vmatprep.subr.mxu0 0.0
    %2540 = vmatpush1.msra.mxu0 0.0
    %2541 = vmatprep.subr.mxu0 0.0
    %2542 = vmatpush1.msra.mxu0 0.0
    %2543 = vmatprep.subr.mxu0 0.0
    %2544 = vmatpush1.msra.mxu0 0.0
    %2545 = vmatprep.subr.mxu0 0.0
    %2546 = vmatpush1.msra.mxu0 0.0
    %2547 = vmatprep.subr.mxu0 0.0
    %2548 = vmatpush1.msra.mxu0 0.0
    %2549 = vmatprep.subr.mxu0 0.0
    %2550 = vmatpush1.msra.mxu0 0.0
    %2551 = vmatprep.mubr.f32.mxu0 0.0
    %2552 = vmatmul.mubr.f32.gmra.mrb[0].mxu0 %v542
    %v2553 = vpop.f32.mrb[0].mxu0
    %v2554 = vadd.f32 0.0, %v2553
    %v2555 = vpop.f32.mrb[0].mxu0
    %2556 = vmatprep.mubr.f32.mxu0 0.0
    %2557 = vmatmul.mubr.f32.gmra.mrb[0].mxu0 %v545
    %v2558 = vpop.f32.mrb[0].mxu0
    %v2559 = vadd.f32 0.0, %v2558
    %v2560 = vpop.f32.mrb[0].mxu0
    %2561 = vdwg.mxu0
    %s2562 = scalar_lea.vmem %s12, 96
    %v2563 = vld [vmem:[%s2562] sm:$0xff]
    %v2564 = vld [vmem:[%s2562 + $0x8] sm:$0xff]
    %v2565 = vld [vmem:[%s2562 + $0x10] sm:$0xff]
    %v2566 = vld [vmem:[%s2562 + $0x18] sm:$0xff]
    %2567 = vmatprep.subr.mxu0 0.0
    %2568 = vmatpush1.msra.mxu0 %v2563
    %2569 = vmatprep.subr.mxu0 0.0
    %2570 = vmatpush1.msra.mxu0 %v2564
    %2571 = vmatprep.subr.mxu0 0.0
    %2572 = vmatpush1.msra.mxu0 %v2565
    %2573 = vmatprep.subr.mxu0 0.0
    %2574 = vmatpush1.msra.mxu0 %v2566
    %2575 = vmatprep.subr.mxu0 0.0
    %2576 = vmatpush1.msra.mxu0 0.0
    %2577 = vmatprep.subr.mxu0 0.0
    %2578 = vmatpush1.msra.mxu0 0.0
    %2579 = vmatprep.subr.mxu0 0.0
    %2580 = vmatpush1.msra.mxu0 0.0
    %2581 = vmatprep.subr.mxu0 0.0
    %2582 = vmatpush1.msra.mxu0 0.0
    %2583 = vmatprep.subr.mxu0 0.0
    %2584 = vmatpush1.msra.mxu0 0.0
    %2585 = vmatprep.subr.mxu0 0.0
    %2586 = vmatpush1.msra.mxu0 0.0
    %2587 = vmatprep.subr.mxu0 0.0
    %2588 = vmatpush1.msra.mxu0 0.0
    %2589 = vmatprep.subr.mxu0 0.0
    %2590 = vmatpush1.msra.mxu0 0.0
    %2591 = vmatprep.subr.mxu0 0.0
    %2592 = vmatpush1.msra.mxu0 0.0
    %2593 = vmatprep.subr.mxu0 0.0
    %2594 = vmatpush1.msra.mxu0 0.0
    %2595 = vmatprep.subr.mxu0 0.0
    %2596 = vmatpush1.msra.mxu0 0.0
    %2597 = vmatprep.subr.mxu0 0.0
    %2598 = vmatpush1.msra.mxu0 0.0
    %2599 = vmatprep.subr.mxu0 0.0
    %2600 = vmatpush1.msra.mxu0 0.0
    %2601 = vmatprep.subr.mxu0 0.0
    %2602 = vmatpush1.msra.mxu0 0.0
    %2603 = vmatprep.subr.mxu0 0.0
    %2604 = vmatpush1.msra.mxu0 0.0
    %2605 = vmatprep.subr.mxu0 0.0
    %2606 = vmatpush1.msra.mxu0 0.0
    %2607 = vmatprep.subr.mxu0 0.0
    %2608 = vmatpush1.msra.mxu0 0.0
    %2609 = vmatprep.subr.mxu0 0.0
    %2610 = vmatpush1.msra.mxu0 0.0
    %2611 = vmatprep.subr.mxu0 0.0
    %2612 = vmatpush1.msra.mxu0 0.0
    %2613 = vmatprep.subr.mxu0 0.0
    %2614 = vmatpush1.msra.mxu0 0.0
    %2615 = vmatprep.subr.mxu0 0.0
    %2616 = vmatpush1.msra.mxu0 0.0
    %2617 = vmatprep.subr.mxu0 0.0
    %2618 = vmatpush1.msra.mxu0 0.0
    %2619 = vmatprep.subr.mxu0 0.0
    %2620 = vmatpush1.msra.mxu0 0.0
    %2621 = vmatprep.subr.mxu0 0.0
    %2622 = vmatpush1.msra.mxu0 0.0
    %2623 = vmatprep.subr.mxu0 0.0
    %2624 = vmatpush1.msra.mxu0 0.0
    %2625 = vmatprep.subr.mxu0 0.0
    %2626 = vmatpush1.msra.mxu0 0.0
    %2627 = vmatprep.subr.mxu0 0.0
    %2628 = vmatpush1.msra.mxu0 0.0
    %2629 = vmatprep.subr.mxu0 0.0
    %2630 = vmatpush1.msra.mxu0 0.0
    %2631 = vmatprep.mubr.f32.mxu0 0.0
    %2632 = vmatmul.mubr.f32.gmra.mrb[0].mxu0 %v372
    %v2633 = vpop.f32.mrb[0].mxu0
    %v2634 = vadd.f32 0.0, %v2633
    %v2635 = vpop.f32.mrb[0].mxu0
    %2636 = vmatprep.mubr.f32.mxu0 0.0
    %2637 = vmatmul.mubr.f32.gmra.mrb[0].mxu0 %v375
    %v2638 = vpop.f32.mrb[0].mxu0
    %v2639 = vadd.f32 0.0, %v2638
    %v2640 = vpop.f32.mrb[0].mxu0
    %2641 = vdwg.mxu0
    %v2643 = vsel %vm701, %v2634, 0
    %v2646 = vsel %vm701, %v2474, 0
    %2648 = vmatprep.subr.mxu0 0.0
    %2649 = vmatpush1.xpose.msra.mxu0 %v2646
    %2650 = vmatprep.subr.mxu0 0.0
    %2651 = vmatpush1.xpose.msra.mxu0 0.0
    %2652 = vmatprep.subr.mxu0 0.0
    %2653 = vmatpush1.xpose.msra.mxu0 0.0
    %2654 = vmatprep.subr.mxu0 0.0
    %2655 = vmatpush1.xpose.msra.mxu0 0.0
    %2656 = vmatprep.subr.mxu0 0.0
    %2657 = vmatpush1.xpose.msra.mxu0 0.0
    %2658 = vmatprep.subr.mxu0 0.0
    %2659 = vmatpush1.xpose.msra.mxu0 0.0
    %2660 = vmatprep.subr.mxu0 0.0
    %2661 = vmatpush1.xpose.msra.mxu0 0.0
    %2662 = vmatprep.subr.mxu0 0.0
    %2663 = vmatpush1.xpose.msra.mxu0 0.0
    %2664 = vmatprep.subr.mxu0 0.0
    %2665 = vmatpush1.xpose.msra.mxu0 0.0
    %2666 = vmatprep.subr.mxu0 0.0
    %2667 = vmatpush1.xpose.msra.mxu0 0.0
    %2668 = vmatprep.subr.mxu0 0.0
    %2669 = vmatpush1.xpose.msra.mxu0 0.0
    %2670 = vmatprep.subr.mxu0 0.0
    %2671 = vmatpush1.xpose.msra.mxu0 0.0
    %2672 = vmatprep.subr.mxu0 0.0
    %2673 = vmatpush1.xpose.msra.mxu0 0.0
    %2674 = vmatprep.subr.mxu0 0.0
    %2675 = vmatpush1.xpose.msra.mxu0 0.0
    %2676 = vmatprep.subr.mxu0 0.0
    %2677 = vmatpush1.xpose.msra.mxu0 0.0
    %2678 = vmatprep.subr.mxu0 0.0
    %2679 = vmatpush1.xpose.msra.mxu0 0.0
    %2680 = vmatprep.subr.mxu0 0.0
    %2681 = vmatpush1.xpose.msra.mxu0 0.0
    %2682 = vmatprep.subr.mxu0 0.0
    %2683 = vmatpush1.xpose.msra.mxu0 0.0
    %2684 = vmatprep.subr.mxu0 0.0
    %2685 = vmatpush1.xpose.msra.mxu0 0.0
    %2686 = vmatprep.subr.mxu0 0.0
    %2687 = vmatpush1.xpose.msra.mxu0 0.0
    %2688 = vmatprep.subr.mxu0 0.0
    %2689 = vmatpush1.xpose.msra.mxu0 0.0
    %2690 = vmatprep.subr.mxu0 0.0
    %2691 = vmatpush1.xpose.msra.mxu0 0.0
    %2692 = vmatprep.subr.mxu0 0.0
    %2693 = vmatpush1.xpose.msra.mxu0 0.0
    %2694 = vmatprep.subr.mxu0 0.0
    %2695 = vmatpush1.xpose.msra.mxu0 0.0
    %2696 = vmatprep.subr.mxu0 0.0
    %2697 = vmatpush1.xpose.msra.mxu0 0.0
    %2698 = vmatprep.subr.mxu0 0.0
    %2699 = vmatpush1.xpose.msra.mxu0 0.0
    %2700 = vmatprep.subr.mxu0 0.0
    %2701 = vmatpush1.xpose.msra.mxu0 0.0
    %2702 = vmatprep.subr.mxu0 0.0
    %2703 = vmatpush1.xpose.msra.mxu0 0.0
    %2704 = vmatprep.subr.mxu0 0.0
    %2705 = vmatpush1.xpose.msra.mxu0 0.0
    %2706 = vmatprep.subr.mxu0 0.0
    %2707 = vmatpush1.xpose.msra.mxu0 0.0
    %2708 = vmatprep.subr.mxu0 0.0
    %2709 = vmatpush1.xpose.msra.mxu0 0.0
    %2710 = vmatprep.subr.mxu0 0.0
    %2711 = vmatpush1.xpose.msra.mxu0 0.0
    %2712 = vmatprep.mubr.f32.mxu0 0.0
    %2713 = vmatmul.mubr.f32.gmra.mrb[0].mxu0 %v2643
    %v2714 = vpop.f32.mrb[0].mxu0
    %v2715 = vadd.f32 0.0, %v2714
    %v2716 = vpop.f32.mrb[0].mxu0
    %2717 = vdwg.mxu0
    %v2719 = vsel %vm701, %v2639, 0
    %v2722 = vsel %vm701, %v2479, 0
    %2724 = vmatprep.subr.mxu0 0.0
    %2725 = vmatpush1.xpose.msra.mxu0 %v2722
    %2726 = vmatprep.subr.mxu0 0.0
    %2727 = vmatpush1.xpose.msra.mxu0 0.0
    %2728 = vmatprep.subr.mxu0 0.0
    %2729 = vmatpush1.xpose.msra.mxu0 0.0
    %2730 = vmatprep.subr.mxu0 0.0
    %2731 = vmatpush1.xpose.msra.mxu0 0.0
    %2732 = vmatprep.subr.mxu0 0.0
    %2733 = vmatpush1.xpose.msra.mxu0 0.0
    %2734 = vmatprep.subr.mxu0 0.0
    %2735 = vmatpush1.xpose.msra.mxu0 0.0
    %2736 = vmatprep.subr.mxu0 0.0
    %2737 = vmatpush1.xpose.msra.mxu0 0.0
    %2738 = vmatprep.subr.mxu0 0.0
    %2739 = vmatpush1.xpose.msra.mxu0 0.0
    %2740 = vmatprep.subr.mxu0 0.0
    %2741 = vmatpush1.xpose.msra.mxu0 0.0
    %2742 = vmatprep.subr.mxu0 0.0
    %2743 = vmatpush1.xpose.msra.mxu0 0.0
    %2744 = vmatprep.subr.mxu0 0.0
    %2745 = vmatpush1.xpose.msra.mxu0 0.0
    %2746 = vmatprep.subr.mxu0 0.0
    %2747 = vmatpush1.xpose.msra.mxu0 0.0
    %2748 = vmatprep.subr.mxu0 0.0
    %2749 = vmatpush1.xpose.msra.mxu0 0.0
    %2750 = vmatprep.subr.mxu0 0.0
    %2751 = vmatpush1.xpose.msra.mxu0 0.0
    %2752 = vmatprep.subr.mxu0 0.0
    %2753 = vmatpush1.xpose.msra.mxu0 0.0
    %2754 = vmatprep.subr.mxu0 0.0
    %2755 = vmatpush1.xpose.msra.mxu0 0.0
    %2756 = vmatprep.subr.mxu0 0.0
    %2757 = vmatpush1.xpose.msra.mxu0 0.0
    %2758 = vmatprep.subr.mxu0 0.0
    %2759 = vmatpush1.xpose.msra.mxu0 0.0
    %2760 = vmatprep.subr.mxu0 0.0
    %2761 = vmatpush1.xpose.msra.mxu0 0.0
    %2762 = vmatprep.subr.mxu0 0.0
    %2763 = vmatpush1.xpose.msra.mxu0 0.0
    %2764 = vmatprep.subr.mxu0 0.0
    %2765 = vmatpush1.xpose.msra.mxu0 0.0
    %2766 = vmatprep.subr.mxu0 0.0
    %2767 = vmatpush1.xpose.msra.mxu0 0.0
    %2768 = vmatprep.subr.mxu0 0.0
    %2769 = vmatpush1.xpose.msra.mxu0 0.0
    %2770 = vmatprep.subr.mxu0 0.0
    %2771 = vmatpush1.xpose.msra.mxu0 0.0
    %2772 = vmatprep.subr.mxu0 0.0
    %2773 = vmatpush1.xpose.msra.mxu0 0.0
    %2774 = vmatprep.subr.mxu0 0.0
    %2775 = vmatpush1.xpose.msra.mxu0 0.0
    %2776 = vmatprep.subr.mxu0 0.0
    %2777 = vmatpush1.xpose.msra.mxu0 0.0
    %2778 = vmatprep.subr.mxu0 0.0
    %2779 = vmatpush1.xpose.msra.mxu0 0.0
    %2780 = vmatprep.subr.mxu0 0.0
    %2781 = vmatpush1.xpose.msra.mxu0 0.0
    %2782 = vmatprep.subr.mxu0 0.0
    %2783 = vmatpush1.xpose.msra.mxu0 0.0
    %2784 = vmatprep.subr.mxu0 0.0
    %2785 = vmatpush1.xpose.msra.mxu0 0.0
    %2786 = vmatprep.subr.mxu0 0.0
    %2787 = vmatpush1.xpose.msra.mxu0 0.0
    %2788 = vmatprep.mubr.f32.mxu0 0.0
    %2789 = vmatmul.mubr.f32.gmra.mrb[0].mxu0 %v2719
    %v2790 = vpop.f32.mrb[0].mxu0
    %v2791 = vadd.f32 0.0, %v2790
    %v2792 = vpop.f32.mrb[0].mxu0
    %2793 = vdwg.mxu0
    %v2794 = vmul.f32 %v2715, 0.35355338
    %v2795 = vmul.f32 %v2791, 0.35355338
    %v2796 = vsel %vm701, %v2794, -inf
    %2797 = vmax.xlane.f32.xlu0 %v2796
    %v2798 = vpop.xlane.xlu0 %2797
    %v2799 = vsel %vm701, %v2795, -inf
    %2800 = vmax.xlane.f32.xlu0 %v2799
    %v2801 = vpop.xlane.xlu0 %2800
    %v2802 = vsub.f32 %v2794, %v2798
    %v2803 = vsub.f32 %v2795, %v2801
    %v2804 = vmul.f32 %v2802, 1.442695
    %v2805 = vpow.pop %v2804
    %v2806 = vmul.f32 %v2803, 1.442695
    %v2807 = vpow.pop %v2806
    %v2808 = vsel %vm701, %v2805, 0.0
    %2809 = vadd.xlane.f32.xlu0 %v2808
    %v2810 = vpop.xlane.xlu0 %2809
    %v2811 = vsel %vm701, %v2807, 0.0
    %2812 = vadd.xlane.f32.xlu0 %v2811
    %v2813 = vpop.xlane.xlu0 %2812
    %v2814 = vrcp.pop %v2810
    %v2815 = vrcp.pop %v2813
    %v2816 = vmul.f32 %v2805, %v2814
    %v2817 = vmul.f32 %v2807, %v2815
    %v2819 = vsel %vm701, %v2816, 0
    %2821 = vmatprep.subr.mxu0 0.0
    %2822 = vmatpush1.msra.mxu0 %v2554
    %2823 = vmatprep.subr.mxu0 0.0
    %2824 = vmatpush1.msra.mxu0 0.0
    %2825 = vmatprep.subr.mxu0 0.0
    %2826 = vmatpush1.msra.mxu0 0.0
    %2827 = vmatprep.subr.mxu0 0.0
    %2828 = vmatpush1.msra.mxu0 0.0
    %2829 = vmatprep.subr.mxu0 0.0
    %2830 = vmatpush1.msra.mxu0 0.0
    %2831 = vmatprep.subr.mxu0 0.0
    %2832 = vmatpush1.msra.mxu0 0.0
    %2833 = vmatprep.subr.mxu0 0.0
    %2834 = vmatpush1.msra.mxu0 0.0
    %2835 = vmatprep.subr.mxu0 0.0
    %2836 = vmatpush1.msra.mxu0 0.0
    %2837 = vmatprep.subr.mxu0 0.0
    %2838 = vmatpush1.msra.mxu0 0.0
    %2839 = vmatprep.subr.mxu0 0.0
    %2840 = vmatpush1.msra.mxu0 0.0
    %2841 = vmatprep.subr.mxu0 0.0
    %2842 = vmatpush1.msra.mxu0 0.0
    %2843 = vmatprep.subr.mxu0 0.0
    %2844 = vmatpush1.msra.mxu0 0.0
    %2845 = vmatprep.subr.mxu0 0.0
    %2846 = vmatpush1.msra.mxu0 0.0
    %2847 = vmatprep.subr.mxu0 0.0
    %2848 = vmatpush1.msra.mxu0 0.0
    %2849 = vmatprep.subr.mxu0 0.0
    %2850 = vmatpush1.msra.mxu0 0.0
    %2851 = vmatprep.subr.mxu0 0.0
    %2852 = vmatpush1.msra.mxu0 0.0
    %2853 = vmatprep.subr.mxu0 0.0
    %2854 = vmatpush1.msra.mxu0 0.0
    %2855 = vmatprep.subr.mxu0 0.0
    %2856 = vmatpush1.msra.mxu0 0.0
    %2857 = vmatprep.subr.mxu0 0.0
    %2858 = vmatpush1.msra.mxu0 0.0
    %2859 = vmatprep.subr.mxu0 0.0
    %2860 = vmatpush1.msra.mxu0 0.0
    %2861 = vmatprep.subr.mxu0 0.0
    %2862 = vmatpush1.msra.mxu0 0.0
    %2863 = vmatprep.subr.mxu0 0.0
    %2864 = vmatpush1.msra.mxu0 0.0
    %2865 = vmatprep.subr.mxu0 0.0
    %2866 = vmatpush1.msra.mxu0 0.0
    %2867 = vmatprep.subr.mxu0 0.0
    %2868 = vmatpush1.msra.mxu0 0.0
    %2869 = vmatprep.subr.mxu0 0.0
    %2870 = vmatpush1.msra.mxu0 0.0
    %2871 = vmatprep.subr.mxu0 0.0
    %2872 = vmatpush1.msra.mxu0 0.0
    %2873 = vmatprep.subr.mxu0 0.0
    %2874 = vmatpush1.msra.mxu0 0.0
    %2875 = vmatprep.subr.mxu0 0.0
    %2876 = vmatpush1.msra.mxu0 0.0
    %2877 = vmatprep.subr.mxu0 0.0
    %2878 = vmatpush1.msra.mxu0 0.0
    %2879 = vmatprep.subr.mxu0 0.0
    %2880 = vmatpush1.msra.mxu0 0.0
    %2881 = vmatprep.subr.mxu0 0.0
    %2882 = vmatpush1.msra.mxu0 0.0
    %2883 = vmatprep.subr.mxu0 0.0
    %2884 = vmatpush1.msra.mxu0 0.0
    %2885 = vmatprep.mubr.f32.mxu0 0.0
    %2886 = vmatmul.mubr.f32.gmra.mrb[0].mxu0 %v2819
    %v2887 = vpop.f32.mrb[0].mxu0
    %v2888 = vadd.f32 0.0, %v2887
    %v2889 = vpop.f32.mrb[0].mxu0
    %2890 = vdwg.mxu0
    %v2892 = vsel %vm701, %v2817, 0
    %2894 = vmatprep.subr.mxu0 0.0
    %2895 = vmatpush1.msra.mxu0 %v2559
    %2896 = vmatprep.subr.mxu0 0.0
    %2897 = vmatpush1.msra.mxu0 0.0
    %2898 = vmatprep.subr.mxu0 0.0
    %2899 = vmatpush1.msra.mxu0 0.0
    %2900 = vmatprep.subr.mxu0 0.0
    %2901 = vmatpush1.msra.mxu0 0.0
    %2902 = vmatprep.subr.mxu0 0.0
    %2903 = vmatpush1.msra.mxu0 0.0
    %2904 = vmatprep.subr.mxu0 0.0
    %2905 = vmatpush1.msra.mxu0 0.0
    %2906 = vmatprep.subr.mxu0 0.0
    %2907 = vmatpush1.msra.mxu0 0.0
    %2908 = vmatprep.subr.mxu0 0.0
    %2909 = vmatpush1.msra.mxu0 0.0
    %2910 = vmatprep.subr.mxu0 0.0
    %2911 = vmatpush1.msra.mxu0 0.0
    %2912 = vmatprep.subr.mxu0 0.0
    %2913 = vmatpush1.msra.mxu0 0.0
    %2914 = vmatprep.subr.mxu0 0.0
    %2915 = vmatpush1.msra.mxu0 0.0
    %2916 = vmatprep.subr.mxu0 0.0
    %2917 = vmatpush1.msra.mxu0 0.0
    %2918 = vmatprep.subr.mxu0 0.0
    %2919 = vmatpush1.msra.mxu0 0.0
    %2920 = vmatprep.subr.mxu0 0.0
    %2921 = vmatpush1.msra.mxu0 0.0
    %2922 = vmatprep.subr.mxu0 0.0
    %2923 = vmatpush1.msra.mxu0 0.0
    %2924 = vmatprep.subr.mxu0 0.0
    %2925 = vmatpush1.msra.mxu0 0.0
    %2926 = vmatprep.subr.mxu0 0.0
    %2927 = vmatpush1.msra.mxu0 0.0
    %2928 = vmatprep.subr.mxu0 0.0
    %2929 = vmatpush1.msra.mxu0 0.0
    %2930 = vmatprep.subr.mxu0 0.0
    %2931 = vmatpush1.msra.mxu0 0.0
    %2932 = vmatprep.subr.mxu0 0.0
    %2933 = vmatpush1.msra.mxu0 0.0
    %2934 = vmatprep.subr.mxu0 0.0
    %2935 = vmatpush1.msra.mxu0 0.0
    %2936 = vmatprep.subr.mxu0 0.0
    %2937 = vmatpush1.msra.mxu0 0.0
    %2938 = vmatprep.subr.mxu0 0.0
    %2939 = vmatpush1.msra.mxu0 0.0
    %2940 = vmatprep.subr.mxu0 0.0
    %2941 = vmatpush1.msra.mxu0 0.0
    %2942 = vmatprep.subr.mxu0 0.0
    %2943 = vmatpush1.msra.mxu0 0.0
    %2944 = vmatprep.subr.mxu0 0.0
    %2945 = vmatpush1.msra.mxu0 0.0
    %2946 = vmatprep.subr.mxu0 0.0
    %2947 = vmatpush1.msra.mxu0 0.0
    %2948 = vmatprep.subr.mxu0 0.0
    %2949 = vmatpush1.msra.mxu0 0.0
    %2950 = vmatprep.subr.mxu0 0.0
    %2951 = vmatpush1.msra.mxu0 0.0
    %2952 = vmatprep.subr.mxu0 0.0
    %2953 = vmatpush1.msra.mxu0 0.0
    %2954 = vmatprep.subr.mxu0 0.0
    %2955 = vmatpush1.msra.mxu0 0.0
    %2956 = vmatprep.subr.mxu0 0.0
    %2957 = vmatpush1.msra.mxu0 0.0
    %2958 = vmatprep.mubr.f32.mxu0 0.0
    %2959 = vmatmul.mubr.f32.gmra.mrb[0].mxu0 %v2892
    %v2960 = vpop.f32.mrb[0].mxu0
    %v2961 = vadd.f32 0.0, %v2960
    %v2962 = vpop.f32.mrb[0].mxu0
    %2963 = vdwg.mxu0
    %s2964 = scalar_lea.vmem %s14, 24
    %v2965 = vld [vmem:[%s2964] sm:$0xff]
    %v2967 = vsel %vm701, %v2888, 0
    %v2970 = vsel %vm701, %v2961, 0
    %2972 = vmatprep.subr.mxu0 0.0
    %2973 = vmatpush1.msra.mxu0 %v2965
    %2974 = vmatprep.subr.mxu0 0.0
    %2975 = vmatpush1.msra.mxu0 0.0
    %2976 = vmatprep.subr.mxu0 0.0
    %2977 = vmatpush1.msra.mxu0 0.0
    %2978 = vmatprep.subr.mxu0 0.0
    %2979 = vmatpush1.msra.mxu0 0.0
    %2980 = vmatprep.subr.mxu0 0.0
    %2981 = vmatpush1.msra.mxu0 0.0
    %2982 = vmatprep.subr.mxu0 0.0
    %2983 = vmatpush1.msra.mxu0 0.0
    %2984 = vmatprep.subr.mxu0 0.0
    %2985 = vmatpush1.msra.mxu0 0.0
    %2986 = vmatprep.subr.mxu0 0.0
    %2987 = vmatpush1.msra.mxu0 0.0
    %2988 = vmatprep.subr.mxu0 0.0
    %2989 = vmatpush1.msra.mxu0 0.0
    %2990 = vmatprep.subr.mxu0 0.0
    %2991 = vmatpush1.msra.mxu0 0.0
    %2992 = vmatprep.subr.mxu0 0.0
    %2993 = vmatpush1.msra.mxu0 0.0
    %2994 = vmatprep.subr.mxu0 0.0
    %2995 = vmatpush1.msra.mxu0 0.0
    %2996 = vmatprep.subr.mxu0 0.0
    %2997 = vmatpush1.msra.mxu0 0.0
    %2998 = vmatprep.subr.mxu0 0.0
    %2999 = vmatpush1.msra.mxu0 0.0
    %3000 = vmatprep.subr.mxu0 0.0
    %3001 = vmatpush1.msra.mxu0 0.0
    %3002 = vmatprep.subr.mxu0 0.0
    %3003 = vmatpush1.msra.mxu0 0.0
    %3004 = vmatprep.subr.mxu0 0.0
    %3005 = vmatpush1.msra.mxu0 0.0
    %3006 = vmatprep.subr.mxu0 0.0
    %3007 = vmatpush1.msra.mxu0 0.0
    %3008 = vmatprep.subr.mxu0 0.0
    %3009 = vmatpush1.msra.mxu0 0.0
    %3010 = vmatprep.subr.mxu0 0.0
    %3011 = vmatpush1.msra.mxu0 0.0
    %3012 = vmatprep.subr.mxu0 0.0
    %3013 = vmatpush1.msra.mxu0 0.0
    %3014 = vmatprep.subr.mxu0 0.0
    %3015 = vmatpush1.msra.mxu0 0.0
    %3016 = vmatprep.subr.mxu0 0.0
    %3017 = vmatpush1.msra.mxu0 0.0
    %3018 = vmatprep.subr.mxu0 0.0
    %3019 = vmatpush1.msra.mxu0 0.0
    %3020 = vmatprep.subr.mxu0 0.0
    %3021 = vmatpush1.msra.mxu0 0.0
    %3022 = vmatprep.subr.mxu0 0.0
    %3023 = vmatpush1.msra.mxu0 0.0
    %3024 = vmatprep.subr.mxu0 0.0
    %3025 = vmatpush1.msra.mxu0 0.0
    %3026 = vmatprep.subr.mxu0 0.0
    %3027 = vmatpush1.msra.mxu0 0.0
    %3028 = vmatprep.subr.mxu0 0.0
    %3029 = vmatpush1.msra.mxu0 0.0
    %3030 = vmatprep.subr.mxu0 0.0
    %3031 = vmatpush1.msra.mxu0 0.0
    %3032 = vmatprep.subr.mxu0 0.0
    %3033 = vmatpush1.msra.mxu0 0.0
    %3034 = vmatprep.subr.mxu0 0.0
    %3035 = vmatpush1.msra.mxu0 0.0
    %3036 = vmatprep.mubr.f32.mxu0 0.0
    %3037 = vmatmul.mubr.f32.gmra.mrb[0].mxu0 %v2967
    %v3038 = vpop.f32.mrb[0].mxu0
    %v3039 = vadd.f32 0.0, %v3038
    %v3040 = vpop.f32.mrb[0].mxu0
    %3041 = vmatprep.mubr.f32.mxu0 0.0
    %3042 = vmatmul.mubr.f32.gmra.mrb[0].mxu0 %v2970
    %v3043 = vpop.f32.mrb[0].mxu0
    %v3044 = vadd.f32 0.0, %v3043
    %v3045 = vpop.f32.mrb[0].mxu0
    %3046 = vdwg.mxu0
    %v3047 = vadd.f32 %v2400, %v3039
    %v3048 = vadd.f32 %v2401, %v3044
    %v3049 = vadd.f32 %v3047, %v351
    %v3050 = vadd.f32 %v3048, %v356
    %v3051 = vld [vmem:[%s16] sm:$0x1]
    %v3052 = vld [vmem:[%s17] sm:$0x1]
    %v3053 = vsel %vm370, %v3049, 0.0
    %3054 = vadd.xlane.f32.xlu0 %v3053
    %v3055 = vpop.xlane.xlu0 %3054
    %v3056 = vsel %vm370, %v3050, 0.0
    %3057 = vadd.xlane.f32.xlu0 %v3056
    %v3058 = vpop.xlane.xlu0 %3057
    %v3059 = vrcp.pop 32.0
    %v3060 = vmul.f32 %v3055, %v3059
    %v3061 = vmul.f32 %v3058, %v3059
    %v3062 = vsub.f32 %v3049, %v3060
    %v3063 = vsub.f32 %v3050, %v3061
    %v3064 = vmul.f32 %v3062, %v3062
    %v3065 = vmul.f32 %v3063, %v3063
    %v3066 = vsel %vm370, %v3064, 0.0
    %3067 = vadd.xlane.f32.xlu0 %v3066
    %v3068 = vpop.xlane.xlu0 %3067
    %v3069 = vsel %vm370, %v3065, 0.0
    %3070 = vadd.xlane.f32.xlu0 %v3069
    %v3071 = vpop.xlane.xlu0 %3070
    %v3072 = vmul.f32 %v3068, %v3059
    %v3073 = vmul.f32 %v3071, %v3059
    %v3074 = vadd.f32 %v3072, 1e-05
    %v3075 = vadd.f32 %v3073, 1e-05
    %v3076 = vrsqrt.pop %v3074
    %v3077 = vrsqrt.pop %v3075
    %v3078 = vmul.f32 %v3062, %v3076
    %v3079 = vmul.f32 %v3063, %v3077
    %v3081 = vlaneseq
    %v3082 = vshrl.u32 %v3081, 7
    %v3083 = vsub.s32 0, %v3082
    %v3084 = vrot.slane %v3051, %v3083
    %v3086 = vmul.f32 %v3084, %v3078
    %v3087 = vmul.f32 %v3084, %v3079
    %v3089 = vlaneseq
    %v3090 = vshrl.u32 %v3089, 7
    %v3091 = vsub.s32 0, %v3090
    %v3092 = vrot.slane %v3052, %v3091
    %v3094 = vadd.f32 %v3086, %v3092
    %v3095 = vadd.f32 %v3087, %v3092
    %s3096 = scalar_lea.vmem %s13, 32
    %v3097 = vld [vmem:[%s3096] sm:$0xff]
    %v3098 = vld [vmem:[%s3096 + $0x8] sm:$0xff]
    %v3099 = vld [vmem:[%s3096 + $0x10] sm:$0xff]
    %v3100 = vld [vmem:[%s3096 + $0x18] sm:$0xff]
    %s3101 = scalar_lea.vmem %s15, 1
    %v3102 = vld [vmem:[%s3101] sm:$0x1]
    %v3104 = vlaneseq
    %v3105 = vshrl.u32 %v3104, 7
    %v3106 = vsub.s32 0, %v3105
    %v3107 = vrot.slane %v3102, %v3106
    %v3110 = vsel %vm370, %v3094, 0
    %v3113 = vsel %vm370, %v3095, 0
    %3115 = vmatprep.subr.mxu0 0.0
    %3116 = vmatpush1.msra.mxu0 %v3097
    %3117 = vmatprep.subr.mxu0 0.0
    %3118 = vmatpush1.msra.mxu0 %v3098
    %3119 = vmatprep.subr.mxu0 0.0
    %3120 = vmatpush1.msra.mxu0 %v3099
    %3121 = vmatprep.subr.mxu0 0.0
    %3122 = vmatpush1.msra.mxu0 %v3100
    %3123 = vmatprep.subr.mxu0 0.0
    %3124 = vmatpush1.msra.mxu0 0.0
    %3125 = vmatprep.subr.mxu0 0.0
    %3126 = vmatpush1.msra.mxu0 0.0
    %3127 = vmatprep.subr.mxu0 0.0
    %3128 = vmatpush1.msra.mxu0 0.0
    %3129 = vmatprep.subr.mxu0 0.0
    %3130 = vmatpush1.msra.mxu0 0.0
    %3131 = vmatprep.subr.mxu0 0.0
    %3132 = vmatpush1.msra.mxu0 0.0
    %3133 = vmatprep.subr.mxu0 0.0
    %3134 = vmatpush1.msra.mxu0 0.0
    %3135 = vmatprep.subr.mxu0 0.0
    %3136 = vmatpush1.msra.mxu0 0.0
    %3137 = vmatprep.subr.mxu0 0.0
    %3138 = vmatpush1.msra.mxu0 0.0
    %3139 = vmatprep.subr.mxu0 0.0
    %3140 = vmatpush1.msra.mxu0 0.0
    %3141 = vmatprep.subr.mxu0 0.0
    %3142 = vmatpush1.msra.mxu0 0.0
    %3143 = vmatprep.subr.mxu0 0.0
    %3144 = vmatpush1.msra.mxu0 0.0
    %3145 = vmatprep.subr.mxu0 0.0
    %3146 = vmatpush1.msra.mxu0 0.0
    %3147 = vmatprep.subr.mxu0 0.0
    %3148 = vmatpush1.msra.mxu0 0.0
    %3149 = vmatprep.subr.mxu0 0.0
    %3150 = vmatpush1.msra.mxu0 0.0
    %3151 = vmatprep.subr.mxu0 0.0
    %3152 = vmatpush1.msra.mxu0 0.0
    %3153 = vmatprep.subr.mxu0 0.0
    %3154 = vmatpush1.msra.mxu0 0.0
    %3155 = vmatprep.subr.mxu0 0.0
    %3156 = vmatpush1.msra.mxu0 0.0
    %3157 = vmatprep.subr.mxu0 0.0
    %3158 = vmatpush1.msra.mxu0 0.0
    %3159 = vmatprep.subr.mxu0 0.0
    %3160 = vmatpush1.msra.mxu0 0.0
    %3161 = vmatprep.subr.mxu0 0.0
    %3162 = vmatpush1.msra.mxu0 0.0
    %3163 = vmatprep.subr.mxu0 0.0
    %3164 = vmatpush1.msra.mxu0 0.0
    %3165 = vmatprep.subr.mxu0 0.0
    %3166 = vmatpush1.msra.mxu0 0.0
    %3167 = vmatprep.subr.mxu0 0.0
    %3168 = vmatpush1.msra.mxu0 0.0
    %3169 = vmatprep.subr.mxu0 0.0
    %3170 = vmatpush1.msra.mxu0 0.0
    %3171 = vmatprep.subr.mxu0 0.0
    %3172 = vmatpush1.msra.mxu0 0.0
    %3173 = vmatprep.subr.mxu0 0.0
    %3174 = vmatpush1.msra.mxu0 0.0
    %3175 = vmatprep.subr.mxu0 0.0
    %3176 = vmatpush1.msra.mxu0 0.0
    %3177 = vmatprep.subr.mxu0 0.0
    %3178 = vmatpush1.msra.mxu0 0.0
    %3179 = vmatprep.mubr.f32.mxu0 0.0
    %3180 = vmatmul.mubr.f32.gmra.mrb[0].mxu0 %v3110
    %v3181 = vpop.f32.mrb[0].mxu0
    %v3182 = vadd.f32 %v3107, %v3181
    %v3183 = vpop.f32.mrb[0].mxu0
    %3184 = vmatprep.mubr.f32.mxu0 0.0
    %3185 = vmatmul.mubr.f32.gmra.mrb[0].mxu0 %v3113
    %v3186 = vpop.f32.mrb[0].mxu0
    %v3187 = vadd.f32 %v3107, %v3186
    %v3188 = vpop.f32.mrb[0].mxu0
    %3189 = vdwg.mxu0
    %s3190 = scalar_lea.vmem %s10, 128
    %v3191 = vld [vmem:[%s3190] sm:$0xff]
    %v3192 = vld [vmem:[%s3190 + $0x8] sm:$0xff]
    %v3193 = vld [vmem:[%s3190 + $0x10] sm:$0xff]
    %v3194 = vld [vmem:[%s3190 + $0x18] sm:$0xff]
    %3195 = vmatprep.subr.mxu0 0.0
    %3196 = vmatpush1.msra.mxu0 %v3191
    %3197 = vmatprep.subr.mxu0 0.0
    %3198 = vmatpush1.msra.mxu0 %v3192
    %3199 = vmatprep.subr.mxu0 0.0
    %3200 = vmatpush1.msra.mxu0 %v3193
    %3201 = vmatprep.subr.mxu0 0.0
    %3202 = vmatpush1.msra.mxu0 %v3194
    %3203 = vmatprep.subr.mxu0 0.0
    %3204 = vmatpush1.msra.mxu0 0.0
    %3205 = vmatprep.subr.mxu0 0.0
    %3206 = vmatpush1.msra.mxu0 0.0
    %3207 = vmatprep.subr.mxu0 0.0
    %3208 = vmatpush1.msra.mxu0 0.0
    %3209 = vmatprep.subr.mxu0 0.0
    %3210 = vmatpush1.msra.mxu0 0.0
    %3211 = vmatprep.subr.mxu0 0.0
    %3212 = vmatpush1.msra.mxu0 0.0
    %3213 = vmatprep.subr.mxu0 0.0
    %3214 = vmatpush1.msra.mxu0 0.0
    %3215 = vmatprep.subr.mxu0 0.0
    %3216 = vmatpush1.msra.mxu0 0.0
    %3217 = vmatprep.subr.mxu0 0.0
    %3218 = vmatpush1.msra.mxu0 0.0
    %3219 = vmatprep.subr.mxu0 0.0
    %3220 = vmatpush1.msra.mxu0 0.0
    %3221 = vmatprep.subr.mxu0 0.0
    %3222 = vmatpush1.msra.mxu0 0.0
    %3223 = vmatprep.subr.mxu0 0.0
    %3224 = vmatpush1.msra.mxu0 0.0
    %3225 = vmatprep.subr.mxu0 0.0
    %3226 = vmatpush1.msra.mxu0 0.0
    %3227 = vmatprep.subr.mxu0 0.0
    %3228 = vmatpush1.msra.mxu0 0.0
    %3229 = vmatprep.subr.mxu0 0.0
    %3230 = vmatpush1.msra.mxu0 0.0
    %3231 = vmatprep.subr.mxu0 0.0
    %3232 = vmatpush1.msra.mxu0 0.0
    %3233 = vmatprep.subr.mxu0 0.0
    %3234 = vmatpush1.msra.mxu0 0.0
    %3235 = vmatprep.subr.mxu0 0.0
    %3236 = vmatpush1.msra.mxu0 0.0
    %3237 = vmatprep.subr.mxu0 0.0
    %3238 = vmatpush1.msra.mxu0 0.0
    %3239 = vmatprep.subr.mxu0 0.0
    %3240 = vmatpush1.msra.mxu0 0.0
    %3241 = vmatprep.subr.mxu0 0.0
    %3242 = vmatpush1.msra.mxu0 0.0
    %3243 = vmatprep.subr.mxu0 0.0
    %3244 = vmatpush1.msra.mxu0 0.0
    %3245 = vmatprep.subr.mxu0 0.0
    %3246 = vmatpush1.msra.mxu0 0.0
    %3247 = vmatprep.subr.mxu0 0.0
    %3248 = vmatpush1.msra.mxu0 0.0
    %3249 = vmatprep.subr.mxu0 0.0
    %3250 = vmatpush1.msra.mxu0 0.0
    %3251 = vmatprep.subr.mxu0 0.0
    %3252 = vmatpush1.msra.mxu0 0.0
    %3253 = vmatprep.subr.mxu0 0.0
    %3254 = vmatpush1.msra.mxu0 0.0
    %3255 = vmatprep.subr.mxu0 0.0
    %3256 = vmatpush1.msra.mxu0 0.0
    %3257 = vmatprep.subr.mxu0 0.0
    %3258 = vmatpush1.msra.mxu0 0.0
    %3259 = vmatprep.mubr.f32.mxu0 0.0
    %3260 = vmatmul.mubr.f32.gmra.mrb[0].mxu0 %v457
    %v3261 = vpop.f32.mrb[0].mxu0
    %v3262 = vadd.f32 0.0, %v3261
    %v3263 = vpop.f32.mrb[0].mxu0
    %3264 = vmatprep.mubr.f32.mxu0 0.0
    %3265 = vmatmul.mubr.f32.gmra.mrb[0].mxu0 %v460
    %v3266 = vpop.f32.mrb[0].mxu0
    %v3267 = vadd.f32 0.0, %v3266
    %v3268 = vpop.f32.mrb[0].mxu0
    %3269 = vdwg.mxu0
    %s3270 = scalar_lea.vmem %s11, 128
    %v3271 = vld [vmem:[%s3270] sm:$0xff]
    %v3272 = vld [vmem:[%s3270 + $0x8] sm:$0xff]
    %v3273 = vld [vmem:[%s3270 + $0x10] sm:$0xff]
    %v3274 = vld [vmem:[%s3270 + $0x18] sm:$0xff]
    %3275 = vmatprep.subr.mxu0 0.0
    %3276 = vmatpush1.msra.mxu0 %v3271
    %3277 = vmatprep.subr.mxu0 0.0
    %3278 = vmatpush1.msra.mxu0 %v3272
    %3279 = vmatprep.subr.mxu0 0.0
    %3280 = vmatpush1.msra.mxu0 %v3273
    %3281 = vmatprep.subr.mxu0 0.0
    %3282 = vmatpush1.msra.mxu0 %v3274
    %3283 = vmatprep.subr.mxu0 0.0
    %3284 = vmatpush1.msra.mxu0 0.0
    %3285 = vmatprep.subr.mxu0 0.0
    %3286 = vmatpush1.msra.mxu0 0.0
    %3287 = vmatprep.subr.mxu0 0.0
    %3288 = vmatpush1.msra.mxu0 0.0
    %3289 = vmatprep.subr.mxu0 0.0
    %3290 = vmatpush1.msra.mxu0 0.0
    %3291 = vmatprep.subr.mxu0 0.0
    %3292 = vmatpush1.msra.mxu0 0.0
    %3293 = vmatprep.subr.mxu0 0.0
    %3294 = vmatpush1.msra.mxu0 0.0
    %3295 = vmatprep.subr.mxu0 0.0
    %3296 = vmatpush1.msra.mxu0 0.0
    %3297 = vmatprep.subr.mxu0 0.0
    %3298 = vmatpush1.msra.mxu0 0.0
    %3299 = vmatprep.subr.mxu0 0.0
    %3300 = vmatpush1.msra.mxu0 0.0
    %3301 = vmatprep.subr.mxu0 0.0
    %3302 = vmatpush1.msra.mxu0 0.0
    %3303 = vmatprep.subr.mxu0 0.0
    %3304 = vmatpush1.msra.mxu0 0.0
    %3305 = vmatprep.subr.mxu0 0.0
    %3306 = vmatpush1.msra.mxu0 0.0
    %3307 = vmatprep.subr.mxu0 0.0
    %3308 = vmatpush1.msra.mxu0 0.0
    %3309 = vmatprep.subr.mxu0 0.0
    %3310 = vmatpush1.msra.mxu0 0.0
    %3311 = vmatprep.subr.mxu0 0.0
    %3312 = vmatpush1.msra.mxu0 0.0
    %3313 = vmatprep.subr.mxu0 0.0
    %3314 = vmatpush1.msra.mxu0 0.0
    %3315 = vmatprep.subr.mxu0 0.0
    %3316 = vmatpush1.msra.mxu0 0.0
    %3317 = vmatprep.subr.mxu0 0.0
    %3318 = vmatpush1.msra.mxu0 0.0
    %3319 = vmatprep.subr.mxu0 0.0
    %3320 = vmatpush1.msra.mxu0 0.0
    %3321 = vmatprep.subr.mxu0 0.0
    %3322 = vmatpush1.msra.mxu0 0.0
    %3323 = vmatprep.subr.mxu0 0.0
    %3324 = vmatpush1.msra.mxu0 0.0
    %3325 = vmatprep.subr.mxu0 0.0
    %3326 = vmatpush1.msra.mxu0 0.0
    %3327 = vmatprep.subr.mxu0 0.0
    %3328 = vmatpush1.msra.mxu0 0.0
    %3329 = vmatprep.subr.mxu0 0.0
    %3330 = vmatpush1.msra.mxu0 0.0
    %3331 = vmatprep.subr.mxu0 0.0
    %3332 = vmatpush1.msra.mxu0 0.0
    %3333 = vmatprep.subr.mxu0 0.0
    %3334 = vmatpush1.msra.mxu0 0.0
    %3335 = vmatprep.subr.mxu0 0.0
    %3336 = vmatpush1.msra.mxu0 0.0
    %3337 = vmatprep.subr.mxu0 0.0
    %3338 = vmatpush1.msra.mxu0 0.0
    %3339 = vmatprep.mubr.f32.mxu0 0.0
    %3340 = vmatmul.mubr.f32.gmra.mrb[0].mxu0 %v542
    %v3341 = vpop.f32.mrb[0].mxu0
    %v3342 = vadd.f32 0.0, %v3341
    %v3343 = vpop.f32.mrb[0].mxu0
    %3344 = vmatprep.mubr.f32.mxu0 0.0
    %3345 = vmatmul.mubr.f32.gmra.mrb[0].mxu0 %v545
    %v3346 = vpop.f32.mrb[0].mxu0
    %v3347 = vadd.f32 0.0, %v3346
    %v3348 = vpop.f32.mrb[0].mxu0
    %3349 = vdwg.mxu0
    %s3350 = scalar_lea.vmem %s12, 128
    %v3351 = vld [vmem:[%s3350] sm:$0xff]
    %v3352 = vld [vmem:[%s3350 + $0x8] sm:$0xff]
    %v3353 = vld [vmem:[%s3350 + $0x10] sm:$0xff]
    %v3354 = vld [vmem:[%s3350 + $0x18] sm:$0xff]
    %3355 = vmatprep.subr.mxu0 0.0
    %3356 = vmatpush1.msra.mxu0 %v3351
    %3357 = vmatprep.subr.mxu0 0.0
    %3358 = vmatpush1.msra.mxu0 %v3352
    %3359 = vmatprep.subr.mxu0 0.0
    %3360 = vmatpush1.msra.mxu0 %v3353
    %3361 = vmatprep.subr.mxu0 0.0
    %3362 = vmatpush1.msra.mxu0 %v3354
    %3363 = vmatprep.subr.mxu0 0.0
    %3364 = vmatpush1.msra.mxu0 0.0
    %3365 = vmatprep.subr.mxu0 0.0
    %3366 = vmatpush1.msra.mxu0 0.0
    %3367 = vmatprep.subr.mxu0 0.0
    %3368 = vmatpush1.msra.mxu0 0.0
    %3369 = vmatprep.subr.mxu0 0.0
    %3370 = vmatpush1.msra.mxu0 0.0
    %3371 = vmatprep.subr.mxu0 0.0
    %3372 = vmatpush1.msra.mxu0 0.0
    %3373 = vmatprep.subr.mxu0 0.0
    %3374 = vmatpush1.msra.mxu0 0.0
    %3375 = vmatprep.subr.mxu0 0.0
    %3376 = vmatpush1.msra.mxu0 0.0
    %3377 = vmatprep.subr.mxu0 0.0
    %3378 = vmatpush1.msra.mxu0 0.0
    %3379 = vmatprep.subr.mxu0 0.0
    %3380 = vmatpush1.msra.mxu0 0.0
    %3381 = vmatprep.subr.mxu0 0.0
    %3382 = vmatpush1.msra.mxu0 0.0
    %3383 = vmatprep.subr.mxu0 0.0
    %3384 = vmatpush1.msra.mxu0 0.0
    %3385 = vmatprep.subr.mxu0 0.0
    %3386 = vmatpush1.msra.mxu0 0.0
    %3387 = vmatprep.subr.mxu0 0.0
    %3388 = vmatpush1.msra.mxu0 0.0
    %3389 = vmatprep.subr.mxu0 0.0
    %3390 = vmatpush1.msra.mxu0 0.0
    %3391 = vmatprep.subr.mxu0 0.0
    %3392 = vmatpush1.msra.mxu0 0.0
    %3393 = vmatprep.subr.mxu0 0.0
    %3394 = vmatpush1.msra.mxu0 0.0
    %3395 = vmatprep.subr.mxu0 0.0
    %3396 = vmatpush1.msra.mxu0 0.0
    %3397 = vmatprep.subr.mxu0 0.0
    %3398 = vmatpush1.msra.mxu0 0.0
    %3399 = vmatprep.subr.mxu0 0.0
    %3400 = vmatpush1.msra.mxu0 0.0
    %3401 = vmatprep.subr.mxu0 0.0
    %3402 = vmatpush1.msra.mxu0 0.0
    %3403 = vmatprep.subr.mxu0 0.0
    %3404 = vmatpush1.msra.mxu0 0.0
    %3405 = vmatprep.subr.mxu0 0.0
    %3406 = vmatpush1.msra.mxu0 0.0
    %3407 = vmatprep.subr.mxu0 0.0
    %3408 = vmatpush1.msra.mxu0 0.0
    %3409 = vmatprep.subr.mxu0 0.0
    %3410 = vmatpush1.msra.mxu0 0.0
    %3411 = vmatprep.subr.mxu0 0.0
    %3412 = vmatpush1.msra.mxu0 0.0
    %3413 = vmatprep.subr.mxu0 0.0
    %3414 = vmatpush1.msra.mxu0 0.0
    %3415 = vmatprep.subr.mxu0 0.0
    %3416 = vmatpush1.msra.mxu0 0.0
    %3417 = vmatprep.subr.mxu0 0.0
    %3418 = vmatpush1.msra.mxu0 0.0
    %3419 = vmatprep.mubr.f32.mxu0 0.0
    %3420 = vmatmul.mubr.f32.gmra.mrb[0].mxu0 %v3110
    %v3421 = vpop.f32.mrb[0].mxu0
    %v3422 = vadd.f32 0.0, %v3421
    %v3423 = vpop.f32.mrb[0].mxu0
    %3424 = vmatprep.mubr.f32.mxu0 0.0
    %3425 = vmatmul.mubr.f32.gmra.mrb[0].mxu0 %v3113
    %v3426 = vpop.f32.mrb[0].mxu0
    %v3427 = vadd.f32 0.0, %v3426
    %v3428 = vpop.f32.mrb[0].mxu0
    %3429 = vdwg.mxu0
    %v3431 = vsel %vm701, %v3422, 0
    %v3434 = vsel %vm701, %v3262, 0
    %3436 = vmatprep.subr.mxu0 0.0
    %3437 = vmatpush1.xpose.msra.mxu0 %v3434
    %3438 = vmatprep.subr.mxu0 0.0
    %3439 = vmatpush1.xpose.msra.mxu0 0.0
    %3440 = vmatprep.subr.mxu0 0.0
    %3441 = vmatpush1.xpose.msra.mxu0 0.0
    %3442 = vmatprep.subr.mxu0 0.0
    %3443 = vmatpush1.xpose.msra.mxu0 0.0
    %3444 = vmatprep.subr.mxu0 0.0
    %3445 = vmatpush1.xpose.msra.mxu0 0.0
    %3446 = vmatprep.subr.mxu0 0.0
    %3447 = vmatpush1.xpose.msra.mxu0 0.0
    %3448 = vmatprep.subr.mxu0 0.0
    %3449 = vmatpush1.xpose.msra.mxu0 0.0
    %3450 = vmatprep.subr.mxu0 0.0
    %3451 = vmatpush1.xpose.msra.mxu0 0.0
    %3452 = vmatprep.subr.mxu0 0.0
    %3453 = vmatpush1.xpose.msra.mxu0 0.0
    %3454 = vmatprep.subr.mxu0 0.0
    %3455 = vmatpush1.xpose.msra.mxu0 0.0
    %3456 = vmatprep.subr.mxu0 0.0
    %3457 = vmatpush1.xpose.msra.mxu0 0.0
    %3458 = vmatprep.subr.mxu0 0.0
    %3459 = vmatpush1.xpose.msra.mxu0 0.0
    %3460 = vmatprep.subr.mxu0 0.0
    %3461 = vmatpush1.xpose.msra.mxu0 0.0
    %3462 = vmatprep.subr.mxu0 0.0
    %3463 = vmatpush1.xpose.msra.mxu0 0.0
    %3464 = vmatprep.subr.mxu0 0.0
    %3465 = vmatpush1.xpose.msra.mxu0 0.0
    %3466 = vmatprep.subr.mxu0 0.0
    %3467 = vmatpush1.xpose.msra.mxu0 0.0
    %3468 = vmatprep.subr.mxu0 0.0
    %3469 = vmatpush1.xpose.msra.mxu0 0.0
    %3470 = vmatprep.subr.mxu0 0.0
    %3471 = vmatpush1.xpose.msra.mxu0 0.0
    %3472 = vmatprep.subr.mxu0 0.0
    %3473 = vmatpush1.xpose.msra.mxu0 0.0
    %3474 = vmatprep.subr.mxu0 0.0
    %3475 = vmatpush1.xpose.msra.mxu0 0.0
    %3476 = vmatprep.subr.mxu0 0.0
    %3477 = vmatpush1.xpose.msra.mxu0 0.0
    %3478 = vmatprep.subr.mxu0 0.0
    %3479 = vmatpush1.xpose.msra.mxu0 0.0
    %3480 = vmatprep.subr.mxu0 0.0
    %3481 = vmatpush1.xpose.msra.mxu0 0.0
    %3482 = vmatprep.subr.mxu0 0.0
    %3483 = vmatpush1.xpose.msra.mxu0 0.0
    %3484 = vmatprep.subr.mxu0 0.0
    %3485 = vmatpush1.xpose.msra.mxu0 0.0
    %3486 = vmatprep.subr.mxu0 0.0
    %3487 = vmatpush1.xpose.msra.mxu0 0.0
    %3488 = vmatprep.subr.mxu0 0.0
    %3489 = vmatpush1.xpose.msra.mxu0 0.0
    %3490 = vmatprep.subr.mxu0 0.0
    %3491 = vmatpush1.xpose.msra.mxu0 0.0
    %3492 = vmatprep.subr.mxu0 0.0
    %3493 = vmatpush1.xpose.msra.mxu0 0.0
    %3494 = vmatprep.subr.mxu0 0.0
    %3495 = vmatpush1.xpose.msra.mxu0 0.0
    %3496 = vmatprep.subr.mxu0 0.0
    %3497 = vmatpush1.xpose.msra.mxu0 0.0
    %3498 = vmatprep.subr.mxu0 0.0
    %3499 = vmatpush1.xpose.msra.mxu0 0.0
    %3500 = vmatprep.mubr.f32.mxu0 0.0
    %3501 = vmatmul.mubr.f32.gmra.mrb[0].mxu0 %v3431
    %v3502 = vpop.f32.mrb[0].mxu0
    %v3503 = vadd.f32 0.0, %v3502
    %v3504 = vpop.f32.mrb[0].mxu0
    %3505 = vdwg.mxu0
    %v3507 = vsel %vm701, %v3427, 0
    %v3510 = vsel %vm701, %v3267, 0
    %3512 = vmatprep.subr.mxu0 0.0
    %3513 = vmatpush1.xpose.msra.mxu0 %v3510
    %3514 = vmatprep.subr.mxu0 0.0
    %3515 = vmatpush1.xpose.msra.mxu0 0.0
    %3516 = vmatprep.subr.mxu0 0.0
    %3517 = vmatpush1.xpose.msra.mxu0 0.0
    %3518 = vmatprep.subr.mxu0 0.0
    %3519 = vmatpush1.xpose.msra.mxu0 0.0
    %3520 = vmatprep.subr.mxu0 0.0
    %3521 = vmatpush1.xpose.msra.mxu0 0.0
    %3522 = vmatprep.subr.mxu0 0.0
    %3523 = vmatpush1.xpose.msra.mxu0 0.0
    %3524 = vmatprep.subr.mxu0 0.0
    %3525 = vmatpush1.xpose.msra.mxu0 0.0
    %3526 = vmatprep.subr.mxu0 0.0
    %3527 = vmatpush1.xpose.msra.mxu0 0.0
    %3528 = vmatprep.subr.mxu0 0.0
    %3529 = vmatpush1.xpose.msra.mxu0 0.0
    %3530 = vmatprep.subr.mxu0 0.0
    %3531 = vmatpush1.xpose.msra.mxu0 0.0
    %3532 = vmatprep.subr.mxu0 0.0
    %3533 = vmatpush1.xpose.msra.mxu0 0.0
    %3534 = vmatprep.subr.mxu0 0.0
    %3535 = vmatpush1.xpose.msra.mxu0 0.0
    %3536 = vmatprep.subr.mxu0 0.0
    %3537 = vmatpush1.xpose.msra.mxu0 0.0
    %3538 = vmatprep.subr.mxu0 0.0
    %3539 = vmatpush1.xpose.msra.mxu0 0.0
    %3540 = vmatprep.subr.mxu0 0.0
    %3541 = vmatpush1.xpose.msra.mxu0 0.0
    %3542 = vmatprep.subr.mxu0 0.0
    %3543 = vmatpush1.xpose.msra.mxu0 0.0
    %3544 = vmatprep.subr.mxu0 0.0
    %3545 = vmatpush1.xpose.msra.mxu0 0.0
    %3546 = vmatprep.subr.mxu0 0.0
    %3547 = vmatpush1.xpose.msra.mxu0 0.0
    %3548 = vmatprep.subr.mxu0 0.0
    %3549 = vmatpush1.xpose.msra.mxu0 0.0
    %3550 = vmatprep.subr.mxu0 0.0
    %3551 = vmatpush1.xpose.msra.mxu0 0.0
    %3552 = vmatprep.subr.mxu0 0.0
    %3553 = vmatpush1.xpose.msra.mxu0 0.0
    %3554 = vmatprep.subr.mxu0 0.0
    %3555 = vmatpush1.xpose.msra.mxu0 0.0
    %3556 = vmatprep.subr.mxu0 0.0
    %3557 = vmatpush1.xpose.msra.mxu0 0.0
    %3558 = vmatprep.subr.mxu0 0.0
    %3559 = vmatpush1.xpose.msra.mxu0 0.0
    %3560 = vmatprep.subr.mxu0 0.0
    %3561 = vmatpush1.xpose.msra.mxu0 0.0
    %3562 = vmatprep.subr.mxu0 0.0
    %3563 = vmatpush1.xpose.msra.mxu0 0.0
    %3564 = vmatprep.subr.mxu0 0.0
    %3565 = vmatpush1.xpose.msra.mxu0 0.0
    %3566 = vmatprep.subr.mxu0 0.0
    %3567 = vmatpush1.xpose.msra.mxu0 0.0
    %3568 = vmatprep.subr.mxu0 0.0
    %3569 = vmatpush1.xpose.msra.mxu0 0.0
    %3570 = vmatprep.subr.mxu0 0.0
    %3571 = vmatpush1.xpose.msra.mxu0 0.0
    %3572 = vmatprep.subr.mxu0 0.0
    %3573 = vmatpush1.xpose.msra.mxu0 0.0
    %3574 = vmatprep.subr.mxu0 0.0
    %3575 = vmatpush1.xpose.msra.mxu0 0.0
    %3576 = vmatprep.mubr.f32.mxu0 0.0
    %3577 = vmatmul.mubr.f32.gmra.mrb[0].mxu0 %v3507
    %v3578 = vpop.f32.mrb[0].mxu0
    %v3579 = vadd.f32 0.0, %v3578
    %v3580 = vpop.f32.mrb[0].mxu0
    %3581 = vdwg.mxu0
    %v3582 = vmul.f32 %v3503, 0.35355338
    %v3583 = vmul.f32 %v3579, 0.35355338
    %v3584 = vsel %vm701, %v3582, -inf
    %3585 = vmax.xlane.f32.xlu0 %v3584
    %v3586 = vpop.xlane.xlu0 %3585
    %v3587 = vsel %vm701, %v3583, -inf
    %3588 = vmax.xlane.f32.xlu0 %v3587
    %v3589 = vpop.xlane.xlu0 %3588
    %v3590 = vsub.f32 %v3582, %v3586
    %v3591 = vsub.f32 %v3583, %v3589
    %v3592 = vmul.f32 %v3590, 1.442695
    %v3593 = vpow.pop %v3592
    %v3594 = vmul.f32 %v3591, 1.442695
    %v3595 = vpow.pop %v3594
    %v3596 = vsel %vm701, %v3593, 0.0
    %3597 = vadd.xlane.f32.xlu0 %v3596
    %v3598 = vpop.xlane.xlu0 %3597
    %v3599 = vsel %vm701, %v3595, 0.0
    %3600 = vadd.xlane.f32.xlu0 %v3599
    %v3601 = vpop.xlane.xlu0 %3600
    %v3602 = vrcp.pop %v3598
    %v3603 = vrcp.pop %v3601
    %v3604 = vmul.f32 %v3593, %v3602
    %v3605 = vmul.f32 %v3595, %v3603
    %v3607 = vsel %vm701, %v3604, 0
    %3609 = vmatprep.subr.mxu0 0.0
    %3610 = vmatpush1.msra.mxu0 %v3342
    %3611 = vmatprep.subr.mxu0 0.0
    %3612 = vmatpush1.msra.mxu0 0.0
    %3613 = vmatprep.subr.mxu0 0.0
    %3614 = vmatpush1.msra.mxu0 0.0
    %3615 = vmatprep.subr.mxu0 0.0
    %3616 = vmatpush1.msra.mxu0 0.0
    %3617 = vmatprep.subr.mxu0 0.0
    %3618 = vmatpush1.msra.mxu0 0.0
    %3619 = vmatprep.subr.mxu0 0.0
    %3620 = vmatpush1.msra.mxu0 0.0
    %3621 = vmatprep.subr.mxu0 0.0
    %3622 = vmatpush1.msra.mxu0 0.0
    %3623 = vmatprep.subr.mxu0 0.0
    %3624 = vmatpush1.msra.mxu0 0.0
    %3625 = vmatprep.subr.mxu0 0.0
    %3626 = vmatpush1.msra.mxu0 0.0
    %3627 = vmatprep.subr.mxu0 0.0
    %3628 = vmatpush1.msra.mxu0 0.0
    %3629 = vmatprep.subr.mxu0 0.0
    %3630 = vmatpush1.msra.mxu0 0.0
    %3631 = vmatprep.subr.mxu0 0.0
    %3632 = vmatpush1.msra.mxu0 0.0
    %3633 = vmatprep.subr.mxu0 0.0
    %3634 = vmatpush1.msra.mxu0 0.0
    %3635 = vmatprep.subr.mxu0 0.0
    %3636 = vmatpush1.msra.mxu0 0.0
    %3637 = vmatprep.subr.mxu0 0.0
    %3638 = vmatpush1.msra.mxu0 0.0
    %3639 = vmatprep.subr.mxu0 0.0
    %3640 = vmatpush1.msra.mxu0 0.0
    %3641 = vmatprep.subr.mxu0 0.0
    %3642 = vmatpush1.msra.mxu0 0.0
    %3643 = vmatprep.subr.mxu0 0.0
    %3644 = vmatpush1.msra.mxu0 0.0
    %3645 = vmatprep.subr.mxu0 0.0
    %3646 = vmatpush1.msra.mxu0 0.0
    %3647 = vmatprep.subr.mxu0 0.0
    %3648 = vmatpush1.msra.mxu0 0.0
    %3649 = vmatprep.subr.mxu0 0.0
    %3650 = vmatpush1.msra.mxu0 0.0
    %3651 = vmatprep.subr.mxu0 0.0
    %3652 = vmatpush1.msra.mxu0 0.0
    %3653 = vmatprep.subr.mxu0 0.0
    %3654 = vmatpush1.msra.mxu0 0.0
    %3655 = vmatprep.subr.mxu0 0.0
    %3656 = vmatpush1.msra.mxu0 0.0
    %3657 = vmatprep.subr.mxu0 0.0
    %3658 = vmatpush1.msra.mxu0 0.0
    %3659 = vmatprep.subr.mxu0 0.0
    %3660 = vmatpush1.msra.mxu0 0.0
    %3661 = vmatprep.subr.mxu0 0.0
    %3662 = vmatpush1.msra.mxu0 0.0
    %3663 = vmatprep.subr.mxu0 0.0
    %3664 = vmatpush1.msra.mxu0 0.0
    %3665 = vmatprep.subr.mxu0 0.0
    %3666 = vmatpush1.msra.mxu0 0.0
    %3667 = vmatprep.subr.mxu0 0.0
    %3668 = vmatpush1.msra.mxu0 0.0
    %3669 = vmatprep.subr.mxu0 0.0
    %3670 = vmatpush1.msra.mxu0 0.0
    %3671 = vmatprep.subr.mxu0 0.0
    %3672 = vmatpush1.msra.mxu0 0.0
    %3673 = vmatprep.mubr.f32.mxu0 0.0
    %3674 = vmatmul.mubr.f32.gmra.mrb[0].mxu0 %v3607
    %v3675 = vpop.f32.mrb[0].mxu0
    %v3676 = vadd.f32 0.0, %v3675
    %v3677 = vpop.f32.mrb[0].mxu0
    %3678 = vdwg.mxu0
    %v3680 = vsel %vm701, %v3605, 0
    %3682 = vmatprep.subr.mxu0 0.0
    %3683 = vmatpush1.msra.mxu0 %v3347
    %3684 = vmatprep.subr.mxu0 0.0
    %3685 = vmatpush1.msra.mxu0 0.0
    %3686 = vmatprep.subr.mxu0 0.0
    %3687 = vmatpush1.msra.mxu0 0.0
    %3688 = vmatprep.subr.mxu0 0.0
    %3689 = vmatpush1.msra.mxu0 0.0
    %3690 = vmatprep.subr.mxu0 0.0
    %3691 = vmatpush1.msra.mxu0 0.0
    %3692 = vmatprep.subr.mxu0 0.0
    %3693 = vmatpush1.msra.mxu0 0.0
    %3694 = vmatprep.subr.mxu0 0.0
    %3695 = vmatpush1.msra.mxu0 0.0
    %3696 = vmatprep.subr.mxu0 0.0
    %3697 = vmatpush1.msra.mxu0 0.0
    %3698 = vmatprep.subr.mxu0 0.0
    %3699 = vmatpush1.msra.mxu0 0.0
    %3700 = vmatprep.subr.mxu0 0.0
    %3701 = vmatpush1.msra.mxu0 0.0
    %3702 = vmatprep.subr.mxu0 0.0
    %3703 = vmatpush1.msra.mxu0 0.0
    %3704 = vmatprep.subr.mxu0 0.0
    %3705 = vmatpush1.msra.mxu0 0.0
    %3706 = vmatprep.subr.mxu0 0.0
    %3707 = vmatpush1.msra.mxu0 0.0
    %3708 = vmatprep.subr.mxu0 0.0
    %3709 = vmatpush1.msra.mxu0 0.0
    %3710 = vmatprep.subr.mxu0 0.0
    %3711 = vmatpush1.msra.mxu0 0.0
    %3712 = vmatprep.subr.mxu0 0.0
    %3713 = vmatpush1.msra.mxu0 0.0
    %3714 = vmatprep.subr.mxu0 0.0
    %3715 = vmatpush1.msra.mxu0 0.0
    %3716 = vmatprep.subr.mxu0 0.0
    %3717 = vmatpush1.msra.mxu0 0.0
    %3718 = vmatprep.subr.mxu0 0.0
    %3719 = vmatpush1.msra.mxu0 0.0
    %3720 = vmatprep.subr.mxu0 0.0
    %3721 = vmatpush1.msra.mxu0 0.0
    %3722 = vmatprep.subr.mxu0 0.0
    %3723 = vmatpush1.msra.mxu0 0.0
    %3724 = vmatprep.subr.mxu0 0.0
    %3725 = vmatpush1.msra.mxu0 0.0
    %3726 = vmatprep.subr.mxu0 0.0
    %3727 = vmatpush1.msra.mxu0 0.0
    %3728 = vmatprep.subr.mxu0 0.0
    %3729 = vmatpush1.msra.mxu0 0.0
    %3730 = vmatprep.subr.mxu0 0.0
    %3731 = vmatpush1.msra.mxu0 0.0
    %3732 = vmatprep.subr.mxu0 0.0
    %3733 = vmatpush1.msra.mxu0 0.0
    %3734 = vmatprep.subr.mxu0 0.0
    %3735 = vmatpush1.msra.mxu0 0.0
    %3736 = vmatprep.subr.mxu0 0.0
    %3737 = vmatpush1.msra.mxu0 0.0
    %3738 = vmatprep.subr.mxu0 0.0
    %3739 = vmatpush1.msra.mxu0 0.0
    %3740 = vmatprep.subr.mxu0 0.0
    %3741 = vmatpush1.msra.mxu0 0.0
    %3742 = vmatprep.subr.mxu0 0.0
    %3743 = vmatpush1.msra.mxu0 0.0
    %3744 = vmatprep.subr.mxu0 0.0
    %3745 = vmatpush1.msra.mxu0 0.0
    %3746 = vmatprep.mubr.f32.mxu0 0.0
    %3747 = vmatmul.mubr.f32.gmra.mrb[0].mxu0 %v3680
    %v3748 = vpop.f32.mrb[0].mxu0
    %v3749 = vadd.f32 0.0, %v3748
    %v3750 = vpop.f32.mrb[0].mxu0
    %3751 = vdwg.mxu0
    %s3752 = scalar_lea.vmem %s14, 32
    %v3753 = vld [vmem:[%s3752] sm:$0xff]
    %v3755 = vsel %vm701, %v3676, 0
    %v3758 = vsel %vm701, %v3749, 0
    %3760 = vmatprep.subr.mxu0 0.0
    %3761 = vmatpush1.msra.mxu0 %v3753
    %3762 = vmatprep.subr.mxu0 0.0
    %3763 = vmatpush1.msra.mxu0 0.0
    %3764 = vmatprep.subr.mxu0 0.0
    %3765 = vmatpush1.msra.mxu0 0.0
    %3766 = vmatprep.subr.mxu0 0.0
    %3767 = vmatpush1.msra.mxu0 0.0
    %3768 = vmatprep.subr.mxu0 0.0
    %3769 = vmatpush1.msra.mxu0 0.0
    %3770 = vmatprep.subr.mxu0 0.0
    %3771 = vmatpush1.msra.mxu0 0.0
    %3772 = vmatprep.subr.mxu0 0.0
    %3773 = vmatpush1.msra.mxu0 0.0
    %3774 = vmatprep.subr.mxu0 0.0
    %3775 = vmatpush1.msra.mxu0 0.0
    %3776 = vmatprep.subr.mxu0 0.0
    %3777 = vmatpush1.msra.mxu0 0.0
    %3778 = vmatprep.subr.mxu0 0.0
    %3779 = vmatpush1.msra.mxu0 0.0
    %3780 = vmatprep.subr.mxu0 0.0
    %3781 = vmatpush1.msra.mxu0 0.0
    %3782 = vmatprep.subr.mxu0 0.0
    %3783 = vmatpush1.msra.mxu0 0.0
    %3784 = vmatprep.subr.mxu0 0.0
    %3785 = vmatpush1.msra.mxu0 0.0
    %3786 = vmatprep.subr.mxu0 0.0
    %3787 = vmatpush1.msra.mxu0 0.0
    %3788 = vmatprep.subr.mxu0 0.0
    %3789 = vmatpush1.msra.mxu0 0.0
    %3790 = vmatprep.subr.mxu0 0.0
    %3791 = vmatpush1.msra.mxu0 0.0
    %3792 = vmatprep.subr.mxu0 0.0
    %3793 = vmatpush1.msra.mxu0 0.0
    %3794 = vmatprep.subr.mxu0 0.0
    %3795 = vmatpush1.msra.mxu0 0.0
    %3796 = vmatprep.subr.mxu0 0.0
    %3797 = vmatpush1.msra.mxu0 0.0
    %3798 = vmatprep.subr.mxu0 0.0
    %3799 = vmatpush1.msra.mxu0 0.0
    %3800 = vmatprep.subr.mxu0 0.0
    %3801 = vmatpush1.msra.mxu0 0.0
    %3802 = vmatprep.subr.mxu0 0.0
    %3803 = vmatpush1.msra.mxu0 0.0
    %3804 = vmatprep.subr.mxu0 0.0
    %3805 = vmatpush1.msra.mxu0 0.0
    %3806 = vmatprep.subr.mxu0 0.0
    %3807 = vmatpush1.msra.mxu0 0.0
    %3808 = vmatprep.subr.mxu0 0.0
    %3809 = vmatpush1.msra.mxu0 0.0
    %3810 = vmatprep.subr.mxu0 0.0
    %3811 = vmatpush1.msra.mxu0 0.0
    %3812 = vmatprep.subr.mxu0 0.0
    %3813 = vmatpush1.msra.mxu0 0.0
    %3814 = vmatprep.subr.mxu0 0.0
    %3815 = vmatpush1.msra.mxu0 0.0
    %3816 = vmatprep.subr.mxu0 0.0
    %3817 = vmatpush1.msra.mxu0 0.0
    %3818 = vmatprep.subr.mxu0 0.0
    %3819 = vmatpush1.msra.mxu0 0.0
    %3820 = vmatprep.subr.mxu0 0.0
    %3821 = vmatpush1.msra.mxu0 0.0
    %3822 = vmatprep.subr.mxu0 0.0
    %3823 = vmatpush1.msra.mxu0 0.0
    %3824 = vmatprep.mubr.f32.mxu0 0.0
    %3825 = vmatmul.mubr.f32.gmra.mrb[0].mxu0 %v3755
    %v3826 = vpop.f32.mrb[0].mxu0
    %v3827 = vadd.f32 0.0, %v3826
    %v3828 = vpop.f32.mrb[0].mxu0
    %3829 = vmatprep.mubr.f32.mxu0 0.0
    %3830 = vmatmul.mubr.f32.gmra.mrb[0].mxu0 %v3758
    %v3831 = vpop.f32.mrb[0].mxu0
    %v3832 = vadd.f32 0.0, %v3831
    %v3833 = vpop.f32.mrb[0].mxu0
    %3834 = vdwg.mxu0
    %v3835 = vadd.f32 %v3182, %v3827
    %v3836 = vadd.f32 %v3187, %v3832
    %s3837 = scalar_lea.vmem %s10, 160
    %v3838 = vld [vmem:[%s3837] sm:$0xff]
    %v3839 = vld [vmem:[%s3837 + $0x8] sm:$0xff]
    %v3840 = vld [vmem:[%s3837 + $0x10] sm:$0xff]
    %v3841 = vld [vmem:[%s3837 + $0x18] sm:$0xff]
    %3842 = vmatprep.subr.mxu0 0.0
    %3843 = vmatpush1.msra.mxu0 %v3838
    %3844 = vmatprep.subr.mxu0 0.0
    %3845 = vmatpush1.msra.mxu0 %v3839
    %3846 = vmatprep.subr.mxu0 0.0
    %3847 = vmatpush1.msra.mxu0 %v3840
    %3848 = vmatprep.subr.mxu0 0.0
    %3849 = vmatpush1.msra.mxu0 %v3841
    %3850 = vmatprep.subr.mxu0 0.0
    %3851 = vmatpush1.msra.mxu0 0.0
    %3852 = vmatprep.subr.mxu0 0.0
    %3853 = vmatpush1.msra.mxu0 0.0
    %3854 = vmatprep.subr.mxu0 0.0
    %3855 = vmatpush1.msra.mxu0 0.0
    %3856 = vmatprep.subr.mxu0 0.0
    %3857 = vmatpush1.msra.mxu0 0.0
    %3858 = vmatprep.subr.mxu0 0.0
    %3859 = vmatpush1.msra.mxu0 0.0
    %3860 = vmatprep.subr.mxu0 0.0
    %3861 = vmatpush1.msra.mxu0 0.0
    %3862 = vmatprep.subr.mxu0 0.0
    %3863 = vmatpush1.msra.mxu0 0.0
    %3864 = vmatprep.subr.mxu0 0.0
    %3865 = vmatpush1.msra.mxu0 0.0
    %3866 = vmatprep.subr.mxu0 0.0
    %3867 = vmatpush1.msra.mxu0 0.0
    %3868 = vmatprep.subr.mxu0 0.0
    %3869 = vmatpush1.msra.mxu0 0.0
    %3870 = vmatprep.subr.mxu0 0.0
    %3871 = vmatpush1.msra.mxu0 0.0
    %3872 = vmatprep.subr.mxu0 0.0
    %3873 = vmatpush1.msra.mxu0 0.0
    %3874 = vmatprep.subr.mxu0 0.0
    %3875 = vmatpush1.msra.mxu0 0.0
    %3876 = vmatprep.subr.mxu0 0.0
    %3877 = vmatpush1.msra.mxu0 0.0
    %3878 = vmatprep.subr.mxu0 0.0
    %3879 = vmatpush1.msra.mxu0 0.0
    %3880 = vmatprep.subr.mxu0 0.0
    %3881 = vmatpush1.msra.mxu0 0.0
    %3882 = vmatprep.subr.mxu0 0.0
    %3883 = vmatpush1.msra.mxu0 0.0
    %3884 = vmatprep.subr.mxu0 0.0
    %3885 = vmatpush1.msra.mxu0 0.0
    %3886 = vmatprep.subr.mxu0 0.0
    %3887 = vmatpush1.msra.mxu0 0.0
    %3888 = vmatprep.subr.mxu0 0.0
    %3889 = vmatpush1.msra.mxu0 0.0
    %3890 = vmatprep.subr.mxu0 0.0
    %3891 = vmatpush1.msra.mxu0 0.0
    %3892 = vmatprep.subr.mxu0 0.0
    %3893 = vmatpush1.msra.mxu0 0.0
    %3894 = vmatprep.subr.mxu0 0.0
    %3895 = vmatpush1.msra.mxu0 0.0
    %3896 = vmatprep.subr.mxu0 0.0
    %3897 = vmatpush1.msra.mxu0 0.0
    %3898 = vmatprep.subr.mxu0 0.0
    %3899 = vmatpush1.msra.mxu0 0.0
    %3900 = vmatprep.subr.mxu0 0.0
    %3901 = vmatpush1.msra.mxu0 0.0
    %3902 = vmatprep.subr.mxu0 0.0
    %3903 = vmatpush1.msra.mxu0 0.0
    %3904 = vmatprep.subr.mxu0 0.0
    %3905 = vmatpush1.msra.mxu0 0.0
    %3906 = vmatprep.mubr.f32.mxu0 0.0
    %3907 = vmatmul.mubr.f32.gmra.mrb[0].mxu0 %v457
    %v3908 = vpop.f32.mrb[0].mxu0
    %v3909 = vadd.f32 0.0, %v3908
    %v3910 = vpop.f32.mrb[0].mxu0
    %3911 = vmatprep.mubr.f32.mxu0 0.0
    %3912 = vmatmul.mubr.f32.gmra.mrb[0].mxu0 %v460
    %v3913 = vpop.f32.mrb[0].mxu0
    %v3914 = vadd.f32 0.0, %v3913
    %v3915 = vpop.f32.mrb[0].mxu0
    %3916 = vdwg.mxu0
    %s3917 = scalar_lea.vmem %s11, 160
    %v3918 = vld [vmem:[%s3917] sm:$0xff]
    %v3919 = vld [vmem:[%s3917 + $0x8] sm:$0xff]
    %v3920 = vld [vmem:[%s3917 + $0x10] sm:$0xff]
    %v3921 = vld [vmem:[%s3917 + $0x18] sm:$0xff]
    %3922 = vmatprep.subr.mxu0 0.0
    %3923 = vmatpush1.msra.mxu0 %v3918
    %3924 = vmatprep.subr.mxu0 0.0
    %3925 = vmatpush1.msra.mxu0 %v3919
    %3926 = vmatprep.subr.mxu0 0.0
    %3927 = vmatpush1.msra.mxu0 %v3920
    %3928 = vmatprep.subr.mxu0 0.0
    %3929 = vmatpush1.msra.mxu0 %v3921
    %3930 = vmatprep.subr.mxu0 0.0
    %3931 = vmatpush1.msra.mxu0 0.0
    %3932 = vmatprep.subr.mxu0 0.0
    %3933 = vmatpush1.msra.mxu0 0.0
    %3934 = vmatprep.subr.mxu0 0.0
    %3935 = vmatpush1.msra.mxu0 0.0
    %3936 = vmatprep.subr.mxu0 0.0
    %3937 = vmatpush1.msra.mxu0 0.0
    %3938 = vmatprep.subr.mxu0 0.0
    %3939 = vmatpush1.msra.mxu0 0.0
    %3940 = vmatprep.subr.mxu0 0.0
    %3941 = vmatpush1.msra.mxu0 0.0
    %3942 = vmatprep.subr.mxu0 0.0
    %3943 = vmatpush1.msra.mxu0 0.0
    %3944 = vmatprep.subr.mxu0 0.0
    %3945 = vmatpush1.msra.mxu0 0.0
    %3946 = vmatprep.subr.mxu0 0.0
    %3947 = vmatpush1.msra.mxu0 0.0
    %3948 = vmatprep.subr.mxu0 0.0
    %3949 = vmatpush1.msra.mxu0 0.0
    %3950 = vmatprep.subr.mxu0 0.0
    %3951 = vmatpush1.msra.mxu0 0.0
    %3952 = vmatprep.subr.mxu0 0.0
    %3953 = vmatpush1.msra.mxu0 0.0
    %3954 = vmatprep.subr.mxu0 0.0
    %3955 = vmatpush1.msra.mxu0 0.0
    %3956 = vmatprep.subr.mxu0 0.0
    %3957 = vmatpush1.msra.mxu0 0.0
    %3958 = vmatprep.subr.mxu0 0.0
    %3959 = vmatpush1.msra.mxu0 0.0
    %3960 = vmatprep.subr.mxu0 0.0
    %3961 = vmatpush1.msra.mxu0 0.0
    %3962 = vmatprep.subr.mxu0 0.0
    %3963 = vmatpush1.msra.mxu0 0.0
    %3964 = vmatprep.subr.mxu0 0.0
    %3965 = vmatpush1.msra.mxu0 0.0
    %3966 = vmatprep.subr.mxu0 0.0
    %3967 = vmatpush1.msra.mxu0 0.0
    %3968 = vmatprep.subr.mxu0 0.0
    %3969 = vmatpush1.msra.mxu0 0.0
    %3970 = vmatprep.subr.mxu0 0.0
    %3971 = vmatpush1.msra.mxu0 0.0
    %3972 = vmatprep.subr.mxu0 0.0
    %3973 = vmatpush1.msra.mxu0 0.0
    %3974 = vmatprep.subr.mxu0 0.0
    %3975 = vmatpush1.msra.mxu0 0.0
    %3976 = vmatprep.subr.mxu0 0.0
    %3977 = vmatpush1.msra.mxu0 0.0
    %3978 = vmatprep.subr.mxu0 0.0
    %3979 = vmatpush1.msra.mxu0 0.0
    %3980 = vmatprep.subr.mxu0 0.0
    %3981 = vmatpush1.msra.mxu0 0.0
    %3982 = vmatprep.subr.mxu0 0.0
    %3983 = vmatpush1.msra.mxu0 0.0
    %3984 = vmatprep.subr.mxu0 0.0
    %3985 = vmatpush1.msra.mxu0 0.0
    %3986 = vmatprep.mubr.f32.mxu0 0.0
    %3987 = vmatmul.mubr.f32.gmra.mrb[0].mxu0 %v542
    %v3988 = vpop.f32.mrb[0].mxu0
    %v3989 = vadd.f32 0.0, %v3988
    %v3990 = vpop.f32.mrb[0].mxu0
    %3991 = vmatprep.mubr.f32.mxu0 0.0
    %3992 = vmatmul.mubr.f32.gmra.mrb[0].mxu0 %v545
    %v3993 = vpop.f32.mrb[0].mxu0
    %v3994 = vadd.f32 0.0, %v3993
    %v3995 = vpop.f32.mrb[0].mxu0
    %3996 = vdwg.mxu0
    %s3997 = scalar_lea.vmem %s12, 160
    %v3998 = vld [vmem:[%s3997] sm:$0xff]
    %v3999 = vld [vmem:[%s3997 + $0x8] sm:$0xff]
    %v4000 = vld [vmem:[%s3997 + $0x10] sm:$0xff]
    %v4001 = vld [vmem:[%s3997 + $0x18] sm:$0xff]
    %4002 = vmatprep.subr.mxu0 0.0
    %4003 = vmatpush1.msra.mxu0 %v3998
    %4004 = vmatprep.subr.mxu0 0.0
    %4005 = vmatpush1.msra.mxu0 %v3999
    %4006 = vmatprep.subr.mxu0 0.0
    %4007 = vmatpush1.msra.mxu0 %v4000
    %4008 = vmatprep.subr.mxu0 0.0
    %4009 = vmatpush1.msra.mxu0 %v4001
    %4010 = vmatprep.subr.mxu0 0.0
    %4011 = vmatpush1.msra.mxu0 0.0
    %4012 = vmatprep.subr.mxu0 0.0
    %4013 = vmatpush1.msra.mxu0 0.0
    %4014 = vmatprep.subr.mxu0 0.0
    %4015 = vmatpush1.msra.mxu0 0.0
    %4016 = vmatprep.subr.mxu0 0.0
    %4017 = vmatpush1.msra.mxu0 0.0
    %4018 = vmatprep.subr.mxu0 0.0
    %4019 = vmatpush1.msra.mxu0 0.0
    %4020 = vmatprep.subr.mxu0 0.0
    %4021 = vmatpush1.msra.mxu0 0.0
    %4022 = vmatprep.subr.mxu0 0.0
    %4023 = vmatpush1.msra.mxu0 0.0
    %4024 = vmatprep.subr.mxu0 0.0
    %4025 = vmatpush1.msra.mxu0 0.0
    %4026 = vmatprep.subr.mxu0 0.0
    %4027 = vmatpush1.msra.mxu0 0.0
    %4028 = vmatprep.subr.mxu0 0.0
    %4029 = vmatpush1.msra.mxu0 0.0
    %4030 = vmatprep.subr.mxu0 0.0
    %4031 = vmatpush1.msra.mxu0 0.0
    %4032 = vmatprep.subr.mxu0 0.0
    %4033 = vmatpush1.msra.mxu0 0.0
    %4034 = vmatprep.subr.mxu0 0.0
    %4035 = vmatpush1.msra.mxu0 0.0
    %4036 = vmatprep.subr.mxu0 0.0
    %4037 = vmatpush1.msra.mxu0 0.0
    %4038 = vmatprep.subr.mxu0 0.0
    %4039 = vmatpush1.msra.mxu0 0.0
    %4040 = vmatprep.subr.mxu0 0.0
    %4041 = vmatpush1.msra.mxu0 0.0
    %4042 = vmatprep.subr.mxu0 0.0
    %4043 = vmatpush1.msra.mxu0 0.0
    %4044 = vmatprep.subr.mxu0 0.0
    %4045 = vmatpush1.msra.mxu0 0.0
    %4046 = vmatprep.subr.mxu0 0.0
    %4047 = vmatpush1.msra.mxu0 0.0
    %4048 = vmatprep.subr.mxu0 0.0
    %4049 = vmatpush1.msra.mxu0 0.0
    %4050 = vmatprep.subr.mxu0 0.0
    %4051 = vmatpush1.msra.mxu0 0.0
    %4052 = vmatprep.subr.mxu0 0.0
    %4053 = vmatpush1.msra.mxu0 0.0
    %4054 = vmatprep.subr.mxu0 0.0
    %4055 = vmatpush1.msra.mxu0 0.0
    %4056 = vmatprep.subr.mxu0 0.0
    %4057 = vmatpush1.msra.mxu0 0.0
    %4058 = vmatprep.subr.mxu0 0.0
    %4059 = vmatpush1.msra.mxu0 0.0
    %4060 = vmatprep.subr.mxu0 0.0
    %4061 = vmatpush1.msra.mxu0 0.0
    %4062 = vmatprep.subr.mxu0 0.0
    %4063 = vmatpush1.msra.mxu0 0.0
    %4064 = vmatprep.subr.mxu0 0.0
    %4065 = vmatpush1.msra.mxu0 0.0
    %4066 = vmatprep.mubr.f32.mxu0 0.0
    %4067 = vmatmul.mubr.f32.gmra.mrb[0].mxu0 %v3110
    %v4068 = vpop.f32.mrb[0].mxu0
    %v4069 = vadd.f32 0.0, %v4068
    %v4070 = vpop.f32.mrb[0].mxu0
    %4071 = vmatprep.mubr.f32.mxu0 0.0
    %4072 = vmatmul.mubr.f32.gmra.mrb[0].mxu0 %v3113
    %v4073 = vpop.f32.mrb[0].mxu0
    %v4074 = vadd.f32 0.0, %v4073
    %v4075 = vpop.f32.mrb[0].mxu0
    %4076 = vdwg.mxu0
    %v4078 = vsel %vm701, %v4069, 0
    %v4081 = vsel %vm701, %v3909, 0
    %4083 = vmatprep.subr.mxu0 0.0
    %4084 = vmatpush1.xpose.msra.mxu0 %v4081
    %4085 = vmatprep.subr.mxu0 0.0
    %4086 = vmatpush1.xpose.msra.mxu0 0.0
    %4087 = vmatprep.subr.mxu0 0.0
    %4088 = vmatpush1.xpose.msra.mxu0 0.0
    %4089 = vmatprep.subr.mxu0 0.0
    %4090 = vmatpush1.xpose.msra.mxu0 0.0
    %4091 = vmatprep.subr.mxu0 0.0
    %4092 = vmatpush1.xpose.msra.mxu0 0.0
    %4093 = vmatprep.subr.mxu0 0.0
    %4094 = vmatpush1.xpose.msra.mxu0 0.0
    %4095 = vmatprep.subr.mxu0 0.0
    %4096 = vmatpush1.xpose.msra.mxu0 0.0
    %4097 = vmatprep.subr.mxu0 0.0
    %4098 = vmatpush1.xpose.msra.mxu0 0.0
    %4099 = vmatprep.subr.mxu0 0.0
    %4100 = vmatpush1.xpose.msra.mxu0 0.0
    %4101 = vmatprep.subr.mxu0 0.0
    %4102 = vmatpush1.xpose.msra.mxu0 0.0
    %4103 = vmatprep.subr.mxu0 0.0
    %4104 = vmatpush1.xpose.msra.mxu0 0.0
    %4105 = vmatprep.subr.mxu0 0.0
    %4106 = vmatpush1.xpose.msra.mxu0 0.0
    %4107 = vmatprep.subr.mxu0 0.0
    %4108 = vmatpush1.xpose.msra.mxu0 0.0
    %4109 = vmatprep.subr.mxu0 0.0
    %4110 = vmatpush1.xpose.msra.mxu0 0.0
    %4111 = vmatprep.subr.mxu0 0.0
    %4112 = vmatpush1.xpose.msra.mxu0 0.0
    %4113 = vmatprep.subr.mxu0 0.0
    %4114 = vmatpush1.xpose.msra.mxu0 0.0
    %4115 = vmatprep.subr.mxu0 0.0
    %4116 = vmatpush1.xpose.msra.mxu0 0.0
    %4117 = vmatprep.subr.mxu0 0.0
    %4118 = vmatpush1.xpose.msra.mxu0 0.0
    %4119 = vmatprep.subr.mxu0 0.0
    %4120 = vmatpush1.xpose.msra.mxu0 0.0
    %4121 = vmatprep.subr.mxu0 0.0
    %4122 = vmatpush1.xpose.msra.mxu0 0.0
    %4123 = vmatprep.subr.mxu0 0.0
    %4124 = vmatpush1.xpose.msra.mxu0 0.0
    %4125 = vmatprep.subr.mxu0 0.0
    %4126 = vmatpush1.xpose.msra.mxu0 0.0
    %4127 = vmatprep.subr.mxu0 0.0
    %4128 = vmatpush1.xpose.msra.mxu0 0.0
    %4129 = vmatprep.subr.mxu0 0.0
    %4130 = vmatpush1.xpose.msra.mxu0 0.0
    %4131 = vmatprep.subr.mxu0 0.0
    %4132 = vmatpush1.xpose.msra.mxu0 0.0
    %4133 = vmatprep.subr.mxu0 0.0
    %4134 = vmatpush1.xpose.msra.mxu0 0.0
    %4135 = vmatprep.subr.mxu0 0.0
    %4136 = vmatpush1.xpose.msra.mxu0 0.0
    %4137 = vmatprep.subr.mxu0 0.0
    %4138 = vmatpush1.xpose.msra.mxu0 0.0
    %4139 = vmatprep.subr.mxu0 0.0
    %4140 = vmatpush1.xpose.msra.mxu0 0.0
    %4141 = vmatprep.subr.mxu0 0.0
    %4142 = vmatpush1.xpose.msra.mxu0 0.0
    %4143 = vmatprep.subr.mxu0 0.0
    %4144 = vmatpush1.xpose.msra.mxu0 0.0
    %4145 = vmatprep.subr.mxu0 0.0
    %4146 = vmatpush1.xpose.msra.mxu0 0.0
    %4147 = vmatprep.mubr.f32.mxu0 0.0
    %4148 = vmatmul.mubr.f32.gmra.mrb[0].mxu0 %v4078
    %v4149 = vpop.f32.mrb[0].mxu0
    %v4150 = vadd.f32 0.0, %v4149
    %v4151 = vpop.f32.mrb[0].mxu0
    %4152 = vdwg.mxu0
    %v4154 = vsel %vm701, %v4074, 0
    %v4157 = vsel %vm701, %v3914, 0
    %4159 = vmatprep.subr.mxu0 0.0
    %4160 = vmatpush1.xpose.msra.mxu0 %v4157
    %4161 = vmatprep.subr.mxu0 0.0
    %4162 = vmatpush1.xpose.msra.mxu0 0.0
    %4163 = vmatprep.subr.mxu0 0.0
    %4164 = vmatpush1.xpose.msra.mxu0 0.0
    %4165 = vmatprep.subr.mxu0 0.0
    %4166 = vmatpush1.xpose.msra.mxu0 0.0
    %4167 = vmatprep.subr.mxu0 0.0
    %4168 = vmatpush1.xpose.msra.mxu0 0.0
    %4169 = vmatprep.subr.mxu0 0.0
    %4170 = vmatpush1.xpose.msra.mxu0 0.0
    %4171 = vmatprep.subr.mxu0 0.0
    %4172 = vmatpush1.xpose.msra.mxu0 0.0
    %4173 = vmatprep.subr.mxu0 0.0
    %4174 = vmatpush1.xpose.msra.mxu0 0.0
    %4175 = vmatprep.subr.mxu0 0.0
    %4176 = vmatpush1.xpose.msra.mxu0 0.0
    %4177 = vmatprep.subr.mxu0 0.0
    %4178 = vmatpush1.xpose.msra.mxu0 0.0
    %4179 = vmatprep.subr.mxu0 0.0
    %4180 = vmatpush1.xpose.msra.mxu0 0.0
    %4181 = vmatprep.subr.mxu0 0.0
    %4182 = vmatpush1.xpose.msra.mxu0 0.0
    %4183 = vmatprep.subr.mxu0 0.0
    %4184 = vmatpush1.xpose.msra.mxu0 0.0
    %4185 = vmatprep.subr.mxu0 0.0
    %4186 = vmatpush1.xpose.msra.mxu0 0.0
    %4187 = vmatprep.subr.mxu0 0.0
    %4188 = vmatpush1.xpose.msra.mxu0 0.0
    %4189 = vmatprep.subr.mxu0 0.0
    %4190 = vmatpush1.xpose.msra.mxu0 0.0
    %4191 = vmatprep.subr.mxu0 0.0
    %4192 = vmatpush1.xpose.msra.mxu0 0.0
    %4193 = vmatprep.subr.mxu0 0.0
    %4194 = vmatpush1.xpose.msra.mxu0 0.0
    %4195 = vmatprep.subr.mxu0 0.0
    %4196 = vmatpush1.xpose.msra.mxu0 0.0
    %4197 = vmatprep.subr.mxu0 0.0
    %4198 = vmatpush1.xpose.msra.mxu0 0.0
    %4199 = vmatprep.subr.mxu0 0.0
    %4200 = vmatpush1.xpose.msra.mxu0 0.0
    %4201 = vmatprep.subr.mxu0 0.0
    %4202 = vmatpush1.xpose.msra.mxu0 0.0
    %4203 = vmatprep.subr.mxu0 0.0
    %4204 = vmatpush1.xpose.msra.mxu0 0.0
    %4205 = vmatprep.subr.mxu0 0.0
    %4206 = vmatpush1.xpose.msra.mxu0 0.0
    %4207 = vmatprep.subr.mxu0 0.0
    %4208 = vmatpush1.xpose.msra.mxu0 0.0
    %4209 = vmatprep.subr.mxu0 0.0
    %4210 = vmatpush1.xpose.msra.mxu0 0.0
    %4211 = vmatprep.subr.mxu0 0.0
    %4212 = vmatpush1.xpose.msra.mxu0 0.0
    %4213 = vmatprep.subr.mxu0 0.0
    %4214 = vmatpush1.xpose.msra.mxu0 0.0
    %4215 = vmatprep.subr.mxu0 0.0
    %4216 = vmatpush1.xpose.msra.mxu0 0.0
    %4217 = vmatprep.subr.mxu0 0.0
    %4218 = vmatpush1.xpose.msra.mxu0 0.0
    %4219 = vmatprep.subr.mxu0 0.0
    %4220 = vmatpush1.xpose.msra.mxu0 0.0
    %4221 = vmatprep.subr.mxu0 0.0
    %4222 = vmatpush1.xpose.msra.mxu0 0.0
    %4223 = vmatprep.mubr.f32.mxu0 0.0
    %4224 = vmatmul.mubr.f32.gmra.mrb[0].mxu0 %v4154
    %v4225 = vpop.f32.mrb[0].mxu0
    %v4226 = vadd.f32 0.0, %v4225
    %v4227 = vpop.f32.mrb[0].mxu0
    %4228 = vdwg.mxu0
    %v4229 = vmul.f32 %v4150, 0.35355338
    %v4230 = vmul.f32 %v4226, 0.35355338
    %v4231 = vsel %vm701, %v4229, -inf
    %4232 = vmax.xlane.f32.xlu0 %v4231
    %v4233 = vpop.xlane.xlu0 %4232
    %v4234 = vsel %vm701, %v4230, -inf
    %4235 = vmax.xlane.f32.xlu0 %v4234
    %v4236 = vpop.xlane.xlu0 %4235
    %v4237 = vsub.f32 %v4229, %v4233
    %v4238 = vsub.f32 %v4230, %v4236
    %v4239 = vmul.f32 %v4237, 1.442695
    %v4240 = vpow.pop %v4239
    %v4241 = vmul.f32 %v4238, 1.442695
    %v4242 = vpow.pop %v4241
    %v4243 = vsel %vm701, %v4240, 0.0
    %4244 = vadd.xlane.f32.xlu0 %v4243
    %v4245 = vpop.xlane.xlu0 %4244
    %v4246 = vsel %vm701, %v4242, 0.0
    %4247 = vadd.xlane.f32.xlu0 %v4246
    %v4248 = vpop.xlane.xlu0 %4247
    %v4249 = vrcp.pop %v4245
    %v4250 = vrcp.pop %v4248
    %v4251 = vmul.f32 %v4240, %v4249
    %v4252 = vmul.f32 %v4242, %v4250
    %v4254 = vsel %vm701, %v4251, 0
    %4256 = vmatprep.subr.mxu0 0.0
    %4257 = vmatpush1.msra.mxu0 %v3989
    %4258 = vmatprep.subr.mxu0 0.0
    %4259 = vmatpush1.msra.mxu0 0.0
    %4260 = vmatprep.subr.mxu0 0.0
    %4261 = vmatpush1.msra.mxu0 0.0
    %4262 = vmatprep.subr.mxu0 0.0
    %4263 = vmatpush1.msra.mxu0 0.0
    %4264 = vmatprep.subr.mxu0 0.0
    %4265 = vmatpush1.msra.mxu0 0.0
    %4266 = vmatprep.subr.mxu0 0.0
    %4267 = vmatpush1.msra.mxu0 0.0
    %4268 = vmatprep.subr.mxu0 0.0
    %4269 = vmatpush1.msra.mxu0 0.0
    %4270 = vmatprep.subr.mxu0 0.0
    %4271 = vmatpush1.msra.mxu0 0.0
    %4272 = vmatprep.subr.mxu0 0.0
    %4273 = vmatpush1.msra.mxu0 0.0
    %4274 = vmatprep.subr.mxu0 0.0
    %4275 = vmatpush1.msra.mxu0 0.0
    %4276 = vmatprep.subr.mxu0 0.0
    %4277 = vmatpush1.msra.mxu0 0.0
    %4278 = vmatprep.subr.mxu0 0.0
    %4279 = vmatpush1.msra.mxu0 0.0
    %4280 = vmatprep.subr.mxu0 0.0
    %4281 = vmatpush1.msra.mxu0 0.0
    %4282 = vmatprep.subr.mxu0 0.0
    %4283 = vmatpush1.msra.mxu0 0.0
    %4284 = vmatprep.subr.mxu0 0.0
    %4285 = vmatpush1.msra.mxu0 0.0
    %4286 = vmatprep.subr.mxu0 0.0
    %4287 = vmatpush1.msra.mxu0 0.0
    %4288 = vmatprep.subr.mxu0 0.0
    %4289 = vmatpush1.msra.mxu0 0.0
    %4290 = vmatprep.subr.mxu0 0.0
    %4291 = vmatpush1.msra.mxu0 0.0
    %4292 = vmatprep.subr.mxu0 0.0
    %4293 = vmatpush1.msra.mxu0 0.0
    %4294 = vmatprep.subr.mxu0 0.0
    %4295 = vmatpush1.msra.mxu0 0.0
    %4296 = vmatprep.subr.mxu0 0.0
    %4297 = vmatpush1.msra.mxu0 0.0
    %4298 = vmatprep.subr.mxu0 0.0
    %4299 = vmatpush1.msra.mxu0 0.0
    %4300 = vmatprep.subr.mxu0 0.0
    %4301 = vmatpush1.msra.mxu0 0.0
    %4302 = vmatprep.subr.mxu0 0.0
    %4303 = vmatpush1.msra.mxu0 0.0
    %4304 = vmatprep.subr.mxu0 0.0
    %4305 = vmatpush1.msra.mxu0 0.0
    %4306 = vmatprep.subr.mxu0 0.0
    %4307 = vmatpush1.msra.mxu0 0.0
    %4308 = vmatprep.subr.mxu0 0.0
    %4309 = vmatpush1.msra.mxu0 0.0
    %4310 = vmatprep.subr.mxu0 0.0
    %4311 = vmatpush1.msra.mxu0 0.0
    %4312 = vmatprep.subr.mxu0 0.0
    %4313 = vmatpush1.msra.mxu0 0.0
    %4314 = vmatprep.subr.mxu0 0.0
    %4315 = vmatpush1.msra.mxu0 0.0
    %4316 = vmatprep.subr.mxu0 0.0
    %4317 = vmatpush1.msra.mxu0 0.0
    %4318 = vmatprep.subr.mxu0 0.0
    %4319 = vmatpush1.msra.mxu0 0.0
    %4320 = vmatprep.mubr.f32.mxu0 0.0
    %4321 = vmatmul.mubr.f32.gmra.mrb[0].mxu0 %v4254
    %v4322 = vpop.f32.mrb[0].mxu0
    %v4323 = vadd.f32 0.0, %v4322
    %v4324 = vpop.f32.mrb[0].mxu0
    %4325 = vdwg.mxu0
    %v4327 = vsel %vm701, %v4252, 0
    %4329 = vmatprep.subr.mxu0 0.0
    %4330 = vmatpush1.msra.mxu0 %v3994
    %4331 = vmatprep.subr.mxu0 0.0
    %4332 = vmatpush1.msra.mxu0 0.0
    %4333 = vmatprep.subr.mxu0 0.0
    %4334 = vmatpush1.msra.mxu0 0.0
    %4335 = vmatprep.subr.mxu0 0.0
    %4336 = vmatpush1.msra.mxu0 0.0
    %4337 = vmatprep.subr.mxu0 0.0
    %4338 = vmatpush1.msra.mxu0 0.0
    %4339 = vmatprep.subr.mxu0 0.0
    %4340 = vmatpush1.msra.mxu0 0.0
    %4341 = vmatprep.subr.mxu0 0.0
    %4342 = vmatpush1.msra.mxu0 0.0
    %4343 = vmatprep.subr.mxu0 0.0
    %4344 = vmatpush1.msra.mxu0 0.0
    %4345 = vmatprep.subr.mxu0 0.0
    %4346 = vmatpush1.msra.mxu0 0.0
    %4347 = vmatprep.subr.mxu0 0.0
    %4348 = vmatpush1.msra.mxu0 0.0
    %4349 = vmatprep.subr.mxu0 0.0
    %4350 = vmatpush1.msra.mxu0 0.0
    %4351 = vmatprep.subr.mxu0 0.0
    %4352 = vmatpush1.msra.mxu0 0.0
    %4353 = vmatprep.subr.mxu0 0.0
    %4354 = vmatpush1.msra.mxu0 0.0
    %4355 = vmatprep.subr.mxu0 0.0
    %4356 = vmatpush1.msra.mxu0 0.0
    %4357 = vmatprep.subr.mxu0 0.0
    %4358 = vmatpush1.msra.mxu0 0.0
    %4359 = vmatprep.subr.mxu0 0.0
    %4360 = vmatpush1.msra.mxu0 0.0
    %4361 = vmatprep.subr.mxu0 0.0
    %4362 = vmatpush1.msra.mxu0 0.0
    %4363 = vmatprep.subr.mxu0 0.0
    %4364 = vmatpush1.msra.mxu0 0.0
    %4365 = vmatprep.subr.mxu0 0.0
    %4366 = vmatpush1.msra.mxu0 0.0
    %4367 = vmatprep.subr.mxu0 0.0
    %4368 = vmatpush1.msra.mxu0 0.0
    %4369 = vmatprep.subr.mxu0 0.0
    %4370 = vmatpush1.msra.mxu0 0.0
    %4371 = vmatprep.subr.mxu0 0.0
    %4372 = vmatpush1.msra.mxu0 0.0
    %4373 = vmatprep.subr.mxu0 0.0
    %4374 = vmatpush1.msra.mxu0 0.0
    %4375 = vmatprep.subr.mxu0 0.0
    %4376 = vmatpush1.msra.mxu0 0.0
    %4377 = vmatprep.subr.mxu0 0.0
    %4378 = vmatpush1.msra.mxu0 0.0
    %4379 = vmatprep.subr.mxu0 0.0
    %4380 = vmatpush1.msra.mxu0 0.0
    %4381 = vmatprep.subr.mxu0 0.0
    %4382 = vmatpush1.msra.mxu0 0.0
    %4383 = vmatprep.subr.mxu0 0.0
    %4384 = vmatpush1.msra.mxu0 0.0
    %4385 = vmatprep.subr.mxu0 0.0
    %4386 = vmatpush1.msra.mxu0 0.0
    %4387 = vmatprep.subr.mxu0 0.0
    %4388 = vmatpush1.msra.mxu0 0.0
    %4389 = vmatprep.subr.mxu0 0.0
    %4390 = vmatpush1.msra.mxu0 0.0
    %4391 = vmatprep.subr.mxu0 0.0
    %4392 = vmatpush1.msra.mxu0 0.0
    %4393 = vmatprep.mubr.f32.mxu0 0.0
    %4394 = vmatmul.mubr.f32.gmra.mrb[0].mxu0 %v4327
    %v4395 = vpop.f32.mrb[0].mxu0
    %v4396 = vadd.f32 0.0, %v4395
    %v4397 = vpop.f32.mrb[0].mxu0
    %4398 = vdwg.mxu0
    %s4399 = scalar_lea.vmem %s14, 40
    %v4400 = vld [vmem:[%s4399] sm:$0xff]
    %v4402 = vsel %vm701, %v4323, 0
    %v4405 = vsel %vm701, %v4396, 0
    %4407 = vmatprep.subr.mxu0 0.0
    %4408 = vmatpush1.msra.mxu0 %v4400
    %4409 = vmatprep.subr.mxu0 0.0
    %4410 = vmatpush1.msra.mxu0 0.0
    %4411 = vmatprep.subr.mxu0 0.0
    %4412 = vmatpush1.msra.mxu0 0.0
    %4413 = vmatprep.subr.mxu0 0.0
    %4414 = vmatpush1.msra.mxu0 0.0
    %4415 = vmatprep.subr.mxu0 0.0
    %4416 = vmatpush1.msra.mxu0 0.0
    %4417 = vmatprep.subr.mxu0 0.0
    %4418 = vmatpush1.msra.mxu0 0.0
    %4419 = vmatprep.subr.mxu0 0.0
    %4420 = vmatpush1.msra.mxu0 0.0
    %4421 = vmatprep.subr.mxu0 0.0
    %4422 = vmatpush1.msra.mxu0 0.0
    %4423 = vmatprep.subr.mxu0 0.0
    %4424 = vmatpush1.msra.mxu0 0.0
    %4425 = vmatprep.subr.mxu0 0.0
    %4426 = vmatpush1.msra.mxu0 0.0
    %4427 = vmatprep.subr.mxu0 0.0
    %4428 = vmatpush1.msra.mxu0 0.0
    %4429 = vmatprep.subr.mxu0 0.0
    %4430 = vmatpush1.msra.mxu0 0.0
    %4431 = vmatprep.subr.mxu0 0.0
    %4432 = vmatpush1.msra.mxu0 0.0
    %4433 = vmatprep.subr.mxu0 0.0
    %4434 = vmatpush1.msra.mxu0 0.0
    %4435 = vmatprep.subr.mxu0 0.0
    %4436 = vmatpush1.msra.mxu0 0.0
    %4437 = vmatprep.subr.mxu0 0.0
    %4438 = vmatpush1.msra.mxu0 0.0
    %4439 = vmatprep.subr.mxu0 0.0
    %4440 = vmatpush1.msra.mxu0 0.0
    %4441 = vmatprep.subr.mxu0 0.0
    %4442 = vmatpush1.msra.mxu0 0.0
    %4443 = vmatprep.subr.mxu0 0.0
    %4444 = vmatpush1.msra.mxu0 0.0
    %4445 = vmatprep.subr.mxu0 0.0
    %4446 = vmatpush1.msra.mxu0 0.0
    %4447 = vmatprep.subr.mxu0 0.0
    %4448 = vmatpush1.msra.mxu0 0.0
    %4449 = vmatprep.subr.mxu0 0.0
    %4450 = vmatpush1.msra.mxu0 0.0
    %4451 = vmatprep.subr.mxu0 0.0
    %4452 = vmatpush1.msra.mxu0 0.0
    %4453 = vmatprep.subr.mxu0 0.0
    %4454 = vmatpush1.msra.mxu0 0.0
    %4455 = vmatprep.subr.mxu0 0.0
    %4456 = vmatpush1.msra.mxu0 0.0
    %4457 = vmatprep.subr.mxu0 0.0
    %4458 = vmatpush1.msra.mxu0 0.0
    %4459 = vmatprep.subr.mxu0 0.0
    %4460 = vmatpush1.msra.mxu0 0.0
    %4461 = vmatprep.subr.mxu0 0.0
    %4462 = vmatpush1.msra.mxu0 0.0
    %4463 = vmatprep.subr.mxu0 0.0
    %4464 = vmatpush1.msra.mxu0 0.0
    %4465 = vmatprep.subr.mxu0 0.0
    %4466 = vmatpush1.msra.mxu0 0.0
    %4467 = vmatprep.subr.mxu0 0.0
    %4468 = vmatpush1.msra.mxu0 0.0
    %4469 = vmatprep.subr.mxu0 0.0
    %4470 = vmatpush1.msra.mxu0 0.0
    %4471 = vmatprep.mubr.f32.mxu0 0.0
    %4472 = vmatmul.mubr.f32.gmra.mrb[0].mxu0 %v4402
    %v4473 = vpop.f32.mrb[0].mxu0
    %v4474 = vadd.f32 0.0, %v4473
    %v4475 = vpop.f32.mrb[0].mxu0
    %4476 = vmatprep.mubr.f32.mxu0 0.0
    %4477 = vmatmul.mubr.f32.gmra.mrb[0].mxu0 %v4405
    %v4478 = vpop.f32.mrb[0].mxu0
    %v4479 = vadd.f32 0.0, %v4478
    %v4480 = vpop.f32.mrb[0].mxu0
    %4481 = vdwg.mxu0
    %v4482 = vadd.f32 %v3835, %v4474
    %v4483 = vadd.f32 %v3836, %v4479
    %s4484 = scalar_lea.vmem %s10, 192
    %v4485 = vld [vmem:[%s4484] sm:$0xff]
    %v4486 = vld [vmem:[%s4484 + $0x8] sm:$0xff]
    %v4487 = vld [vmem:[%s4484 + $0x10] sm:$0xff]
    %v4488 = vld [vmem:[%s4484 + $0x18] sm:$0xff]
    %4489 = vmatprep.subr.mxu0 0.0
    %4490 = vmatpush1.msra.mxu0 %v4485
    %4491 = vmatprep.subr.mxu0 0.0
    %4492 = vmatpush1.msra.mxu0 %v4486
    %4493 = vmatprep.subr.mxu0 0.0
    %4494 = vmatpush1.msra.mxu0 %v4487
    %4495 = vmatprep.subr.mxu0 0.0
    %4496 = vmatpush1.msra.mxu0 %v4488
    %4497 = vmatprep.subr.mxu0 0.0
    %4498 = vmatpush1.msra.mxu0 0.0
    %4499 = vmatprep.subr.mxu0 0.0
    %4500 = vmatpush1.msra.mxu0 0.0
    %4501 = vmatprep.subr.mxu0 0.0
    %4502 = vmatpush1.msra.mxu0 0.0
    %4503 = vmatprep.subr.mxu0 0.0
    %4504 = vmatpush1.msra.mxu0 0.0
    %4505 = vmatprep.subr.mxu0 0.0
    %4506 = vmatpush1.msra.mxu0 0.0
    %4507 = vmatprep.subr.mxu0 0.0
    %4508 = vmatpush1.msra.mxu0 0.0
    %4509 = vmatprep.subr.mxu0 0.0
    %4510 = vmatpush1.msra.mxu0 0.0
    %4511 = vmatprep.subr.mxu0 0.0
    %4512 = vmatpush1.msra.mxu0 0.0
    %4513 = vmatprep.subr.mxu0 0.0
    %4514 = vmatpush1.msra.mxu0 0.0
    %4515 = vmatprep.subr.mxu0 0.0
    %4516 = vmatpush1.msra.mxu0 0.0
    %4517 = vmatprep.subr.mxu0 0.0
    %4518 = vmatpush1.msra.mxu0 0.0
    %4519 = vmatprep.subr.mxu0 0.0
    %4520 = vmatpush1.msra.mxu0 0.0
    %4521 = vmatprep.subr.mxu0 0.0
    %4522 = vmatpush1.msra.mxu0 0.0
    %4523 = vmatprep.subr.mxu0 0.0
    %4524 = vmatpush1.msra.mxu0 0.0
    %4525 = vmatprep.subr.mxu0 0.0
    %4526 = vmatpush1.msra.mxu0 0.0
    %4527 = vmatprep.subr.mxu0 0.0
    %4528 = vmatpush1.msra.mxu0 0.0
    %4529 = vmatprep.subr.mxu0 0.0
    %4530 = vmatpush1.msra.mxu0 0.0
    %4531 = vmatprep.subr.mxu0 0.0
    %4532 = vmatpush1.msra.mxu0 0.0
    %4533 = vmatprep.subr.mxu0 0.0
    %4534 = vmatpush1.msra.mxu0 0.0
    %4535 = vmatprep.subr.mxu0 0.0
    %4536 = vmatpush1.msra.mxu0 0.0
    %4537 = vmatprep.subr.mxu0 0.0
    %4538 = vmatpush1.msra.mxu0 0.0
    %4539 = vmatprep.subr.mxu0 0.0
    %4540 = vmatpush1.msra.mxu0 0.0
    %4541 = vmatprep.subr.mxu0 0.0
    %4542 = vmatpush1.msra.mxu0 0.0
    %4543 = vmatprep.subr.mxu0 0.0
    %4544 = vmatpush1.msra.mxu0 0.0
    %4545 = vmatprep.subr.mxu0 0.0
    %4546 = vmatpush1.msra.mxu0 0.0
    %4547 = vmatprep.subr.mxu0 0.0
    %4548 = vmatpush1.msra.mxu0 0.0
    %4549 = vmatprep.subr.mxu0 0.0
    %4550 = vmatpush1.msra.mxu0 0.0
    %4551 = vmatprep.subr.mxu0 0.0
    %4552 = vmatpush1.msra.mxu0 0.0
    %4553 = vmatprep.mubr.f32.mxu0 0.0
    %4554 = vmatmul.mubr.f32.gmra.mrb[0].mxu0 %v457
    %v4555 = vpop.f32.mrb[0].mxu0
    %v4556 = vadd.f32 0.0, %v4555
    %v4557 = vpop.f32.mrb[0].mxu0
    %4558 = vmatprep.mubr.f32.mxu0 0.0
    %4559 = vmatmul.mubr.f32.gmra.mrb[0].mxu0 %v460
    %v4560 = vpop.f32.mrb[0].mxu0
    %v4561 = vadd.f32 0.0, %v4560
    %v4562 = vpop.f32.mrb[0].mxu0
    %4563 = vdwg.mxu0
    %s4564 = scalar_lea.vmem %s11, 192
    %v4565 = vld [vmem:[%s4564] sm:$0xff]
    %v4566 = vld [vmem:[%s4564 + $0x8] sm:$0xff]
    %v4567 = vld [vmem:[%s4564 + $0x10] sm:$0xff]
    %v4568 = vld [vmem:[%s4564 + $0x18] sm:$0xff]
    %4569 = vmatprep.subr.mxu0 0.0
    %4570 = vmatpush1.msra.mxu0 %v4565
    %4571 = vmatprep.subr.mxu0 0.0
    %4572 = vmatpush1.msra.mxu0 %v4566
    %4573 = vmatprep.subr.mxu0 0.0
    %4574 = vmatpush1.msra.mxu0 %v4567
    %4575 = vmatprep.subr.mxu0 0.0
    %4576 = vmatpush1.msra.mxu0 %v4568
    %4577 = vmatprep.subr.mxu0 0.0
    %4578 = vmatpush1.msra.mxu0 0.0
    %4579 = vmatprep.subr.mxu0 0.0
    %4580 = vmatpush1.msra.mxu0 0.0
    %4581 = vmatprep.subr.mxu0 0.0
    %4582 = vmatpush1.msra.mxu0 0.0
    %4583 = vmatprep.subr.mxu0 0.0
    %4584 = vmatpush1.msra.mxu0 0.0
    %4585 = vmatprep.subr.mxu0 0.0
    %4586 = vmatpush1.msra.mxu0 0.0
    %4587 = vmatprep.subr.mxu0 0.0
    %4588 = vmatpush1.msra.mxu0 0.0
    %4589 = vmatprep.subr.mxu0 0.0
    %4590 = vmatpush1.msra.mxu0 0.0
    %4591 = vmatprep.subr.mxu0 0.0
    %4592 = vmatpush1.msra.mxu0 0.0
    %4593 = vmatprep.subr.mxu0 0.0
    %4594 = vmatpush1.msra.mxu0 0.0
    %4595 = vmatprep.subr.mxu0 0.0
    %4596 = vmatpush1.msra.mxu0 0.0
    %4597 = vmatprep.subr.mxu0 0.0
    %4598 = vmatpush1.msra.mxu0 0.0
    %4599 = vmatprep.subr.mxu0 0.0
    %4600 = vmatpush1.msra.mxu0 0.0
    %4601 = vmatprep.subr.mxu0 0.0
    %4602 = vmatpush1.msra.mxu0 0.0
    %4603 = vmatprep.subr.mxu0 0.0
    %4604 = vmatpush1.msra.mxu0 0.0
    %4605 = vmatprep.subr.mxu0 0.0
    %4606 = vmatpush1.msra.mxu0 0.0
    %4607 = vmatprep.subr.mxu0 0.0
    %4608 = vmatpush1.msra.mxu0 0.0
    %4609 = vmatprep.subr.mxu0 0.0
    %4610 = vmatpush1.msra.mxu0 0.0
    %4611 = vmatprep.subr.mxu0 0.0
    %4612 = vmatpush1.msra.mxu0 0.0
    %4613 = vmatprep.subr.mxu0 0.0
    %4614 = vmatpush1.msra.mxu0 0.0
    %4615 = vmatprep.subr.mxu0 0.0
    %4616 = vmatpush1.msra.mxu0 0.0
    %4617 = vmatprep.subr.mxu0 0.0
    %4618 = vmatpush1.msra.mxu0 0.0
    %4619 = vmatprep.subr.mxu0 0.0
    %4620 = vmatpush1.msra.mxu0 0.0
    %4621 = vmatprep.subr.mxu0 0.0
    %4622 = vmatpush1.msra.mxu0 0.0
    %4623 = vmatprep.subr.mxu0 0.0
    %4624 = vmatpush1.msra.mxu0 0.0
    %4625 = vmatprep.subr.mxu0 0.0
    %4626 = vmatpush1.msra.mxu0 0.0
    %4627 = vmatprep.subr.mxu0 0.0
    %4628 = vmatpush1.msra.mxu0 0.0
    %4629 = vmatprep.subr.mxu0 0.0
    %4630 = vmatpush1.msra.mxu0 0.0
    %4631 = vmatprep.subr.mxu0 0.0
    %4632 = vmatpush1.msra.mxu0 0.0
    %4633 = vmatprep.mubr.f32.mxu0 0.0
    %4634 = vmatmul.mubr.f32.gmra.mrb[0].mxu0 %v542
    %v4635 = vpop.f32.mrb[0].mxu0
    %v4636 = vadd.f32 0.0, %v4635
    %v4637 = vpop.f32.mrb[0].mxu0
    %4638 = vmatprep.mubr.f32.mxu0 0.0
    %4639 = vmatmul.mubr.f32.gmra.mrb[0].mxu0 %v545
    %v4640 = vpop.f32.mrb[0].mxu0
    %v4641 = vadd.f32 0.0, %v4640
    %v4642 = vpop.f32.mrb[0].mxu0
    %4643 = vdwg.mxu0
    %s4644 = scalar_lea.vmem %s12, 192
    %v4645 = vld [vmem:[%s4644] sm:$0xff]
    %v4646 = vld [vmem:[%s4644 + $0x8] sm:$0xff]
    %v4647 = vld [vmem:[%s4644 + $0x10] sm:$0xff]
    %v4648 = vld [vmem:[%s4644 + $0x18] sm:$0xff]
    %4649 = vmatprep.subr.mxu0 0.0
    %4650 = vmatpush1.msra.mxu0 %v4645
    %4651 = vmatprep.subr.mxu0 0.0
    %4652 = vmatpush1.msra.mxu0 %v4646
    %4653 = vmatprep.subr.mxu0 0.0
    %4654 = vmatpush1.msra.mxu0 %v4647
    %4655 = vmatprep.subr.mxu0 0.0
    %4656 = vmatpush1.msra.mxu0 %v4648
    %4657 = vmatprep.subr.mxu0 0.0
    %4658 = vmatpush1.msra.mxu0 0.0
    %4659 = vmatprep.subr.mxu0 0.0
    %4660 = vmatpush1.msra.mxu0 0.0
    %4661 = vmatprep.subr.mxu0 0.0
    %4662 = vmatpush1.msra.mxu0 0.0
    %4663 = vmatprep.subr.mxu0 0.0
    %4664 = vmatpush1.msra.mxu0 0.0
    %4665 = vmatprep.subr.mxu0 0.0
    %4666 = vmatpush1.msra.mxu0 0.0
    %4667 = vmatprep.subr.mxu0 0.0
    %4668 = vmatpush1.msra.mxu0 0.0
    %4669 = vmatprep.subr.mxu0 0.0
    %4670 = vmatpush1.msra.mxu0 0.0
    %4671 = vmatprep.subr.mxu0 0.0
    %4672 = vmatpush1.msra.mxu0 0.0
    %4673 = vmatprep.subr.mxu0 0.0
    %4674 = vmatpush1.msra.mxu0 0.0
    %4675 = vmatprep.subr.mxu0 0.0
    %4676 = vmatpush1.msra.mxu0 0.0
    %4677 = vmatprep.subr.mxu0 0.0
    %4678 = vmatpush1.msra.mxu0 0.0
    %4679 = vmatprep.subr.mxu0 0.0
    %4680 = vmatpush1.msra.mxu0 0.0
    %4681 = vmatprep.subr.mxu0 0.0
    %4682 = vmatpush1.msra.mxu0 0.0
    %4683 = vmatprep.subr.mxu0 0.0
    %4684 = vmatpush1.msra.mxu0 0.0
    %4685 = vmatprep.subr.mxu0 0.0
    %4686 = vmatpush1.msra.mxu0 0.0
    %4687 = vmatprep.subr.mxu0 0.0
    %4688 = vmatpush1.msra.mxu0 0.0
    %4689 = vmatprep.subr.mxu0 0.0
    %4690 = vmatpush1.msra.mxu0 0.0
    %4691 = vmatprep.subr.mxu0 0.0
    %4692 = vmatpush1.msra.mxu0 0.0
    %4693 = vmatprep.subr.mxu0 0.0
    %4694 = vmatpush1.msra.mxu0 0.0
    %4695 = vmatprep.subr.mxu0 0.0
    %4696 = vmatpush1.msra.mxu0 0.0
    %4697 = vmatprep.subr.mxu0 0.0
    %4698 = vmatpush1.msra.mxu0 0.0
    %4699 = vmatprep.subr.mxu0 0.0
    %4700 = vmatpush1.msra.mxu0 0.0
    %4701 = vmatprep.subr.mxu0 0.0
    %4702 = vmatpush1.msra.mxu0 0.0
    %4703 = vmatprep.subr.mxu0 0.0
    %4704 = vmatpush1.msra.mxu0 0.0
    %4705 = vmatprep.subr.mxu0 0.0
    %4706 = vmatpush1.msra.mxu0 0.0
    %4707 = vmatprep.subr.mxu0 0.0
    %4708 = vmatpush1.msra.mxu0 0.0
    %4709 = vmatprep.subr.mxu0 0.0
    %4710 = vmatpush1.msra.mxu0 0.0
    %4711 = vmatprep.subr.mxu0 0.0
    %4712 = vmatpush1.msra.mxu0 0.0
    %4713 = vmatprep.mubr.f32.mxu0 0.0
    %4714 = vmatmul.mubr.f32.gmra.mrb[0].mxu0 %v3110
    %v4715 = vpop.f32.mrb[0].mxu0
    %v4716 = vadd.f32 0.0, %v4715
    %v4717 = vpop.f32.mrb[0].mxu0
    %4718 = vmatprep.mubr.f32.mxu0 0.0
    %4719 = vmatmul.mubr.f32.gmra.mrb[0].mxu0 %v3113
    %v4720 = vpop.f32.mrb[0].mxu0
    %v4721 = vadd.f32 0.0, %v4720
    %v4722 = vpop.f32.mrb[0].mxu0
    %4723 = vdwg.mxu0
    %v4725 = vsel %vm701, %v4716, 0
    %v4728 = vsel %vm701, %v4556, 0
    %4730 = vmatprep.subr.mxu0 0.0
    %4731 = vmatpush1.xpose.msra.mxu0 %v4728
    %4732 = vmatprep.subr.mxu0 0.0
    %4733 = vmatpush1.xpose.msra.mxu0 0.0
    %4734 = vmatprep.subr.mxu0 0.0
    %4735 = vmatpush1.xpose.msra.mxu0 0.0
    %4736 = vmatprep.subr.mxu0 0.0
    %4737 = vmatpush1.xpose.msra.mxu0 0.0
    %4738 = vmatprep.subr.mxu0 0.0
    %4739 = vmatpush1.xpose.msra.mxu0 0.0
    %4740 = vmatprep.subr.mxu0 0.0
    %4741 = vmatpush1.xpose.msra.mxu0 0.0
    %4742 = vmatprep.subr.mxu0 0.0
    %4743 = vmatpush1.xpose.msra.mxu0 0.0
    %4744 = vmatprep.subr.mxu0 0.0
    %4745 = vmatpush1.xpose.msra.mxu0 0.0
    %4746 = vmatprep.subr.mxu0 0.0
    %4747 = vmatpush1.xpose.msra.mxu0 0.0
    %4748 = vmatprep.subr.mxu0 0.0
    %4749 = vmatpush1.xpose.msra.mxu0 0.0
    %4750 = vmatprep.subr.mxu0 0.0
    %4751 = vmatpush1.xpose.msra.mxu0 0.0
    %4752 = vmatprep.subr.mxu0 0.0
    %4753 = vmatpush1.xpose.msra.mxu0 0.0
    %4754 = vmatprep.subr.mxu0 0.0
    %4755 = vmatpush1.xpose.msra.mxu0 0.0
    %4756 = vmatprep.subr.mxu0 0.0
    %4757 = vmatpush1.xpose.msra.mxu0 0.0
    %4758 = vmatprep.subr.mxu0 0.0
    %4759 = vmatpush1.xpose.msra.mxu0 0.0
    %4760 = vmatprep.subr.mxu0 0.0
    %4761 = vmatpush1.xpose.msra.mxu0 0.0
    %4762 = vmatprep.subr.mxu0 0.0
    %4763 = vmatpush1.xpose.msra.mxu0 0.0
    %4764 = vmatprep.subr.mxu0 0.0
    %4765 = vmatpush1.xpose.msra.mxu0 0.0
    %4766 = vmatprep.subr.mxu0 0.0
    %4767 = vmatpush1.xpose.msra.mxu0 0.0
    %4768 = vmatprep.subr.mxu0 0.0
    %4769 = vmatpush1.xpose.msra.mxu0 0.0
    %4770 = vmatprep.subr.mxu0 0.0
    %4771 = vmatpush1.xpose.msra.mxu0 0.0
    %4772 = vmatprep.subr.mxu0 0.0
    %4773 = vmatpush1.xpose.msra.mxu0 0.0
    %4774 = vmatprep.subr.mxu0 0.0
    %4775 = vmatpush1.xpose.msra.mxu0 0.0
    %4776 = vmatprep.subr.mxu0 0.0
    %4777 = vmatpush1.xpose.msra.mxu0 0.0
    %4778 = vmatprep.subr.mxu0 0.0
    %4779 = vmatpush1.xpose.msra.mxu0 0.0
    %4780 = vmatprep.subr.mxu0 0.0
    %4781 = vmatpush1.xpose.msra.mxu0 0.0
    %4782 = vmatprep.subr.mxu0 0.0
    %4783 = vmatpush1.xpose.msra.mxu0 0.0
    %4784 = vmatprep.subr.mxu0 0.0
    %4785 = vmatpush1.xpose.msra.mxu0 0.0
    %4786 = vmatprep.subr.mxu0 0.0
    %4787 = vmatpush1.xpose.msra.mxu0 0.0
    %4788 = vmatprep.subr.mxu0 0.0
    %4789 = vmatpush1.xpose.msra.mxu0 0.0
    %4790 = vmatprep.subr.mxu0 0.0
    %4791 = vmatpush1.xpose.msra.mxu0 0.0
    %4792 = vmatprep.subr.mxu0 0.0
    %4793 = vmatpush1.xpose.msra.mxu0 0.0
    %4794 = vmatprep.mubr.f32.mxu0 0.0
    %4795 = vmatmul.mubr.f32.gmra.mrb[0].mxu0 %v4725
    %v4796 = vpop.f32.mrb[0].mxu0
    %v4797 = vadd.f32 0.0, %v4796
    %v4798 = vpop.f32.mrb[0].mxu0
    %4799 = vdwg.mxu0
    %v4801 = vsel %vm701, %v4721, 0
    %v4804 = vsel %vm701, %v4561, 0
    %4806 = vmatprep.subr.mxu0 0.0
    %4807 = vmatpush1.xpose.msra.mxu0 %v4804
    %4808 = vmatprep.subr.mxu0 0.0
    %4809 = vmatpush1.xpose.msra.mxu0 0.0
    %4810 = vmatprep.subr.mxu0 0.0
    %4811 = vmatpush1.xpose.msra.mxu0 0.0
    %4812 = vmatprep.subr.mxu0 0.0
    %4813 = vmatpush1.xpose.msra.mxu0 0.0
    %4814 = vmatprep.subr.mxu0 0.0
    %4815 = vmatpush1.xpose.msra.mxu0 0.0
    %4816 = vmatprep.subr.mxu0 0.0
    %4817 = vmatpush1.xpose.msra.mxu0 0.0
    %4818 = vmatprep.subr.mxu0 0.0
    %4819 = vmatpush1.xpose.msra.mxu0 0.0
    %4820 = vmatprep.subr.mxu0 0.0
    %4821 = vmatpush1.xpose.msra.mxu0 0.0
    %4822 = vmatprep.subr.mxu0 0.0
    %4823 = vmatpush1.xpose.msra.mxu0 0.0
    %4824 = vmatprep.subr.mxu0 0.0
    %4825 = vmatpush1.xpose.msra.mxu0 0.0
    %4826 = vmatprep.subr.mxu0 0.0
    %4827 = vmatpush1.xpose.msra.mxu0 0.0
    %4828 = vmatprep.subr.mxu0 0.0
    %4829 = vmatpush1.xpose.msra.mxu0 0.0
    %4830 = vmatprep.subr.mxu0 0.0
    %4831 = vmatpush1.xpose.msra.mxu0 0.0
    %4832 = vmatprep.subr.mxu0 0.0
    %4833 = vmatpush1.xpose.msra.mxu0 0.0
    %4834 = vmatprep.subr.mxu0 0.0
    %4835 = vmatpush1.xpose.msra.mxu0 0.0
    %4836 = vmatprep.subr.mxu0 0.0
    %4837 = vmatpush1.xpose.msra.mxu0 0.0
    %4838 = vmatprep.subr.mxu0 0.0
    %4839 = vmatpush1.xpose.msra.mxu0 0.0
    %4840 = vmatprep.subr.mxu0 0.0
    %4841 = vmatpush1.xpose.msra.mxu0 0.0
    %4842 = vmatprep.subr.mxu0 0.0
    %4843 = vmatpush1.xpose.msra.mxu0 0.0
    %4844 = vmatprep.subr.mxu0 0.0
    %4845 = vmatpush1.xpose.msra.mxu0 0.0
    %4846 = vmatprep.subr.mxu0 0.0
    %4847 = vmatpush1.xpose.msra.mxu0 0.0
    %4848 = vmatprep.subr.mxu0 0.0
    %4849 = vmatpush1.xpose.msra.mxu0 0.0
    %4850 = vmatprep.subr.mxu0 0.0
    %4851 = vmatpush1.xpose.msra.mxu0 0.0
    %4852 = vmatprep.subr.mxu0 0.0
    %4853 = vmatpush1.xpose.msra.mxu0 0.0
    %4854 = vmatprep.subr.mxu0 0.0
    %4855 = vmatpush1.xpose.msra.mxu0 0.0
    %4856 = vmatprep.subr.mxu0 0.0
    %4857 = vmatpush1.xpose.msra.mxu0 0.0
    %4858 = vmatprep.subr.mxu0 0.0
    %4859 = vmatpush1.xpose.msra.mxu0 0.0
    %4860 = vmatprep.subr.mxu0 0.0
    %4861 = vmatpush1.xpose.msra.mxu0 0.0
    %4862 = vmatprep.subr.mxu0 0.0
    %4863 = vmatpush1.xpose.msra.mxu0 0.0
    %4864 = vmatprep.subr.mxu0 0.0
    %4865 = vmatpush1.xpose.msra.mxu0 0.0
    %4866 = vmatprep.subr.mxu0 0.0
    %4867 = vmatpush1.xpose.msra.mxu0 0.0
    %4868 = vmatprep.subr.mxu0 0.0
    %4869 = vmatpush1.xpose.msra.mxu0 0.0
    %4870 = vmatprep.mubr.f32.mxu0 0.0
    %4871 = vmatmul.mubr.f32.gmra.mrb[0].mxu0 %v4801
    %v4872 = vpop.f32.mrb[0].mxu0
    %v4873 = vadd.f32 0.0, %v4872
    %v4874 = vpop.f32.mrb[0].mxu0
    %4875 = vdwg.mxu0
    %v4876 = vmul.f32 %v4797, 0.35355338
    %v4877 = vmul.f32 %v4873, 0.35355338
    %v4878 = vsel %vm701, %v4876, -inf
    %4879 = vmax.xlane.f32.xlu0 %v4878
    %v4880 = vpop.xlane.xlu0 %4879
    %v4881 = vsel %vm701, %v4877, -inf
    %4882 = vmax.xlane.f32.xlu0 %v4881
    %v4883 = vpop.xlane.xlu0 %4882
    %v4884 = vsub.f32 %v4876, %v4880
    %v4885 = vsub.f32 %v4877, %v4883
    %v4886 = vmul.f32 %v4884, 1.442695
    %v4887 = vpow.pop %v4886
    %v4888 = vmul.f32 %v4885, 1.442695
    %v4889 = vpow.pop %v4888
    %v4890 = vsel %vm701, %v4887, 0.0
    %4891 = vadd.xlane.f32.xlu0 %v4890
    %v4892 = vpop.xlane.xlu0 %4891
    %v4893 = vsel %vm701, %v4889, 0.0
    %4894 = vadd.xlane.f32.xlu0 %v4893
    %v4895 = vpop.xlane.xlu0 %4894
    %v4896 = vrcp.pop %v4892
    %v4897 = vrcp.pop %v4895
    %v4898 = vmul.f32 %v4887, %v4896
    %v4899 = vmul.f32 %v4889, %v4897
    %v4901 = vsel %vm701, %v4898, 0
    %4903 = vmatprep.subr.mxu0 0.0
    %4904 = vmatpush1.msra.mxu0 %v4636
    %4905 = vmatprep.subr.mxu0 0.0
    %4906 = vmatpush1.msra.mxu0 0.0
    %4907 = vmatprep.subr.mxu0 0.0
    %4908 = vmatpush1.msra.mxu0 0.0
    %4909 = vmatprep.subr.mxu0 0.0
    %4910 = vmatpush1.msra.mxu0 0.0
    %4911 = vmatprep.subr.mxu0 0.0
    %4912 = vmatpush1.msra.mxu0 0.0
    %4913 = vmatprep.subr.mxu0 0.0
    %4914 = vmatpush1.msra.mxu0 0.0
    %4915 = vmatprep.subr.mxu0 0.0
    %4916 = vmatpush1.msra.mxu0 0.0
    %4917 = vmatprep.subr.mxu0 0.0
    %4918 = vmatpush1.msra.mxu0 0.0
    %4919 = vmatprep.subr.mxu0 0.0
    %4920 = vmatpush1.msra.mxu0 0.0
    %4921 = vmatprep.subr.mxu0 0.0
    %4922 = vmatpush1.msra.mxu0 0.0
    %4923 = vmatprep.subr.mxu0 0.0
    %4924 = vmatpush1.msra.mxu0 0.0
    %4925 = vmatprep.subr.mxu0 0.0
    %4926 = vmatpush1.msra.mxu0 0.0
    %4927 = vmatprep.subr.mxu0 0.0
    %4928 = vmatpush1.msra.mxu0 0.0
    %4929 = vmatprep.subr.mxu0 0.0
    %4930 = vmatpush1.msra.mxu0 0.0
    %4931 = vmatprep.subr.mxu0 0.0
    %4932 = vmatpush1.msra.mxu0 0.0
    %4933 = vmatprep.subr.mxu0 0.0
    %4934 = vmatpush1.msra.mxu0 0.0
    %4935 = vmatprep.subr.mxu0 0.0
    %4936 = vmatpush1.msra.mxu0 0.0
    %4937 = vmatprep.subr.mxu0 0.0
    %4938 = vmatpush1.msra.mxu0 0.0
    %4939 = vmatprep.subr.mxu0 0.0
    %4940 = vmatpush1.msra.mxu0 0.0
    %4941 = vmatprep.subr.mxu0 0.0
    %4942 = vmatpush1.msra.mxu0 0.0
    %4943 = vmatprep.subr.mxu0 0.0
    %4944 = vmatpush1.msra.mxu0 0.0
    %4945 = vmatprep.subr.mxu0 0.0
    %4946 = vmatpush1.msra.mxu0 0.0
    %4947 = vmatprep.subr.mxu0 0.0
    %4948 = vmatpush1.msra.mxu0 0.0
    %4949 = vmatprep.subr.mxu0 0.0
    %4950 = vmatpush1.msra.mxu0 0.0
    %4951 = vmatprep.subr.mxu0 0.0
    %4952 = vmatpush1.msra.mxu0 0.0
    %4953 = vmatprep.subr.mxu0 0.0
    %4954 = vmatpush1.msra.mxu0 0.0
    %4955 = vmatprep.subr.mxu0 0.0
    %4956 = vmatpush1.msra.mxu0 0.0
    %4957 = vmatprep.subr.mxu0 0.0
    %4958 = vmatpush1.msra.mxu0 0.0
    %4959 = vmatprep.subr.mxu0 0.0
    %4960 = vmatpush1.msra.mxu0 0.0
    %4961 = vmatprep.subr.mxu0 0.0
    %4962 = vmatpush1.msra.mxu0 0.0
    %4963 = vmatprep.subr.mxu0 0.0
    %4964 = vmatpush1.msra.mxu0 0.0
    %4965 = vmatprep.subr.mxu0 0.0
    %4966 = vmatpush1.msra.mxu0 0.0
    %4967 = vmatprep.mubr.f32.mxu0 0.0
    %4968 = vmatmul.mubr.f32.gmra.mrb[0].mxu0 %v4901
    %v4969 = vpop.f32.mrb[0].mxu0
    %v4970 = vadd.f32 0.0, %v4969
    %v4971 = vpop.f32.mrb[0].mxu0
    %4972 = vdwg.mxu0
    %v4974 = vsel %vm701, %v4899, 0
    %4976 = vmatprep.subr.mxu0 0.0
    %4977 = vmatpush1.msra.mxu0 %v4641
    %4978 = vmatprep.subr.mxu0 0.0
    %4979 = vmatpush1.msra.mxu0 0.0
    %4980 = vmatprep.subr.mxu0 0.0
    %4981 = vmatpush1.msra.mxu0 0.0
    %4982 = vmatprep.subr.mxu0 0.0
    %4983 = vmatpush1.msra.mxu0 0.0
    %4984 = vmatprep.subr.mxu0 0.0
    %4985 = vmatpush1.msra.mxu0 0.0
    %4986 = vmatprep.subr.mxu0 0.0
    %4987 = vmatpush1.msra.mxu0 0.0
    %4988 = vmatprep.subr.mxu0 0.0
    %4989 = vmatpush1.msra.mxu0 0.0
    %4990 = vmatprep.subr.mxu0 0.0
    %4991 = vmatpush1.msra.mxu0 0.0
    %4992 = vmatprep.subr.mxu0 0.0
    %4993 = vmatpush1.msra.mxu0 0.0
    %4994 = vmatprep.subr.mxu0 0.0
    %4995 = vmatpush1.msra.mxu0 0.0
    %4996 = vmatprep.subr.mxu0 0.0
    %4997 = vmatpush1.msra.mxu0 0.0
    %4998 = vmatprep.subr.mxu0 0.0
    %4999 = vmatpush1.msra.mxu0 0.0
    %5000 = vmatprep.subr.mxu0 0.0
    %5001 = vmatpush1.msra.mxu0 0.0
    %5002 = vmatprep.subr.mxu0 0.0
    %5003 = vmatpush1.msra.mxu0 0.0
    %5004 = vmatprep.subr.mxu0 0.0
    %5005 = vmatpush1.msra.mxu0 0.0
    %5006 = vmatprep.subr.mxu0 0.0
    %5007 = vmatpush1.msra.mxu0 0.0
    %5008 = vmatprep.subr.mxu0 0.0
    %5009 = vmatpush1.msra.mxu0 0.0
    %5010 = vmatprep.subr.mxu0 0.0
    %5011 = vmatpush1.msra.mxu0 0.0
    %5012 = vmatprep.subr.mxu0 0.0
    %5013 = vmatpush1.msra.mxu0 0.0
    %5014 = vmatprep.subr.mxu0 0.0
    %5015 = vmatpush1.msra.mxu0 0.0
    %5016 = vmatprep.subr.mxu0 0.0
    %5017 = vmatpush1.msra.mxu0 0.0
    %5018 = vmatprep.subr.mxu0 0.0
    %5019 = vmatpush1.msra.mxu0 0.0
    %5020 = vmatprep.subr.mxu0 0.0
    %5021 = vmatpush1.msra.mxu0 0.0
    %5022 = vmatprep.subr.mxu0 0.0
    %5023 = vmatpush1.msra.mxu0 0.0
    %5024 = vmatprep.subr.mxu0 0.0
    %5025 = vmatpush1.msra.mxu0 0.0
    %5026 = vmatprep.subr.mxu0 0.0
    %5027 = vmatpush1.msra.mxu0 0.0
    %5028 = vmatprep.subr.mxu0 0.0
    %5029 = vmatpush1.msra.mxu0 0.0
    %5030 = vmatprep.subr.mxu0 0.0
    %5031 = vmatpush1.msra.mxu0 0.0
    %5032 = vmatprep.subr.mxu0 0.0
    %5033 = vmatpush1.msra.mxu0 0.0
    %5034 = vmatprep.subr.mxu0 0.0
    %5035 = vmatpush1.msra.mxu0 0.0
    %5036 = vmatprep.subr.mxu0 0.0
    %5037 = vmatpush1.msra.mxu0 0.0
    %5038 = vmatprep.subr.mxu0 0.0
    %5039 = vmatpush1.msra.mxu0 0.0
    %5040 = vmatprep.mubr.f32.mxu0 0.0
    %5041 = vmatmul.mubr.f32.gmra.mrb[0].mxu0 %v4974
    %v5042 = vpop.f32.mrb[0].mxu0
    %v5043 = vadd.f32 0.0, %v5042
    %v5044 = vpop.f32.mrb[0].mxu0
    %5045 = vdwg.mxu0
    %s5046 = scalar_lea.vmem %s14, 48
    %v5047 = vld [vmem:[%s5046] sm:$0xff]
    %v5049 = vsel %vm701, %v4970, 0
    %v5052 = vsel %vm701, %v5043, 0
    %5054 = vmatprep.subr.mxu0 0.0
    %5055 = vmatpush1.msra.mxu0 %v5047
    %5056 = vmatprep.subr.mxu0 0.0
    %5057 = vmatpush1.msra.mxu0 0.0
    %5058 = vmatprep.subr.mxu0 0.0
    %5059 = vmatpush1.msra.mxu0 0.0
    %5060 = vmatprep.subr.mxu0 0.0
    %5061 = vmatpush1.msra.mxu0 0.0
    %5062 = vmatprep.subr.mxu0 0.0
    %5063 = vmatpush1.msra.mxu0 0.0
    %5064 = vmatprep.subr.mxu0 0.0
    %5065 = vmatpush1.msra.mxu0 0.0
    %5066 = vmatprep.subr.mxu0 0.0
    %5067 = vmatpush1.msra.mxu0 0.0
    %5068 = vmatprep.subr.mxu0 0.0
    %5069 = vmatpush1.msra.mxu0 0.0
    %5070 = vmatprep.subr.mxu0 0.0
    %5071 = vmatpush1.msra.mxu0 0.0
    %5072 = vmatprep.subr.mxu0 0.0
    %5073 = vmatpush1.msra.mxu0 0.0
    %5074 = vmatprep.subr.mxu0 0.0
    %5075 = vmatpush1.msra.mxu0 0.0
    %5076 = vmatprep.subr.mxu0 0.0
    %5077 = vmatpush1.msra.mxu0 0.0
    %5078 = vmatprep.subr.mxu0 0.0
    %5079 = vmatpush1.msra.mxu0 0.0
    %5080 = vmatprep.subr.mxu0 0.0
    %5081 = vmatpush1.msra.mxu0 0.0
    %5082 = vmatprep.subr.mxu0 0.0
    %5083 = vmatpush1.msra.mxu0 0.0
    %5084 = vmatprep.subr.mxu0 0.0
    %5085 = vmatpush1.msra.mxu0 0.0
    %5086 = vmatprep.subr.mxu0 0.0
    %5087 = vmatpush1.msra.mxu0 0.0
    %5088 = vmatprep.subr.mxu0 0.0
    %5089 = vmatpush1.msra.mxu0 0.0
    %5090 = vmatprep.subr.mxu0 0.0
    %5091 = vmatpush1.msra.mxu0 0.0
    %5092 = vmatprep.subr.mxu0 0.0
    %5093 = vmatpush1.msra.mxu0 0.0
    %5094 = vmatprep.subr.mxu0 0.0
    %5095 = vmatpush1.msra.mxu0 0.0
    %5096 = vmatprep.subr.mxu0 0.0
    %5097 = vmatpush1.msra.mxu0 0.0
    %5098 = vmatprep.subr.mxu0 0.0
    %5099 = vmatpush1.msra.mxu0 0.0
    %5100 = vmatprep.subr.mxu0 0.0
    %5101 = vmatpush1.msra.mxu0 0.0
    %5102 = vmatprep.subr.mxu0 0.0
    %5103 = vmatpush1.msra.mxu0 0.0
    %5104 = vmatprep.subr.mxu0 0.0
    %5105 = vmatpush1.msra.mxu0 0.0
    %5106 = vmatprep.subr.mxu0 0.0
    %5107 = vmatpush1.msra.mxu0 0.0
    %5108 = vmatprep.subr.mxu0 0.0
    %5109 = vmatpush1.msra.mxu0 0.0
    %5110 = vmatprep.subr.mxu0 0.0
    %5111 = vmatpush1.msra.mxu0 0.0
    %5112 = vmatprep.subr.mxu0 0.0
    %5113 = vmatpush1.msra.mxu0 0.0
    %5114 = vmatprep.subr.mxu0 0.0
    %5115 = vmatpush1.msra.mxu0 0.0
    %5116 = vmatprep.subr.mxu0 0.0
    %5117 = vmatpush1.msra.mxu0 0.0
    %5118 = vmatprep.mubr.f32.mxu0 0.0
    %5119 = vmatmul.mubr.f32.gmra.mrb[0].mxu0 %v5049
    %v5120 = vpop.f32.mrb[0].mxu0
    %v5121 = vadd.f32 0.0, %v5120
    %v5122 = vpop.f32.mrb[0].mxu0
    %5123 = vmatprep.mubr.f32.mxu0 0.0
    %5124 = vmatmul.mubr.f32.gmra.mrb[0].mxu0 %v5052
    %v5125 = vpop.f32.mrb[0].mxu0
    %v5126 = vadd.f32 0.0, %v5125
    %v5127 = vpop.f32.mrb[0].mxu0
    %5128 = vdwg.mxu0
    %v5129 = vadd.f32 %v4482, %v5121
    %v5130 = vadd.f32 %v4483, %v5126
    %s5131 = scalar_lea.vmem %s10, 224
    %v5132 = vld [vmem:[%s5131] sm:$0xff]
    %v5133 = vld [vmem:[%s5131 + $0x8] sm:$0xff]
    %v5134 = vld [vmem:[%s5131 + $0x10] sm:$0xff]
    %v5135 = vld [vmem:[%s5131 + $0x18] sm:$0xff]
    %5136 = vmatprep.subr.mxu0 0.0
    %5137 = vmatpush1.msra.mxu0 %v5132
    %5138 = vmatprep.subr.mxu0 0.0
    %5139 = vmatpush1.msra.mxu0 %v5133
    %5140 = vmatprep.subr.mxu0 0.0
    %5141 = vmatpush1.msra.mxu0 %v5134
    %5142 = vmatprep.subr.mxu0 0.0
    %5143 = vmatpush1.msra.mxu0 %v5135
    %5144 = vmatprep.subr.mxu0 0.0
    %5145 = vmatpush1.msra.mxu0 0.0
    %5146 = vmatprep.subr.mxu0 0.0
    %5147 = vmatpush1.msra.mxu0 0.0
    %5148 = vmatprep.subr.mxu0 0.0
    %5149 = vmatpush1.msra.mxu0 0.0
    %5150 = vmatprep.subr.mxu0 0.0
    %5151 = vmatpush1.msra.mxu0 0.0
    %5152 = vmatprep.subr.mxu0 0.0
    %5153 = vmatpush1.msra.mxu0 0.0
    %5154 = vmatprep.subr.mxu0 0.0
    %5155 = vmatpush1.msra.mxu0 0.0
    %5156 = vmatprep.subr.mxu0 0.0
    %5157 = vmatpush1.msra.mxu0 0.0
    %5158 = vmatprep.subr.mxu0 0.0
    %5159 = vmatpush1.msra.mxu0 0.0
    %5160 = vmatprep.subr.mxu0 0.0
    %5161 = vmatpush1.msra.mxu0 0.0
    %5162 = vmatprep.subr.mxu0 0.0
    %5163 = vmatpush1.msra.mxu0 0.0
    %5164 = vmatprep.subr.mxu0 0.0
    %5165 = vmatpush1.msra.mxu0 0.0
    %5166 = vmatprep.subr.mxu0 0.0
    %5167 = vmatpush1.msra.mxu0 0.0
    %5168 = vmatprep.subr.mxu0 0.0
    %5169 = vmatpush1.msra.mxu0 0.0
    %5170 = vmatprep.subr.mxu0 0.0
    %5171 = vmatpush1.msra.mxu0 0.0
    %5172 = vmatprep.subr.mxu0 0.0
    %5173 = vmatpush1.msra.mxu0 0.0
    %5174 = vmatprep.subr.mxu0 0.0
    %5175 = vmatpush1.msra.mxu0 0.0
    %5176 = vmatprep.subr.mxu0 0.0
    %5177 = vmatpush1.msra.mxu0 0.0
    %5178 = vmatprep.subr.mxu0 0.0
    %5179 = vmatpush1.msra.mxu0 0.0
    %5180 = vmatprep.subr.mxu0 0.0
    %5181 = vmatpush1.msra.mxu0 0.0
    %5182 = vmatprep.subr.mxu0 0.0
    %5183 = vmatpush1.msra.mxu0 0.0
    %5184 = vmatprep.subr.mxu0 0.0
    %5185 = vmatpush1.msra.mxu0 0.0
    %5186 = vmatprep.subr.mxu0 0.0
    %5187 = vmatpush1.msra.mxu0 0.0
    %5188 = vmatprep.subr.mxu0 0.0
    %5189 = vmatpush1.msra.mxu0 0.0
    %5190 = vmatprep.subr.mxu0 0.0
    %5191 = vmatpush1.msra.mxu0 0.0
    %5192 = vmatprep.subr.mxu0 0.0
    %5193 = vmatpush1.msra.mxu0 0.0
    %5194 = vmatprep.subr.mxu0 0.0
    %5195 = vmatpush1.msra.mxu0 0.0
    %5196 = vmatprep.subr.mxu0 0.0
    %5197 = vmatpush1.msra.mxu0 0.0
    %5198 = vmatprep.subr.mxu0 0.0
    %5199 = vmatpush1.msra.mxu0 0.0
    %5200 = vmatprep.mubr.f32.mxu0 0.0
    %5201 = vmatmul.mubr.f32.gmra.mrb[0].mxu0 %v457
    %v5202 = vpop.f32.mrb[0].mxu0
    %v5203 = vadd.f32 0.0, %v5202
    %v5204 = vpop.f32.mrb[0].mxu0
    %5205 = vmatprep.mubr.f32.mxu0 0.0
    %5206 = vmatmul.mubr.f32.gmra.mrb[0].mxu0 %v460
    %v5207 = vpop.f32.mrb[0].mxu0
    %v5208 = vadd.f32 0.0, %v5207
    %v5209 = vpop.f32.mrb[0].mxu0
    %5210 = vdwg.mxu0
    %s5211 = scalar_lea.vmem %s11, 224
    %v5212 = vld [vmem:[%s5211] sm:$0xff]
    %v5213 = vld [vmem:[%s5211 + $0x8] sm:$0xff]
    %v5214 = vld [vmem:[%s5211 + $0x10] sm:$0xff]
    %v5215 = vld [vmem:[%s5211 + $0x18] sm:$0xff]
    %5216 = vmatprep.subr.mxu0 0.0
    %5217 = vmatpush1.msra.mxu0 %v5212
    %5218 = vmatprep.subr.mxu0 0.0
    %5219 = vmatpush1.msra.mxu0 %v5213
    %5220 = vmatprep.subr.mxu0 0.0
    %5221 = vmatpush1.msra.mxu0 %v5214
    %5222 = vmatprep.subr.mxu0 0.0
    %5223 = vmatpush1.msra.mxu0 %v5215
    %5224 = vmatprep.subr.mxu0 0.0
    %5225 = vmatpush1.msra.mxu0 0.0
    %5226 = vmatprep.subr.mxu0 0.0
    %5227 = vmatpush1.msra.mxu0 0.0
    %5228 = vmatprep.subr.mxu0 0.0
    %5229 = vmatpush1.msra.mxu0 0.0
    %5230 = vmatprep.subr.mxu0 0.0
    %5231 = vmatpush1.msra.mxu0 0.0
    %5232 = vmatprep.subr.mxu0 0.0
    %5233 = vmatpush1.msra.mxu0 0.0
    %5234 = vmatprep.subr.mxu0 0.0
    %5235 = vmatpush1.msra.mxu0 0.0
    %5236 = vmatprep.subr.mxu0 0.0
    %5237 = vmatpush1.msra.mxu0 0.0
    %5238 = vmatprep.subr.mxu0 0.0
    %5239 = vmatpush1.msra.mxu0 0.0
    %5240 = vmatprep.subr.mxu0 0.0
    %5241 = vmatpush1.msra.mxu0 0.0
    %5242 = vmatprep.subr.mxu0 0.0
    %5243 = vmatpush1.msra.mxu0 0.0
    %5244 = vmatprep.subr.mxu0 0.0
    %5245 = vmatpush1.msra.mxu0 0.0
    %5246 = vmatprep.subr.mxu0 0.0
    %5247 = vmatpush1.msra.mxu0 0.0
    %5248 = vmatprep.subr.mxu0 0.0
    %5249 = vmatpush1.msra.mxu0 0.0
    %5250 = vmatprep.subr.mxu0 0.0
    %5251 = vmatpush1.msra.mxu0 0.0
    %5252 = vmatprep.subr.mxu0 0.0
    %5253 = vmatpush1.msra.mxu0 0.0
    %5254 = vmatprep.subr.mxu0 0.0
    %5255 = vmatpush1.msra.mxu0 0.0
    %5256 = vmatprep.subr.mxu0 0.0
    %5257 = vmatpush1.msra.mxu0 0.0
    %5258 = vmatprep.subr.mxu0 0.0
    %5259 = vmatpush1.msra.mxu0 0.0
    %5260 = vmatprep.subr.mxu0 0.0
    %5261 = vmatpush1.msra.mxu0 0.0
    %5262 = vmatprep.subr.mxu0 0.0
    %5263 = vmatpush1.msra.mxu0 0.0
    %5264 = vmatprep.subr.mxu0 0.0
    %5265 = vmatpush1.msra.mxu0 0.0
    %5266 = vmatprep.subr.mxu0 0.0
    %5267 = vmatpush1.msra.mxu0 0.0
    %5268 = vmatprep.subr.mxu0 0.0
    %5269 = vmatpush1.msra.mxu0 0.0
    %5270 = vmatprep.subr.mxu0 0.0
    %5271 = vmatpush1.msra.mxu0 0.0
    %5272 = vmatprep.subr.mxu0 0.0
    %5273 = vmatpush1.msra.mxu0 0.0
    %5274 = vmatprep.subr.mxu0 0.0
    %5275 = vmatpush1.msra.mxu0 0.0
    %5276 = vmatprep.subr.mxu0 0.0
    %5277 = vmatpush1.msra.mxu0 0.0
    %5278 = vmatprep.subr.mxu0 0.0
    %5279 = vmatpush1.msra.mxu0 0.0
    %5280 = vmatprep.mubr.f32.mxu0 0.0
    %5281 = vmatmul.mubr.f32.gmra.mrb[0].mxu0 %v542
    %v5282 = vpop.f32.mrb[0].mxu0
    %v5283 = vadd.f32 0.0, %v5282
    %v5284 = vpop.f32.mrb[0].mxu0
    %5285 = vmatprep.mubr.f32.mxu0 0.0
    %5286 = vmatmul.mubr.f32.gmra.mrb[0].mxu0 %v545
    %v5287 = vpop.f32.mrb[0].mxu0
    %v5288 = vadd.f32 0.0, %v5287
    %v5289 = vpop.f32.mrb[0].mxu0
    %5290 = vdwg.mxu0
    %s5291 = scalar_lea.vmem %s12, 224
    %v5292 = vld [vmem:[%s5291] sm:$0xff]
    %v5293 = vld [vmem:[%s5291 + $0x8] sm:$0xff]
    %v5294 = vld [vmem:[%s5291 + $0x10] sm:$0xff]
    %v5295 = vld [vmem:[%s5291 + $0x18] sm:$0xff]
    %5296 = vmatprep.subr.mxu0 0.0
    %5297 = vmatpush1.msra.mxu0 %v5292
    %5298 = vmatprep.subr.mxu0 0.0
    %5299 = vmatpush1.msra.mxu0 %v5293
    %5300 = vmatprep.subr.mxu0 0.0
    %5301 = vmatpush1.msra.mxu0 %v5294
    %5302 = vmatprep.subr.mxu0 0.0
    %5303 = vmatpush1.msra.mxu0 %v5295
    %5304 = vmatprep.subr.mxu0 0.0
    %5305 = vmatpush1.msra.mxu0 0.0
    %5306 = vmatprep.subr.mxu0 0.0
    %5307 = vmatpush1.msra.mxu0 0.0
    %5308 = vmatprep.subr.mxu0 0.0
    %5309 = vmatpush1.msra.mxu0 0.0
    %5310 = vmatprep.subr.mxu0 0.0
    %5311 = vmatpush1.msra.mxu0 0.0
    %5312 = vmatprep.subr.mxu0 0.0
    %5313 = vmatpush1.msra.mxu0 0.0
    %5314 = vmatprep.subr.mxu0 0.0
    %5315 = vmatpush1.msra.mxu0 0.0
    %5316 = vmatprep.subr.mxu0 0.0
    %5317 = vmatpush1.msra.mxu0 0.0
    %5318 = vmatprep.subr.mxu0 0.0
    %5319 = vmatpush1.msra.mxu0 0.0
    %5320 = vmatprep.subr.mxu0 0.0
    %5321 = vmatpush1.msra.mxu0 0.0
    %5322 = vmatprep.subr.mxu0 0.0
    %5323 = vmatpush1.msra.mxu0 0.0
    %5324 = vmatprep.subr.mxu0 0.0
    %5325 = vmatpush1.msra.mxu0 0.0
    %5326 = vmatprep.subr.mxu0 0.0
    %5327 = vmatpush1.msra.mxu0 0.0
    %5328 = vmatprep.subr.mxu0 0.0
    %5329 = vmatpush1.msra.mxu0 0.0
    %5330 = vmatprep.subr.mxu0 0.0
    %5331 = vmatpush1.msra.mxu0 0.0
    %5332 = vmatprep.subr.mxu0 0.0
    %5333 = vmatpush1.msra.mxu0 0.0
    %5334 = vmatprep.subr.mxu0 0.0
    %5335 = vmatpush1.msra.mxu0 0.0
    %5336 = vmatprep.subr.mxu0 0.0
    %5337 = vmatpush1.msra.mxu0 0.0
    %5338 = vmatprep.subr.mxu0 0.0
    %5339 = vmatpush1.msra.mxu0 0.0
    %5340 = vmatprep.subr.mxu0 0.0
    %5341 = vmatpush1.msra.mxu0 0.0
    %5342 = vmatprep.subr.mxu0 0.0
    %5343 = vmatpush1.msra.mxu0 0.0
    %5344 = vmatprep.subr.mxu0 0.0
    %5345 = vmatpush1.msra.mxu0 0.0
    %5346 = vmatprep.subr.mxu0 0.0
    %5347 = vmatpush1.msra.mxu0 0.0
    %5348 = vmatprep.subr.mxu0 0.0
    %5349 = vmatpush1.msra.mxu0 0.0
    %5350 = vmatprep.subr.mxu0 0.0
    %5351 = vmatpush1.msra.mxu0 0.0
    %5352 = vmatprep.subr.mxu0 0.0
    %5353 = vmatpush1.msra.mxu0 0.0
    %5354 = vmatprep.subr.mxu0 0.0
    %5355 = vmatpush1.msra.mxu0 0.0
    %5356 = vmatprep.subr.mxu0 0.0
    %5357 = vmatpush1.msra.mxu0 0.0
    %5358 = vmatprep.subr.mxu0 0.0
    %5359 = vmatpush1.msra.mxu0 0.0
    %5360 = vmatprep.mubr.f32.mxu0 0.0
    %5361 = vmatmul.mubr.f32.gmra.mrb[0].mxu0 %v3110
    %v5362 = vpop.f32.mrb[0].mxu0
    %v5363 = vadd.f32 0.0, %v5362
    %v5364 = vpop.f32.mrb[0].mxu0
    %5365 = vmatprep.mubr.f32.mxu0 0.0
    %5366 = vmatmul.mubr.f32.gmra.mrb[0].mxu0 %v3113
    %v5367 = vpop.f32.mrb[0].mxu0
    %v5368 = vadd.f32 0.0, %v5367
    %v5369 = vpop.f32.mrb[0].mxu0
    %5370 = vdwg.mxu0
    %v5372 = vsel %vm701, %v5363, 0
    %v5375 = vsel %vm701, %v5203, 0
    %5377 = vmatprep.subr.mxu0 0.0
    %5378 = vmatpush1.xpose.msra.mxu0 %v5375
    %5379 = vmatprep.subr.mxu0 0.0
    %5380 = vmatpush1.xpose.msra.mxu0 0.0
    %5381 = vmatprep.subr.mxu0 0.0
    %5382 = vmatpush1.xpose.msra.mxu0 0.0
    %5383 = vmatprep.subr.mxu0 0.0
    %5384 = vmatpush1.xpose.msra.mxu0 0.0
    %5385 = vmatprep.subr.mxu0 0.0
    %5386 = vmatpush1.xpose.msra.mxu0 0.0
    %5387 = vmatprep.subr.mxu0 0.0
    %5388 = vmatpush1.xpose.msra.mxu0 0.0
    %5389 = vmatprep.subr.mxu0 0.0
    %5390 = vmatpush1.xpose.msra.mxu0 0.0
    %5391 = vmatprep.subr.mxu0 0.0
    %5392 = vmatpush1.xpose.msra.mxu0 0.0
    %5393 = vmatprep.subr.mxu0 0.0
    %5394 = vmatpush1.xpose.msra.mxu0 0.0
    %5395 = vmatprep.subr.mxu0 0.0
    %5396 = vmatpush1.xpose.msra.mxu0 0.0
    %5397 = vmatprep.subr.mxu0 0.0
    %5398 = vmatpush1.xpose.msra.mxu0 0.0
    %5399 = vmatprep.subr.mxu0 0.0
    %5400 = vmatpush1.xpose.msra.mxu0 0.0
    %5401 = vmatprep.subr.mxu0 0.0
    %5402 = vmatpush1.xpose.msra.mxu0 0.0
    %5403 = vmatprep.subr.mxu0 0.0
    %5404 = vmatpush1.xpose.msra.mxu0 0.0
    %5405 = vmatprep.subr.mxu0 0.0
    %5406 = vmatpush1.xpose.msra.mxu0 0.0
    %5407 = vmatprep.subr.mxu0 0.0
    %5408 = vmatpush1.xpose.msra.mxu0 0.0
    %5409 = vmatprep.subr.mxu0 0.0
    %5410 = vmatpush1.xpose.msra.mxu0 0.0
    %5411 = vmatprep.subr.mxu0 0.0
    %5412 = vmatpush1.xpose.msra.mxu0 0.0
    %5413 = vmatprep.subr.mxu0 0.0
    %5414 = vmatpush1.xpose.msra.mxu0 0.0
    %5415 = vmatprep.subr.mxu0 0.0
    %5416 = vmatpush1.xpose.msra.mxu0 0.0
    %5417 = vmatprep.subr.mxu0 0.0
    %5418 = vmatpush1.xpose.msra.mxu0 0.0
    %5419 = vmatprep.subr.mxu0 0.0
    %5420 = vmatpush1.xpose.msra.mxu0 0.0
    %5421 = vmatprep.subr.mxu0 0.0
    %5422 = vmatpush1.xpose.msra.mxu0 0.0
    %5423 = vmatprep.subr.mxu0 0.0
    %5424 = vmatpush1.xpose.msra.mxu0 0.0
    %5425 = vmatprep.subr.mxu0 0.0
    %5426 = vmatpush1.xpose.msra.mxu0 0.0
    %5427 = vmatprep.subr.mxu0 0.0
    %5428 = vmatpush1.xpose.msra.mxu0 0.0
    %5429 = vmatprep.subr.mxu0 0.0
    %5430 = vmatpush1.xpose.msra.mxu0 0.0
    %5431 = vmatprep.subr.mxu0 0.0
    %5432 = vmatpush1.xpose.msra.mxu0 0.0
    %5433 = vmatprep.subr.mxu0 0.0
    %5434 = vmatpush1.xpose.msra.mxu0 0.0
    %5435 = vmatprep.subr.mxu0 0.0
    %5436 = vmatpush1.xpose.msra.mxu0 0.0
    %5437 = vmatprep.subr.mxu0 0.0
    %5438 = vmatpush1.xpose.msra.mxu0 0.0
    %5439 = vmatprep.subr.mxu0 0.0
    %5440 = vmatpush1.xpose.msra.mxu0 0.0
    %5441 = vmatprep.mubr.f32.mxu0 0.0
    %5442 = vmatmul.mubr.f32.gmra.mrb[0].mxu0 %v5372
    %v5443 = vpop.f32.mrb[0].mxu0
    %v5444 = vadd.f32 0.0, %v5443
    %v5445 = vpop.f32.mrb[0].mxu0
    %5446 = vdwg.mxu0
    %v5448 = vsel %vm701, %v5368, 0
    %v5451 = vsel %vm701, %v5208, 0
    %5453 = vmatprep.subr.mxu0 0.0
    %5454 = vmatpush1.xpose.msra.mxu0 %v5451
    %5455 = vmatprep.subr.mxu0 0.0
    %5456 = vmatpush1.xpose.msra.mxu0 0.0
    %5457 = vmatprep.subr.mxu0 0.0
    %5458 = vmatpush1.xpose.msra.mxu0 0.0
    %5459 = vmatprep.subr.mxu0 0.0
    %5460 = vmatpush1.xpose.msra.mxu0 0.0
    %5461 = vmatprep.subr.mxu0 0.0
    %5462 = vmatpush1.xpose.msra.mxu0 0.0
    %5463 = vmatprep.subr.mxu0 0.0
    %5464 = vmatpush1.xpose.msra.mxu0 0.0
    %5465 = vmatprep.subr.mxu0 0.0
    %5466 = vmatpush1.xpose.msra.mxu0 0.0
    %5467 = vmatprep.subr.mxu0 0.0
    %5468 = vmatpush1.xpose.msra.mxu0 0.0
    %5469 = vmatprep.subr.mxu0 0.0
    %5470 = vmatpush1.xpose.msra.mxu0 0.0
    %5471 = vmatprep.subr.mxu0 0.0
    %5472 = vmatpush1.xpose.msra.mxu0 0.0
    %5473 = vmatprep.subr.mxu0 0.0
    %5474 = vmatpush1.xpose.msra.mxu0 0.0
    %5475 = vmatprep.subr.mxu0 0.0
    %5476 = vmatpush1.xpose.msra.mxu0 0.0
    %5477 = vmatprep.subr.mxu0 0.0
    %5478 = vmatpush1.xpose.msra.mxu0 0.0
    %5479 = vmatprep.subr.mxu0 0.0
    %5480 = vmatpush1.xpose.msra.mxu0 0.0
    %5481 = vmatprep.subr.mxu0 0.0
    %5482 = vmatpush1.xpose.msra.mxu0 0.0
    %5483 = vmatprep.subr.mxu0 0.0
    %5484 = vmatpush1.xpose.msra.mxu0 0.0
    %5485 = vmatprep.subr.mxu0 0.0
    %5486 = vmatpush1.xpose.msra.mxu0 0.0
    %5487 = vmatprep.subr.mxu0 0.0
    %5488 = vmatpush1.xpose.msra.mxu0 0.0
    %5489 = vmatprep.subr.mxu0 0.0
    %5490 = vmatpush1.xpose.msra.mxu0 0.0
    %5491 = vmatprep.subr.mxu0 0.0
    %5492 = vmatpush1.xpose.msra.mxu0 0.0
    %5493 = vmatprep.subr.mxu0 0.0
    %5494 = vmatpush1.xpose.msra.mxu0 0.0
    %5495 = vmatprep.subr.mxu0 0.0
    %5496 = vmatpush1.xpose.msra.mxu0 0.0
    %5497 = vmatprep.subr.mxu0 0.0
    %5498 = vmatpush1.xpose.msra.mxu0 0.0
    %5499 = vmatprep.subr.mxu0 0.0
    %5500 = vmatpush1.xpose.msra.mxu0 0.0
    %5501 = vmatprep.subr.mxu0 0.0
    %5502 = vmatpush1.xpose.msra.mxu0 0.0
    %5503 = vmatprep.subr.mxu0 0.0
    %5504 = vmatpush1.xpose.msra.mxu0 0.0
    %5505 = vmatprep.subr.mxu0 0.0
    %5506 = vmatpush1.xpose.msra.mxu0 0.0
    %5507 = vmatprep.subr.mxu0 0.0
    %5508 = vmatpush1.xpose.msra.mxu0 0.0
    %5509 = vmatprep.subr.mxu0 0.0
    %5510 = vmatpush1.xpose.msra.mxu0 0.0
    %5511 = vmatprep.subr.mxu0 0.0
    %5512 = vmatpush1.xpose.msra.mxu0 0.0
    %5513 = vmatprep.subr.mxu0 0.0
    %5514 = vmatpush1.xpose.msra.mxu0 0.0
    %5515 = vmatprep.subr.mxu0 0.0
    %5516 = vmatpush1.xpose.msra.mxu0 0.0
    %5517 = vmatprep.mubr.f32.mxu0 0.0
    %5518 = vmatmul.mubr.f32.gmra.mrb[0].mxu0 %v5448
    %v5519 = vpop.f32.mrb[0].mxu0
    %v5520 = vadd.f32 0.0, %v5519
    %v5521 = vpop.f32.mrb[0].mxu0
    %5522 = vdwg.mxu0
    %v5523 = vmul.f32 %v5444, 0.35355338
    %v5524 = vmul.f32 %v5520, 0.35355338
    %v5525 = vsel %vm701, %v5523, -inf
    %5526 = vmax.xlane.f32.xlu0 %v5525
    %v5527 = vpop.xlane.xlu0 %5526
    %v5528 = vsel %vm701, %v5524, -inf
    %5529 = vmax.xlane.f32.xlu0 %v5528
    %v5530 = vpop.xlane.xlu0 %5529
    %v5531 = vsub.f32 %v5523, %v5527
    %v5532 = vsub.f32 %v5524, %v5530
    %v5533 = vmul.f32 %v5531, 1.442695
    %v5534 = vpow.pop %v5533
    %v5535 = vmul.f32 %v5532, 1.442695
    %v5536 = vpow.pop %v5535
    %v5537 = vsel %vm701, %v5534, 0.0
    %5538 = vadd.xlane.f32.xlu0 %v5537
    %v5539 = vpop.xlane.xlu0 %5538
    %v5540 = vsel %vm701, %v5536, 0.0
    %5541 = vadd.xlane.f32.xlu0 %v5540
    %v5542 = vpop.xlane.xlu0 %5541
    %v5543 = vrcp.pop %v5539
    %v5544 = vrcp.pop %v5542
    %v5545 = vmul.f32 %v5534, %v5543
    %v5546 = vmul.f32 %v5536, %v5544
    %v5548 = vsel %vm701, %v5545, 0
    %5550 = vmatprep.subr.mxu0 0.0
    %5551 = vmatpush1.msra.mxu0 %v5283
    %5552 = vmatprep.subr.mxu0 0.0
    %5553 = vmatpush1.msra.mxu0 0.0
    %5554 = vmatprep.subr.mxu0 0.0
    %5555 = vmatpush1.msra.mxu0 0.0
    %5556 = vmatprep.subr.mxu0 0.0
    %5557 = vmatpush1.msra.mxu0 0.0
    %5558 = vmatprep.subr.mxu0 0.0
    %5559 = vmatpush1.msra.mxu0 0.0
    %5560 = vmatprep.subr.mxu0 0.0
    %5561 = vmatpush1.msra.mxu0 0.0
    %5562 = vmatprep.subr.mxu0 0.0
    %5563 = vmatpush1.msra.mxu0 0.0
    %5564 = vmatprep.subr.mxu0 0.0
    %5565 = vmatpush1.msra.mxu0 0.0
    %5566 = vmatprep.subr.mxu0 0.0
    %5567 = vmatpush1.msra.mxu0 0.0
    %5568 = vmatprep.subr.mxu0 0.0
    %5569 = vmatpush1.msra.mxu0 0.0
    %5570 = vmatprep.subr.mxu0 0.0
    %5571 = vmatpush1.msra.mxu0 0.0
    %5572 = vmatprep.subr.mxu0 0.0
    %5573 = vmatpush1.msra.mxu0 0.0
    %5574 = vmatprep.subr.mxu0 0.0
    %5575 = vmatpush1.msra.mxu0 0.0
    %5576 = vmatprep.subr.mxu0 0.0
    %5577 = vmatpush1.msra.mxu0 0.0
    %5578 = vmatprep.subr.mxu0 0.0
    %5579 = vmatpush1.msra.mxu0 0.0
    %5580 = vmatprep.subr.mxu0 0.0
    %5581 = vmatpush1.msra.mxu0 0.0
    %5582 = vmatprep.subr.mxu0 0.0
    %5583 = vmatpush1.msra.mxu0 0.0
    %5584 = vmatprep.subr.mxu0 0.0
    %5585 = vmatpush1.msra.mxu0 0.0
    %5586 = vmatprep.subr.mxu0 0.0
    %5587 = vmatpush1.msra.mxu0 0.0
    %5588 = vmatprep.subr.mxu0 0.0
    %5589 = vmatpush1.msra.mxu0 0.0
    %5590 = vmatprep.subr.mxu0 0.0
    %5591 = vmatpush1.msra.mxu0 0.0
    %5592 = vmatprep.subr.mxu0 0.0
    %5593 = vmatpush1.msra.mxu0 0.0
    %5594 = vmatprep.subr.mxu0 0.0
    %5595 = vmatpush1.msra.mxu0 0.0
    %5596 = vmatprep.subr.mxu0 0.0
    %5597 = vmatpush1.msra.mxu0 0.0
    %5598 = vmatprep.subr.mxu0 0.0
    %5599 = vmatpush1.msra.mxu0 0.0
    %5600 = vmatprep.subr.mxu0 0.0
    %5601 = vmatpush1.msra.mxu0 0.0
    %5602 = vmatprep.subr.mxu0 0.0
    %5603 = vmatpush1.msra.mxu0 0.0
    %5604 = vmatprep.subr.mxu0 0.0
    %5605 = vmatpush1.msra.mxu0 0.0
    %5606 = vmatprep.subr.mxu0 0.0
    %5607 = vmatpush1.msra.mxu0 0.0
    %5608 = vmatprep.subr.mxu0 0.0
    %5609 = vmatpush1.msra.mxu0 0.0
    %5610 = vmatprep.subr.mxu0 0.0
    %5611 = vmatpush1.msra.mxu0 0.0
    %5612 = vmatprep.subr.mxu0 0.0
    %5613 = vmatpush1.msra.mxu0 0.0
    %5614 = vmatprep.mubr.f32.mxu0 0.0
    %5615 = vmatmul.mubr.f32.gmra.mrb[0].mxu0 %v5548
    %v5616 = vpop.f32.mrb[0].mxu0
    %v5617 = vadd.f32 0.0, %v5616
    %v5618 = vpop.f32.mrb[0].mxu0
    %5619 = vdwg.mxu0
    %v5621 = vsel %vm701, %v5546, 0
    %5623 = vmatprep.subr.mxu0 0.0
    %5624 = vmatpush1.msra.mxu0 %v5288
    %5625 = vmatprep.subr.mxu0 0.0
    %5626 = vmatpush1.msra.mxu0 0.0
    %5627 = vmatprep.subr.mxu0 0.0
    %5628 = vmatpush1.msra.mxu0 0.0
    %5629 = vmatprep.subr.mxu0 0.0
    %5630 = vmatpush1.msra.mxu0 0.0
    %5631 = vmatprep.subr.mxu0 0.0
    %5632 = vmatpush1.msra.mxu0 0.0
    %5633 = vmatprep.subr.mxu0 0.0
    %5634 = vmatpush1.msra.mxu0 0.0
    %5635 = vmatprep.subr.mxu0 0.0
    %5636 = vmatpush1.msra.mxu0 0.0
    %5637 = vmatprep.subr.mxu0 0.0
    %5638 = vmatpush1.msra.mxu0 0.0
    %5639 = vmatprep.subr.mxu0 0.0
    %5640 = vmatpush1.msra.mxu0 0.0
    %5641 = vmatprep.subr.mxu0 0.0
    %5642 = vmatpush1.msra.mxu0 0.0
    %5643 = vmatprep.subr.mxu0 0.0
    %5644 = vmatpush1.msra.mxu0 0.0
    %5645 = vmatprep.subr.mxu0 0.0
    %5646 = vmatpush1.msra.mxu0 0.0
    %5647 = vmatprep.subr.mxu0 0.0
    %5648 = vmatpush1.msra.mxu0 0.0
    %5649 = vmatprep.subr.mxu0 0.0
    %5650 = vmatpush1.msra.mxu0 0.0
    %5651 = vmatprep.subr.mxu0 0.0
    %5652 = vmatpush1.msra.mxu0 0.0
    %5653 = vmatprep.subr.mxu0 0.0
    %5654 = vmatpush1.msra.mxu0 0.0
    %5655 = vmatprep.subr.mxu0 0.0
    %5656 = vmatpush1.msra.mxu0 0.0
    %5657 = vmatprep.subr.mxu0 0.0
    %5658 = vmatpush1.msra.mxu0 0.0
    %5659 = vmatprep.subr.mxu0 0.0
    %5660 = vmatpush1.msra.mxu0 0.0
    %5661 = vmatprep.subr.mxu0 0.0
    %5662 = vmatpush1.msra.mxu0 0.0
    %5663 = vmatprep.subr.mxu0 0.0
    %5664 = vmatpush1.msra.mxu0 0.0
    %5665 = vmatprep.subr.mxu0 0.0
    %5666 = vmatpush1.msra.mxu0 0.0
    %5667 = vmatprep.subr.mxu0 0.0
    %5668 = vmatpush1.msra.mxu0 0.0
    %5669 = vmatprep.subr.mxu0 0.0
    %5670 = vmatpush1.msra.mxu0 0.0
    %5671 = vmatprep.subr.mxu0 0.0
    %5672 = vmatpush1.msra.mxu0 0.0
    %5673 = vmatprep.subr.mxu0 0.0
    %5674 = vmatpush1.msra.mxu0 0.0
    %5675 = vmatprep.subr.mxu0 0.0
    %5676 = vmatpush1.msra.mxu0 0.0
    %5677 = vmatprep.subr.mxu0 0.0
    %5678 = vmatpush1.msra.mxu0 0.0
    %5679 = vmatprep.subr.mxu0 0.0
    %5680 = vmatpush1.msra.mxu0 0.0
    %5681 = vmatprep.subr.mxu0 0.0
    %5682 = vmatpush1.msra.mxu0 0.0
    %5683 = vmatprep.subr.mxu0 0.0
    %5684 = vmatpush1.msra.mxu0 0.0
    %5685 = vmatprep.subr.mxu0 0.0
    %5686 = vmatpush1.msra.mxu0 0.0
    %5687 = vmatprep.mubr.f32.mxu0 0.0
    %5688 = vmatmul.mubr.f32.gmra.mrb[0].mxu0 %v5621
    %v5689 = vpop.f32.mrb[0].mxu0
    %v5690 = vadd.f32 0.0, %v5689
    %v5691 = vpop.f32.mrb[0].mxu0
    %5692 = vdwg.mxu0
    %s5693 = scalar_lea.vmem %s14, 56
    %v5694 = vld [vmem:[%s5693] sm:$0xff]
    %v5696 = vsel %vm701, %v5617, 0
    %v5699 = vsel %vm701, %v5690, 0
    %5701 = vmatprep.subr.mxu0 0.0
    %5702 = vmatpush1.msra.mxu0 %v5694
    %5703 = vmatprep.subr.mxu0 0.0
    %5704 = vmatpush1.msra.mxu0 0.0
    %5705 = vmatprep.subr.mxu0 0.0
    %5706 = vmatpush1.msra.mxu0 0.0
    %5707 = vmatprep.subr.mxu0 0.0
    %5708 = vmatpush1.msra.mxu0 0.0
    %5709 = vmatprep.subr.mxu0 0.0
    %5710 = vmatpush1.msra.mxu0 0.0
    %5711 = vmatprep.subr.mxu0 0.0
    %5712 = vmatpush1.msra.mxu0 0.0
    %5713 = vmatprep.subr.mxu0 0.0
    %5714 = vmatpush1.msra.mxu0 0.0
    %5715 = vmatprep.subr.mxu0 0.0
    %5716 = vmatpush1.msra.mxu0 0.0
    %5717 = vmatprep.subr.mxu0 0.0
    %5718 = vmatpush1.msra.mxu0 0.0
    %5719 = vmatprep.subr.mxu0 0.0
    %5720 = vmatpush1.msra.mxu0 0.0
    %5721 = vmatprep.subr.mxu0 0.0
    %5722 = vmatpush1.msra.mxu0 0.0
    %5723 = vmatprep.subr.mxu0 0.0
    %5724 = vmatpush1.msra.mxu0 0.0
    %5725 = vmatprep.subr.mxu0 0.0
    %5726 = vmatpush1.msra.mxu0 0.0
    %5727 = vmatprep.subr.mxu0 0.0
    %5728 = vmatpush1.msra.mxu0 0.0
    %5729 = vmatprep.subr.mxu0 0.0
    %5730 = vmatpush1.msra.mxu0 0.0
    %5731 = vmatprep.subr.mxu0 0.0
    %5732 = vmatpush1.msra.mxu0 0.0
    %5733 = vmatprep.subr.mxu0 0.0
    %5734 = vmatpush1.msra.mxu0 0.0
    %5735 = vmatprep.subr.mxu0 0.0
    %5736 = vmatpush1.msra.mxu0 0.0
    %5737 = vmatprep.subr.mxu0 0.0
    %5738 = vmatpush1.msra.mxu0 0.0
    %5739 = vmatprep.subr.mxu0 0.0
    %5740 = vmatpush1.msra.mxu0 0.0
    %5741 = vmatprep.subr.mxu0 0.0
    %5742 = vmatpush1.msra.mxu0 0.0
    %5743 = vmatprep.subr.mxu0 0.0
    %5744 = vmatpush1.msra.mxu0 0.0
    %5745 = vmatprep.subr.mxu0 0.0
    %5746 = vmatpush1.msra.mxu0 0.0
    %5747 = vmatprep.subr.mxu0 0.0
    %5748 = vmatpush1.msra.mxu0 0.0
    %5749 = vmatprep.subr.mxu0 0.0
    %5750 = vmatpush1.msra.mxu0 0.0
    %5751 = vmatprep.subr.mxu0 0.0
    %5752 = vmatpush1.msra.mxu0 0.0
    %5753 = vmatprep.subr.mxu0 0.0
    %5754 = vmatpush1.msra.mxu0 0.0
    %5755 = vmatprep.subr.mxu0 0.0
    %5756 = vmatpush1.msra.mxu0 0.0
    %5757 = vmatprep.subr.mxu0 0.0
    %5758 = vmatpush1.msra.mxu0 0.0
    %5759 = vmatprep.subr.mxu0 0.0
    %5760 = vmatpush1.msra.mxu0 0.0
    %5761 = vmatprep.subr.mxu0 0.0
    %5762 = vmatpush1.msra.mxu0 0.0
    %5763 = vmatprep.subr.mxu0 0.0
    %5764 = vmatpush1.msra.mxu0 0.0
    %5765 = vmatprep.mubr.f32.mxu0 0.0
    %5766 = vmatmul.mubr.f32.gmra.mrb[0].mxu0 %v5696
    %v5767 = vpop.f32.mrb[0].mxu0
    %v5768 = vadd.f32 0.0, %v5767
    %v5769 = vpop.f32.mrb[0].mxu0
    %5770 = vmatprep.mubr.f32.mxu0 0.0
    %5771 = vmatmul.mubr.f32.gmra.mrb[0].mxu0 %v5699
    %v5772 = vpop.f32.mrb[0].mxu0
    %v5773 = vadd.f32 0.0, %v5772
    %v5774 = vpop.f32.mrb[0].mxu0
    %5775 = vdwg.mxu0
    %v5776 = vadd.f32 %v5129, %v5768
    %v5777 = vadd.f32 %v5130, %v5773
    %v5778 = vadd.f32 %v5776, %v3094
    %v5779 = vadd.f32 %v5777, %v3095
    %s5780 = scalar_lea.vmem %s16, 1
    %v5781 = vld [vmem:[%s5780] sm:$0x1]
    %s5782 = scalar_lea.vmem %s17, 1
    %v5783 = vld [vmem:[%s5782] sm:$0x1]
    %v5784 = vsel %vm370, %v5778, 0.0
    %5785 = vadd.xlane.f32.xlu0 %v5784
    %v5786 = vpop.xlane.xlu0 %5785
    %v5787 = vsel %vm370, %v5779, 0.0
    %5788 = vadd.xlane.f32.xlu0 %v5787
    %v5789 = vpop.xlane.xlu0 %5788
    %v5790 = vmul.f32 %v5786, %v3059
    %v5791 = vmul.f32 %v5789, %v3059
    %v5792 = vsub.f32 %v5778, %v5790
    %v5793 = vsub.f32 %v5779, %v5791
    %v5794 = vmul.f32 %v5792, %v5792
    %v5795 = vmul.f32 %v5793, %v5793
    %v5796 = vsel %vm370, %v5794, 0.0
    %5797 = vadd.xlane.f32.xlu0 %v5796
    %v5798 = vpop.xlane.xlu0 %5797
    %v5799 = vsel %vm370, %v5795, 0.0
    %5800 = vadd.xlane.f32.xlu0 %v5799
    %v5801 = vpop.xlane.xlu0 %5800
    %v5802 = vmul.f32 %v5798, %v3059
    %v5803 = vmul.f32 %v5801, %v3059
    %v5804 = vadd.f32 %v5802, 1e-05
    %v5805 = vadd.f32 %v5803, 1e-05
    %v5806 = vrsqrt.pop %v5804
    %v5807 = vrsqrt.pop %v5805
    %v5808 = vmul.f32 %v5792, %v5806
    %v5809 = vmul.f32 %v5793, %v5807
    %v5811 = vlaneseq
    %v5812 = vshrl.u32 %v5811, 7
    %v5813 = vsub.s32 0, %v5812
    %v5814 = vrot.slane %v5781, %v5813
    %v5816 = vmul.f32 %v5814, %v5808
    %v5817 = vmul.f32 %v5814, %v5809
    %v5819 = vlaneseq
    %v5820 = vshrl.u32 %v5819, 7
    %v5821 = vsub.s32 0, %v5820
    %v5822 = vrot.slane %v5783, %v5821
    %v5824 = vadd.f32 %v5816, %v5822
    %v5825 = vadd.f32 %v5817, %v5822
    %5826 = vst.msk [vmem:[#allocation2] sm:$0xff] %vm370, %v5824
    %5827 = vst.msk [vmem:[#allocation2 + $0x8] sm:$0xff] %vm370, %v5825
    // Predicated region
    $region74: #{tpu_custom_call.1} parent=1 // pred_check
      _
    $region75: #{tpu_custom_call.1} parent=1 // pred_check_branch
      %5829 = sbr.rel (0) target = $region77
    $region76: #{tpu_custom_call.1} parent=1 // pred_region
      %s5831 = ssub.s32 256, 256
      %5832 = vsyncadd [#allocation3], %s5831
      %s5833 = sshll.u32 [#allocation2], 4
      %s5834 = int_to_ptr.vmem [resolvable:$true] %s5833
      %5839 = dma.vmem_to_hbm [thread:$0]  %s5834, 256, %s18, [#allocation3], 128, 128, 8
    $region77: #{tpu_custom_call.1} parent=1 // pred_fallthru
      _
    // Predicated region
    $region78: #{tpu_custom_call.1} parent=1 // pred_check
      _
    $region79: #{tpu_custom_call.1} parent=1 // pred_check_branch
      %5841 = sbr.rel (0) target = $region81
    $region80: #{tpu_custom_call.1} parent=1 // pred_region
      %5842 = dma.done [#allocation3], 256
    $region81: #{tpu_custom_call.1} parent=1 // pred_fallthru
      _
    %5843 = vsyncpa [#allocation3], 1

</llo_original>
